<compile_context>
chip_gen: v5e
topology: v5e:2x2
jax: 0.10.0
libtpu: 0.0.40
codegen_flags: <defaults>
</compile_context>

<pallas_src>
import functools
import math

import jax
import jax.numpy as jnp
from jax.experimental import pallas as pl
from jax.experimental import pallas as pl  # noqa: F811 (kept single import path)
from jax.experimental.pallas import tpu as pltpu  # noqa: F401  (TPU backend assumed)


NEG_INF = jnp.float32(-1e30)
_SQRT_HALF = 0.7071067811865476


# --------------------------- in-kernel math helpers ---------------------------
def _erf(x):
    # Abramowitz & Stegun 7.1.26 rational approximation, |abs err| < 1.5e-7:
    # a float32-accurate stand-in for the exact-erf GELU used by F.gelu.
    a1, a2, a3, a4, a5 = (0.254829592, -0.284496736, 1.421413741,
                          -1.453152027, 1.061405429)
    p = 0.3275911
    ax = jnp.abs(x)
    t = 1.0 / (1.0 + p * ax)
    poly = ((((a5 * t + a4) * t + a3) * t + a2) * t + a1) * t
    e = 1.0 - poly * jnp.exp(-ax * ax)
    return jnp.where(x < 0.0, -e, e)


def _gelu(x):
    return 0.5 * x * (1.0 + _erf(x * _SQRT_HALF))


def _layernorm(x, g, b, eps=1e-5):
    mean = jnp.mean(x, axis=-1, keepdims=True)
    xc = x - mean
    var = jnp.mean(xc * xc, axis=-1, keepdims=True)
    return xc * jax.lax.rsqrt(var + eps) * g + b


def _mha(x_q, kv_list, bias_list, w_q_ref, w_k_ref, w_v_ref,
         b_q_ref, b_k_ref, b_v_ref, w_o_ref, n_head, scale):
    """Multi-head self attention for query rows x_q over key/value pieces.

    x_q: (Sq, D) float32.  kv_list: list of (Si, D) pieces supplying keys and
    values.  bias_list: per-piece additive (Sq, Si) bias or None.  Returns the
    output-projected attention (Sq, D) WITHOUT the output-projection bias.
    """
    Sq, D = x_q.shape
    attn = jnp.zeros((Sq, D), jnp.float32)
    for h in range(n_head):
        w_q = w_q_ref[h]
        w_k = w_k_ref[h]
        w_v = w_v_ref[h]
        b_q = b_q_ref[h]
        b_k = b_k_ref[h]
        b_v = b_v_ref[h]
        q = (jnp.dot(x_q, w_q, preferred_element_type=jnp.float32) + b_q) * scale
        # scores per key piece (softmax runs over the union of pieces)
        ss = []
        for xi, bias in zip(kv_list, bias_list):
            k = jnp.dot(xi, w_k, preferred_element_type=jnp.float32) + b_k
            s = jax.lax.dot_general(q, k, (((1,), (1,)), ((), ())),
                                    preferred_element_type=jnp.float32)
            if bias is not None:
                s = s + bias
            ss.append(s)
        m = ss[0].max(axis=-1, keepdims=True)
        for s in ss[1:]:
            m = jnp.maximum(m, s.max(axis=-1, keepdims=True))
        es = [jnp.exp(s - m) for s in ss]
        l = es[0].sum(axis=-1, keepdims=True)
        for e in es[1:]:
            l = l + e.sum(axis=-1, keepdims=True)
        o = None
        for xi, e in zip(kv_list, es):
            v = jnp.dot(xi, w_v, preferred_element_type=jnp.float32) + b_v
            pv = jnp.dot(e, v, preferred_element_type=jnp.float32)
            o = pv if o is None else o + pv
        o = o * pl.reciprocal(l)                       # exact reciprocal
        attn = attn + jnp.dot(o, w_o_ref[h], preferred_element_type=jnp.float32)
    return attn


def _layer_tail(x, attn, b_o, ff1_w, ff1_b, ff2_w, ff2_b,
                ln1_g, ln1_b, ln2_g, ln2_b):
    """Post-norm transformer layer tail: residual+LN1, GELU FFN, residual+LN2."""
    h1 = _layernorm(x + attn + b_o, ln1_g, ln1_b)
    ff = jnp.dot(h1, ff1_w, preferred_element_type=jnp.float32) + ff1_b
    ff = _gelu(ff)
    ff = jnp.dot(ff, ff2_w, preferred_element_type=jnp.float32) + ff2_b
    return _layernorm(h1 + ff, ln2_g, ln2_b)


# ------------------------------- Pallas kernels -------------------------------
def _linear_kernel(x_ref, w_ref, b_ref, o_ref):
    acc = jnp.dot(x_ref[...], w_ref[...], preferred_element_type=jnp.float32)
    o_ref[...] = (acc + b_ref[...]).astype(o_ref.dtype)


def _linear_nobias_kernel(x_ref, w_ref, o_ref):
    o_ref[...] = jnp.dot(x_ref[...], w_ref[...],
                         preferred_element_type=jnp.float32).astype(o_ref.dtype)


def linear(x, w, b=None):
    """y = x @ w (+ b).   x: (M, K), w: (K, N), b: (1, N) or None."""
    M = x.shape[0]
    N = w.shape[1]
    if b is None:
        return pl.pallas_call(
            _linear_nobias_kernel,
            out_shape=jax.ShapeDtypeStruct((M, N), x.dtype),
        )(x, w)
    return pl.pallas_call(
        _linear_kernel,
        out_shape=jax.ShapeDtypeStruct((M, N), x.dtype),
    )(x, w, b)


def _enc_layer_kernel(x_ref,
                      w_q_ref, w_k_ref, w_v_ref, b_q_ref, b_k_ref, b_v_ref,
                      w_o_ref, b_o_ref, ff1_w_ref, ff1_b_ref, ff2_w_ref,
                      ff2_b_ref, ln1_g_ref, ln1_b_ref, ln2_g_ref, ln2_b_ref,
                      o_ref, *, n_head):
    """One full TransformerEncoderLayer (post-norm, GELU), no mask.
       x_ref/o_ref: (B, S, D) batch-first."""
    D = x_ref.shape[-1]
    scale = 1.0 / math.sqrt(D // n_head)
    b_o = b_o_ref[...]
    ff1_w = ff1_w_ref[...]
    ff1_b = ff1_b_ref[...]
    ff2_w = ff2_w_ref[...]
    ff2_b = ff2_b_ref[...]
    ln1_g = ln1_g_ref[...]
    ln1_b = ln1_b_ref[...]
    ln2_g = ln2_g_ref[...]
    ln2_b = ln2_b_ref[...]
    for b in range(x_ref.shape[0]):
        x = x_ref[b].astype(jnp.float32)
        attn = _mha(x, [x], [None], w_q_ref, w_k_ref, w_v_ref,
                    b_q_ref, b_k_ref, b_v_ref, w_o_ref, n_head, scale)
        y = _layer_tail(x, attn, b_o, ff1_w, ff1_b, ff2_w, ff2_b,
                        ln1_g, ln1_b, ln2_g, ln2_b)
        o_ref[b] = y.astype(o_ref.dtype)


def _cond_layer_kernel(cond_ref, x_ref, bias_ref, lin_w_ref, lin_b_ref,
                       w_q_ref, w_k_ref, w_v_ref, b_q_ref, b_k_ref, b_v_ref,
                       w_o_ref, b_o_ref, ff1_w_ref, ff1_b_ref, ff2_w_ref,
                       ff2_b_ref, ln1_g_ref, ln1_b_ref, ln2_g_ref, ln2_b_ref,
                       o_ref, *, n_head):
    """One CustomTransformerEncoder_v2 layer step, fully fused:
         cond_tmp = cond @ lin_w + lin_b
         out      = TransformerEncoderLayer(cat([cond_tmp, x]))[Lc:]
       computed without materializing the concatenation (split-key attention,
       only the kept query rows are produced).  The additive bias applies to
       the non-cond keys only (cond keys are unmasked in this module).
       cond_ref: (B, Lc, D); x_ref/o_ref: (B, St, D); bias_ref: (B, St, St)."""
    D = x_ref.shape[-1]
    scale = 1.0 / math.sqrt(D // n_head)
    lin_w = lin_w_ref[...]
    lin_b = lin_b_ref[...]
    b_o = b_o_ref[...]
    ff1_w = ff1_w_ref[...]
    ff1_b = ff1_b_ref[...]
    ff2_w = ff2_w_ref[...]
    ff2_b = ff2_b_ref[...]
    ln1_g = ln1_g_ref[...]
    ln1_b = ln1_b_ref[...]
    ln2_g = ln2_g_ref[...]
    ln2_b = ln2_b_ref[...]
    for b in range(x_ref.shape[0]):
        x = x_ref[b].astype(jnp.float32)
        c = jnp.dot(cond_ref[b].astype(jnp.float32), lin_w,
                    preferred_element_type=jnp.float32) + lin_b
        bias = bias_ref[b]
        attn = _mha(x, [c, x], [None, bias], w_q_ref, w_k_ref, w_v_ref,
                    b_q_ref, b_k_ref, b_v_ref, w_o_ref, n_head, scale)
        y = _layer_tail(x, attn, b_o, ff1_w, ff1_b, ff2_w, ff2_b,
                        ln1_g, ln1_b, ln2_g, ln2_b)
        o_ref[b] = y.astype(o_ref.dtype)


_LAYER_KEYS = ('w_q', 'w_k', 'w_v', 'b_q', 'b_k', 'b_v', 'w_o', 'b_o',
               'ff1_w', 'ff1_b', 'ff2_w', 'ff2_b',
               'ln1_g', 'ln1_b', 'ln2_g', 'ln2_b')


def encoder_layer(x, p, n_head):
    """x: (B, S, D) batch-first."""
    B, S, D = x.shape
    return pl.pallas_call(
        functools.partial(_enc_layer_kernel, n_head=n_head),
        out_shape=jax.ShapeDtypeStruct((B, S, D), x.dtype),
    )(x, *[p[k] for k in _LAYER_KEYS])


def cond_encoder_layer(cond, x, bias, lp, p, n_head):
    """cond: (B, Lc, D); x: (B, St, D); bias: (B, St, St) additive, x-keys only."""
    B, St, D = x.shape
    return pl.pallas_call(
        functools.partial(_cond_layer_kernel, n_head=n_head),
        out_shape=jax.ShapeDtypeStruct((B, St, D), x.dtype),
    )(cond, x, bias, lp['w'], lp['b'], *[p[k] for k in _LAYER_KEYS])


# ------------------------------- parameters -----------------------------------
def positional_encoding(max_len, d_model):
    position = jnp.arange(max_len, dtype=jnp.float32)[:, None]
    div_term = jnp.exp(jnp.arange(0, d_model, 2, dtype=jnp.float32)
                       * (-math.log(10000.0) / d_model))
    pe = jnp.zeros((max_len, d_model), jnp.float32)
    pe = pe.at[:, 0::2].set(jnp.sin(position * div_term))
    pe = pe.at[:, 1::2].set(jnp.cos(position * div_term))
    return pe                                   # (max_len, d_model)


def init_params(key, *, nx, nh_emb, nh_lin, n_action, n_layer, n_head):
    keys = iter(jax.random.split(key, 128))
    D, H, F = nh_emb, n_head, nh_lin
    Dh = D // H

    def lin_init(fan_in, fan_out, bias=True, scale=0.05):
        kw, kb = jax.random.split(next(keys))
        p = {'w': jax.random.normal(kw, (fan_in, fan_out), jnp.float32) * scale}
        if bias:
            p['b'] = jax.random.normal(kb, (1, fan_out), jnp.float32) * scale
        return p

    def layer_init(scale=0.05):
        ks = jax.random.split(next(keys), 8)
        # Same parameterization as nn.TransformerEncoderLayer, pre-arranged
        # head-major: qkv = x @ in_w + in_b with columns [Q | K | V], each D
        # wide and head-split into Dh chunks; out_w rows are the concat-head dim.
        in_w = jax.random.normal(ks[0], (D, 3 * D), jnp.float32) * scale
        in_b = jax.random.normal(ks[1], (3 * D,), jnp.float32) * scale
        out_w = jax.random.normal(ks[2], (D, D), jnp.float32) * scale
        out_b = jax.random.normal(ks[3], (D,), jnp.float32) * scale
        w_in = in_w.reshape(D, 3, H, Dh).transpose(1, 2, 0, 3)   # (3, H, D, Dh)
        b_in = in_b.reshape(3, H, 1, Dh)
        return {
            'w_q': w_in[0], 'w_k': w_in[1], 'w_v': w_in[2],
            'b_q': b_in[0], 'b_k': b_in[1], 'b_v': b_in[2],
            'w_o': out_w.reshape(H, Dh, D), 'b_o': out_b.reshape(1, D),
            'ff1_w': jax.random.normal(ks[4], (D, F), jnp.float32) * scale,
            'ff1_b': jax.random.normal(ks[5], (1, F), jnp.float32) * scale,
            'ff2_w': jax.random.normal(ks[6], (F, D), jnp.float32) * scale,
            'ff2_b': jax.random.normal(ks[7], (1, D), jnp.float32) * scale,
            'ln1_g': jnp.ones((1, D), jnp.float32),
            'ln1_b': jnp.zeros((1, D), jnp.float32),
            'ln2_g': jnp.ones((1, D), jnp.float32),
            'ln2_b': jnp.zeros((1, D), jnp.float32),
        }

    return {
        'his_lin_proj': lin_init(nx, D),
        'enc_x': [layer_init() for _ in range(n_layer // 2)],
        'mu_std_token': lin_init(n_action, 2 * D, bias=False),
        'enc_lin_proj': lin_init(nx, D),
        'enc_tf_layers': [layer_init() for _ in range(n_layer)],
        'enc_tf_lin': [lin_init(D, D) for _ in range(n_layer)],
        'dec_act_token': lin_init(n_action, D, bias=False),
        'dec_lin_proj_out': lin_init(D, nx),
        'dec_tf_layers': [layer_init() for _ in range(n_layer)],
        'dec_tf_lin': [lin_init(D, D) for _ in range(n_layer)],
        'pe': positional_encoding(5000, D),
    }


# ------------------------------- forward pass ----------------------------------
def transformer_vae_v4_forward(params, x, y, act, fn_mask, *, n_head):
    """x: (t_his, bs, nx), y: (t_pre, bs, nx), act: (bs, n_action),
       fn_mask: (bs, t_pre) bool (True = padded key).  Returns (yp, mu, logvar)
       with yp: (t_pre, bs, nx), mu/logvar: (bs, nh_emb)."""
    D = params['pe'].shape[-1]
    t_his, bs, nx = x.shape
    t_pre = y.shape[0]
    pe = params['pe']                                   # (max_len, D)

    # batch-first activations throughout (seq-first only at the boundaries)
    x_bf = jnp.transpose(x, (1, 0, 2))                  # (bs, t_his, nx)
    y_bf = jnp.transpose(y, (1, 0, 2))                  # (bs, t_pre, nx)

    # -------------------------------- encode --------------------------------
    hx = linear(x_bf.reshape(bs * t_his, nx),
                params['his_lin_proj']['w'], params['his_lin_proj']['b'])
    hx = hx.reshape(bs, t_his, D)
    for p in params['enc_x']:
        hx = encoder_layer(hx, p, n_head)

    hact = linear(act, params['mu_std_token']['w'])     # bias=False
    hact = hact.reshape(bs, 2, D)

    hy = linear(y_bf.reshape(bs * t_pre, nx),
                params['enc_lin_proj']['w'], params['enc_lin_proj']['b'])
    hy = hy.reshape(bs, t_pre, D)
    hy = jnp.concatenate([hact, hy], axis=1)            # (bs, 2+t_pre, D)
    St_e = 2 + t_pre
    hy = hy + pe[:St_e][None]                           # PositionalEncoding (eval)

    # key-padding bias over the non-cond keys, built once and reused by every
    # layer (cond keys are never padded -> zero bias handled structurally).
    fn_x = jnp.concatenate([jnp.zeros((bs, 2), dtype=bool), fn_mask], axis=1)
    enc_bias = jnp.where(fn_x[:, None, :], NEG_INF, jnp.float32(0.0))
    enc_bias = jnp.broadcast_to(enc_bias, (bs, St_e, St_e)).astype(jnp.float32)

    out = hy
    for p, lp in zip(params['enc_tf_layers'], params['enc_tf_lin']):
        out = cond_encoder_layer(hx, out, enc_bias, lp, p, n_head)
    mu = out[:, 0]
    logvar = out[:, 1]

    # reparameterize: eval mode -> z = mu
    z = mu

    # -------------------------------- decode --------------------------------
    T = t_pre
    hact_d = linear(act, params['dec_act_token']['w'])  # bias=False
    hact_d = z + hact_d
    hcond = jnp.concatenate([hact_d[:, None, :], hx], axis=1)   # (bs, 1+t_his, D)

    ht = jnp.broadcast_to(pe[:T][None], (bs, T, D)).astype(x.dtype)

    # strict-causal bias over the T generated keys for the T kept query rows;
    # cond keys are always attendable (zero bias handled structurally).
    causal = jnp.tril(jnp.ones((T, T), jnp.float32), k=-1)
    dec_bias = jnp.where(causal == 0, NEG_INF, jnp.float32(0.0))
    dec_bias = jnp.broadcast_to(dec_bias[None], (bs, T, T)).astype(jnp.float32)

    out = ht
    for p, lp in zip(params['dec_tf_layers'], params['dec_tf_lin']):
        out = cond_encoder_layer(hcond, out, dec_bias, lp, p, n_head)

    yp = linear(out.reshape(bs * T, D),
                params['dec_lin_proj_out']['w'], params['dec_lin_proj_out']['b'])
    yp = yp.reshape(bs, T, nx)
    yp = yp + x_bf[:, -1:, :]
    yp = jnp.transpose(yp, (1, 0, 2))                   # back to (t_pre, bs, nx)
    return yp, mu, logvar


# ---------------------------------- main ---------------------------------------
if __name__ == "__main__":
    nx, ny, horizon = 6, 6, 8
    specs = dict(n_head=2, n_layer=2, nh_lin=64, nh_emb=32, n_action=5)
    t_his, t_pre, bs = 4, 8, 2

    key = jax.random.PRNGKey(0)
    kp, kx, ky, ka = jax.random.split(key, 4)
    params = init_params(kp, nx=nx, nh_emb=specs['nh_emb'], nh_lin=specs['nh_lin'],
                         n_action=specs['n_action'], n_layer=specs['n_layer'],
                         n_head=specs['n_head'])

    x = jax.random.normal(kx, (t_his, bs, nx), jnp.float32)
    y = jax.random.normal(ky, (t_pre, bs, nx), jnp.float32)
    act = jax.random.normal(ka, (bs, specs['n_action']), jnp.float32)
    fn_mask = jnp.zeros((bs, t_pre), dtype=bool).at[1, -2:].set(True)

    fwd = jax.jit(functools.partial(transformer_vae_v4_forward,
                                    n_head=specs['n_head']))
    yp, mu, logvar = fwd(params, x, y, act, fn_mask)
    jax.block_until_ready((yp, mu, logvar))

    assert yp.shape == (t_pre, bs, nx)
    assert mu.shape == (bs, specs['nh_emb'])
    assert logvar.shape == (bs, specs['nh_emb'])
    print("KERNEL_OK")
</pallas_src>

<mosaic_0001>
module attributes {stable_mosaic.version = 11 : i64} {
  func.func @_linear_kernel(%arg0: memref<8x6xf32, #tpu.memory_space<vmem>>, %arg1: memref<6x32xf32, #tpu.memory_space<vmem>>, %arg2: memref<1x32xf32, #tpu.memory_space<vmem>>, %arg3: memref<8x32xf32, #tpu.memory_space<vmem>>) attributes {dimension_semantics = [], scalar_prefetch = 0 : i64, scratch_operands = 0 : i64, tpu.core_type = #tpu.core_type<tc>} {
    %c0 = arith.constant 0 : index
    %c0_0 = arith.constant 0 : index
    %0 = vector.load %arg0[%c0, %c0_0] : memref<8x6xf32, #tpu.memory_space<vmem>>, vector<8x6xf32>
    %c0_1 = arith.constant 0 : index
    %c0_2 = arith.constant 0 : index
    %1 = vector.load %arg1[%c0_1, %c0_2] : memref<6x32xf32, #tpu.memory_space<vmem>>, vector<6x32xf32>
    %cst = arith.constant dense<0.000000e+00> : vector<8x32xf32>
    %2 = tpu.matmul %0, %1, %cst {dimension_numbers = #tpu.dot_dimension_numbers<[1], [0], [0], [1], [0, 0, 1, 1], [], []>} : vector<8x6xf32>, vector<6x32xf32>, vector<8x32xf32> -> vector<8x32xf32>
    %c0_3 = arith.constant 0 : index
    %c0_4 = arith.constant 0 : index
    %3 = vector.load %arg2[%c0_3, %c0_4] : memref<1x32xf32, #tpu.memory_space<vmem>>, vector<1x32xf32>
    %4 = vector.broadcast %3 : vector<1x32xf32> to vector<8x32xf32>
    %5 = arith.addf %2, %4 : vector<8x32xf32>
    %c0_5 = arith.constant 0 : index
    %c0_6 = arith.constant 0 : index
    %6 = vector.load %arg3[%c0_5, %c0_6] : memref<8x32xf32, #tpu.memory_space<vmem>>, vector<8x32xf32>
    tpu.vector_store %arg3[%c0_5, %c0_6], %5 {strides = array<i32>} : memref<8x32xf32, #tpu.memory_space<vmem>>, vector<8x32xf32>,
    return
  }
}

module attributes {stable_mosaic.version = 11 : i64} {
  func.func @_linear_nobias_kernel(%arg0: memref<2x5xf32, #tpu.memory_space<vmem>>, %arg1: memref<5x64xf32, #tpu.memory_space<vmem>>, %arg2: memref<2x64xf32, #tpu.memory_space<vmem>>) attributes {dimension_semantics = [], scalar_prefetch = 0 : i64, scratch_operands = 0 : i64, tpu.core_type = #tpu.core_type<tc>} {
    %c0 = arith.constant 0 : index
    %c0_0 = arith.constant 0 : index
    %0 = vector.load %arg0[%c0, %c0_0] : memref<2x5xf32, #tpu.memory_space<vmem>>, vector<2x5xf32>
    %c0_1 = arith.constant 0 : index
    %c0_2 = arith.constant 0 : index
    %1 = vector.load %arg1[%c0_1, %c0_2] : memref<5x64xf32, #tpu.memory_space<vmem>>, vector<5x64xf32>
    %cst = arith.constant dense<0.000000e+00> : vector<2x64xf32>
    %2 = tpu.matmul %0, %1, %cst {dimension_numbers = #tpu.dot_dimension_numbers<[1], [0], [0], [1], [0, 0, 1, 1], [], []>} : vector<2x5xf32>, vector<5x64xf32>, vector<2x64xf32> -> vector<2x64xf32>
    %c0_3 = arith.constant 0 : index
    %c0_4 = arith.constant 0 : index
    %3 = vector.load %arg2[%c0_3, %c0_4] : memref<2x64xf32, #tpu.memory_space<vmem>>, vector<2x64xf32>
    tpu.vector_store %arg2[%c0_3, %c0_4], %2 {strides = array<i32>} : memref<2x64xf32, #tpu.memory_space<vmem>>, vector<2x64xf32>,
    return
  }
}

module attributes {stable_mosaic.version = 11 : i64} {
  func.func @_enc_layer_kernel(%arg0: memref<2x4x32xf32, #tpu.memory_space<vmem>>, %arg1: memref<2x32x16xf32, #tpu.memory_space<vmem>>, %arg2: memref<2x32x16xf32, #tpu.memory_space<vmem>>, %arg3: memref<2x32x16xf32, #tpu.memory_space<vmem>>, %arg4: memref<2x1x16xf32, #tpu.memory_space<vmem>>, %arg5: memref<2x1x16xf32, #tpu.memory_space<vmem>>, %arg6: memref<2x1x16xf32, #tpu.memory_space<vmem>>, %arg7: memref<2x16x32xf32, #tpu.memory_space<vmem>>, %arg8: memref<1x32xf32, #tpu.memory_space<vmem>>, %arg9: memref<32x64xf32, #tpu.memory_space<vmem>>, %arg10: memref<1x64xf32, #tpu.memory_space<vmem>>, %arg11: memref<64x32xf32, #tpu.memory_space<vmem>>, %arg12: memref<1x32xf32, #tpu.memory_space<vmem>>, %arg13: memref<1x32xf32, #tpu.memory_space<vmem>>, %arg14: memref<1x32xf32, #tpu.memory_space<vmem>>, %arg15: memref<1x32xf32, #tpu.memory_space<vmem>>, %arg16: memref<1x32xf32, #tpu.memory_space<vmem>>, %arg17: memref<2x4x32xf32, #tpu.memory_space<vmem>>) attributes {dimension_semantics = [], scalar_prefetch = 0 : i64, scratch_operands = 0 : i64, tpu.core_type = #tpu.core_type<tc>} {
    %c0 = arith.constant 0 : index
    %c0_0 = arith.constant 0 : index
    %0 = vector.load %arg8[%c0, %c0_0] : memref<1x32xf32, #tpu.memory_space<vmem>>, vector<1x32xf32>
    %c0_1 = arith.constant 0 : index
    %c0_2 = arith.constant 0 : index
    %1 = vector.load %arg9[%c0_1, %c0_2] : memref<32x64xf32, #tpu.memory_space<vmem>>, vector<32x64xf32>
    %c0_3 = arith.constant 0 : index
    %c0_4 = arith.constant 0 : index
    %2 = vector.load %arg10[%c0_3, %c0_4] : memref<1x64xf32, #tpu.memory_space<vmem>>, vector<1x64xf32>
    %c0_5 = arith.constant 0 : index
    %c0_6 = arith.constant 0 : index
    %3 = vector.load %arg11[%c0_5, %c0_6] : memref<64x32xf32, #tpu.memory_space<vmem>>, vector<64x32xf32>
    %c0_7 = arith.constant 0 : index
    %c0_8 = arith.constant 0 : index
    %4 = vector.load %arg12[%c0_7, %c0_8] : memref<1x32xf32, #tpu.memory_space<vmem>>, vector<1x32xf32>
    %c0_9 = arith.constant 0 : index
    %c0_10 = arith.constant 0 : index
    %5 = vector.load %arg13[%c0_9, %c0_10] : memref<1x32xf32, #tpu.memory_space<vmem>>, vector<1x32xf32>
    %c0_11 = arith.constant 0 : index
    %c0_12 = arith.constant 0 : index
    %6 = vector.load %arg14[%c0_11, %c0_12] : memref<1x32xf32, #tpu.memory_space<vmem>>, vector<1x32xf32>
    %c0_13 = arith.constant 0 : index
    %c0_14 = arith.constant 0 : index
    %7 = vector.load %arg15[%c0_13, %c0_14] : memref<1x32xf32, #tpu.memory_space<vmem>>, vector<1x32xf32>
    %c0_15 = arith.constant 0 : index
    %c0_16 = arith.constant 0 : index
    %8 = vector.load %arg16[%c0_15, %c0_16] : memref<1x32xf32, #tpu.memory_space<vmem>>, vector<1x32xf32>
    %c0_17 = arith.constant 0 : index
    %c0_18 = arith.constant 0 : index
    %c0_19 = arith.constant 0 : index
    %9 = vector.load %arg0[%c0_17, %c0_18, %c0_19] : memref<2x4x32xf32, #tpu.memory_space<vmem>>, vector<1x4x32xf32>
    %10 = vector.shape_cast %9 : vector<1x4x32xf32> to vector<4x32xf32>
    %cst = arith.constant 0.000000e+00 : f32
    %11 = vector.broadcast %cst : f32 to vector<4x32xf32>
    %c0_20 = arith.constant 0 : index
    %c0_21 = arith.constant 0 : index
    %c0_22 = arith.constant 0 : index
    %12 = vector.load %arg1[%c0_20, %c0_21, %c0_22] : memref<2x32x16xf32, #tpu.memory_space<vmem>>, vector<1x32x16xf32>
    %13 = vector.shape_cast %12 : vector<1x32x16xf32> to vector<32x16xf32>
    %c0_23 = arith.constant 0 : index
    %c0_24 = arith.constant 0 : index
    %c0_25 = arith.constant 0 : index
    %14 = vector.load %arg2[%c0_23, %c0_24, %c0_25] : memref<2x32x16xf32, #tpu.memory_space<vmem>>, vector<1x32x16xf32>
    %15 = vector.shape_cast %14 : vector<1x32x16xf32> to vector<32x16xf32>
    %c0_26 = arith.constant 0 : index
    %c0_27 = arith.constant 0 : index
    %c0_28 = arith.constant 0 : index
    %16 = vector.load %arg3[%c0_26, %c0_27, %c0_28] : memref<2x32x16xf32, #tpu.memory_space<vmem>>, vector<1x32x16xf32>
    %17 = vector.shape_cast %16 : vector<1x32x16xf32> to vector<32x16xf32>
    %c0_29 = arith.constant 0 : index
    %c0_30 = arith.constant 0 : index
    %c0_31 = arith.constant 0 : index
    %18 = vector.load %arg4[%c0_29, %c0_30, %c0_31] : memref<2x1x16xf32, #tpu.memory_space<vmem>>, vector<1x1x16xf32>
    %19 = vector.shape_cast %18 : vector<1x1x16xf32> to vector<1x16xf32>
    %c0_32 = arith.constant 0 : index
    %c0_33 = arith.constant 0 : index
    %c0_34 = arith.constant 0 : index
    %20 = vector.load %arg5[%c0_32, %c0_33, %c0_34] : memref<2x1x16xf32, #tpu.memory_space<vmem>>, vector<1x1x16xf32>
    %21 = vector.shape_cast %20 : vector<1x1x16xf32> to vector<1x16xf32>
    %c0_35 = arith.constant 0 : index
    %c0_36 = arith.constant 0 : index
    %c0_37 = arith.constant 0 : index
    %22 = vector.load %arg6[%c0_35, %c0_36, %c0_37] : memref<2x1x16xf32, #tpu.memory_space<vmem>>, vector<1x1x16xf32>
    %23 = vector.shape_cast %22 : vector<1x1x16xf32> to vector<1x16xf32>
    %cst_38 = arith.constant dense<0.000000e+00> : vector<4x16xf32>
    %24 = tpu.matmul %10, %13, %cst_38 {dimension_numbers = #tpu.dot_dimension_numbers<[1], [0], [0], [1], [0, 0, 1, 1], [], []>} : vector<4x32xf32>, vector<32x16xf32>, vector<4x16xf32> -> vector<4x16xf32>
    %25 = vector.broadcast %19 : vector<1x16xf32> to vector<4x16xf32>
    %26 = arith.addf %24, %25 : vector<4x16xf32>
    %cst_39 = arith.constant 2.500000e-01 : f32
    %27 = vector.broadcast %cst_39 : f32 to vector<4x16xf32>
    %28 = arith.mulf %26, %27 : vector<4x16xf32>
    %cst_40 = arith.constant dense<0.000000e+00> : vector<4x16xf32>
    %29 = tpu.matmul %10, %15, %cst_40 {dimension_numbers = #tpu.dot_dimension_numbers<[1], [0], [0], [1], [0, 0, 1, 1], [], []>} : vector<4x32xf32>, vector<32x16xf32>, vector<4x16xf32> -> vector<4x16xf32>
    %30 = vector.broadcast %21 : vector<1x16xf32> to vector<4x16xf32>
    %31 = arith.addf %29, %30 : vector<4x16xf32>
    %cst_41 = arith.constant dense<0.000000e+00> : vector<4x4xf32>
    %32 = tpu.matmul %28, %31, %cst_41 {dimension_numbers = #tpu.dot_dimension_numbers<[1], [1], [0], [0], [0, 0, 1, 0], [], []>} : vector<4x16xf32>, vector<4x16xf32>, vector<4x4xf32> -> vector<4x4xf32>
    %cst_42 = arith.constant dense<0xFF800000> : vector<4xf32>
    %33 = vector.multi_reduction <maximumf>, %32, %cst_42 [1] : vector<4x4xf32> to vector<4xf32>
    %34 = vector.shape_cast %33 : vector<4xf32> to vector<4x1xf32>
    %35 = vector.broadcast %34 : vector<4x1xf32> to vector<4x4xf32>
    %36 = arith.subf %32, %35 : vector<4x4xf32>
    %37 = math.exp %36 : vector<4x4xf32>
    %cst_43 = arith.constant dense<0.000000e+00> : vector<4xf32>
    %38 = vector.multi_reduction <add>, %37, %cst_43 [1] : vector<4x4xf32> to vector<4xf32>
    %39 = vector.shape_cast %38 : vector<4xf32> to vector<4x1xf32>
    %cst_44 = arith.constant dense<0.000000e+00> : vector<4x16xf32>
    %40 = tpu.matmul %10, %17, %cst_44 {dimension_numbers = #tpu.dot_dimension_numbers<[1], [0], [0], [1], [0, 0, 1, 1], [], []>} : vector<4x32xf32>, vector<32x16xf32>, vector<4x16xf32> -> vector<4x16xf32>
    %41 = vector.broadcast %23 : vector<1x16xf32> to vector<4x16xf32>
    %42 = arith.addf %40, %41 : vector<4x16xf32>
    %cst_45 = arith.constant dense<0.000000e+00> : vector<4x16xf32>
    %43 = tpu.matmul %37, %42, %cst_45 {dimension_numbers = #tpu.dot_dimension_numbers<[1], [0], [0], [1], [0, 0, 1, 1], [], []>} : vector<4x4xf32>, vector<4x16xf32>, vector<4x16xf32> -> vector<4x16xf32>
    %44 = tpu.reciprocal %39 : vector<4x1xf32> -> vector<4x1xf32>
    %45 = vector.broadcast %44 : vector<4x1xf32> to vector<4x16xf32>
    %46 = arith.mulf %43, %45 : vector<4x16xf32>
    %c0_46 = arith.constant 0 : index
    %c0_47 = arith.constant 0 : index
    %c0_48 = arith.constant 0 : index
    %47 = vector.load %arg7[%c0_46, %c0_47, %c0_48] : memref<2x16x32xf32, #tpu.memory_space<vmem>>, vector<1x16x32xf32>
    %48 = vector.shape_cast %47 : vector<1x16x32xf32> to vector<16x32xf32>
    %cst_49 = arith.constant dense<0.000000e+00> : vector<4x32xf32>
    %49 = tpu.matmul %46, %48, %cst_49 {dimension_numbers = #tpu.dot_dimension_numbers<[1], [0], [0], [1], [0, 0, 1, 1], [], []>} : vector<4x16xf32>, vector<16x32xf32>, vector<4x32xf32> -> vector<4x32xf32>
    %50 = arith.addf %11, %49 : vector<4x32xf32>
    %c1 = arith.constant 1 : index
    %c0_50 = arith.constant 0 : index
    %c0_51 = arith.constant 0 : index
    %51 = vector.load %arg1[%c1, %c0_50, %c0_51] : memref<2x32x16xf32, #tpu.memory_space<vmem>>, vector<1x32x16xf32>
    %52 = vector.shape_cast %51 : vector<1x32x16xf32> to vector<32x16xf32>
    %c1_52 = arith.constant 1 : index
    %c0_53 = arith.constant 0 : index
    %c0_54 = arith.constant 0 : index
    %53 = vector.load %arg2[%c1_52, %c0_53, %c0_54] : memref<2x32x16xf32, #tpu.memory_space<vmem>>, vector<1x32x16xf32>
    %54 = vector.shape_cast %53 : vector<1x32x16xf32> to vector<32x16xf32>
    %c1_55 = arith.constant 1 : index
    %c0_56 = arith.constant 0 : index
    %c0_57 = arith.constant 0 : index
    %55 = vector.load %arg3[%c1_55, %c0_56, %c0_57] : memref<2x32x16xf32, #tpu.memory_space<vmem>>, vector<1x32x16xf32>
    %56 = vector.shape_cast %55 : vector<1x32x16xf32> to vector<32x16xf32>
    %c1_58 = arith.constant 1 : index
    %c0_59 = arith.constant 0 : index
    %c0_60 = arith.constant 0 : index
    %57 = vector.load %arg4[%c1_58, %c0_59, %c0_60] : memref<2x1x16xf32, #tpu.memory_space<vmem>>, vector<1x1x16xf32>
    %58 = vector.shape_cast %57 : vector<1x1x16xf32> to vector<1x16xf32>
    %c1_61 = arith.constant 1 : index
    %c0_62 = arith.constant 0 : index
    %c0_63 = arith.constant 0 : index
    %59 = vector.load %arg5[%c1_61, %c0_62, %c0_63] : memref<2x1x16xf32, #tpu.memory_space<vmem>>, vector<1x1x16xf32>
    %60 = vector.shape_cast %59 : vector<1x1x16xf32> to vector<1x16xf32>
    %c1_64 = arith.constant 1 : index
    %c0_65 = arith.constant 0 : index
    %c0_66 = arith.constant 0 : index
    %61 = vector.load %arg6[%c1_64, %c0_65, %c0_66] : memref<2x1x16xf32, #tpu.memory_space<vmem>>, vector<1x1x16xf32>
    %62 = vector.shape_cast %61 : vector<1x1x16xf32> to vector<1x16xf32>
    %cst_67 = arith.constant dense<0.000000e+00> : vector<4x16xf32>
    %63 = tpu.matmul %10, %52, %cst_67 {dimension_numbers = #tpu.dot_dimension_numbers<[1], [0], [0], [1], [0, 0, 1, 1], [], []>} : vector<4x32xf32>, vector<32x16xf32>, vector<4x16xf32> -> vector<4x16xf32>
    %64 = vector.broadcast %58 : vector<1x16xf32> to vector<4x16xf32>
    %65 = arith.addf %63, %64 : vector<4x16xf32>
    %cst_68 = arith.constant 2.500000e-01 : f32
    %66 = vector.broadcast %cst_68 : f32 to vector<4x16xf32>
    %67 = arith.mulf %65, %66 : vector<4x16xf32>
    %cst_69 = arith.constant dense<0.000000e+00> : vector<4x16xf32>
    %68 = tpu.matmul %10, %54, %cst_69 {dimension_numbers = #tpu.dot_dimension_numbers<[1], [0], [0], [1], [0, 0, 1, 1], [], []>} : vector<4x32xf32>, vector<32x16xf32>, vector<4x16xf32> -> vector<4x16xf32>
    %69 = vector.broadcast %60 : vector<1x16xf32> to vector<4x16xf32>
    %70 = arith.addf %68, %69 : vector<4x16xf32>
    %cst_70 = arith.constant dense<0.000000e+00> : vector<4x4xf32>
    %71 = tpu.matmul %67, %70, %cst_70 {dimension_numbers = #tpu.dot_dimension_numbers<[1], [1], [0], [0], [0, 0, 1, 0], [], []>} : vector<4x16xf32>, vector<4x16xf32>, vector<4x4xf32> -> vector<4x4xf32>
    %cst_71 = arith.constant dense<0xFF800000> : vector<4xf32>
    %72 = vector.multi_reduction <maximumf>, %71, %cst_71 [1] : vector<4x4xf32> to vector<4xf32>
    %73 = vector.shape_cast %72 : vector<4xf32> to vector<4x1xf32>
    %74 = vector.broadcast %73 : vector<4x1xf32> to vector<4x4xf32>
    %75 = arith.subf %71, %74 : vector<4x4xf32>
    %76 = math.exp %75 : vector<4x4xf32>
    %cst_72 = arith.constant dense<0.000000e+00> : vector<4xf32>
    %77 = vector.multi_reduction <add>, %76, %cst_72 [1] : vector<4x4xf32> to vector<4xf32>
    %78 = vector.shape_cast %77 : vector<4xf32> to vector<4x1xf32>
    %cst_73 = arith.constant dense<0.000000e+00> : vector<4x16xf32>
    %79 = tpu.matmul %10, %56, %cst_73 {dimension_numbers = #tpu.dot_dimension_numbers<[1], [0], [0], [1], [0, 0, 1, 1], [], []>} : vector<4x32xf32>, vector<32x16xf32>, vector<4x16xf32> -> vector<4x16xf32>
    %80 = vector.broadcast %62 : vector<1x16xf32> to vector<4x16xf32>
    %81 = arith.addf %79, %80 : vector<4x16xf32>
    %cst_74 = arith.constant dense<0.000000e+00> : vector<4x16xf32>
    %82 = tpu.matmul %76, %81, %cst_74 {dimension_numbers = #tpu.dot_dimension_numbers<[1], [0], [0], [1], [0, 0, 1, 1], [], []>} : vector<4x4xf32>, vector<4x16xf32>, vector<4x16xf32> -> vector<4x16xf32>
    %83 = tpu.reciprocal %78 : vector<4x1xf32> -> vector<4x1xf32>
    %84 = vector.broadcast %83 : vector<4x1xf32> to vector<4x16xf32>
    %85 = arith.mulf %82, %84 : vector<4x16xf32>
    %c1_75 = arith.constant 1 : index
    %c0_76 = arith.constant 0 : index
    %c0_77 = arith.constant 0 : index
    %86 = vector.load %arg7[%c1_75, %c0_76, %c0_77] : memref<2x16x32xf32, #tpu.memory_space<vmem>>, vector<1x16x32xf32>
    %87 = vector.shape_cast %86 : vector<1x16x32xf32> to vector<16x32xf32>
    %cst_78 = arith.constant dense<0.000000e+00> : vector<4x32xf32>
    %88 = tpu.matmul %85, %87, %cst_78 {dimension_numbers = #tpu.dot_dimension_numbers<[1], [0], [0], [1], [0, 0, 1, 1], [], []>} : vector<4x16xf32>, vector<16x32xf32>, vector<4x32xf32> -> vector<4x32xf32>
    %89 = arith.addf %50, %88 : vector<4x32xf32>
    %90 = arith.addf %10, %89 : vector<4x32xf32>
    %91 = vector.broadcast %0 : vector<1x32xf32> to vector<4x32xf32>
    %92 = arith.addf %90, %91 : vector<4x32xf32>
    %cst_79 = arith.constant dense<0.000000e+00> : vector<4xf32>
    %93 = vector.multi_reduction <add>, %92, %cst_79 [1] : vector<4x32xf32> to vector<4xf32>
    %94 = vector.shape_cast %93 : vector<4xf32> to vector<4x1xf32>
    %cst_80 = arith.constant 3.200000e+01 : f32
    %95 = vector.broadcast %cst_80 : f32 to vector<4x1xf32>
    %96 = arith.divf %94, %95 : vector<4x1xf32>
    %97 = vector.broadcast %96 : vector<4x1xf32> to vector<4x32xf32>
    %98 = arith.subf %92, %97 : vector<4x32xf32>
    %99 = arith.mulf %98, %98 : vector<4x32xf32>
    %cst_81 = arith.constant dense<0.000000e+00> : vector<4xf32>
    %100 = vector.multi_reduction <add>, %99, %cst_81 [1] : vector<4x32xf32> to vector<4xf32>
    %101 = vector.shape_cast %100 : vector<4xf32> to vector<4x1xf32>
    %cst_82 = arith.constant 3.200000e+01 : f32
    %102 = vector.broadcast %cst_82 : f32 to vector<4x1xf32>
    %103 = arith.divf %101, %102 : vector<4x1xf32>
    %cst_83 = arith.constant 9.99999974E-6 : f32
    %104 = vector.broadcast %cst_83 : f32 to vector<4x1xf32>
    %105 = arith.addf %103, %104 : vector<4x1xf32>
    %106 = math.rsqrt %105 : vector<4x1xf32>
    %107 = vector.broadcast %106 : vector<4x1xf32> to vector<4x32xf32>
    %108 = arith.mulf %98, %107 : vector<4x32xf32>
    %109 = vector.broadcast %5 : vector<1x32xf32> to vector<4x32xf32>
    %110 = arith.mulf %108, %109 : vector<4x32xf32>
    %111 = vector.broadcast %6 : vector<1x32xf32> to vector<4x32xf32>
    %112 = arith.addf %110, %111 : vector<4x32xf32>
    %cst_84 = arith.constant dense<0.000000e+00> : vector<4x64xf32>
    %113 = tpu.matmul %112, %1, %cst_84 {dimension_numbers = #tpu.dot_dimension_numbers<[1], [0], [0], [1], [0, 0, 1, 1], [], []>} : vector<4x32xf32>, vector<32x64xf32>, vector<4x64xf32> -> vector<4x64xf32>
    %114 = vector.broadcast %2 : vector<1x64xf32> to vector<4x64xf32>
    %115 = arith.addf %113, %114 : vector<4x64xf32>
    %cst_85 = arith.constant 5.000000e-01 : f32
    %116 = vector.broadcast %cst_85 : f32 to vector<4x64xf32>
    %117 = arith.mulf %116, %115 : vector<4x64xf32>
    %cst_86 = arith.constant 0.707106769 : f32
    %118 = vector.broadcast %cst_86 : f32 to vector<4x64xf32>
    %119 = arith.mulf %115, %118 : vector<4x64xf32>
    %120 = math.absf %119 : vector<4x64xf32>
    %cst_87 = arith.constant 0.327591091 : f32
    %121 = vector.broadcast %cst_87 : f32 to vector<4x64xf32>
    %122 = arith.mulf %121, %120 : vector<4x64xf32>
    %cst_88 = arith.constant 1.000000e+00 : f32
    %123 = vector.broadcast %cst_88 : f32 to vector<4x64xf32>
    %124 = arith.addf %123, %122 : vector<4x64xf32>
    %cst_89 = arith.constant 1.000000e+00 : f32
    %125 = vector.broadcast %cst_89 : f32 to vector<4x64xf32>
    %126 = arith.divf %125, %124 : vector<4x64xf32>
    %cst_90 = arith.constant 1.06140542 : f32
    %127 = vector.broadcast %cst_90 : f32 to vector<4x64xf32>
    %128 = arith.mulf %127, %126 : vector<4x64xf32>
    %cst_91 = arith.constant -1.45315206 : f32
    %129 = vector.broadcast %cst_91 : f32 to vector<4x64xf32>
    %130 = arith.addf %128, %129 : vector<4x64xf32>
    %131 = arith.mulf %130, %126 : vector<4x64xf32>
    %cst_92 = arith.constant 1.42141378 : f32
    %132 = vector.broadcast %cst_92 : f32 to vector<4x64xf32>
    %133 = arith.addf %131, %132 : vector<4x64xf32>
    %134 = arith.mulf %133, %126 : vector<4x64xf32>
    %cst_93 = arith.constant -0.284496725 : f32
    %135 = vector.broadcast %cst_93 : f32 to vector<4x64xf32>
    %136 = arith.addf %134, %135 : vector<4x64xf32>
    %137 = arith.mulf %136, %126 : vector<4x64xf32>
    %cst_94 = arith.constant 0.254829586 : f32
    %138 = vector.broadcast %cst_94 : f32 to vector<4x64xf32>
    %139 = arith.addf %137, %138 : vector<4x64xf32>
    %140 = arith.mulf %139, %126 : vector<4x64xf32>
    %cst_95 = arith.constant 0.000000e+00 : f32
    %141 = vector.broadcast %cst_95 : f32 to vector<4x64xf32>
    %142 = arith.subf %141, %120 : vector<4x64xf32>
    %143 = arith.mulf %142, %120 : vector<4x64xf32>
    %144 = math.exp %143 : vector<4x64xf32>
    %145 = arith.mulf %140, %144 : vector<4x64xf32>
    %cst_96 = arith.constant 1.000000e+00 : f32
    %146 = vector.broadcast %cst_96 : f32 to vector<4x64xf32>
    %147 = arith.subf %146, %145 : vector<4x64xf32>
    %cst_97 = arith.constant 0.000000e+00 : f32
    %148 = vector.broadcast %cst_97 : f32 to vector<4x64xf32>
    %149 = arith.cmpf olt, %119, %148 : vector<4x64xf32>
    %cst_98 = arith.constant 0.000000e+00 : f32
    %150 = vector.broadcast %cst_98 : f32 to vector<4x64xf32>
    %151 = arith.subf %150, %147 : vector<4x64xf32>
    %152 = arith.select %149, %151, %147 : vector<4x64xi1>, vector<4x64xf32>
    %cst_99 = arith.constant 1.000000e+00 : f32
    %153 = vector.broadcast %cst_99 : f32 to vector<4x64xf32>
    %154 = arith.addf %153, %152 : vector<4x64xf32>
    %155 = arith.mulf %117, %154 : vector<4x64xf32>
    %cst_100 = arith.constant dense<0.000000e+00> : vector<4x32xf32>
    %156 = tpu.matmul %155, %3, %cst_100 {dimension_numbers = #tpu.dot_dimension_numbers<[1], [0], [0], [1], [0, 0, 1, 1], [], []>} : vector<4x64xf32>, vector<64x32xf32>, vector<4x32xf32> -> vector<4x32xf32>
    %157 = vector.broadcast %4 : vector<1x32xf32> to vector<4x32xf32>
    %158 = arith.addf %156, %157 : vector<4x32xf32>
    %159 = arith.addf %112, %158 : vector<4x32xf32>
    %cst_101 = arith.constant dense<0.000000e+00> : vector<4xf32>
    %160 = vector.multi_reduction <add>, %159, %cst_101 [1] : vector<4x32xf32> to vector<4xf32>
    %161 = vector.shape_cast %160 : vector<4xf32> to vector<4x1xf32>
    %cst_102 = arith.constant 3.200000e+01 : f32
    %162 = vector.broadcast %cst_102 : f32 to vector<4x1xf32>
    %163 = arith.divf %161, %162 : vector<4x1xf32>
    %164 = vector.broadcast %163 : vector<4x1xf32> to vector<4x32xf32>
    %165 = arith.subf %159, %164 : vector<4x32xf32>
    %166 = arith.mulf %165, %165 : vector<4x32xf32>
    %cst_103 = arith.constant dense<0.000000e+00> : vector<4xf32>
    %167 = vector.multi_reduction <add>, %166, %cst_103 [1] : vector<4x32xf32> to vector<4xf32>
    %168 = vector.shape_cast %167 : vector<4xf32> to vector<4x1xf32>
    %cst_104 = arith.constant 3.200000e+01 : f32
    %169 = vector.broadcast %cst_104 : f32 to vector<4x1xf32>
    %170 = arith.divf %168, %169 : vector<4x1xf32>
    %cst_105 = arith.constant 9.99999974E-6 : f32
    %171 = vector.broadcast %cst_105 : f32 to vector<4x1xf32>
    %172 = arith.addf %170, %171 : vector<4x1xf32>
    %173 = math.rsqrt %172 : vector<4x1xf32>
    %174 = vector.broadcast %173 : vector<4x1xf32> to vector<4x32xf32>
    %175 = arith.mulf %165, %174 : vector<4x32xf32>
    %176 = vector.broadcast %7 : vector<1x32xf32> to vector<4x32xf32>
    %177 = arith.mulf %175, %176 : vector<4x32xf32>
    %178 = vector.broadcast %8 : vector<1x32xf32> to vector<4x32xf32>
    %179 = arith.addf %177, %178 : vector<4x32xf32>
    %c0_106 = arith.constant 0 : index
    %c0_107 = arith.constant 0 : index
    %c0_108 = arith.constant 0 : index
    %180 = vector.load %arg17[%c0_106, %c0_107, %c0_108] : memref<2x4x32xf32, #tpu.memory_space<vmem>>, vector<1x4x32xf32>
    %181 = vector.shape_cast %180 : vector<1x4x32xf32> to vector<4x32xf32>
    %182 = vector.shape_cast %179 : vector<4x32xf32> to vector<1x4x32xf32>
    tpu.vector_store %arg17[%c0_106, %c0_107, %c0_108], %182 {strides = array<i32>} : memref<2x4x32xf32, #tpu.memory_space<vmem>>, vector<1x4x32xf32>,
    %c1_109 = arith.constant 1 : index
    %c0_110 = arith.constant 0 : index
    %c0_111 = arith.constant 0 : index
    %183 = vector.load %arg0[%c1_109, %c0_110, %c0_111] : memref<2x4x32xf32, #tpu.memory_space<vmem>>, vector<1x4x32xf32>
    %184 = vector.shape_cast %183 : vector<1x4x32xf32> to vector<4x32xf32>
    %cst_112 = arith.constant 0.000000e+00 : f32
    %185 = vector.broadcast %cst_112 : f32 to vector<4x32xf32>
    %c0_113 = arith.constant 0 : index
    %c0_114 = arith.constant 0 : index
    %c0_115 = arith.constant 0 : index
    %186 = vector.load %arg1[%c0_113, %c0_114, %c0_115] : memref<2x32x16xf32, #tpu.memory_space<vmem>>, vector<1x32x16xf32>
    %187 = vector.shape_cast %186 : vector<1x32x16xf32> to vector<32x16xf32>
    %c0_116 = arith.constant 0 : index
    %c0_117 = arith.constant 0 : index
    %c0_118 = arith.constant 0 : index
    %188 = vector.load %arg2[%c0_116, %c0_117, %c0_118] : memref<2x32x16xf32, #tpu.memory_space<vmem>>, vector<1x32x16xf32>
    %189 = vector.shape_cast %188 : vector<1x32x16xf32> to vector<32x16xf32>
    %c0_119 = arith.constant 0 : index
    %c0_120 = arith.constant 0 : index
    %c0_121 = arith.constant 0 : index
    %190 = vector.load %arg3[%c0_119, %c0_120, %c0_121] : memref<2x32x16xf32, #tpu.memory_space<vmem>>, vector<1x32x16xf32>
    %191 = vector.shape_cast %190 : vector<1x32x16xf32> to vector<32x16xf32>
    %c0_122 = arith.constant 0 : index
    %c0_123 = arith.constant 0 : index
    %c0_124 = arith.constant 0 : index
    %192 = vector.load %arg4[%c0_122, %c0_123, %c0_124] : memref<2x1x16xf32, #tpu.memory_space<vmem>>, vector<1x1x16xf32>
    %193 = vector.shape_cast %192 : vector<1x1x16xf32> to vector<1x16xf32>
    %c0_125 = arith.constant 0 : index
    %c0_126 = arith.constant 0 : index
    %c0_127 = arith.constant 0 : index
    %194 = vector.load %arg5[%c0_125, %c0_126, %c0_127] : memref<2x1x16xf32, #tpu.memory_space<vmem>>, vector<1x1x16xf32>
    %195 = vector.shape_cast %194 : vector<1x1x16xf32> to vector<1x16xf32>
    %c0_128 = arith.constant 0 : index
    %c0_129 = arith.constant 0 : index
    %c0_130 = arith.constant 0 : index
    %196 = vector.load %arg6[%c0_128, %c0_129, %c0_130] : memref<2x1x16xf32, #tpu.memory_space<vmem>>, vector<1x1x16xf32>
    %197 = vector.shape_cast %196 : vector<1x1x16xf32> to vector<1x16xf32>
    %cst_131 = arith.constant dense<0.000000e+00> : vector<4x16xf32>
    %198 = tpu.matmul %184, %187, %cst_131 {dimension_numbers = #tpu.dot_dimension_numbers<[1], [0], [0], [1], [0, 0, 1, 1], [], []>} : vector<4x32xf32>, vector<32x16xf32>, vector<4x16xf32> -> vector<4x16xf32>
    %199 = vector.broadcast %193 : vector<1x16xf32> to vector<4x16xf32>
    %200 = arith.addf %198, %199 : vector<4x16xf32>
    %cst_132 = arith.constant 2.500000e-01 : f32
    %201 = vector.broadcast %cst_132 : f32 to vector<4x16xf32>
    %202 = arith.mulf %200, %201 : vector<4x16xf32>
    %cst_133 = arith.constant dense<0.000000e+00> : vector<4x16xf32>
    %203 = tpu.matmul %184, %189, %cst_133 {dimension_numbers = #tpu.dot_dimension_numbers<[1], [0], [0], [1], [0, 0, 1, 1], [], []>} : vector<4x32xf32>, vector<32x16xf32>, vector<4x16xf32> -> vector<4x16xf32>
    %204 = vector.broadcast %195 : vector<1x16xf32> to vector<4x16xf32>
    %205 = arith.addf %203, %204 : vector<4x16xf32>
    %cst_134 = arith.constant dense<0.000000e+00> : vector<4x4xf32>
    %206 = tpu.matmul %202, %205, %cst_134 {dimension_numbers = #tpu.dot_dimension_numbers<[1], [1], [0], [0], [0, 0, 1, 0], [], []>} : vector<4x16xf32>, vector<4x16xf32>, vector<4x4xf32> -> vector<4x4xf32>
    %cst_135 = arith.constant dense<0xFF800000> : vector<4xf32>
    %207 = vector.multi_reduction <maximumf>, %206, %cst_135 [1] : vector<4x4xf32> to vector<4xf32>
    %208 = vector.shape_cast %207 : vector<4xf32> to vector<4x1xf32>
    %209 = vector.broadcast %208 : vector<4x1xf32> to vector<4x4xf32>
    %210 = arith.subf %206, %209 : vector<4x4xf32>
    %211 = math.exp %210 : vector<4x4xf32>
    %cst_136 = arith.constant dense<0.000000e+00> : vector<4xf32>
    %212 = vector.multi_reduction <add>, %211, %cst_136 [1] : vector<4x4xf32> to vector<4xf32>
    %213 = vector.shape_cast %212 : vector<4xf32> to vector<4x1xf32>
    %cst_137 = arith.constant dense<0.000000e+00> : vector<4x16xf32>
    %214 = tpu.matmul %184, %191, %cst_137 {dimension_numbers = #tpu.dot_dimension_numbers<[1], [0], [0], [1], [0, 0, 1, 1], [], []>} : vector<4x32xf32>, vector<32x16xf32>, vector<4x16xf32> -> vector<4x16xf32>
    %215 = vector.broadcast %197 : vector<1x16xf32> to vector<4x16xf32>
    %216 = arith.addf %214, %215 : vector<4x16xf32>
    %cst_138 = arith.constant dense<0.000000e+00> : vector<4x16xf32>
    %217 = tpu.matmul %211, %216, %cst_138 {dimension_numbers = #tpu.dot_dimension_numbers<[1], [0], [0], [1], [0, 0, 1, 1], [], []>} : vector<4x4xf32>, vector<4x16xf32>, vector<4x16xf32> -> vector<4x16xf32>
    %218 = tpu.reciprocal %213 : vector<4x1xf32> -> vector<4x1xf32>
    %219 = vector.broadcast %218 : vector<4x1xf32> to vector<4x16xf32>
    %220 = arith.mulf %217, %219 : vector<4x16xf32>
    %c0_139 = arith.constant 0 : index
    %c0_140 = arith.constant 0 : index
    %c0_141 = arith.constant 0 : index
    %221 = vector.load %arg7[%c0_139, %c0_140, %c0_141] : memref<2x16x32xf32, #tpu.memory_space<vmem>>, vector<1x16x32xf32>
    %222 = vector.shape_cast %221 : vector<1x16x32xf32> to vector<16x32xf32>
    %cst_142 = arith.constant dense<0.000000e+00> : vector<4x32xf32>
    %223 = tpu.matmul %220, %222, %cst_142 {dimension_numbers = #tpu.dot_dimension_numbers<[1], [0], [0], [1], [0, 0, 1, 1], [], []>} : vector<4x16xf32>, vector<16x32xf32>, vector<4x32xf32> -> vector<4x32xf32>
    %224 = arith.addf %185, %223 : vector<4x32xf32>
    %c1_143 = arith.constant 1 : index
    %c0_144 = arith.constant 0 : index
    %c0_145 = arith.constant 0 : index
    %225 = vector.load %arg1[%c1_143, %c0_144, %c0_145] : memref<2x32x16xf32, #tpu.memory_space<vmem>>, vector<1x32x16xf32>
    %226 = vector.shape_cast %225 : vector<1x32x16xf32> to vector<32x16xf32>
    %c1_146 = arith.constant 1 : index
    %c0_147 = arith.constant 0 : index
    %c0_148 = arith.constant 0 : index
    %227 = vector.load %arg2[%c1_146, %c0_147, %c0_148] : memref<2x32x16xf32, #tpu.memory_space<vmem>>, vector<1x32x16xf32>
    %228 = vector.shape_cast %227 : vector<1x32x16xf32> to vector<32x16xf32>
    %c1_149 = arith.constant 1 : index
    %c0_150 = arith.constant 0 : index
    %c0_151 = arith.constant 0 : index
    %229 = vector.load %arg3[%c1_149, %c0_150, %c0_151] : memref<2x32x16xf32, #tpu.memory_space<vmem>>, vector<1x32x16xf32>
    %230 = vector.shape_cast %229 : vector<1x32x16xf32> to vector<32x16xf32>
    %c1_152 = arith.constant 1 : index
    %c0_153 = arith.constant 0 : index
    %c0_154 = arith.constant 0 : index
    %231 = vector.load %arg4[%c1_152, %c0_153, %c0_154] : memref<2x1x16xf32, #tpu.memory_space<vmem>>, vector<1x1x16xf32>
    %232 = vector.shape_cast %231 : vector<1x1x16xf32> to vector<1x16xf32>
    %c1_155 = arith.constant 1 : index
    %c0_156 = arith.constant 0 : index
    %c0_157 = arith.constant 0 : index
    %233 = vector.load %arg5[%c1_155, %c0_156, %c0_157] : memref<2x1x16xf32, #tpu.memory_space<vmem>>, vector<1x1x16xf32>
    %234 = vector.shape_cast %233 : vector<1x1x16xf32> to vector<1x16xf32>
    %c1_158 = arith.constant 1 : index
    %c0_159 = arith.constant 0 : index
    %c0_160 = arith.constant 0 : index
    %235 = vector.load %arg6[%c1_158, %c0_159, %c0_160] : memref<2x1x16xf32, #tpu.memory_space<vmem>>, vector<1x1x16xf32>
    %236 = vector.shape_cast %235 : vector<1x1x16xf32> to vector<1x16xf32>
    %cst_161 = arith.constant dense<0.000000e+00> : vector<4x16xf32>
    %237 = tpu.matmul %184, %226, %cst_161 {dimension_numbers = #tpu.dot_dimension_numbers<[1], [0], [0], [1], [0, 0, 1, 1], [], []>} : vector<4x32xf32>, vector<32x16xf32>, vector<4x16xf32> -> vector<4x16xf32>
    %238 = vector.broadcast %232 : vector<1x16xf32> to vector<4x16xf32>
    %239 = arith.addf %237, %238 : vector<4x16xf32>
    %cst_162 = arith.constant 2.500000e-01 : f32
    %240 = vector.broadcast %cst_162 : f32 to vector<4x16xf32>
    %241 = arith.mulf %239, %240 : vector<4x16xf32>
    %cst_163 = arith.constant dense<0.000000e+00> : vector<4x16xf32>
    %242 = tpu.matmul %184, %228, %cst_163 {dimension_numbers = #tpu.dot_dimension_numbers<[1], [0], [0], [1], [0, 0, 1, 1], [], []>} : vector<4x32xf32>, vector<32x16xf32>, vector<4x16xf32> -> vector<4x16xf32>
    %243 = vector.broadcast %234 : vector<1x16xf32> to vector<4x16xf32>
    %244 = arith.addf %242, %243 : vector<4x16xf32>
    %cst_164 = arith.constant dense<0.000000e+00> : vector<4x4xf32>
    %245 = tpu.matmul %241, %244, %cst_164 {dimension_numbers = #tpu.dot_dimension_numbers<[1], [1], [0], [0], [0, 0, 1, 0], [], []>} : vector<4x16xf32>, vector<4x16xf32>, vector<4x4xf32> -> vector<4x4xf32>
    %cst_165 = arith.constant dense<0xFF800000> : vector<4xf32>
    %246 = vector.multi_reduction <maximumf>, %245, %cst_165 [1] : vector<4x4xf32> to vector<4xf32>
    %247 = vector.shape_cast %246 : vector<4xf32> to vector<4x1xf32>
    %248 = vector.broadcast %247 : vector<4x1xf32> to vector<4x4xf32>
    %249 = arith.subf %245, %248 : vector<4x4xf32>
    %250 = math.exp %249 : vector<4x4xf32>
    %cst_166 = arith.constant dense<0.000000e+00> : vector<4xf32>
    %251 = vector.multi_reduction <add>, %250, %cst_166 [1] : vector<4x4xf32> to vector<4xf32>
    %252 = vector.shape_cast %251 : vector<4xf32> to vector<4x1xf32>
    %cst_167 = arith.constant dense<0.000000e+00> : vector<4x16xf32>
    %253 = tpu.matmul %184, %230, %cst_167 {dimension_numbers = #tpu.dot_dimension_numbers<[1], [0], [0], [1], [0, 0, 1, 1], [], []>} : vector<4x32xf32>, vector<32x16xf32>, vector<4x16xf32> -> vector<4x16xf32>
    %254 = vector.broadcast %236 : vector<1x16xf32> to vector<4x16xf32>
    %255 = arith.addf %253, %254 : vector<4x16xf32>
    %cst_168 = arith.constant dense<0.000000e+00> : vector<4x16xf32>
    %256 = tpu.matmul %250, %255, %cst_168 {dimension_numbers = #tpu.dot_dimension_numbers<[1], [0], [0], [1], [0, 0, 1, 1], [], []>} : vector<4x4xf32>, vector<4x16xf32>, vector<4x16xf32> -> vector<4x16xf32>
    %257 = tpu.reciprocal %252 : vector<4x1xf32> -> vector<4x1xf32>
    %258 = vector.broadcast %257 : vector<4x1xf32> to vector<4x16xf32>
    %259 = arith.mulf %256, %258 : vector<4x16xf32>
    %c1_169 = arith.constant 1 : index
    %c0_170 = arith.constant 0 : index
    %c0_171 = arith.constant 0 : index
    %260 = vector.load %arg7[%c1_169, %c0_170, %c0_171] : memref<2x16x32xf32, #tpu.memory_space<vmem>>, vector<1x16x32xf32>
    %261 = vector.shape_cast %260 : vector<1x16x32xf32> to vector<16x32xf32>
    %cst_172 = arith.constant dense<0.000000e+00> : vector<4x32xf32>
    %262 = tpu.matmul %259, %261, %cst_172 {dimension_numbers = #tpu.dot_dimension_numbers<[1], [0], [0], [1], [0, 0, 1, 1], [], []>} : vector<4x16xf32>, vector<16x32xf32>, vector<4x32xf32> -> vector<4x32xf32>
    %263 = arith.addf %224, %262 : vector<4x32xf32>
    %264 = arith.addf %184, %263 : vector<4x32xf32>
    %265 = vector.broadcast %0 : vector<1x32xf32> to vector<4x32xf32>
    %266 = arith.addf %264, %265 : vector<4x32xf32>
    %cst_173 = arith.constant dense<0.000000e+00> : vector<4xf32>
    %267 = vector.multi_reduction <add>, %266, %cst_173 [1] : vector<4x32xf32> to vector<4xf32>
    %268 = vector.shape_cast %267 : vector<4xf32> to vector<4x1xf32>
    %cst_174 = arith.constant 3.200000e+01 : f32
    %269 = vector.broadcast %cst_174 : f32 to vector<4x1xf32>
    %270 = arith.divf %268, %269 : vector<4x1xf32>
    %271 = vector.broadcast %270 : vector<4x1xf32> to vector<4x32xf32>
    %272 = arith.subf %266, %271 : vector<4x32xf32>
    %273 = arith.mulf %272, %272 : vector<4x32xf32>
    %cst_175 = arith.constant dense<0.000000e+00> : vector<4xf32>
    %274 = vector.multi_reduction <add>, %273, %cst_175 [1] : vector<4x32xf32> to vector<4xf32>
    %275 = vector.shape_cast %274 : vector<4xf32> to vector<4x1xf32>
    %cst_176 = arith.constant 3.200000e+01 : f32
    %276 = vector.broadcast %cst_176 : f32 to vector<4x1xf32>
    %277 = arith.divf %275, %276 : vector<4x1xf32>
    %cst_177 = arith.constant 9.99999974E-6 : f32
    %278 = vector.broadcast %cst_177 : f32 to vector<4x1xf32>
    %279 = arith.addf %277, %278 : vector<4x1xf32>
    %280 = math.rsqrt %279 : vector<4x1xf32>
    %281 = vector.broadcast %280 : vector<4x1xf32> to vector<4x32xf32>
    %282 = arith.mulf %272, %281 : vector<4x32xf32>
    %283 = vector.broadcast %5 : vector<1x32xf32> to vector<4x32xf32>
    %284 = arith.mulf %282, %283 : vector<4x32xf32>
    %285 = vector.broadcast %6 : vector<1x32xf32> to vector<4x32xf32>
    %286 = arith.addf %284, %285 : vector<4x32xf32>
    %cst_178 = arith.constant dense<0.000000e+00> : vector<4x64xf32>
    %287 = tpu.matmul %286, %1, %cst_178 {dimension_numbers = #tpu.dot_dimension_numbers<[1], [0], [0], [1], [0, 0, 1, 1], [], []>} : vector<4x32xf32>, vector<32x64xf32>, vector<4x64xf32> -> vector<4x64xf32>
    %288 = vector.broadcast %2 : vector<1x64xf32> to vector<4x64xf32>
    %289 = arith.addf %287, %288 : vector<4x64xf32>
    %cst_179 = arith.constant 5.000000e-01 : f32
    %290 = vector.broadcast %cst_179 : f32 to vector<4x64xf32>
    %291 = arith.mulf %290, %289 : vector<4x64xf32>
    %cst_180 = arith.constant 0.707106769 : f32
    %292 = vector.broadcast %cst_180 : f32 to vector<4x64xf32>
    %293 = arith.mulf %289, %292 : vector<4x64xf32>
    %294 = math.absf %293 : vector<4x64xf32>
    %cst_181 = arith.constant 0.327591091 : f32
    %295 = vector.broadcast %cst_181 : f32 to vector<4x64xf32>
    %296 = arith.mulf %295, %294 : vector<4x64xf32>
    %cst_182 = arith.constant 1.000000e+00 : f32
    %297 = vector.broadcast %cst_182 : f32 to vector<4x64xf32>
    %298 = arith.addf %297, %296 : vector<4x64xf32>
    %cst_183 = arith.constant 1.000000e+00 : f32
    %299 = vector.broadcast %cst_183 : f32 to vector<4x64xf32>
    %300 = arith.divf %299, %298 : vector<4x64xf32>
    %cst_184 = arith.constant 1.06140542 : f32
    %301 = vector.broadcast %cst_184 : f32 to vector<4x64xf32>
    %302 = arith.mulf %301, %300 : vector<4x64xf32>
    %cst_185 = arith.constant -1.45315206 : f32
    %303 = vector.broadcast %cst_185 : f32 to vector<4x64xf32>
    %304 = arith.addf %302, %303 : vector<4x64xf32>
    %305 = arith.mulf %304, %300 : vector<4x64xf32>
    %cst_186 = arith.constant 1.42141378 : f32
    %306 = vector.broadcast %cst_186 : f32 to vector<4x64xf32>
    %307 = arith.addf %305, %306 : vector<4x64xf32>
    %308 = arith.mulf %307, %300 : vector<4x64xf32>
    %cst_187 = arith.constant -0.284496725 : f32
    %309 = vector.broadcast %cst_187 : f32 to vector<4x64xf32>
    %310 = arith.addf %308, %309 : vector<4x64xf32>
    %311 = arith.mulf %310, %300 : vector<4x64xf32>
    %cst_188 = arith.constant 0.254829586 : f32
    %312 = vector.broadcast %cst_188 : f32 to vector<4x64xf32>
    %313 = arith.addf %311, %312 : vector<4x64xf32>
    %314 = arith.mulf %313, %300 : vector<4x64xf32>
    %cst_189 = arith.constant 0.000000e+00 : f32
    %315 = vector.broadcast %cst_189 : f32 to vector<4x64xf32>
    %316 = arith.subf %315, %294 : vector<4x64xf32>
    %317 = arith.mulf %316, %294 : vector<4x64xf32>
    %318 = math.exp %317 : vector<4x64xf32>
    %319 = arith.mulf %314, %318 : vector<4x64xf32>
    %cst_190 = arith.constant 1.000000e+00 : f32
    %320 = vector.broadcast %cst_190 : f32 to vector<4x64xf32>
    %321 = arith.subf %320, %319 : vector<4x64xf32>
    %cst_191 = arith.constant 0.000000e+00 : f32
    %322 = vector.broadcast %cst_191 : f32 to vector<4x64xf32>
    %323 = arith.cmpf olt, %293, %322 : vector<4x64xf32>
    %cst_192 = arith.constant 0.000000e+00 : f32
    %324 = vector.broadcast %cst_192 : f32 to vector<4x64xf32>
    %325 = arith.subf %324, %321 : vector<4x64xf32>
    %326 = arith.select %323, %325, %321 : vector<4x64xi1>, vector<4x64xf32>
    %cst_193 = arith.constant 1.000000e+00 : f32
    %327 = vector.broadcast %cst_193 : f32 to vector<4x64xf32>
    %328 = arith.addf %327, %326 : vector<4x64xf32>
    %329 = arith.mulf %291, %328 : vector<4x64xf32>
    %cst_194 = arith.constant dense<0.000000e+00> : vector<4x32xf32>
    %330 = tpu.matmul %329, %3, %cst_194 {dimension_numbers = #tpu.dot_dimension_numbers<[1], [0], [0], [1], [0, 0, 1, 1], [], []>} : vector<4x64xf32>, vector<64x32xf32>, vector<4x32xf32> -> vector<4x32xf32>
    %331 = vector.broadcast %4 : vector<1x32xf32> to vector<4x32xf32>
    %332 = arith.addf %330, %331 : vector<4x32xf32>
    %333 = arith.addf %286, %332 : vector<4x32xf32>
    %cst_195 = arith.constant dense<0.000000e+00> : vector<4xf32>
    %334 = vector.multi_reduction <add>, %333, %cst_195 [1] : vector<4x32xf32> to vector<4xf32>
    %335 = vector.shape_cast %334 : vector<4xf32> to vector<4x1xf32>
    %cst_196 = arith.constant 3.200000e+01 : f32
    %336 = vector.broadcast %cst_196 : f32 to vector<4x1xf32>
    %337 = arith.divf %335, %336 : vector<4x1xf32>
    %338 = vector.broadcast %337 : vector<4x1xf32> to vector<4x32xf32>
    %339 = arith.subf %333, %338 : vector<4x32xf32>
    %340 = arith.mulf %339, %339 : vector<4x32xf32>
    %cst_197 = arith.constant dense<0.000000e+00> : vector<4xf32>
    %341 = vector.multi_reduction <add>, %340, %cst_197 [1] : vector<4x32xf32> to vector<4xf32>
    %342 = vector.shape_cast %341 : vector<4xf32> to vector<4x1xf32>
    %cst_198 = arith.constant 3.200000e+01 : f32
    %343 = vector.broadcast %cst_198 : f32 to vector<4x1xf32>
    %344 = arith.divf %342, %343 : vector<4x1xf32>
    %cst_199 = arith.constant 9.99999974E-6 : f32
    %345 = vector.broadcast %cst_199 : f32 to vector<4x1xf32>
    %346 = arith.addf %344, %345 : vector<4x1xf32>
    %347 = math.rsqrt %346 : vector<4x1xf32>
    %348 = vector.broadcast %347 : vector<4x1xf32> to vector<4x32xf32>
    %349 = arith.mulf %339, %348 : vector<4x32xf32>
    %350 = vector.broadcast %7 : vector<1x32xf32> to vector<4x32xf32>
    %351 = arith.mulf %349, %350 : vector<4x32xf32>
    %352 = vector.broadcast %8 : vector<1x32xf32> to vector<4x32xf32>
    %353 = arith.addf %351, %352 : vector<4x32xf32>
    %c1_200 = arith.constant 1 : index
    %c0_201 = arith.constant 0 : index
    %c0_202 = arith.constant 0 : index
    %354 = vector.load %arg17[%c1_200, %c0_201, %c0_202] : memref<2x4x32xf32, #tpu.memory_space<vmem>>, vector<1x4x32xf32>
    %355 = vector.shape_cast %354 : vector<1x4x32xf32> to vector<4x32xf32>
    %356 = vector.shape_cast %353 : vector<4x32xf32> to vector<1x4x32xf32>
    tpu.vector_store %arg17[%c1_200, %c0_201, %c0_202], %356 {strides = array<i32>} : memref<2x4x32xf32, #tpu.memory_space<vmem>>, vector<1x4x32xf32>,
    return
  }
}

module attributes {stable_mosaic.version = 11 : i64} {
  func.func @_linear_kernel(%arg0: memref<16x6xf32, #tpu.memory_space<vmem>>, %arg1: memref<6x32xf32, #tpu.memory_space<vmem>>, %arg2: memref<1x32xf32, #tpu.memory_space<vmem>>, %arg3: memref<16x32xf32, #tpu.memory_space<vmem>>) attributes {dimension_semantics = [], scalar_prefetch = 0 : i64, scratch_operands = 0 : i64, tpu.core_type = #tpu.core_type<tc>} {
    %c0 = arith.constant 0 : index
    %c0_0 = arith.constant 0 : index
    %0 = vector.load %arg0[%c0, %c0_0] : memref<16x6xf32, #tpu.memory_space<vmem>>, vector<16x6xf32>
    %c0_1 = arith.constant 0 : index
    %c0_2 = arith.constant 0 : index
    %1 = vector.load %arg1[%c0_1, %c0_2] : memref<6x32xf32, #tpu.memory_space<vmem>>, vector<6x32xf32>
    %cst = arith.constant dense<0.000000e+00> : vector<16x32xf32>
    %2 = tpu.matmul %0, %1, %cst {dimension_numbers = #tpu.dot_dimension_numbers<[1], [0], [0], [1], [0, 0, 1, 1], [], []>} : vector<16x6xf32>, vector<6x32xf32>, vector<16x32xf32> -> vector<16x32xf32>
    %c0_3 = arith.constant 0 : index
    %c0_4 = arith.constant 0 : index
    %3 = vector.load %arg2[%c0_3, %c0_4] : memref<1x32xf32, #tpu.memory_space<vmem>>, vector<1x32xf32>
    %4 = vector.broadcast %3 : vector<1x32xf32> to vector<16x32xf32>
    %5 = arith.addf %2, %4 : vector<16x32xf32>
    %c0_5 = arith.constant 0 : index
    %c0_6 = arith.constant 0 : index
    %6 = vector.load %arg3[%c0_5, %c0_6] : memref<16x32xf32, #tpu.memory_space<vmem>>, vector<16x32xf32>
    tpu.vector_store %arg3[%c0_5, %c0_6], %5 {strides = array<i32>} : memref<16x32xf32, #tpu.memory_space<vmem>>, vector<16x32xf32>,
    return
  }
}

module attributes {stable_mosaic.version = 11 : i64} {
  func.func @_cond_layer_kernel(%arg0: memref<2x4x32xf32, #tpu.memory_space<vmem>>, %arg1: memref<2x10x32xf32, #tpu.memory_space<vmem>>, %arg2: memref<2x10x10xf32, #tpu.memory_space<vmem>>, %arg3: memref<32x32xf32, #tpu.memory_space<vmem>>, %arg4: memref<1x32xf32, #tpu.memory_space<vmem>>, %arg5: memref<2x32x16xf32, #tpu.memory_space<vmem>>, %arg6: memref<2x32x16xf32, #tpu.memory_space<vmem>>, %arg7: memref<2x32x16xf32, #tpu.memory_space<vmem>>, %arg8: memref<2x1x16xf32, #tpu.memory_space<vmem>>, %arg9: memref<2x1x16xf32, #tpu.memory_space<vmem>>, %arg10: memref<2x1x16xf32, #tpu.memory_space<vmem>>, %arg11: memref<2x16x32xf32, #tpu.memory_space<vmem>>, %arg12: memref<1x32xf32, #tpu.memory_space<vmem>>, %arg13: memref<32x64xf32, #tpu.memory_space<vmem>>, %arg14: memref<1x64xf32, #tpu.memory_space<vmem>>, %arg15: memref<64x32xf32, #tpu.memory_space<vmem>>, %arg16: memref<1x32xf32, #tpu.memory_space<vmem>>, %arg17: memref<1x32xf32, #tpu.memory_space<vmem>>, %arg18: memref<1x32xf32, #tpu.memory_space<vmem>>, %arg19: memref<1x32xf32, #tpu.memory_space<vmem>>, %arg20: memref<1x32xf32, #tpu.memory_space<vmem>>, %arg21: memref<2x10x32xf32, #tpu.memory_space<vmem>>) attributes {dimension_semantics = [], scalar_prefetch = 0 : i64, scratch_operands = 0 : i64, tpu.core_type = #tpu.core_type<tc>} {
    %c0 = arith.constant 0 : index
    %c0_0 = arith.constant 0 : index
    %0 = vector.load %arg3[%c0, %c0_0] : memref<32x32xf32, #tpu.memory_space<vmem>>, vector<32x32xf32>
    %c0_1 = arith.constant 0 : index
    %c0_2 = arith.constant 0 : index
    %1 = vector.load %arg4[%c0_1, %c0_2] : memref<1x32xf32, #tpu.memory_space<vmem>>, vector<1x32xf32>
    %c0_3 = arith.constant 0 : index
    %c0_4 = arith.constant 0 : index
    %2 = vector.load %arg12[%c0_3, %c0_4] : memref<1x32xf32, #tpu.memory_space<vmem>>, vector<1x32xf32>
    %c0_5 = arith.constant 0 : index
    %c0_6 = arith.constant 0 : index
    %3 = vector.load %arg13[%c0_5, %c0_6] : memref<32x64xf32, #tpu.memory_space<vmem>>, vector<32x64xf32>
    %c0_7 = arith.constant 0 : index
    %c0_8 = arith.constant 0 : index
    %4 = vector.load %arg14[%c0_7, %c0_8] : memref<1x64xf32, #tpu.memory_space<vmem>>, vector<1x64xf32>
    %c0_9 = arith.constant 0 : index
    %c0_10 = arith.constant 0 : index
    %5 = vector.load %arg15[%c0_9, %c0_10] : memref<64x32xf32, #tpu.memory_space<vmem>>, vector<64x32xf32>
    %c0_11 = arith.constant 0 : index
    %c0_12 = arith.constant 0 : index
    %6 = vector.load %arg16[%c0_11, %c0_12] : memref<1x32xf32, #tpu.memory_space<vmem>>, vector<1x32xf32>
    %c0_13 = arith.constant 0 : index
    %c0_14 = arith.constant 0 : index
    %7 = vector.load %arg17[%c0_13, %c0_14] : memref<1x32xf32, #tpu.memory_space<vmem>>, vector<1x32xf32>
    %c0_15 = arith.constant 0 : index
    %c0_16 = arith.constant 0 : index
    %8 = vector.load %arg18[%c0_15, %c0_16] : memref<1x32xf32, #tpu.memory_space<vmem>>, vector<1x32xf32>
    %c0_17 = arith.constant 0 : index
    %c0_18 = arith.constant 0 : index
    %9 = vector.load %arg19[%c0_17, %c0_18] : memref<1x32xf32, #tpu.memory_space<vmem>>, vector<1x32xf32>
    %c0_19 = arith.constant 0 : index
    %c0_20 = arith.constant 0 : index
    %10 = vector.load %arg20[%c0_19, %c0_20] : memref<1x32xf32, #tpu.memory_space<vmem>>, vector<1x32xf32>
    %c0_21 = arith.constant 0 : index
    %c0_22 = arith.constant 0 : index
    %c0_23 = arith.constant 0 : index
    %11 = vector.load %arg1[%c0_21, %c0_22, %c0_23] : memref<2x10x32xf32, #tpu.memory_space<vmem>>, vector<1x10x32xf32>
    %12 = vector.shape_cast %11 : vector<1x10x32xf32> to vector<10x32xf32>
    %c0_24 = arith.constant 0 : index
    %c0_25 = arith.constant 0 : index
    %c0_26 = arith.constant 0 : index
    %13 = vector.load %arg0[%c0_24, %c0_25, %c0_26] : memref<2x4x32xf32, #tpu.memory_space<vmem>>, vector<1x4x32xf32>
    %14 = vector.shape_cast %13 : vector<1x4x32xf32> to vector<4x32xf32>
    %cst = arith.constant dense<0.000000e+00> : vector<4x32xf32>
    %15 = tpu.matmul %14, %0, %cst {dimension_numbers = #tpu.dot_dimension_numbers<[1], [0], [0], [1], [0, 0, 1, 1], [], []>} : vector<4x32xf32>, vector<32x32xf32>, vector<4x32xf32> -> vector<4x32xf32>
    %16 = vector.broadcast %1 : vector<1x32xf32> to vector<4x32xf32>
    %17 = arith.addf %15, %16 : vector<4x32xf32>
    %c0_27 = arith.constant 0 : index
    %c0_28 = arith.constant 0 : index
    %c0_29 = arith.constant 0 : index
    %18 = vector.load %arg2[%c0_27, %c0_28, %c0_29] : memref<2x10x10xf32, #tpu.memory_space<vmem>>, vector<1x10x10xf32>
    %19 = vector.shape_cast %18 : vector<1x10x10xf32> to vector<10x10xf32>
    %cst_30 = arith.constant 0.000000e+00 : f32
    %20 = vector.broadcast %cst_30 : f32 to vector<10x32xf32>
    %c0_31 = arith.constant 0 : index
    %c0_32 = arith.constant 0 : index
    %c0_33 = arith.constant 0 : index
    %21 = vector.load %arg5[%c0_31, %c0_32, %c0_33] : memref<2x32x16xf32, #tpu.memory_space<vmem>>, vector<1x32x16xf32>
    %22 = vector.shape_cast %21 : vector<1x32x16xf32> to vector<32x16xf32>
    %c0_34 = arith.constant 0 : index
    %c0_35 = arith.constant 0 : index
    %c0_36 = arith.constant 0 : index
    %23 = vector.load %arg6[%c0_34, %c0_35, %c0_36] : memref<2x32x16xf32, #tpu.memory_space<vmem>>, vector<1x32x16xf32>
    %24 = vector.shape_cast %23 : vector<1x32x16xf32> to vector<32x16xf32>
    %c0_37 = arith.constant 0 : index
    %c0_38 = arith.constant 0 : index
    %c0_39 = arith.constant 0 : index
    %25 = vector.load %arg7[%c0_37, %c0_38, %c0_39] : memref<2x32x16xf32, #tpu.memory_space<vmem>>, vector<1x32x16xf32>
    %26 = vector.shape_cast %25 : vector<1x32x16xf32> to vector<32x16xf32>
    %c0_40 = arith.constant 0 : index
    %c0_41 = arith.constant 0 : index
    %c0_42 = arith.constant 0 : index
    %27 = vector.load %arg8[%c0_40, %c0_41, %c0_42] : memref<2x1x16xf32, #tpu.memory_space<vmem>>, vector<1x1x16xf32>
    %28 = vector.shape_cast %27 : vector<1x1x16xf32> to vector<1x16xf32>
    %c0_43 = arith.constant 0 : index
    %c0_44 = arith.constant 0 : index
    %c0_45 = arith.constant 0 : index
    %29 = vector.load %arg9[%c0_43, %c0_44, %c0_45] : memref<2x1x16xf32, #tpu.memory_space<vmem>>, vector<1x1x16xf32>
    %30 = vector.shape_cast %29 : vector<1x1x16xf32> to vector<1x16xf32>
    %c0_46 = arith.constant 0 : index
    %c0_47 = arith.constant 0 : index
    %c0_48 = arith.constant 0 : index
    %31 = vector.load %arg10[%c0_46, %c0_47, %c0_48] : memref<2x1x16xf32, #tpu.memory_space<vmem>>, vector<1x1x16xf32>
    %32 = vector.shape_cast %31 : vector<1x1x16xf32> to vector<1x16xf32>
    %cst_49 = arith.constant dense<0.000000e+00> : vector<10x16xf32>
    %33 = tpu.matmul %12, %22, %cst_49 {dimension_numbers = #tpu.dot_dimension_numbers<[1], [0], [0], [1], [0, 0, 1, 1], [], []>} : vector<10x32xf32>, vector<32x16xf32>, vector<10x16xf32> -> vector<10x16xf32>
    %34 = vector.broadcast %28 : vector<1x16xf32> to vector<10x16xf32>
    %35 = arith.addf %33, %34 : vector<10x16xf32>
    %cst_50 = arith.constant 2.500000e-01 : f32
    %36 = vector.broadcast %cst_50 : f32 to vector<10x16xf32>
    %37 = arith.mulf %35, %36 : vector<10x16xf32>
    %cst_51 = arith.constant dense<0.000000e+00> : vector<4x16xf32>
    %38 = tpu.matmul %17, %24, %cst_51 {dimension_numbers = #tpu.dot_dimension_numbers<[1], [0], [0], [1], [0, 0, 1, 1], [], []>} : vector<4x32xf32>, vector<32x16xf32>, vector<4x16xf32> -> vector<4x16xf32>
    %39 = vector.broadcast %30 : vector<1x16xf32> to vector<4x16xf32>
    %40 = arith.addf %38, %39 : vector<4x16xf32>
    %cst_52 = arith.constant dense<0.000000e+00> : vector<10x4xf32>
    %41 = tpu.matmul %37, %40, %cst_52 {dimension_numbers = #tpu.dot_dimension_numbers<[1], [1], [0], [0], [0, 0, 1, 0], [], []>} : vector<10x16xf32>, vector<4x16xf32>, vector<10x4xf32> -> vector<10x4xf32>
    %cst_53 = arith.constant dense<0.000000e+00> : vector<10x16xf32>
    %42 = tpu.matmul %12, %24, %cst_53 {dimension_numbers = #tpu.dot_dimension_numbers<[1], [0], [0], [1], [0, 0, 1, 1], [], []>} : vector<10x32xf32>, vector<32x16xf32>, vector<10x16xf32> -> vector<10x16xf32>
    %43 = vector.broadcast %30 : vector<1x16xf32> to vector<10x16xf32>
    %44 = arith.addf %42, %43 : vector<10x16xf32>
    %cst_54 = arith.constant dense<0.000000e+00> : vector<10x10xf32>
    %45 = tpu.matmul %37, %44, %cst_54 {dimension_numbers = #tpu.dot_dimension_numbers<[1], [1], [0], [0], [0, 0, 1, 0], [], []>} : vector<10x16xf32>, vector<10x16xf32>, vector<10x10xf32> -> vector<10x10xf32>
    %46 = arith.addf %45, %19 : vector<10x10xf32>
    %cst_55 = arith.constant dense<0xFF800000> : vector<10xf32>
    %47 = vector.multi_reduction <maximumf>, %41, %cst_55 [1] : vector<10x4xf32> to vector<10xf32>
    %48 = vector.shape_cast %47 : vector<10xf32> to vector<10x1xf32>
    %cst_56 = arith.constant dense<0xFF800000> : vector<10xf32>
    %49 = vector.multi_reduction <maximumf>, %46, %cst_56 [1] : vector<10x10xf32> to vector<10xf32>
    %50 = vector.shape_cast %49 : vector<10xf32> to vector<10x1xf32>
    %51 = arith.maximumf %48, %50 : vector<10x1xf32>
    %52 = vector.broadcast %51 : vector<10x1xf32> to vector<10x4xf32>
    %53 = arith.subf %41, %52 : vector<10x4xf32>
    %54 = math.exp %53 : vector<10x4xf32>
    %55 = vector.broadcast %51 : vector<10x1xf32> to vector<10x10xf32>
    %56 = arith.subf %46, %55 : vector<10x10xf32>
    %57 = math.exp %56 : vector<10x10xf32>
    %cst_57 = arith.constant dense<0.000000e+00> : vector<10xf32>
    %58 = vector.multi_reduction <add>, %54, %cst_57 [1] : vector<10x4xf32> to vector<10xf32>
    %59 = vector.shape_cast %58 : vector<10xf32> to vector<10x1xf32>
    %cst_58 = arith.constant dense<0.000000e+00> : vector<10xf32>
    %60 = vector.multi_reduction <add>, %57, %cst_58 [1] : vector<10x10xf32> to vector<10xf32>
    %61 = vector.shape_cast %60 : vector<10xf32> to vector<10x1xf32>
    %62 = arith.addf %59, %61 : vector<10x1xf32>
    %cst_59 = arith.constant dense<0.000000e+00> : vector<4x16xf32>
    %63 = tpu.matmul %17, %26, %cst_59 {dimension_numbers = #tpu.dot_dimension_numbers<[1], [0], [0], [1], [0, 0, 1, 1], [], []>} : vector<4x32xf32>, vector<32x16xf32>, vector<4x16xf32> -> vector<4x16xf32>
    %64 = vector.broadcast %32 : vector<1x16xf32> to vector<4x16xf32>
    %65 = arith.addf %63, %64 : vector<4x16xf32>
    %cst_60 = arith.constant dense<0.000000e+00> : vector<10x16xf32>
    %66 = tpu.matmul %54, %65, %cst_60 {dimension_numbers = #tpu.dot_dimension_numbers<[1], [0], [0], [1], [0, 0, 1, 1], [], []>} : vector<10x4xf32>, vector<4x16xf32>, vector<10x16xf32> -> vector<10x16xf32>
    %cst_61 = arith.constant dense<0.000000e+00> : vector<10x16xf32>
    %67 = tpu.matmul %12, %26, %cst_61 {dimension_numbers = #tpu.dot_dimension_numbers<[1], [0], [0], [1], [0, 0, 1, 1], [], []>} : vector<10x32xf32>, vector<32x16xf32>, vector<10x16xf32> -> vector<10x16xf32>
    %68 = vector.broadcast %32 : vector<1x16xf32> to vector<10x16xf32>
    %69 = arith.addf %67, %68 : vector<10x16xf32>
    %cst_62 = arith.constant dense<0.000000e+00> : vector<10x16xf32>
    %70 = tpu.matmul %57, %69, %cst_62 {dimension_numbers = #tpu.dot_dimension_numbers<[1], [0], [0], [1], [0, 0, 1, 1], [], []>} : vector<10x10xf32>, vector<10x16xf32>, vector<10x16xf32> -> vector<10x16xf32>
    %71 = arith.addf %66, %70 : vector<10x16xf32>
    %72 = tpu.reciprocal %62 : vector<10x1xf32> -> vector<10x1xf32>
    %73 = vector.broadcast %72 : vector<10x1xf32> to vector<10x16xf32>
    %74 = arith.mulf %71, %73 : vector<10x16xf32>
    %c0_63 = arith.constant 0 : index
    %c0_64 = arith.constant 0 : index
    %c0_65 = arith.constant 0 : index
    %75 = vector.load %arg11[%c0_63, %c0_64, %c0_65] : memref<2x16x32xf32, #tpu.memory_space<vmem>>, vector<1x16x32xf32>
    %76 = vector.shape_cast %75 : vector<1x16x32xf32> to vector<16x32xf32>
    %cst_66 = arith.constant dense<0.000000e+00> : vector<10x32xf32>
    %77 = tpu.matmul %74, %76, %cst_66 {dimension_numbers = #tpu.dot_dimension_numbers<[1], [0], [0], [1], [0, 0, 1, 1], [], []>} : vector<10x16xf32>, vector<16x32xf32>, vector<10x32xf32> -> vector<10x32xf32>
    %78 = arith.addf %20, %77 : vector<10x32xf32>
    %c1 = arith.constant 1 : index
    %c0_67 = arith.constant 0 : index
    %c0_68 = arith.constant 0 : index
    %79 = vector.load %arg5[%c1, %c0_67, %c0_68] : memref<2x32x16xf32, #tpu.memory_space<vmem>>, vector<1x32x16xf32>
    %80 = vector.shape_cast %79 : vector<1x32x16xf32> to vector<32x16xf32>
    %c1_69 = arith.constant 1 : index
    %c0_70 = arith.constant 0 : index
    %c0_71 = arith.constant 0 : index
    %81 = vector.load %arg6[%c1_69, %c0_70, %c0_71] : memref<2x32x16xf32, #tpu.memory_space<vmem>>, vector<1x32x16xf32>
    %82 = vector.shape_cast %81 : vector<1x32x16xf32> to vector<32x16xf32>
    %c1_72 = arith.constant 1 : index
    %c0_73 = arith.constant 0 : index
    %c0_74 = arith.constant 0 : index
    %83 = vector.load %arg7[%c1_72, %c0_73, %c0_74] : memref<2x32x16xf32, #tpu.memory_space<vmem>>, vector<1x32x16xf32>
    %84 = vector.shape_cast %83 : vector<1x32x16xf32> to vector<32x16xf32>
    %c1_75 = arith.constant 1 : index
    %c0_76 = arith.constant 0 : index
    %c0_77 = arith.constant 0 : index
    %85 = vector.load %arg8[%c1_75, %c0_76, %c0_77] : memref<2x1x16xf32, #tpu.memory_space<vmem>>, vector<1x1x16xf32>
    %86 = vector.shape_cast %85 : vector<1x1x16xf32> to vector<1x16xf32>
    %c1_78 = arith.constant 1 : index
    %c0_79 = arith.constant 0 : index
    %c0_80 = arith.constant 0 : index
    %87 = vector.load %arg9[%c1_78, %c0_79, %c0_80] : memref<2x1x16xf32, #tpu.memory_space<vmem>>, vector<1x1x16xf32>
    %88 = vector.shape_cast %87 : vector<1x1x16xf32> to vector<1x16xf32>
    %c1_81 = arith.constant 1 : index
    %c0_82 = arith.constant 0 : index
    %c0_83 = arith.constant 0 : index
    %89 = vector.load %arg10[%c1_81, %c0_82, %c0_83] : memref<2x1x16xf32, #tpu.memory_space<vmem>>, vector<1x1x16xf32>
    %90 = vector.shape_cast %89 : vector<1x1x16xf32> to vector<1x16xf32>
    %cst_84 = arith.constant dense<0.000000e+00> : vector<10x16xf32>
    %91 = tpu.matmul %12, %80, %cst_84 {dimension_numbers = #tpu.dot_dimension_numbers<[1], [0], [0], [1], [0, 0, 1, 1], [], []>} : vector<10x32xf32>, vector<32x16xf32>, vector<10x16xf32> -> vector<10x16xf32>
    %92 = vector.broadcast %86 : vector<1x16xf32> to vector<10x16xf32>
    %93 = arith.addf %91, %92 : vector<10x16xf32>
    %cst_85 = arith.constant 2.500000e-01 : f32
    %94 = vector.broadcast %cst_85 : f32 to vector<10x16xf32>
    %95 = arith.mulf %93, %94 : vector<10x16xf32>
    %cst_86 = arith.constant dense<0.000000e+00> : vector<4x16xf32>
    %96 = tpu.matmul %17, %82, %cst_86 {dimension_numbers = #tpu.dot_dimension_numbers<[1], [0], [0], [1], [0, 0, 1, 1], [], []>} : vector<4x32xf32>, vector<32x16xf32>, vector<4x16xf32> -> vector<4x16xf32>
    %97 = vector.broadcast %88 : vector<1x16xf32> to vector<4x16xf32>
    %98 = arith.addf %96, %97 : vector<4x16xf32>
    %cst_87 = arith.constant dense<0.000000e+00> : vector<10x4xf32>
    %99 = tpu.matmul %95, %98, %cst_87 {dimension_numbers = #tpu.dot_dimension_numbers<[1], [1], [0], [0], [0, 0, 1, 0], [], []>} : vector<10x16xf32>, vector<4x16xf32>, vector<10x4xf32> -> vector<10x4xf32>
    %cst_88 = arith.constant dense<0.000000e+00> : vector<10x16xf32>
    %100 = tpu.matmul %12, %82, %cst_88 {dimension_numbers = #tpu.dot_dimension_numbers<[1], [0], [0], [1], [0, 0, 1, 1], [], []>} : vector<10x32xf32>, vector<32x16xf32>, vector<10x16xf32> -> vector<10x16xf32>
    %101 = vector.broadcast %88 : vector<1x16xf32> to vector<10x16xf32>
    %102 = arith.addf %100, %101 : vector<10x16xf32>
    %cst_89 = arith.constant dense<0.000000e+00> : vector<10x10xf32>
    %103 = tpu.matmul %95, %102, %cst_89 {dimension_numbers = #tpu.dot_dimension_numbers<[1], [1], [0], [0], [0, 0, 1, 0], [], []>} : vector<10x16xf32>, vector<10x16xf32>, vector<10x10xf32> -> vector<10x10xf32>
    %104 = arith.addf %103, %19 : vector<10x10xf32>
    %cst_90 = arith.constant dense<0xFF800000> : vector<10xf32>
    %105 = vector.multi_reduction <maximumf>, %99, %cst_90 [1] : vector<10x4xf32> to vector<10xf32>
    %106 = vector.shape_cast %105 : vector<10xf32> to vector<10x1xf32>
    %cst_91 = arith.constant dense<0xFF800000> : vector<10xf32>
    %107 = vector.multi_reduction <maximumf>, %104, %cst_91 [1] : vector<10x10xf32> to vector<10xf32>
    %108 = vector.shape_cast %107 : vector<10xf32> to vector<10x1xf32>
    %109 = arith.maximumf %106, %108 : vector<10x1xf32>
    %110 = vector.broadcast %109 : vector<10x1xf32> to vector<10x4xf32>
    %111 = arith.subf %99, %110 : vector<10x4xf32>
    %112 = math.exp %111 : vector<10x4xf32>
    %113 = vector.broadcast %109 : vector<10x1xf32> to vector<10x10xf32>
    %114 = arith.subf %104, %113 : vector<10x10xf32>
    %115 = math.exp %114 : vector<10x10xf32>
    %cst_92 = arith.constant dense<0.000000e+00> : vector<10xf32>
    %116 = vector.multi_reduction <add>, %112, %cst_92 [1] : vector<10x4xf32> to vector<10xf32>
    %117 = vector.shape_cast %116 : vector<10xf32> to vector<10x1xf32>
    %cst_93 = arith.constant dense<0.000000e+00> : vector<10xf32>
    %118 = vector.multi_reduction <add>, %115, %cst_93 [1] : vector<10x10xf32> to vector<10xf32>
    %119 = vector.shape_cast %118 : vector<10xf32> to vector<10x1xf32>
    %120 = arith.addf %117, %119 : vector<10x1xf32>
    %cst_94 = arith.constant dense<0.000000e+00> : vector<4x16xf32>
    %121 = tpu.matmul %17, %84, %cst_94 {dimension_numbers = #tpu.dot_dimension_numbers<[1], [0], [0], [1], [0, 0, 1, 1], [], []>} : vector<4x32xf32>, vector<32x16xf32>, vector<4x16xf32> -> vector<4x16xf32>
    %122 = vector.broadcast %90 : vector<1x16xf32> to vector<4x16xf32>
    %123 = arith.addf %121, %122 : vector<4x16xf32>
    %cst_95 = arith.constant dense<0.000000e+00> : vector<10x16xf32>
    %124 = tpu.matmul %112, %123, %cst_95 {dimension_numbers = #tpu.dot_dimension_numbers<[1], [0], [0], [1], [0, 0, 1, 1], [], []>} : vector<10x4xf32>, vector<4x16xf32>, vector<10x16xf32> -> vector<10x16xf32>
    %cst_96 = arith.constant dense<0.000000e+00> : vector<10x16xf32>
    %125 = tpu.matmul %12, %84, %cst_96 {dimension_numbers = #tpu.dot_dimension_numbers<[1], [0], [0], [1], [0, 0, 1, 1], [], []>} : vector<10x32xf32>, vector<32x16xf32>, vector<10x16xf32> -> vector<10x16xf32>
    %126 = vector.broadcast %90 : vector<1x16xf32> to vector<10x16xf32>
    %127 = arith.addf %125, %126 : vector<10x16xf32>
    %cst_97 = arith.constant dense<0.000000e+00> : vector<10x16xf32>
    %128 = tpu.matmul %115, %127, %cst_97 {dimension_numbers = #tpu.dot_dimension_numbers<[1], [0], [0], [1], [0, 0, 1, 1], [], []>} : vector<10x10xf32>, vector<10x16xf32>, vector<10x16xf32> -> vector<10x16xf32>
    %129 = arith.addf %124, %128 : vector<10x16xf32>
    %130 = tpu.reciprocal %120 : vector<10x1xf32> -> vector<10x1xf32>
    %131 = vector.broadcast %130 : vector<10x1xf32> to vector<10x16xf32>
    %132 = arith.mulf %129, %131 : vector<10x16xf32>
    %c1_98 = arith.constant 1 : index
    %c0_99 = arith.constant 0 : index
    %c0_100 = arith.constant 0 : index
    %133 = vector.load %arg11[%c1_98, %c0_99, %c0_100] : memref<2x16x32xf32, #tpu.memory_space<vmem>>, vector<1x16x32xf32>
    %134 = vector.shape_cast %133 : vector<1x16x32xf32> to vector<16x32xf32>
    %cst_101 = arith.constant dense<0.000000e+00> : vector<10x32xf32>
    %135 = tpu.matmul %132, %134, %cst_101 {dimension_numbers = #tpu.dot_dimension_numbers<[1], [0], [0], [1], [0, 0, 1, 1], [], []>} : vector<10x16xf32>, vector<16x32xf32>, vector<10x32xf32> -> vector<10x32xf32>
    %136 = arith.addf %78, %135 : vector<10x32xf32>
    %137 = arith.addf %12, %136 : vector<10x32xf32>
    %138 = vector.broadcast %2 : vector<1x32xf32> to vector<10x32xf32>
    %139 = arith.addf %137, %138 : vector<10x32xf32>
    %cst_102 = arith.constant dense<0.000000e+00> : vector<10xf32>
    %140 = vector.multi_reduction <add>, %139, %cst_102 [1] : vector<10x32xf32> to vector<10xf32>
    %141 = vector.shape_cast %140 : vector<10xf32> to vector<10x1xf32>
    %cst_103 = arith.constant 3.200000e+01 : f32
    %142 = vector.broadcast %cst_103 : f32 to vector<10x1xf32>
    %143 = arith.divf %141, %142 : vector<10x1xf32>
    %144 = vector.broadcast %143 : vector<10x1xf32> to vector<10x32xf32>
    %145 = arith.subf %139, %144 : vector<10x32xf32>
    %146 = arith.mulf %145, %145 : vector<10x32xf32>
    %cst_104 = arith.constant dense<0.000000e+00> : vector<10xf32>
    %147 = vector.multi_reduction <add>, %146, %cst_104 [1] : vector<10x32xf32> to vector<10xf32>
    %148 = vector.shape_cast %147 : vector<10xf32> to vector<10x1xf32>
    %cst_105 = arith.constant 3.200000e+01 : f32
    %149 = vector.broadcast %cst_105 : f32 to vector<10x1xf32>
    %150 = arith.divf %148, %149 : vector<10x1xf32>
    %cst_106 = arith.constant 9.99999974E-6 : f32
    %151 = vector.broadcast %cst_106 : f32 to vector<10x1xf32>
    %152 = arith.addf %150, %151 : vector<10x1xf32>
    %153 = math.rsqrt %152 : vector<10x1xf32>
    %154 = vector.broadcast %153 : vector<10x1xf32> to vector<10x32xf32>
    %155 = arith.mulf %145, %154 : vector<10x32xf32>
    %156 = vector.broadcast %7 : vector<1x32xf32> to vector<10x32xf32>
    %157 = arith.mulf %155, %156 : vector<10x32xf32>
    %158 = vector.broadcast %8 : vector<1x32xf32> to vector<10x32xf32>
    %159 = arith.addf %157, %158 : vector<10x32xf32>
    %cst_107 = arith.constant dense<0.000000e+00> : vector<10x64xf32>
    %160 = tpu.matmul %159, %3, %cst_107 {dimension_numbers = #tpu.dot_dimension_numbers<[1], [0], [0], [1], [0, 0, 1, 1], [], []>} : vector<10x32xf32>, vector<32x64xf32>, vector<10x64xf32> -> vector<10x64xf32>
    %161 = vector.broadcast %4 : vector<1x64xf32> to vector<10x64xf32>
    %162 = arith.addf %160, %161 : vector<10x64xf32>
    %cst_108 = arith.constant 5.000000e-01 : f32
    %163 = vector.broadcast %cst_108 : f32 to vector<10x64xf32>
    %164 = arith.mulf %163, %162 : vector<10x64xf32>
    %cst_109 = arith.constant 0.707106769 : f32
    %165 = vector.broadcast %cst_109 : f32 to vector<10x64xf32>
    %166 = arith.mulf %162, %165 : vector<10x64xf32>
    %167 = math.absf %166 : vector<10x64xf32>
    %cst_110 = arith.constant 0.327591091 : f32
    %168 = vector.broadcast %cst_110 : f32 to vector<10x64xf32>
    %169 = arith.mulf %168, %167 : vector<10x64xf32>
    %cst_111 = arith.constant 1.000000e+00 : f32
    %170 = vector.broadcast %cst_111 : f32 to vector<10x64xf32>
    %171 = arith.addf %170, %169 : vector<10x64xf32>
    %cst_112 = arith.constant 1.000000e+00 : f32
    %172 = vector.broadcast %cst_112 : f32 to vector<10x64xf32>
    %173 = arith.divf %172, %171 : vector<10x64xf32>
    %cst_113 = arith.constant 1.06140542 : f32
    %174 = vector.broadcast %cst_113 : f32 to vector<10x64xf32>
    %175 = arith.mulf %174, %173 : vector<10x64xf32>
    %cst_114 = arith.constant -1.45315206 : f32
    %176 = vector.broadcast %cst_114 : f32 to vector<10x64xf32>
    %177 = arith.addf %175, %176 : vector<10x64xf32>
    %178 = arith.mulf %177, %173 : vector<10x64xf32>
    %cst_115 = arith.constant 1.42141378 : f32
    %179 = vector.broadcast %cst_115 : f32 to vector<10x64xf32>
    %180 = arith.addf %178, %179 : vector<10x64xf32>
    %181 = arith.mulf %180, %173 : vector<10x64xf32>
    %cst_116 = arith.constant -0.284496725 : f32
    %182 = vector.broadcast %cst_116 : f32 to vector<10x64xf32>
    %183 = arith.addf %181, %182 : vector<10x64xf32>
    %184 = arith.mulf %183, %173 : vector<10x64xf32>
    %cst_117 = arith.constant 0.254829586 : f32
    %185 = vector.broadcast %cst_117 : f32 to vector<10x64xf32>
    %186 = arith.addf %184, %185 : vector<10x64xf32>
    %187 = arith.mulf %186, %173 : vector<10x64xf32>
    %cst_118 = arith.constant 0.000000e+00 : f32
    %188 = vector.broadcast %cst_118 : f32 to vector<10x64xf32>
    %189 = arith.subf %188, %167 : vector<10x64xf32>
    %190 = arith.mulf %189, %167 : vector<10x64xf32>
    %191 = math.exp %190 : vector<10x64xf32>
    %192 = arith.mulf %187, %191 : vector<10x64xf32>
    %cst_119 = arith.constant 1.000000e+00 : f32
    %193 = vector.broadcast %cst_119 : f32 to vector<10x64xf32>
    %194 = arith.subf %193, %192 : vector<10x64xf32>
    %cst_120 = arith.constant 0.000000e+00 : f32
    %195 = vector.broadcast %cst_120 : f32 to vector<10x64xf32>
    %196 = arith.cmpf olt, %166, %195 : vector<10x64xf32>
    %cst_121 = arith.constant 0.000000e+00 : f32
    %197 = vector.broadcast %cst_121 : f32 to vector<10x64xf32>
    %198 = arith.subf %197, %194 : vector<10x64xf32>
    %199 = arith.select %196, %198, %194 : vector<10x64xi1>, vector<10x64xf32>
    %cst_122 = arith.constant 1.000000e+00 : f32
    %200 = vector.broadcast %cst_122 : f32 to vector<10x64xf32>
    %201 = arith.addf %200, %199 : vector<10x64xf32>
    %202 = arith.mulf %164, %201 : vector<10x64xf32>
    %cst_123 = arith.constant dense<0.000000e+00> : vector<10x32xf32>
    %203 = tpu.matmul %202, %5, %cst_123 {dimension_numbers = #tpu.dot_dimension_numbers<[1], [0], [0], [1], [0, 0, 1, 1], [], []>} : vector<10x64xf32>, vector<64x32xf32>, vector<10x32xf32> -> vector<10x32xf32>
    %204 = vector.broadcast %6 : vector<1x32xf32> to vector<10x32xf32>
    %205 = arith.addf %203, %204 : vector<10x32xf32>
    %206 = arith.addf %159, %205 : vector<10x32xf32>
    %cst_124 = arith.constant dense<0.000000e+00> : vector<10xf32>
    %207 = vector.multi_reduction <add>, %206, %cst_124 [1] : vector<10x32xf32> to vector<10xf32>
    %208 = vector.shape_cast %207 : vector<10xf32> to vector<10x1xf32>
    %cst_125 = arith.constant 3.200000e+01 : f32
    %209 = vector.broadcast %cst_125 : f32 to vector<10x1xf32>
    %210 = arith.divf %208, %209 : vector<10x1xf32>
    %211 = vector.broadcast %210 : vector<10x1xf32> to vector<10x32xf32>
    %212 = arith.subf %206, %211 : vector<10x32xf32>
    %213 = arith.mulf %212, %212 : vector<10x32xf32>
    %cst_126 = arith.constant dense<0.000000e+00> : vector<10xf32>
    %214 = vector.multi_reduction <add>, %213, %cst_126 [1] : vector<10x32xf32> to vector<10xf32>
    %215 = vector.shape_cast %214 : vector<10xf32> to vector<10x1xf32>
    %cst_127 = arith.constant 3.200000e+01 : f32
    %216 = vector.broadcast %cst_127 : f32 to vector<10x1xf32>
    %217 = arith.divf %215, %216 : vector<10x1xf32>
    %cst_128 = arith.constant 9.99999974E-6 : f32
    %218 = vector.broadcast %cst_128 : f32 to vector<10x1xf32>
    %219 = arith.addf %217, %218 : vector<10x1xf32>
    %220 = math.rsqrt %219 : vector<10x1xf32>
    %221 = vector.broadcast %220 : vector<10x1xf32> to vector<10x32xf32>
    %222 = arith.mulf %212, %221 : vector<10x32xf32>
    %223 = vector.broadcast %9 : vector<1x32xf32> to vector<10x32xf32>
    %224 = arith.mulf %222, %223 : vector<10x32xf32>
    %225 = vector.broadcast %10 : vector<1x32xf32> to vector<10x32xf32>
    %226 = arith.addf %224, %225 : vector<10x32xf32>
    %c0_129 = arith.constant 0 : index
    %c0_130 = arith.constant 0 : index
    %c0_131 = arith.constant 0 : index
    %227 = vector.load %arg21[%c0_129, %c0_130, %c0_131] : memref<2x10x32xf32, #tpu.memory_space<vmem>>, vector<1x10x32xf32>
    %228 = vector.shape_cast %227 : vector<1x10x32xf32> to vector<10x32xf32>
    %229 = vector.shape_cast %226 : vector<10x32xf32> to vector<1x10x32xf32>
    tpu.vector_store %arg21[%c0_129, %c0_130, %c0_131], %229 {strides = array<i32>} : memref<2x10x32xf32, #tpu.memory_space<vmem>>, vector<1x10x32xf32>,
    %c1_132 = arith.constant 1 : index
    %c0_133 = arith.constant 0 : index
    %c0_134 = arith.constant 0 : index
    %230 = vector.load %arg1[%c1_132, %c0_133, %c0_134] : memref<2x10x32xf32, #tpu.memory_space<vmem>>, vector<1x10x32xf32>
    %231 = vector.shape_cast %230 : vector<1x10x32xf32> to vector<10x32xf32>
    %c1_135 = arith.constant 1 : index
    %c0_136 = arith.constant 0 : index
    %c0_137 = arith.constant 0 : index
    %232 = vector.load %arg0[%c1_135, %c0_136, %c0_137] : memref<2x4x32xf32, #tpu.memory_space<vmem>>, vector<1x4x32xf32>
    %233 = vector.shape_cast %232 : vector<1x4x32xf32> to vector<4x32xf32>
    %cst_138 = arith.constant dense<0.000000e+00> : vector<4x32xf32>
    %234 = tpu.matmul %233, %0, %cst_138 {dimension_numbers = #tpu.dot_dimension_numbers<[1], [0], [0], [1], [0, 0, 1, 1], [], []>} : vector<4x32xf32>, vector<32x32xf32>, vector<4x32xf32> -> vector<4x32xf32>
    %235 = vector.broadcast %1 : vector<1x32xf32> to vector<4x32xf32>
    %236 = arith.addf %234, %235 : vector<4x32xf32>
    %c1_139 = arith.constant 1 : index
    %c0_140 = arith.constant 0 : index
    %c0_141 = arith.constant 0 : index
    %237 = vector.load %arg2[%c1_139, %c0_140, %c0_141] : memref<2x10x10xf32, #tpu.memory_space<vmem>>, vector<1x10x10xf32>
    %238 = vector.shape_cast %237 : vector<1x10x10xf32> to vector<10x10xf32>
    %cst_142 = arith.constant 0.000000e+00 : f32
    %239 = vector.broadcast %cst_142 : f32 to vector<10x32xf32>
    %c0_143 = arith.constant 0 : index
    %c0_144 = arith.constant 0 : index
    %c0_145 = arith.constant 0 : index
    %240 = vector.load %arg5[%c0_143, %c0_144, %c0_145] : memref<2x32x16xf32, #tpu.memory_space<vmem>>, vector<1x32x16xf32>
    %241 = vector.shape_cast %240 : vector<1x32x16xf32> to vector<32x16xf32>
    %c0_146 = arith.constant 0 : index
    %c0_147 = arith.constant 0 : index
    %c0_148 = arith.constant 0 : index
    %242 = vector.load %arg6[%c0_146, %c0_147, %c0_148] : memref<2x32x16xf32, #tpu.memory_space<vmem>>, vector<1x32x16xf32>
    %243 = vector.shape_cast %242 : vector<1x32x16xf32> to vector<32x16xf32>
    %c0_149 = arith.constant 0 : index
    %c0_150 = arith.constant 0 : index
    %c0_151 = arith.constant 0 : index
    %244 = vector.load %arg7[%c0_149, %c0_150, %c0_151] : memref<2x32x16xf32, #tpu.memory_space<vmem>>, vector<1x32x16xf32>
    %245 = vector.shape_cast %244 : vector<1x32x16xf32> to vector<32x16xf32>
    %c0_152 = arith.constant 0 : index
    %c0_153 = arith.constant 0 : index
    %c0_154 = arith.constant 0 : index
    %246 = vector.load %arg8[%c0_152, %c0_153, %c0_154] : memref<2x1x16xf32, #tpu.memory_space<vmem>>, vector<1x1x16xf32>
    %247 = vector.shape_cast %246 : vector<1x1x16xf32> to vector<1x16xf32>
    %c0_155 = arith.constant 0 : index
    %c0_156 = arith.constant 0 : index
    %c0_157 = arith.constant 0 : index
    %248 = vector.load %arg9[%c0_155, %c0_156, %c0_157] : memref<2x1x16xf32, #tpu.memory_space<vmem>>, vector<1x1x16xf32>
    %249 = vector.shape_cast %248 : vector<1x1x16xf32> to vector<1x16xf32>
    %c0_158 = arith.constant 0 : index
    %c0_159 = arith.constant 0 : index
    %c0_160 = arith.constant 0 : index
    %250 = vector.load %arg10[%c0_158, %c0_159, %c0_160] : memref<2x1x16xf32, #tpu.memory_space<vmem>>, vector<1x1x16xf32>
    %251 = vector.shape_cast %250 : vector<1x1x16xf32> to vector<1x16xf32>
    %cst_161 = arith.constant dense<0.000000e+00> : vector<10x16xf32>
    %252 = tpu.matmul %231, %241, %cst_161 {dimension_numbers = #tpu.dot_dimension_numbers<[1], [0], [0], [1], [0, 0, 1, 1], [], []>} : vector<10x32xf32>, vector<32x16xf32>, vector<10x16xf32> -> vector<10x16xf32>
    %253 = vector.broadcast %247 : vector<1x16xf32> to vector<10x16xf32>
    %254 = arith.addf %252, %253 : vector<10x16xf32>
    %cst_162 = arith.constant 2.500000e-01 : f32
    %255 = vector.broadcast %cst_162 : f32 to vector<10x16xf32>
    %256 = arith.mulf %254, %255 : vector<10x16xf32>
    %cst_163 = arith.constant dense<0.000000e+00> : vector<4x16xf32>
    %257 = tpu.matmul %236, %243, %cst_163 {dimension_numbers = #tpu.dot_dimension_numbers<[1], [0], [0], [1], [0, 0, 1, 1], [], []>} : vector<4x32xf32>, vector<32x16xf32>, vector<4x16xf32> -> vector<4x16xf32>
    %258 = vector.broadcast %249 : vector<1x16xf32> to vector<4x16xf32>
    %259 = arith.addf %257, %258 : vector<4x16xf32>
    %cst_164 = arith.constant dense<0.000000e+00> : vector<10x4xf32>
    %260 = tpu.matmul %256, %259, %cst_164 {dimension_numbers = #tpu.dot_dimension_numbers<[1], [1], [0], [0], [0, 0, 1, 0], [], []>} : vector<10x16xf32>, vector<4x16xf32>, vector<10x4xf32> -> vector<10x4xf32>
    %cst_165 = arith.constant dense<0.000000e+00> : vector<10x16xf32>
    %261 = tpu.matmul %231, %243, %cst_165 {dimension_numbers = #tpu.dot_dimension_numbers<[1], [0], [0], [1], [0, 0, 1, 1], [], []>} : vector<10x32xf32>, vector<32x16xf32>, vector<10x16xf32> -> vector<10x16xf32>
    %262 = vector.broadcast %249 : vector<1x16xf32> to vector<10x16xf32>
    %263 = arith.addf %261, %262 : vector<10x16xf32>
    %cst_166 = arith.constant dense<0.000000e+00> : vector<10x10xf32>
    %264 = tpu.matmul %256, %263, %cst_166 {dimension_numbers = #tpu.dot_dimension_numbers<[1], [1], [0], [0], [0, 0, 1, 0], [], []>} : vector<10x16xf32>, vector<10x16xf32>, vector<10x10xf32> -> vector<10x10xf32>
    %265 = arith.addf %264, %238 : vector<10x10xf32>
    %cst_167 = arith.constant dense<0xFF800000> : vector<10xf32>
    %266 = vector.multi_reduction <maximumf>, %260, %cst_167 [1] : vector<10x4xf32> to vector<10xf32>
    %267 = vector.shape_cast %266 : vector<10xf32> to vector<10x1xf32>
    %cst_168 = arith.constant dense<0xFF800000> : vector<10xf32>
    %268 = vector.multi_reduction <maximumf>, %265, %cst_168 [1] : vector<10x10xf32> to vector<10xf32>
    %269 = vector.shape_cast %268 : vector<10xf32> to vector<10x1xf32>
    %270 = arith.maximumf %267, %269 : vector<10x1xf32>
    %271 = vector.broadcast %270 : vector<10x1xf32> to vector<10x4xf32>
    %272 = arith.subf %260, %271 : vector<10x4xf32>
    %273 = math.exp %272 : vector<10x4xf32>
    %274 = vector.broadcast %270 : vector<10x1xf32> to vector<10x10xf32>
    %275 = arith.subf %265, %274 : vector<10x10xf32>
    %276 = math.exp %275 : vector<10x10xf32>
    %cst_169 = arith.constant dense<0.000000e+00> : vector<10xf32>
    %277 = vector.multi_reduction <add>, %273, %cst_169 [1] : vector<10x4xf32> to vector<10xf32>
    %278 = vector.shape_cast %277 : vector<10xf32> to vector<10x1xf32>
    %cst_170 = arith.constant dense<0.000000e+00> : vector<10xf32>
    %279 = vector.multi_reduction <add>, %276, %cst_170 [1] : vector<10x10xf32> to vector<10xf32>
    %280 = vector.shape_cast %279 : vector<10xf32> to vector<10x1xf32>
    %281 = arith.addf %278, %280 : vector<10x1xf32>
    %cst_171 = arith.constant dense<0.000000e+00> : vector<4x16xf32>
    %282 = tpu.matmul %236, %245, %cst_171 {dimension_numbers = #tpu.dot_dimension_numbers<[1], [0], [0], [1], [0, 0, 1, 1], [], []>} : vector<4x32xf32>, vector<32x16xf32>, vector<4x16xf32> -> vector<4x16xf32>
    %283 = vector.broadcast %251 : vector<1x16xf32> to vector<4x16xf32>
    %284 = arith.addf %282, %283 : vector<4x16xf32>
    %cst_172 = arith.constant dense<0.000000e+00> : vector<10x16xf32>
    %285 = tpu.matmul %273, %284, %cst_172 {dimension_numbers = #tpu.dot_dimension_numbers<[1], [0], [0], [1], [0, 0, 1, 1], [], []>} : vector<10x4xf32>, vector<4x16xf32>, vector<10x16xf32> -> vector<10x16xf32>
    %cst_173 = arith.constant dense<0.000000e+00> : vector<10x16xf32>
    %286 = tpu.matmul %231, %245, %cst_173 {dimension_numbers = #tpu.dot_dimension_numbers<[1], [0], [0], [1], [0, 0, 1, 1], [], []>} : vector<10x32xf32>, vector<32x16xf32>, vector<10x16xf32> -> vector<10x16xf32>
    %287 = vector.broadcast %251 : vector<1x16xf32> to vector<10x16xf32>
    %288 = arith.addf %286, %287 : vector<10x16xf32>
    %cst_174 = arith.constant dense<0.000000e+00> : vector<10x16xf32>
    %289 = tpu.matmul %276, %288, %cst_174 {dimension_numbers = #tpu.dot_dimension_numbers<[1], [0], [0], [1], [0, 0, 1, 1], [], []>} : vector<10x10xf32>, vector<10x16xf32>, vector<10x16xf32> -> vector<10x16xf32>
    %290 = arith.addf %285, %289 : vector<10x16xf32>
    %291 = tpu.reciprocal %281 : vector<10x1xf32> -> vector<10x1xf32>
    %292 = vector.broadcast %291 : vector<10x1xf32> to vector<10x16xf32>
    %293 = arith.mulf %290, %292 : vector<10x16xf32>
    %c0_175 = arith.constant 0 : index
    %c0_176 = arith.constant 0 : index
    %c0_177 = arith.constant 0 : index
    %294 = vector.load %arg11[%c0_175, %c0_176, %c0_177] : memref<2x16x32xf32, #tpu.memory_space<vmem>>, vector<1x16x32xf32>
    %295 = vector.shape_cast %294 : vector<1x16x32xf32> to vector<16x32xf32>
    %cst_178 = arith.constant dense<0.000000e+00> : vector<10x32xf32>
    %296 = tpu.matmul %293, %295, %cst_178 {dimension_numbers = #tpu.dot_dimension_numbers<[1], [0], [0], [1], [0, 0, 1, 1], [], []>} : vector<10x16xf32>, vector<16x32xf32>, vector<10x32xf32> -> vector<10x32xf32>
    %297 = arith.addf %239, %296 : vector<10x32xf32>
    %c1_179 = arith.constant 1 : index
    %c0_180 = arith.constant 0 : index
    %c0_181 = arith.constant 0 : index
    %298 = vector.load %arg5[%c1_179, %c0_180, %c0_181] : memref<2x32x16xf32, #tpu.memory_space<vmem>>, vector<1x32x16xf32>
    %299 = vector.shape_cast %298 : vector<1x32x16xf32> to vector<32x16xf32>
    %c1_182 = arith.constant 1 : index
    %c0_183 = arith.constant 0 : index
    %c0_184 = arith.constant 0 : index
    %300 = vector.load %arg6[%c1_182, %c0_183, %c0_184] : memref<2x32x16xf32, #tpu.memory_space<vmem>>, vector<1x32x16xf32>
    %301 = vector.shape_cast %300 : vector<1x32x16xf32> to vector<32x16xf32>
    %c1_185 = arith.constant 1 : index
    %c0_186 = arith.constant 0 : index
    %c0_187 = arith.constant 0 : index
    %302 = vector.load %arg7[%c1_185, %c0_186, %c0_187] : memref<2x32x16xf32, #tpu.memory_space<vmem>>, vector<1x32x16xf32>
    %303 = vector.shape_cast %302 : vector<1x32x16xf32> to vector<32x16xf32>
    %c1_188 = arith.constant 1 : index
    %c0_189 = arith.constant 0 : index
    %c0_190 = arith.constant 0 : index
    %304 = vector.load %arg8[%c1_188, %c0_189, %c0_190] : memref<2x1x16xf32, #tpu.memory_space<vmem>>, vector<1x1x16xf32>
    %305 = vector.shape_cast %304 : vector<1x1x16xf32> to vector<1x16xf32>
    %c1_191 = arith.constant 1 : index
    %c0_192 = arith.constant 0 : index
    %c0_193 = arith.constant 0 : index
    %306 = vector.load %arg9[%c1_191, %c0_192, %c0_193] : memref<2x1x16xf32, #tpu.memory_space<vmem>>, vector<1x1x16xf32>
    %307 = vector.shape_cast %306 : vector<1x1x16xf32> to vector<1x16xf32>
    %c1_194 = arith.constant 1 : index
    %c0_195 = arith.constant 0 : index
    %c0_196 = arith.constant 0 : index
    %308 = vector.load %arg10[%c1_194, %c0_195, %c0_196] : memref<2x1x16xf32, #tpu.memory_space<vmem>>, vector<1x1x16xf32>
    %309 = vector.shape_cast %308 : vector<1x1x16xf32> to vector<1x16xf32>
    %cst_197 = arith.constant dense<0.000000e+00> : vector<10x16xf32>
    %310 = tpu.matmul %231, %299, %cst_197 {dimension_numbers = #tpu.dot_dimension_numbers<[1], [0], [0], [1], [0, 0, 1, 1], [], []>} : vector<10x32xf32>, vector<32x16xf32>, vector<10x16xf32> -> vector<10x16xf32>
    %311 = vector.broadcast %305 : vector<1x16xf32> to vector<10x16xf32>
    %312 = arith.addf %310, %311 : vector<10x16xf32>
    %cst_198 = arith.constant 2.500000e-01 : f32
    %313 = vector.broadcast %cst_198 : f32 to vector<10x16xf32>
    %314 = arith.mulf %312, %313 : vector<10x16xf32>
    %cst_199 = arith.constant dense<0.000000e+00> : vector<4x16xf32>
    %315 = tpu.matmul %236, %301, %cst_199 {dimension_numbers = #tpu.dot_dimension_numbers<[1], [0], [0], [1], [0, 0, 1, 1], [], []>} : vector<4x32xf32>, vector<32x16xf32>, vector<4x16xf32> -> vector<4x16xf32>
    %316 = vector.broadcast %307 : vector<1x16xf32> to vector<4x16xf32>
    %317 = arith.addf %315, %316 : vector<4x16xf32>
    %cst_200 = arith.constant dense<0.000000e+00> : vector<10x4xf32>
    %318 = tpu.matmul %314, %317, %cst_200 {dimension_numbers = #tpu.dot_dimension_numbers<[1], [1], [0], [0], [0, 0, 1, 0], [], []>} : vector<10x16xf32>, vector<4x16xf32>, vector<10x4xf32> -> vector<10x4xf32>
    %cst_201 = arith.constant dense<0.000000e+00> : vector<10x16xf32>
    %319 = tpu.matmul %231, %301, %cst_201 {dimension_numbers = #tpu.dot_dimension_numbers<[1], [0], [0], [1], [0, 0, 1, 1], [], []>} : vector<10x32xf32>, vector<32x16xf32>, vector<10x16xf32> -> vector<10x16xf32>
    %320 = vector.broadcast %307 : vector<1x16xf32> to vector<10x16xf32>
    %321 = arith.addf %319, %320 : vector<10x16xf32>
    %cst_202 = arith.constant dense<0.000000e+00> : vector<10x10xf32>
    %322 = tpu.matmul %314, %321, %cst_202 {dimension_numbers = #tpu.dot_dimension_numbers<[1], [1], [0], [0], [0, 0, 1, 0], [], []>} : vector<10x16xf32>, vector<10x16xf32>, vector<10x10xf32> -> vector<10x10xf32>
    %323 = arith.addf %322, %238 : vector<10x10xf32>
    %cst_203 = arith.constant dense<0xFF800000> : vector<10xf32>
    %324 = vector.multi_reduction <maximumf>, %318, %cst_203 [1] : vector<10x4xf32> to vector<10xf32>
    %325 = vector.shape_cast %324 : vector<10xf32> to vector<10x1xf32>
    %cst_204 = arith.constant dense<0xFF800000> : vector<10xf32>
    %326 = vector.multi_reduction <maximumf>, %323, %cst_204 [1] : vector<10x10xf32> to vector<10xf32>
    %327 = vector.shape_cast %326 : vector<10xf32> to vector<10x1xf32>
    %328 = arith.maximumf %325, %327 : vector<10x1xf32>
    %329 = vector.broadcast %328 : vector<10x1xf32> to vector<10x4xf32>
    %330 = arith.subf %318, %329 : vector<10x4xf32>
    %331 = math.exp %330 : vector<10x4xf32>
    %332 = vector.broadcast %328 : vector<10x1xf32> to vector<10x10xf32>
    %333 = arith.subf %323, %332 : vector<10x10xf32>
    %334 = math.exp %333 : vector<10x10xf32>
    %cst_205 = arith.constant dense<0.000000e+00> : vector<10xf32>
    %335 = vector.multi_reduction <add>, %331, %cst_205 [1] : vector<10x4xf32> to vector<10xf32>
    %336 = vector.shape_cast %335 : vector<10xf32> to vector<10x1xf32>
    %cst_206 = arith.constant dense<0.000000e+00> : vector<10xf32>
    %337 = vector.multi_reduction <add>, %334, %cst_206 [1] : vector<10x10xf32> to vector<10xf32>
    %338 = vector.shape_cast %337 : vector<10xf32> to vector<10x1xf32>
    %339 = arith.addf %336, %338 : vector<10x1xf32>
    %cst_207 = arith.constant dense<0.000000e+00> : vector<4x16xf32>
    %340 = tpu.matmul %236, %303, %cst_207 {dimension_numbers = #tpu.dot_dimension_numbers<[1], [0], [0], [1], [0, 0, 1, 1], [], []>} : vector<4x32xf32>, vector<32x16xf32>, vector<4x16xf32> -> vector<4x16xf32>
    %341 = vector.broadcast %309 : vector<1x16xf32> to vector<4x16xf32>
    %342 = arith.addf %340, %341 : vector<4x16xf32>
    %cst_208 = arith.constant dense<0.000000e+00> : vector<10x16xf32>
    %343 = tpu.matmul %331, %342, %cst_208 {dimension_numbers = #tpu.dot_dimension_numbers<[1], [0], [0], [1], [0, 0, 1, 1], [], []>} : vector<10x4xf32>, vector<4x16xf32>, vector<10x16xf32> -> vector<10x16xf32>
    %cst_209 = arith.constant dense<0.000000e+00> : vector<10x16xf32>
    %344 = tpu.matmul %231, %303, %cst_209 {dimension_numbers = #tpu.dot_dimension_numbers<[1], [0], [0], [1], [0, 0, 1, 1], [], []>} : vector<10x32xf32>, vector<32x16xf32>, vector<10x16xf32> -> vector<10x16xf32>
    %345 = vector.broadcast %309 : vector<1x16xf32> to vector<10x16xf32>
    %346 = arith.addf %344, %345 : vector<10x16xf32>
    %cst_210 = arith.constant dense<0.000000e+00> : vector<10x16xf32>
    %347 = tpu.matmul %334, %346, %cst_210 {dimension_numbers = #tpu.dot_dimension_numbers<[1], [0], [0], [1], [0, 0, 1, 1], [], []>} : vector<10x10xf32>, vector<10x16xf32>, vector<10x16xf32> -> vector<10x16xf32>
    %348 = arith.addf %343, %347 : vector<10x16xf32>
    %349 = tpu.reciprocal %339 : vector<10x1xf32> -> vector<10x1xf32>
    %350 = vector.broadcast %349 : vector<10x1xf32> to vector<10x16xf32>
    %351 = arith.mulf %348, %350 : vector<10x16xf32>
    %c1_211 = arith.constant 1 : index
    %c0_212 = arith.constant 0 : index
    %c0_213 = arith.constant 0 : index
    %352 = vector.load %arg11[%c1_211, %c0_212, %c0_213] : memref<2x16x32xf32, #tpu.memory_space<vmem>>, vector<1x16x32xf32>
    %353 = vector.shape_cast %352 : vector<1x16x32xf32> to vector<16x32xf32>
    %cst_214 = arith.constant dense<0.000000e+00> : vector<10x32xf32>
    %354 = tpu.matmul %351, %353, %cst_214 {dimension_numbers = #tpu.dot_dimension_numbers<[1], [0], [0], [1], [0, 0, 1, 1], [], []>} : vector<10x16xf32>, vector<16x32xf32>, vector<10x32xf32> -> vector<10x32xf32>
    %355 = arith.addf %297, %354 : vector<10x32xf32>
    %356 = arith.addf %231, %355 : vector<10x32xf32>
    %357 = vector.broadcast %2 : vector<1x32xf32> to vector<10x32xf32>
    %358 = arith.addf %356, %357 : vector<10x32xf32>
    %cst_215 = arith.constant dense<0.000000e+00> : vector<10xf32>
    %359 = vector.multi_reduction <add>, %358, %cst_215 [1] : vector<10x32xf32> to vector<10xf32>
    %360 = vector.shape_cast %359 : vector<10xf32> to vector<10x1xf32>
    %cst_216 = arith.constant 3.200000e+01 : f32
    %361 = vector.broadcast %cst_216 : f32 to vector<10x1xf32>
    %362 = arith.divf %360, %361 : vector<10x1xf32>
    %363 = vector.broadcast %362 : vector<10x1xf32> to vector<10x32xf32>
    %364 = arith.subf %358, %363 : vector<10x32xf32>
    %365 = arith.mulf %364, %364 : vector<10x32xf32>
    %cst_217 = arith.constant dense<0.000000e+00> : vector<10xf32>
    %366 = vector.multi_reduction <add>, %365, %cst_217 [1] : vector<10x32xf32> to vector<10xf32>
    %367 = vector.shape_cast %366 : vector<10xf32> to vector<10x1xf32>
    %cst_218 = arith.constant 3.200000e+01 : f32
    %368 = vector.broadcast %cst_218 : f32 to vector<10x1xf32>
    %369 = arith.divf %367, %368 : vector<10x1xf32>
    %cst_219 = arith.constant 9.99999974E-6 : f32
    %370 = vector.broadcast %cst_219 : f32 to vector<10x1xf32>
    %371 = arith.addf %369, %370 : vector<10x1xf32>
    %372 = math.rsqrt %371 : vector<10x1xf32>
    %373 = vector.broadcast %372 : vector<10x1xf32> to vector<10x32xf32>
    %374 = arith.mulf %364, %373 : vector<10x32xf32>
    %375 = vector.broadcast %7 : vector<1x32xf32> to vector<10x32xf32>
    %376 = arith.mulf %374, %375 : vector<10x32xf32>
    %377 = vector.broadcast %8 : vector<1x32xf32> to vector<10x32xf32>
    %378 = arith.addf %376, %377 : vector<10x32xf32>
    %cst_220 = arith.constant dense<0.000000e+00> : vector<10x64xf32>
    %379 = tpu.matmul %378, %3, %cst_220 {dimension_numbers = #tpu.dot_dimension_numbers<[1], [0], [0], [1], [0, 0, 1, 1], [], []>} : vector<10x32xf32>, vector<32x64xf32>, vector<10x64xf32> -> vector<10x64xf32>
    %380 = vector.broadcast %4 : vector<1x64xf32> to vector<10x64xf32>
    %381 = arith.addf %379, %380 : vector<10x64xf32>
    %cst_221 = arith.constant 5.000000e-01 : f32
    %382 = vector.broadcast %cst_221 : f32 to vector<10x64xf32>
    %383 = arith.mulf %382, %381 : vector<10x64xf32>
    %cst_222 = arith.constant 0.707106769 : f32
    %384 = vector.broadcast %cst_222 : f32 to vector<10x64xf32>
    %385 = arith.mulf %381, %384 : vector<10x64xf32>
    %386 = math.absf %385 : vector<10x64xf32>
    %cst_223 = arith.constant 0.327591091 : f32
    %387 = vector.broadcast %cst_223 : f32 to vector<10x64xf32>
    %388 = arith.mulf %387, %386 : vector<10x64xf32>
    %cst_224 = arith.constant 1.000000e+00 : f32
    %389 = vector.broadcast %cst_224 : f32 to vector<10x64xf32>
    %390 = arith.addf %389, %388 : vector<10x64xf32>
    %cst_225 = arith.constant 1.000000e+00 : f32
    %391 = vector.broadcast %cst_225 : f32 to vector<10x64xf32>
    %392 = arith.divf %391, %390 : vector<10x64xf32>
    %cst_226 = arith.constant 1.06140542 : f32
    %393 = vector.broadcast %cst_226 : f32 to vector<10x64xf32>
    %394 = arith.mulf %393, %392 : vector<10x64xf32>
    %cst_227 = arith.constant -1.45315206 : f32
    %395 = vector.broadcast %cst_227 : f32 to vector<10x64xf32>
    %396 = arith.addf %394, %395 : vector<10x64xf32>
    %397 = arith.mulf %396, %392 : vector<10x64xf32>
    %cst_228 = arith.constant 1.42141378 : f32
    %398 = vector.broadcast %cst_228 : f32 to vector<10x64xf32>
    %399 = arith.addf %397, %398 : vector<10x64xf32>
    %400 = arith.mulf %399, %392 : vector<10x64xf32>
    %cst_229 = arith.constant -0.284496725 : f32
    %401 = vector.broadcast %cst_229 : f32 to vector<10x64xf32>
    %402 = arith.addf %400, %401 : vector<10x64xf32>
    %403 = arith.mulf %402, %392 : vector<10x64xf32>
    %cst_230 = arith.constant 0.254829586 : f32
    %404 = vector.broadcast %cst_230 : f32 to vector<10x64xf32>
    %405 = arith.addf %403, %404 : vector<10x64xf32>
    %406 = arith.mulf %405, %392 : vector<10x64xf32>
    %cst_231 = arith.constant 0.000000e+00 : f32
    %407 = vector.broadcast %cst_231 : f32 to vector<10x64xf32>
    %408 = arith.subf %407, %386 : vector<10x64xf32>
    %409 = arith.mulf %408, %386 : vector<10x64xf32>
    %410 = math.exp %409 : vector<10x64xf32>
    %411 = arith.mulf %406, %410 : vector<10x64xf32>
    %cst_232 = arith.constant 1.000000e+00 : f32
    %412 = vector.broadcast %cst_232 : f32 to vector<10x64xf32>
    %413 = arith.subf %412, %411 : vector<10x64xf32>
    %cst_233 = arith.constant 0.000000e+00 : f32
    %414 = vector.broadcast %cst_233 : f32 to vector<10x64xf32>
    %415 = arith.cmpf olt, %385, %414 : vector<10x64xf32>
    %cst_234 = arith.constant 0.000000e+00 : f32
    %416 = vector.broadcast %cst_234 : f32 to vector<10x64xf32>
    %417 = arith.subf %416, %413 : vector<10x64xf32>
    %418 = arith.select %415, %417, %413 : vector<10x64xi1>, vector<10x64xf32>
    %cst_235 = arith.constant 1.000000e+00 : f32
    %419 = vector.broadcast %cst_235 : f32 to vector<10x64xf32>
    %420 = arith.addf %419, %418 : vector<10x64xf32>
    %421 = arith.mulf %383, %420 : vector<10x64xf32>
    %cst_236 = arith.constant dense<0.000000e+00> : vector<10x32xf32>
    %422 = tpu.matmul %421, %5, %cst_236 {dimension_numbers = #tpu.dot_dimension_numbers<[1], [0], [0], [1], [0, 0, 1, 1], [], []>} : vector<10x64xf32>, vector<64x32xf32>, vector<10x32xf32> -> vector<10x32xf32>
    %423 = vector.broadcast %6 : vector<1x32xf32> to vector<10x32xf32>
    %424 = arith.addf %422, %423 : vector<10x32xf32>
    %425 = arith.addf %378, %424 : vector<10x32xf32>
    %cst_237 = arith.constant dense<0.000000e+00> : vector<10xf32>
    %426 = vector.multi_reduction <add>, %425, %cst_237 [1] : vector<10x32xf32> to vector<10xf32>
    %427 = vector.shape_cast %426 : vector<10xf32> to vector<10x1xf32>
    %cst_238 = arith.constant 3.200000e+01 : f32
    %428 = vector.broadcast %cst_238 : f32 to vector<10x1xf32>
    %429 = arith.divf %427, %428 : vector<10x1xf32>
    %430 = vector.broadcast %429 : vector<10x1xf32> to vector<10x32xf32>
    %431 = arith.subf %425, %430 : vector<10x32xf32>
    %432 = arith.mulf %431, %431 : vector<10x32xf32>
    %cst_239 = arith.constant dense<0.000000e+00> : vector<10xf32>
    %433 = vector.multi_reduction <add>, %432, %cst_239 [1] : vector<10x32xf32> to vector<10xf32>
    %434 = vector.shape_cast %433 : vector<10xf32> to vector<10x1xf32>
    %cst_240 = arith.constant 3.200000e+01 : f32
    %435 = vector.broadcast %cst_240 : f32 to vector<10x1xf32>
    %436 = arith.divf %434, %435 : vector<10x1xf32>
    %cst_241 = arith.constant 9.99999974E-6 : f32
    %437 = vector.broadcast %cst_241 : f32 to vector<10x1xf32>
    %438 = arith.addf %436, %437 : vector<10x1xf32>
    %439 = math.rsqrt %438 : vector<10x1xf32>
    %440 = vector.broadcast %439 : vector<10x1xf32> to vector<10x32xf32>
    %441 = arith.mulf %431, %440 : vector<10x32xf32>
    %442 = vector.broadcast %9 : vector<1x32xf32> to vector<10x32xf32>
    %443 = arith.mulf %441, %442 : vector<10x32xf32>
    %444 = vector.broadcast %10 : vector<1x32xf32> to vector<10x32xf32>
    %445 = arith.addf %443, %444 : vector<10x32xf32>
    %c1_242 = arith.constant 1 : index
    %c0_243 = arith.constant 0 : index
    %c0_244 = arith.constant 0 : index
    %446 = vector.load %arg21[%c1_242, %c0_243, %c0_244] : memref<2x10x32xf32, #tpu.memory_space<vmem>>, vector<1x10x32xf32>
    %447 = vector.shape_cast %446 : vector<1x10x32xf32> to vector<10x32xf32>
    %448 = vector.shape_cast %445 : vector<10x32xf32> to vector<1x10x32xf32>
    tpu.vector_store %arg21[%c1_242, %c0_243, %c0_244], %448 {strides = array<i32>} : memref<2x10x32xf32, #tpu.memory_space<vmem>>, vector<1x10x32xf32>,
    return
  }
}

module attributes {stable_mosaic.version = 11 : i64} {
  func.func @_linear_nobias_kernel(%arg0: memref<2x5xf32, #tpu.memory_space<vmem>>, %arg1: memref<5x32xf32, #tpu.memory_space<vmem>>, %arg2: memref<2x32xf32, #tpu.memory_space<vmem>>) attributes {dimension_semantics = [], scalar_prefetch = 0 : i64, scratch_operands = 0 : i64, tpu.core_type = #tpu.core_type<tc>} {
    %c0 = arith.constant 0 : index
    %c0_0 = arith.constant 0 : index
    %0 = vector.load %arg0[%c0, %c0_0] : memref<2x5xf32, #tpu.memory_space<vmem>>, vector<2x5xf32>
    %c0_1 = arith.constant 0 : index
    %c0_2 = arith.constant 0 : index
    %1 = vector.load %arg1[%c0_1, %c0_2] : memref<5x32xf32, #tpu.memory_space<vmem>>, vector<5x32xf32>
    %cst = arith.constant dense<0.000000e+00> : vector<2x32xf32>
    %2 = tpu.matmul %0, %1, %cst {dimension_numbers = #tpu.dot_dimension_numbers<[1], [0], [0], [1], [0, 0, 1, 1], [], []>} : vector<2x5xf32>, vector<5x32xf32>, vector<2x32xf32> -> vector<2x32xf32>
    %c0_3 = arith.constant 0 : index
    %c0_4 = arith.constant 0 : index
    %3 = vector.load %arg2[%c0_3, %c0_4] : memref<2x32xf32, #tpu.memory_space<vmem>>, vector<2x32xf32>
    tpu.vector_store %arg2[%c0_3, %c0_4], %2 {strides = array<i32>} : memref<2x32xf32, #tpu.memory_space<vmem>>, vector<2x32xf32>,
    return
  }
}

module attributes {stable_mosaic.version = 11 : i64} {
  func.func @_linear_kernel(%arg0: memref<16x32xf32, #tpu.memory_space<vmem>>, %arg1: memref<32x6xf32, #tpu.memory_space<vmem>>, %arg2: memref<1x6xf32, #tpu.memory_space<vmem>>, %arg3: memref<16x6xf32, #tpu.memory_space<vmem>>) attributes {dimension_semantics = [], scalar_prefetch = 0 : i64, scratch_operands = 0 : i64, tpu.core_type = #tpu.core_type<tc>} {
    %c0 = arith.constant 0 : index
    %c0_0 = arith.constant 0 : index
    %0 = vector.load %arg0[%c0, %c0_0] : memref<16x32xf32, #tpu.memory_space<vmem>>, vector<16x32xf32>
    %c0_1 = arith.constant 0 : index
    %c0_2 = arith.constant 0 : index
    %1 = vector.load %arg1[%c0_1, %c0_2] : memref<32x6xf32, #tpu.memory_space<vmem>>, vector<32x6xf32>
    %cst = arith.constant dense<0.000000e+00> : vector<16x6xf32>
    %2 = tpu.matmul %0, %1, %cst {dimension_numbers = #tpu.dot_dimension_numbers<[1], [0], [0], [1], [0, 0, 1, 1], [], []>} : vector<16x32xf32>, vector<32x6xf32>, vector<16x6xf32> -> vector<16x6xf32>
    %c0_3 = arith.constant 0 : index
    %c0_4 = arith.constant 0 : index
    %3 = vector.load %arg2[%c0_3, %c0_4] : memref<1x6xf32, #tpu.memory_space<vmem>>, vector<1x6xf32>
    %4 = vector.broadcast %3 : vector<1x6xf32> to vector<16x6xf32>
    %5 = arith.addf %2, %4 : vector<16x6xf32>
    %c0_5 = arith.constant 0 : index
    %c0_6 = arith.constant 0 : index
    %6 = vector.load %arg3[%c0_5, %c0_6] : memref<16x6xf32, #tpu.memory_space<vmem>>, vector<16x6xf32>
    tpu.vector_store %arg3[%c0_5, %c0_6], %5 {strides = array<i32>} : memref<16x6xf32, #tpu.memory_space<vmem>>, vector<16x6xf32>,
    return
  }
}

module attributes {stable_mosaic.version = 11 : i64} {
  func.func @_cond_layer_kernel(%arg0: memref<2x5x32xf32, #tpu.memory_space<vmem>>, %arg1: memref<2x8x32xf32, #tpu.memory_space<vmem>>, %arg2: memref<2x8x8xf32, #tpu.memory_space<vmem>>, %arg3: memref<32x32xf32, #tpu.memory_space<vmem>>, %arg4: memref<1x32xf32, #tpu.memory_space<vmem>>, %arg5: memref<2x32x16xf32, #tpu.memory_space<vmem>>, %arg6: memref<2x32x16xf32, #tpu.memory_space<vmem>>, %arg7: memref<2x32x16xf32, #tpu.memory_space<vmem>>, %arg8: memref<2x1x16xf32, #tpu.memory_space<vmem>>, %arg9: memref<2x1x16xf32, #tpu.memory_space<vmem>>, %arg10: memref<2x1x16xf32, #tpu.memory_space<vmem>>, %arg11: memref<2x16x32xf32, #tpu.memory_space<vmem>>, %arg12: memref<1x32xf32, #tpu.memory_space<vmem>>, %arg13: memref<32x64xf32, #tpu.memory_space<vmem>>, %arg14: memref<1x64xf32, #tpu.memory_space<vmem>>, %arg15: memref<64x32xf32, #tpu.memory_space<vmem>>, %arg16: memref<1x32xf32, #tpu.memory_space<vmem>>, %arg17: memref<1x32xf32, #tpu.memory_space<vmem>>, %arg18: memref<1x32xf32, #tpu.memory_space<vmem>>, %arg19: memref<1x32xf32, #tpu.memory_space<vmem>>, %arg20: memref<1x32xf32, #tpu.memory_space<vmem>>, %arg21: memref<2x8x32xf32, #tpu.memory_space<vmem>>) attributes {dimension_semantics = [], scalar_prefetch = 0 : i64, scratch_operands = 0 : i64, tpu.core_type = #tpu.core_type<tc>} {
    %c0 = arith.constant 0 : index
    %c0_0 = arith.constant 0 : index
    %0 = vector.load %arg3[%c0, %c0_0] : memref<32x32xf32, #tpu.memory_space<vmem>>, vector<32x32xf32>
    %c0_1 = arith.constant 0 : index
    %c0_2 = arith.constant 0 : index
    %1 = vector.load %arg4[%c0_1, %c0_2] : memref<1x32xf32, #tpu.memory_space<vmem>>, vector<1x32xf32>
    %c0_3 = arith.constant 0 : index
    %c0_4 = arith.constant 0 : index
    %2 = vector.load %arg12[%c0_3, %c0_4] : memref<1x32xf32, #tpu.memory_space<vmem>>, vector<1x32xf32>
    %c0_5 = arith.constant 0 : index
    %c0_6 = arith.constant 0 : index
    %3 = vector.load %arg13[%c0_5, %c0_6] : memref<32x64xf32, #tpu.memory_space<vmem>>, vector<32x64xf32>
    %c0_7 = arith.constant 0 : index
    %c0_8 = arith.constant 0 : index
    %4 = vector.load %arg14[%c0_7, %c0_8] : memref<1x64xf32, #tpu.memory_space<vmem>>, vector<1x64xf32>
    %c0_9 = arith.constant 0 : index
    %c0_10 = arith.constant 0 : index
    %5 = vector.load %arg15[%c0_9, %c0_10] : memref<64x32xf32, #tpu.memory_space<vmem>>, vector<64x32xf32>
    %c0_11 = arith.constant 0 : index
    %c0_12 = arith.constant 0 : index
    %6 = vector.load %arg16[%c0_11, %c0_12] : memref<1x32xf32, #tpu.memory_space<vmem>>, vector<1x32xf32>
    %c0_13 = arith.constant 0 : index
    %c0_14 = arith.constant 0 : index
    %7 = vector.load %arg17[%c0_13, %c0_14] : memref<1x32xf32, #tpu.memory_space<vmem>>, vector<1x32xf32>
    %c0_15 = arith.constant 0 : index
    %c0_16 = arith.constant 0 : index
    %8 = vector.load %arg18[%c0_15, %c0_16] : memref<1x32xf32, #tpu.memory_space<vmem>>, vector<1x32xf32>
    %c0_17 = arith.constant 0 : index
    %c0_18 = arith.constant 0 : index
    %9 = vector.load %arg19[%c0_17, %c0_18] : memref<1x32xf32, #tpu.memory_space<vmem>>, vector<1x32xf32>
    %c0_19 = arith.constant 0 : index
    %c0_20 = arith.constant 0 : index
    %10 = vector.load %arg20[%c0_19, %c0_20] : memref<1x32xf32, #tpu.memory_space<vmem>>, vector<1x32xf32>
    %c0_21 = arith.constant 0 : index
    %c0_22 = arith.constant 0 : index
    %c0_23 = arith.constant 0 : index
    %11 = vector.load %arg1[%c0_21, %c0_22, %c0_23] : memref<2x8x32xf32, #tpu.memory_space<vmem>>, vector<1x8x32xf32>
    %12 = vector.shape_cast %11 : vector<1x8x32xf32> to vector<8x32xf32>
    %c0_24 = arith.constant 0 : index
    %c0_25 = arith.constant 0 : index
    %c0_26 = arith.constant 0 : index
    %13 = vector.load %arg0[%c0_24, %c0_25, %c0_26] : memref<2x5x32xf32, #tpu.memory_space<vmem>>, vector<1x5x32xf32>
    %14 = vector.shape_cast %13 : vector<1x5x32xf32> to vector<5x32xf32>
    %cst = arith.constant dense<0.000000e+00> : vector<5x32xf32>
    %15 = tpu.matmul %14, %0, %cst {dimension_numbers = #tpu.dot_dimension_numbers<[1], [0], [0], [1], [0, 0, 1, 1], [], []>} : vector<5x32xf32>, vector<32x32xf32>, vector<5x32xf32> -> vector<5x32xf32>
    %16 = vector.broadcast %1 : vector<1x32xf32> to vector<5x32xf32>
    %17 = arith.addf %15, %16 : vector<5x32xf32>
    %c0_27 = arith.constant 0 : index
    %c0_28 = arith.constant 0 : index
    %c0_29 = arith.constant 0 : index
    %18 = vector.load %arg2[%c0_27, %c0_28, %c0_29] : memref<2x8x8xf32, #tpu.memory_space<vmem>>, vector<1x8x8xf32>
    %19 = vector.shape_cast %18 : vector<1x8x8xf32> to vector<8x8xf32>
    %cst_30 = arith.constant 0.000000e+00 : f32
    %20 = vector.broadcast %cst_30 : f32 to vector<8x32xf32>
    %c0_31 = arith.constant 0 : index
    %c0_32 = arith.constant 0 : index
    %c0_33 = arith.constant 0 : index
    %21 = vector.load %arg5[%c0_31, %c0_32, %c0_33] : memref<2x32x16xf32, #tpu.memory_space<vmem>>, vector<1x32x16xf32>
    %22 = vector.shape_cast %21 : vector<1x32x16xf32> to vector<32x16xf32>
    %c0_34 = arith.constant 0 : index
    %c0_35 = arith.constant 0 : index
    %c0_36 = arith.constant 0 : index
    %23 = vector.load %arg6[%c0_34, %c0_35, %c0_36] : memref<2x32x16xf32, #tpu.memory_space<vmem>>, vector<1x32x16xf32>
    %24 = vector.shape_cast %23 : vector<1x32x16xf32> to vector<32x16xf32>
    %c0_37 = arith.constant 0 : index
    %c0_38 = arith.constant 0 : index
    %c0_39 = arith.constant 0 : index
    %25 = vector.load %arg7[%c0_37, %c0_38, %c0_39] : memref<2x32x16xf32, #tpu.memory_space<vmem>>, vector<1x32x16xf32>
    %26 = vector.shape_cast %25 : vector<1x32x16xf32> to vector<32x16xf32>
    %c0_40 = arith.constant 0 : index
    %c0_41 = arith.constant 0 : index
    %c0_42 = arith.constant 0 : index
    %27 = vector.load %arg8[%c0_40, %c0_41, %c0_42] : memref<2x1x16xf32, #tpu.memory_space<vmem>>, vector<1x1x16xf32>
    %28 = vector.shape_cast %27 : vector<1x1x16xf32> to vector<1x16xf32>
    %c0_43 = arith.constant 0 : index
    %c0_44 = arith.constant 0 : index
    %c0_45 = arith.constant 0 : index
    %29 = vector.load %arg9[%c0_43, %c0_44, %c0_45] : memref<2x1x16xf32, #tpu.memory_space<vmem>>, vector<1x1x16xf32>
    %30 = vector.shape_cast %29 : vector<1x1x16xf32> to vector<1x16xf32>
    %c0_46 = arith.constant 0 : index
    %c0_47 = arith.constant 0 : index
    %c0_48 = arith.constant 0 : index
    %31 = vector.load %arg10[%c0_46, %c0_47, %c0_48] : memref<2x1x16xf32, #tpu.memory_space<vmem>>, vector<1x1x16xf32>
    %32 = vector.shape_cast %31 : vector<1x1x16xf32> to vector<1x16xf32>
    %cst_49 = arith.constant dense<0.000000e+00> : vector<8x16xf32>
    %33 = tpu.matmul %12, %22, %cst_49 {dimension_numbers = #tpu.dot_dimension_numbers<[1], [0], [0], [1], [0, 0, 1, 1], [], []>} : vector<8x32xf32>, vector<32x16xf32>, vector<8x16xf32> -> vector<8x16xf32>
    %34 = vector.broadcast %28 : vector<1x16xf32> to vector<8x16xf32>
    %35 = arith.addf %33, %34 : vector<8x16xf32>
    %cst_50 = arith.constant 2.500000e-01 : f32
    %36 = vector.broadcast %cst_50 : f32 to vector<8x16xf32>
    %37 = arith.mulf %35, %36 : vector<8x16xf32>
    %cst_51 = arith.constant dense<0.000000e+00> : vector<5x16xf32>
    %38 = tpu.matmul %17, %24, %cst_51 {dimension_numbers = #tpu.dot_dimension_numbers<[1], [0], [0], [1], [0, 0, 1, 1], [], []>} : vector<5x32xf32>, vector<32x16xf32>, vector<5x16xf32> -> vector<5x16xf32>
    %39 = vector.broadcast %30 : vector<1x16xf32> to vector<5x16xf32>
    %40 = arith.addf %38, %39 : vector<5x16xf32>
    %cst_52 = arith.constant dense<0.000000e+00> : vector<8x5xf32>
    %41 = tpu.matmul %37, %40, %cst_52 {dimension_numbers = #tpu.dot_dimension_numbers<[1], [1], [0], [0], [0, 0, 1, 0], [], []>} : vector<8x16xf32>, vector<5x16xf32>, vector<8x5xf32> -> vector<8x5xf32>
    %cst_53 = arith.constant dense<0.000000e+00> : vector<8x16xf32>
    %42 = tpu.matmul %12, %24, %cst_53 {dimension_numbers = #tpu.dot_dimension_numbers<[1], [0], [0], [1], [0, 0, 1, 1], [], []>} : vector<8x32xf32>, vector<32x16xf32>, vector<8x16xf32> -> vector<8x16xf32>
    %43 = vector.broadcast %30 : vector<1x16xf32> to vector<8x16xf32>
    %44 = arith.addf %42, %43 : vector<8x16xf32>
    %cst_54 = arith.constant dense<0.000000e+00> : vector<8x8xf32>
    %45 = tpu.matmul %37, %44, %cst_54 {dimension_numbers = #tpu.dot_dimension_numbers<[1], [1], [0], [0], [0, 0, 1, 0], [], []>} : vector<8x16xf32>, vector<8x16xf32>, vector<8x8xf32> -> vector<8x8xf32>
    %46 = arith.addf %45, %19 : vector<8x8xf32>
    %cst_55 = arith.constant dense<0xFF800000> : vector<8xf32>
    %47 = vector.multi_reduction <maximumf>, %41, %cst_55 [1] : vector<8x5xf32> to vector<8xf32>
    %48 = vector.shape_cast %47 : vector<8xf32> to vector<8x1xf32>
    %cst_56 = arith.constant dense<0xFF800000> : vector<8xf32>
    %49 = vector.multi_reduction <maximumf>, %46, %cst_56 [1] : vector<8x8xf32> to vector<8xf32>
    %50 = vector.shape_cast %49 : vector<8xf32> to vector<8x1xf32>
    %51 = arith.maximumf %48, %50 : vector<8x1xf32>
    %52 = vector.broadcast %51 : vector<8x1xf32> to vector<8x5xf32>
    %53 = arith.subf %41, %52 : vector<8x5xf32>
    %54 = math.exp %53 : vector<8x5xf32>
    %55 = vector.broadcast %51 : vector<8x1xf32> to vector<8x8xf32>
    %56 = arith.subf %46, %55 : vector<8x8xf32>
    %57 = math.exp %56 : vector<8x8xf32>
    %cst_57 = arith.constant dense<0.000000e+00> : vector<8xf32>
    %58 = vector.multi_reduction <add>, %54, %cst_57 [1] : vector<8x5xf32> to vector<8xf32>
    %59 = vector.shape_cast %58 : vector<8xf32> to vector<8x1xf32>
    %cst_58 = arith.constant dense<0.000000e+00> : vector<8xf32>
    %60 = vector.multi_reduction <add>, %57, %cst_58 [1] : vector<8x8xf32> to vector<8xf32>
    %61 = vector.shape_cast %60 : vector<8xf32> to vector<8x1xf32>
    %62 = arith.addf %59, %61 : vector<8x1xf32>
    %cst_59 = arith.constant dense<0.000000e+00> : vector<5x16xf32>
    %63 = tpu.matmul %17, %26, %cst_59 {dimension_numbers = #tpu.dot_dimension_numbers<[1], [0], [0], [1], [0, 0, 1, 1], [], []>} : vector<5x32xf32>, vector<32x16xf32>, vector<5x16xf32> -> vector<5x16xf32>
    %64 = vector.broadcast %32 : vector<1x16xf32> to vector<5x16xf32>
    %65 = arith.addf %63, %64 : vector<5x16xf32>
    %cst_60 = arith.constant dense<0.000000e+00> : vector<8x16xf32>
    %66 = tpu.matmul %54, %65, %cst_60 {dimension_numbers = #tpu.dot_dimension_numbers<[1], [0], [0], [1], [0, 0, 1, 1], [], []>} : vector<8x5xf32>, vector<5x16xf32>, vector<8x16xf32> -> vector<8x16xf32>
    %cst_61 = arith.constant dense<0.000000e+00> : vector<8x16xf32>
    %67 = tpu.matmul %12, %26, %cst_61 {dimension_numbers = #tpu.dot_dimension_numbers<[1], [0], [0], [1], [0, 0, 1, 1], [], []>} : vector<8x32xf32>, vector<32x16xf32>, vector<8x16xf32> -> vector<8x16xf32>
    %68 = vector.broadcast %32 : vector<1x16xf32> to vector<8x16xf32>
    %69 = arith.addf %67, %68 : vector<8x16xf32>
    %cst_62 = arith.constant dense<0.000000e+00> : vector<8x16xf32>
    %70 = tpu.matmul %57, %69, %cst_62 {dimension_numbers = #tpu.dot_dimension_numbers<[1], [0], [0], [1], [0, 0, 1, 1], [], []>} : vector<8x8xf32>, vector<8x16xf32>, vector<8x16xf32> -> vector<8x16xf32>
    %71 = arith.addf %66, %70 : vector<8x16xf32>
    %72 = tpu.reciprocal %62 : vector<8x1xf32> -> vector<8x1xf32>
    %73 = vector.broadcast %72 : vector<8x1xf32> to vector<8x16xf32>
    %74 = arith.mulf %71, %73 : vector<8x16xf32>
    %c0_63 = arith.constant 0 : index
    %c0_64 = arith.constant 0 : index
    %c0_65 = arith.constant 0 : index
    %75 = vector.load %arg11[%c0_63, %c0_64, %c0_65] : memref<2x16x32xf32, #tpu.memory_space<vmem>>, vector<1x16x32xf32>
    %76 = vector.shape_cast %75 : vector<1x16x32xf32> to vector<16x32xf32>
    %cst_66 = arith.constant dense<0.000000e+00> : vector<8x32xf32>
    %77 = tpu.matmul %74, %76, %cst_66 {dimension_numbers = #tpu.dot_dimension_numbers<[1], [0], [0], [1], [0, 0, 1, 1], [], []>} : vector<8x16xf32>, vector<16x32xf32>, vector<8x32xf32> -> vector<8x32xf32>
    %78 = arith.addf %20, %77 : vector<8x32xf32>
    %c1 = arith.constant 1 : index
    %c0_67 = arith.constant 0 : index
    %c0_68 = arith.constant 0 : index
    %79 = vector.load %arg5[%c1, %c0_67, %c0_68] : memref<2x32x16xf32, #tpu.memory_space<vmem>>, vector<1x32x16xf32>
    %80 = vector.shape_cast %79 : vector<1x32x16xf32> to vector<32x16xf32>
    %c1_69 = arith.constant 1 : index
    %c0_70 = arith.constant 0 : index
    %c0_71 = arith.constant 0 : index
    %81 = vector.load %arg6[%c1_69, %c0_70, %c0_71] : memref<2x32x16xf32, #tpu.memory_space<vmem>>, vector<1x32x16xf32>
    %82 = vector.shape_cast %81 : vector<1x32x16xf32> to vector<32x16xf32>
    %c1_72 = arith.constant 1 : index
    %c0_73 = arith.constant 0 : index
    %c0_74 = arith.constant 0 : index
    %83 = vector.load %arg7[%c1_72, %c0_73, %c0_74] : memref<2x32x16xf32, #tpu.memory_space<vmem>>, vector<1x32x16xf32>
    %84 = vector.shape_cast %83 : vector<1x32x16xf32> to vector<32x16xf32>
    %c1_75 = arith.constant 1 : index
    %c0_76 = arith.constant 0 : index
    %c0_77 = arith.constant 0 : index
    %85 = vector.load %arg8[%c1_75, %c0_76, %c0_77] : memref<2x1x16xf32, #tpu.memory_space<vmem>>, vector<1x1x16xf32>
    %86 = vector.shape_cast %85 : vector<1x1x16xf32> to vector<1x16xf32>
    %c1_78 = arith.constant 1 : index
    %c0_79 = arith.constant 0 : index
    %c0_80 = arith.constant 0 : index
    %87 = vector.load %arg9[%c1_78, %c0_79, %c0_80] : memref<2x1x16xf32, #tpu.memory_space<vmem>>, vector<1x1x16xf32>
    %88 = vector.shape_cast %87 : vector<1x1x16xf32> to vector<1x16xf32>
    %c1_81 = arith.constant 1 : index
    %c0_82 = arith.constant 0 : index
    %c0_83 = arith.constant 0 : index
    %89 = vector.load %arg10[%c1_81, %c0_82, %c0_83] : memref<2x1x16xf32, #tpu.memory_space<vmem>>, vector<1x1x16xf32>
    %90 = vector.shape_cast %89 : vector<1x1x16xf32> to vector<1x16xf32>
    %cst_84 = arith.constant dense<0.000000e+00> : vector<8x16xf32>
    %91 = tpu.matmul %12, %80, %cst_84 {dimension_numbers = #tpu.dot_dimension_numbers<[1], [0], [0], [1], [0, 0, 1, 1], [], []>} : vector<8x32xf32>, vector<32x16xf32>, vector<8x16xf32> -> vector<8x16xf32>
    %92 = vector.broadcast %86 : vector<1x16xf32> to vector<8x16xf32>
    %93 = arith.addf %91, %92 : vector<8x16xf32>
    %cst_85 = arith.constant 2.500000e-01 : f32
    %94 = vector.broadcast %cst_85 : f32 to vector<8x16xf32>
    %95 = arith.mulf %93, %94 : vector<8x16xf32>
    %cst_86 = arith.constant dense<0.000000e+00> : vector<5x16xf32>
    %96 = tpu.matmul %17, %82, %cst_86 {dimension_numbers = #tpu.dot_dimension_numbers<[1], [0], [0], [1], [0, 0, 1, 1], [], []>} : vector<5x32xf32>, vector<32x16xf32>, vector<5x16xf32> -> vector<5x16xf32>
    %97 = vector.broadcast %88 : vector<1x16xf32> to vector<5x16xf32>
    %98 = arith.addf %96, %97 : vector<5x16xf32>
    %cst_87 = arith.constant dense<0.000000e+00> : vector<8x5xf32>
    %99 = tpu.matmul %95, %98, %cst_87 {dimension_numbers = #tpu.dot_dimension_numbers<[1], [1], [0], [0], [0, 0, 1, 0], [], []>} : vector<8x16xf32>, vector<5x16xf32>, vector<8x5xf32> -> vector<8x5xf32>
    %cst_88 = arith.constant dense<0.000000e+00> : vector<8x16xf32>
    %100 = tpu.matmul %12, %82, %cst_88 {dimension_numbers = #tpu.dot_dimension_numbers<[1], [0], [0], [1], [0, 0, 1, 1], [], []>} : vector<8x32xf32>, vector<32x16xf32>, vector<8x16xf32> -> vector<8x16xf32>
    %101 = vector.broadcast %88 : vector<1x16xf32> to vector<8x16xf32>
    %102 = arith.addf %100, %101 : vector<8x16xf32>
    %cst_89 = arith.constant dense<0.000000e+00> : vector<8x8xf32>
    %103 = tpu.matmul %95, %102, %cst_89 {dimension_numbers = #tpu.dot_dimension_numbers<[1], [1], [0], [0], [0, 0, 1, 0], [], []>} : vector<8x16xf32>, vector<8x16xf32>, vector<8x8xf32> -> vector<8x8xf32>
    %104 = arith.addf %103, %19 : vector<8x8xf32>
    %cst_90 = arith.constant dense<0xFF800000> : vector<8xf32>
    %105 = vector.multi_reduction <maximumf>, %99, %cst_90 [1] : vector<8x5xf32> to vector<8xf32>
    %106 = vector.shape_cast %105 : vector<8xf32> to vector<8x1xf32>
    %cst_91 = arith.constant dense<0xFF800000> : vector<8xf32>
    %107 = vector.multi_reduction <maximumf>, %104, %cst_91 [1] : vector<8x8xf32> to vector<8xf32>
    %108 = vector.shape_cast %107 : vector<8xf32> to vector<8x1xf32>
    %109 = arith.maximumf %106, %108 : vector<8x1xf32>
    %110 = vector.broadcast %109 : vector<8x1xf32> to vector<8x5xf32>
    %111 = arith.subf %99, %110 : vector<8x5xf32>
    %112 = math.exp %111 : vector<8x5xf32>
    %113 = vector.broadcast %109 : vector<8x1xf32> to vector<8x8xf32>
    %114 = arith.subf %104, %113 : vector<8x8xf32>
    %115 = math.exp %114 : vector<8x8xf32>
    %cst_92 = arith.constant dense<0.000000e+00> : vector<8xf32>
    %116 = vector.multi_reduction <add>, %112, %cst_92 [1] : vector<8x5xf32> to vector<8xf32>
    %117 = vector.shape_cast %116 : vector<8xf32> to vector<8x1xf32>
    %cst_93 = arith.constant dense<0.000000e+00> : vector<8xf32>
    %118 = vector.multi_reduction <add>, %115, %cst_93 [1] : vector<8x8xf32> to vector<8xf32>
    %119 = vector.shape_cast %118 : vector<8xf32> to vector<8x1xf32>
    %120 = arith.addf %117, %119 : vector<8x1xf32>
    %cst_94 = arith.constant dense<0.000000e+00> : vector<5x16xf32>
    %121 = tpu.matmul %17, %84, %cst_94 {dimension_numbers = #tpu.dot_dimension_numbers<[1], [0], [0], [1], [0, 0, 1, 1], [], []>} : vector<5x32xf32>, vector<32x16xf32>, vector<5x16xf32> -> vector<5x16xf32>
    %122 = vector.broadcast %90 : vector<1x16xf32> to vector<5x16xf32>
    %123 = arith.addf %121, %122 : vector<5x16xf32>
    %cst_95 = arith.constant dense<0.000000e+00> : vector<8x16xf32>
    %124 = tpu.matmul %112, %123, %cst_95 {dimension_numbers = #tpu.dot_dimension_numbers<[1], [0], [0], [1], [0, 0, 1, 1], [], []>} : vector<8x5xf32>, vector<5x16xf32>, vector<8x16xf32> -> vector<8x16xf32>
    %cst_96 = arith.constant dense<0.000000e+00> : vector<8x16xf32>
    %125 = tpu.matmul %12, %84, %cst_96 {dimension_numbers = #tpu.dot_dimension_numbers<[1], [0], [0], [1], [0, 0, 1, 1], [], []>} : vector<8x32xf32>, vector<32x16xf32>, vector<8x16xf32> -> vector<8x16xf32>
    %126 = vector.broadcast %90 : vector<1x16xf32> to vector<8x16xf32>
    %127 = arith.addf %125, %126 : vector<8x16xf32>
    %cst_97 = arith.constant dense<0.000000e+00> : vector<8x16xf32>
    %128 = tpu.matmul %115, %127, %cst_97 {dimension_numbers = #tpu.dot_dimension_numbers<[1], [0], [0], [1], [0, 0, 1, 1], [], []>} : vector<8x8xf32>, vector<8x16xf32>, vector<8x16xf32> -> vector<8x16xf32>
    %129 = arith.addf %124, %128 : vector<8x16xf32>
    %130 = tpu.reciprocal %120 : vector<8x1xf32> -> vector<8x1xf32>
    %131 = vector.broadcast %130 : vector<8x1xf32> to vector<8x16xf32>
    %132 = arith.mulf %129, %131 : vector<8x16xf32>
    %c1_98 = arith.constant 1 : index
    %c0_99 = arith.constant 0 : index
    %c0_100 = arith.constant 0 : index
    %133 = vector.load %arg11[%c1_98, %c0_99, %c0_100] : memref<2x16x32xf32, #tpu.memory_space<vmem>>, vector<1x16x32xf32>
    %134 = vector.shape_cast %133 : vector<1x16x32xf32> to vector<16x32xf32>
    %cst_101 = arith.constant dense<0.000000e+00> : vector<8x32xf32>
    %135 = tpu.matmul %132, %134, %cst_101 {dimension_numbers = #tpu.dot_dimension_numbers<[1], [0], [0], [1], [0, 0, 1, 1], [], []>} : vector<8x16xf32>, vector<16x32xf32>, vector<8x32xf32> -> vector<8x32xf32>
    %136 = arith.addf %78, %135 : vector<8x32xf32>
    %137 = arith.addf %12, %136 : vector<8x32xf32>
    %138 = vector.broadcast %2 : vector<1x32xf32> to vector<8x32xf32>
    %139 = arith.addf %137, %138 : vector<8x32xf32>
    %cst_102 = arith.constant dense<0.000000e+00> : vector<8xf32>
    %140 = vector.multi_reduction <add>, %139, %cst_102 [1] : vector<8x32xf32> to vector<8xf32>
    %141 = vector.shape_cast %140 : vector<8xf32> to vector<8x1xf32>
    %cst_103 = arith.constant 3.200000e+01 : f32
    %142 = vector.broadcast %cst_103 : f32 to vector<8x1xf32>
    %143 = arith.divf %141, %142 : vector<8x1xf32>
    %144 = vector.broadcast %143 : vector<8x1xf32> to vector<8x32xf32>
    %145 = arith.subf %139, %144 : vector<8x32xf32>
    %146 = arith.mulf %145, %145 : vector<8x32xf32>
    %cst_104 = arith.constant dense<0.000000e+00> : vector<8xf32>
    %147 = vector.multi_reduction <add>, %146, %cst_104 [1] : vector<8x32xf32> to vector<8xf32>
    %148 = vector.shape_cast %147 : vector<8xf32> to vector<8x1xf32>
    %cst_105 = arith.constant 3.200000e+01 : f32
    %149 = vector.broadcast %cst_105 : f32 to vector<8x1xf32>
    %150 = arith.divf %148, %149 : vector<8x1xf32>
    %cst_106 = arith.constant 9.99999974E-6 : f32
    %151 = vector.broadcast %cst_106 : f32 to vector<8x1xf32>
    %152 = arith.addf %150, %151 : vector<8x1xf32>
    %153 = math.rsqrt %152 : vector<8x1xf32>
    %154 = vector.broadcast %153 : vector<8x1xf32> to vector<8x32xf32>
    %155 = arith.mulf %145, %154 : vector<8x32xf32>
    %156 = vector.broadcast %7 : vector<1x32xf32> to vector<8x32xf32>
    %157 = arith.mulf %155, %156 : vector<8x32xf32>
    %158 = vector.broadcast %8 : vector<1x32xf32> to vector<8x32xf32>
    %159 = arith.addf %157, %158 : vector<8x32xf32>
    %cst_107 = arith.constant dense<0.000000e+00> : vector<8x64xf32>
    %160 = tpu.matmul %159, %3, %cst_107 {dimension_numbers = #tpu.dot_dimension_numbers<[1], [0], [0], [1], [0, 0, 1, 1], [], []>} : vector<8x32xf32>, vector<32x64xf32>, vector<8x64xf32> -> vector<8x64xf32>
    %161 = vector.broadcast %4 : vector<1x64xf32> to vector<8x64xf32>
    %162 = arith.addf %160, %161 : vector<8x64xf32>
    %cst_108 = arith.constant 5.000000e-01 : f32
    %163 = vector.broadcast %cst_108 : f32 to vector<8x64xf32>
    %164 = arith.mulf %163, %162 : vector<8x64xf32>
    %cst_109 = arith.constant 0.707106769 : f32
    %165 = vector.broadcast %cst_109 : f32 to vector<8x64xf32>
    %166 = arith.mulf %162, %165 : vector<8x64xf32>
    %167 = math.absf %166 : vector<8x64xf32>
    %cst_110 = arith.constant 0.327591091 : f32
    %168 = vector.broadcast %cst_110 : f32 to vector<8x64xf32>
    %169 = arith.mulf %168, %167 : vector<8x64xf32>
    %cst_111 = arith.constant 1.000000e+00 : f32
    %170 = vector.broadcast %cst_111 : f32 to vector<8x64xf32>
    %171 = arith.addf %170, %169 : vector<8x64xf32>
    %cst_112 = arith.constant 1.000000e+00 : f32
    %172 = vector.broadcast %cst_112 : f32 to vector<8x64xf32>
    %173 = arith.divf %172, %171 : vector<8x64xf32>
    %cst_113 = arith.constant 1.06140542 : f32
    %174 = vector.broadcast %cst_113 : f32 to vector<8x64xf32>
    %175 = arith.mulf %174, %173 : vector<8x64xf32>
    %cst_114 = arith.constant -1.45315206 : f32
    %176 = vector.broadcast %cst_114 : f32 to vector<8x64xf32>
    %177 = arith.addf %175, %176 : vector<8x64xf32>
    %178 = arith.mulf %177, %173 : vector<8x64xf32>
    %cst_115 = arith.constant 1.42141378 : f32
    %179 = vector.broadcast %cst_115 : f32 to vector<8x64xf32>
    %180 = arith.addf %178, %179 : vector<8x64xf32>
    %181 = arith.mulf %180, %173 : vector<8x64xf32>
    %cst_116 = arith.constant -0.284496725 : f32
    %182 = vector.broadcast %cst_116 : f32 to vector<8x64xf32>
    %183 = arith.addf %181, %182 : vector<8x64xf32>
    %184 = arith.mulf %183, %173 : vector<8x64xf32>
    %cst_117 = arith.constant 0.254829586 : f32
    %185 = vector.broadcast %cst_117 : f32 to vector<8x64xf32>
    %186 = arith.addf %184, %185 : vector<8x64xf32>
    %187 = arith.mulf %186, %173 : vector<8x64xf32>
    %cst_118 = arith.constant 0.000000e+00 : f32
    %188 = vector.broadcast %cst_118 : f32 to vector<8x64xf32>
    %189 = arith.subf %188, %167 : vector<8x64xf32>
    %190 = arith.mulf %189, %167 : vector<8x64xf32>
    %191 = math.exp %190 : vector<8x64xf32>
    %192 = arith.mulf %187, %191 : vector<8x64xf32>
    %cst_119 = arith.constant 1.000000e+00 : f32
    %193 = vector.broadcast %cst_119 : f32 to vector<8x64xf32>
    %194 = arith.subf %193, %192 : vector<8x64xf32>
    %cst_120 = arith.constant 0.000000e+00 : f32
    %195 = vector.broadcast %cst_120 : f32 to vector<8x64xf32>
    %196 = arith.cmpf olt, %166, %195 : vector<8x64xf32>
    %cst_121 = arith.constant 0.000000e+00 : f32
    %197 = vector.broadcast %cst_121 : f32 to vector<8x64xf32>
    %198 = arith.subf %197, %194 : vector<8x64xf32>
    %199 = arith.select %196, %198, %194 : vector<8x64xi1>, vector<8x64xf32>
    %cst_122 = arith.constant 1.000000e+00 : f32
    %200 = vector.broadcast %cst_122 : f32 to vector<8x64xf32>
    %201 = arith.addf %200, %199 : vector<8x64xf32>
    %202 = arith.mulf %164, %201 : vector<8x64xf32>
    %cst_123 = arith.constant dense<0.000000e+00> : vector<8x32xf32>
    %203 = tpu.matmul %202, %5, %cst_123 {dimension_numbers = #tpu.dot_dimension_numbers<[1], [0], [0], [1], [0, 0, 1, 1], [], []>} : vector<8x64xf32>, vector<64x32xf32>, vector<8x32xf32> -> vector<8x32xf32>
    %204 = vector.broadcast %6 : vector<1x32xf32> to vector<8x32xf32>
    %205 = arith.addf %203, %204 : vector<8x32xf32>
    %206 = arith.addf %159, %205 : vector<8x32xf32>
    %cst_124 = arith.constant dense<0.000000e+00> : vector<8xf32>
    %207 = vector.multi_reduction <add>, %206, %cst_124 [1] : vector<8x32xf32> to vector<8xf32>
    %208 = vector.shape_cast %207 : vector<8xf32> to vector<8x1xf32>
    %cst_125 = arith.constant 3.200000e+01 : f32
    %209 = vector.broadcast %cst_125 : f32 to vector<8x1xf32>
    %210 = arith.divf %208, %209 : vector<8x1xf32>
    %211 = vector.broadcast %210 : vector<8x1xf32> to vector<8x32xf32>
    %212 = arith.subf %206, %211 : vector<8x32xf32>
    %213 = arith.mulf %212, %212 : vector<8x32xf32>
    %cst_126 = arith.constant dense<0.000000e+00> : vector<8xf32>
    %214 = vector.multi_reduction <add>, %213, %cst_126 [1] : vector<8x32xf32> to vector<8xf32>
    %215 = vector.shape_cast %214 : vector<8xf32> to vector<8x1xf32>
    %cst_127 = arith.constant 3.200000e+01 : f32
    %216 = vector.broadcast %cst_127 : f32 to vector<8x1xf32>
    %217 = arith.divf %215, %216 : vector<8x1xf32>
    %cst_128 = arith.constant 9.99999974E-6 : f32
    %218 = vector.broadcast %cst_128 : f32 to vector<8x1xf32>
    %219 = arith.addf %217, %218 : vector<8x1xf32>
    %220 = math.rsqrt %219 : vector<8x1xf32>
    %221 = vector.broadcast %220 : vector<8x1xf32> to vector<8x32xf32>
    %222 = arith.mulf %212, %221 : vector<8x32xf32>
    %223 = vector.broadcast %9 : vector<1x32xf32> to vector<8x32xf32>
    %224 = arith.mulf %222, %223 : vector<8x32xf32>
    %225 = vector.broadcast %10 : vector<1x32xf32> to vector<8x32xf32>
    %226 = arith.addf %224, %225 : vector<8x32xf32>
    %c0_129 = arith.constant 0 : index
    %c0_130 = arith.constant 0 : index
    %c0_131 = arith.constant 0 : index
    %227 = vector.load %arg21[%c0_129, %c0_130, %c0_131] : memref<2x8x32xf32, #tpu.memory_space<vmem>>, vector<1x8x32xf32>
    %228 = vector.shape_cast %227 : vector<1x8x32xf32> to vector<8x32xf32>
    %229 = vector.shape_cast %226 : vector<8x32xf32> to vector<1x8x32xf32>
    tpu.vector_store %arg21[%c0_129, %c0_130, %c0_131], %229 {strides = array<i32>} : memref<2x8x32xf32, #tpu.memory_space<vmem>>, vector<1x8x32xf32>,
    %c1_132 = arith.constant 1 : index
    %c0_133 = arith.constant 0 : index
    %c0_134 = arith.constant 0 : index
    %230 = vector.load %arg1[%c1_132, %c0_133, %c0_134] : memref<2x8x32xf32, #tpu.memory_space<vmem>>, vector<1x8x32xf32>
    %231 = vector.shape_cast %230 : vector<1x8x32xf32> to vector<8x32xf32>
    %c1_135 = arith.constant 1 : index
    %c0_136 = arith.constant 0 : index
    %c0_137 = arith.constant 0 : index
    %232 = vector.load %arg0[%c1_135, %c0_136, %c0_137] : memref<2x5x32xf32, #tpu.memory_space<vmem>>, vector<1x5x32xf32>
    %233 = vector.shape_cast %232 : vector<1x5x32xf32> to vector<5x32xf32>
    %cst_138 = arith.constant dense<0.000000e+00> : vector<5x32xf32>
    %234 = tpu.matmul %233, %0, %cst_138 {dimension_numbers = #tpu.dot_dimension_numbers<[1], [0], [0], [1], [0, 0, 1, 1], [], []>} : vector<5x32xf32>, vector<32x32xf32>, vector<5x32xf32> -> vector<5x32xf32>
    %235 = vector.broadcast %1 : vector<1x32xf32> to vector<5x32xf32>
    %236 = arith.addf %234, %235 : vector<5x32xf32>
    %c1_139 = arith.constant 1 : index
    %c0_140 = arith.constant 0 : index
    %c0_141 = arith.constant 0 : index
    %237 = vector.load %arg2[%c1_139, %c0_140, %c0_141] : memref<2x8x8xf32, #tpu.memory_space<vmem>>, vector<1x8x8xf32>
    %238 = vector.shape_cast %237 : vector<1x8x8xf32> to vector<8x8xf32>
    %cst_142 = arith.constant 0.000000e+00 : f32
    %239 = vector.broadcast %cst_142 : f32 to vector<8x32xf32>
    %c0_143 = arith.constant 0 : index
    %c0_144 = arith.constant 0 : index
    %c0_145 = arith.constant 0 : index
    %240 = vector.load %arg5[%c0_143, %c0_144, %c0_145] : memref<2x32x16xf32, #tpu.memory_space<vmem>>, vector<1x32x16xf32>
    %241 = vector.shape_cast %240 : vector<1x32x16xf32> to vector<32x16xf32>
    %c0_146 = arith.constant 0 : index
    %c0_147 = arith.constant 0 : index
    %c0_148 = arith.constant 0 : index
    %242 = vector.load %arg6[%c0_146, %c0_147, %c0_148] : memref<2x32x16xf32, #tpu.memory_space<vmem>>, vector<1x32x16xf32>
    %243 = vector.shape_cast %242 : vector<1x32x16xf32> to vector<32x16xf32>
    %c0_149 = arith.constant 0 : index
    %c0_150 = arith.constant 0 : index
    %c0_151 = arith.constant 0 : index
    %244 = vector.load %arg7[%c0_149, %c0_150, %c0_151] : memref<2x32x16xf32, #tpu.memory_space<vmem>>, vector<1x32x16xf32>
    %245 = vector.shape_cast %244 : vector<1x32x16xf32> to vector<32x16xf32>
    %c0_152 = arith.constant 0 : index
    %c0_153 = arith.constant 0 : index
    %c0_154 = arith.constant 0 : index
    %246 = vector.load %arg8[%c0_152, %c0_153, %c0_154] : memref<2x1x16xf32, #tpu.memory_space<vmem>>, vector<1x1x16xf32>
    %247 = vector.shape_cast %246 : vector<1x1x16xf32> to vector<1x16xf32>
    %c0_155 = arith.constant 0 : index
    %c0_156 = arith.constant 0 : index
    %c0_157 = arith.constant 0 : index
    %248 = vector.load %arg9[%c0_155, %c0_156, %c0_157] : memref<2x1x16xf32, #tpu.memory_space<vmem>>, vector<1x1x16xf32>
    %249 = vector.shape_cast %248 : vector<1x1x16xf32> to vector<1x16xf32>
    %c0_158 = arith.constant 0 : index
    %c0_159 = arith.constant 0 : index
    %c0_160 = arith.constant 0 : index
    %250 = vector.load %arg10[%c0_158, %c0_159, %c0_160] : memref<2x1x16xf32, #tpu.memory_space<vmem>>, vector<1x1x16xf32>
    %251 = vector.shape_cast %250 : vector<1x1x16xf32> to vector<1x16xf32>
    %cst_161 = arith.constant dense<0.000000e+00> : vector<8x16xf32>
    %252 = tpu.matmul %231, %241, %cst_161 {dimension_numbers = #tpu.dot_dimension_numbers<[1], [0], [0], [1], [0, 0, 1, 1], [], []>} : vector<8x32xf32>, vector<32x16xf32>, vector<8x16xf32> -> vector<8x16xf32>
    %253 = vector.broadcast %247 : vector<1x16xf32> to vector<8x16xf32>
    %254 = arith.addf %252, %253 : vector<8x16xf32>
    %cst_162 = arith.constant 2.500000e-01 : f32
    %255 = vector.broadcast %cst_162 : f32 to vector<8x16xf32>
    %256 = arith.mulf %254, %255 : vector<8x16xf32>
    %cst_163 = arith.constant dense<0.000000e+00> : vector<5x16xf32>
    %257 = tpu.matmul %236, %243, %cst_163 {dimension_numbers = #tpu.dot_dimension_numbers<[1], [0], [0], [1], [0, 0, 1, 1], [], []>} : vector<5x32xf32>, vector<32x16xf32>, vector<5x16xf32> -> vector<5x16xf32>
    %258 = vector.broadcast %249 : vector<1x16xf32> to vector<5x16xf32>
    %259 = arith.addf %257, %258 : vector<5x16xf32>
    %cst_164 = arith.constant dense<0.000000e+00> : vector<8x5xf32>
    %260 = tpu.matmul %256, %259, %cst_164 {dimension_numbers = #tpu.dot_dimension_numbers<[1], [1], [0], [0], [0, 0, 1, 0], [], []>} : vector<8x16xf32>, vector<5x16xf32>, vector<8x5xf32> -> vector<8x5xf32>
    %cst_165 = arith.constant dense<0.000000e+00> : vector<8x16xf32>
    %261 = tpu.matmul %231, %243, %cst_165 {dimension_numbers = #tpu.dot_dimension_numbers<[1], [0], [0], [1], [0, 0, 1, 1], [], []>} : vector<8x32xf32>, vector<32x16xf32>, vector<8x16xf32> -> vector<8x16xf32>
    %262 = vector.broadcast %249 : vector<1x16xf32> to vector<8x16xf32>
    %263 = arith.addf %261, %262 : vector<8x16xf32>
    %cst_166 = arith.constant dense<0.000000e+00> : vector<8x8xf32>
    %264 = tpu.matmul %256, %263, %cst_166 {dimension_numbers = #tpu.dot_dimension_numbers<[1], [1], [0], [0], [0, 0, 1, 0], [], []>} : vector<8x16xf32>, vector<8x16xf32>, vector<8x8xf32> -> vector<8x8xf32>
    %265 = arith.addf %264, %238 : vector<8x8xf32>
    %cst_167 = arith.constant dense<0xFF800000> : vector<8xf32>
    %266 = vector.multi_reduction <maximumf>, %260, %cst_167 [1] : vector<8x5xf32> to vector<8xf32>
    %267 = vector.shape_cast %266 : vector<8xf32> to vector<8x1xf32>
    %cst_168 = arith.constant dense<0xFF800000> : vector<8xf32>
    %268 = vector.multi_reduction <maximumf>, %265, %cst_168 [1] : vector<8x8xf32> to vector<8xf32>
    %269 = vector.shape_cast %268 : vector<8xf32> to vector<8x1xf32>
    %270 = arith.maximumf %267, %269 : vector<8x1xf32>
    %271 = vector.broadcast %270 : vector<8x1xf32> to vector<8x5xf32>
    %272 = arith.subf %260, %271 : vector<8x5xf32>
    %273 = math.exp %272 : vector<8x5xf32>
    %274 = vector.broadcast %270 : vector<8x1xf32> to vector<8x8xf32>
    %275 = arith.subf %265, %274 : vector<8x8xf32>
    %276 = math.exp %275 : vector<8x8xf32>
    %cst_169 = arith.constant dense<0.000000e+00> : vector<8xf32>
    %277 = vector.multi_reduction <add>, %273, %cst_169 [1] : vector<8x5xf32> to vector<8xf32>
    %278 = vector.shape_cast %277 : vector<8xf32> to vector<8x1xf32>
    %cst_170 = arith.constant dense<0.000000e+00> : vector<8xf32>
    %279 = vector.multi_reduction <add>, %276, %cst_170 [1] : vector<8x8xf32> to vector<8xf32>
    %280 = vector.shape_cast %279 : vector<8xf32> to vector<8x1xf32>
    %281 = arith.addf %278, %280 : vector<8x1xf32>
    %cst_171 = arith.constant dense<0.000000e+00> : vector<5x16xf32>
    %282 = tpu.matmul %236, %245, %cst_171 {dimension_numbers = #tpu.dot_dimension_numbers<[1], [0], [0], [1], [0, 0, 1, 1], [], []>} : vector<5x32xf32>, vector<32x16xf32>, vector<5x16xf32> -> vector<5x16xf32>
    %283 = vector.broadcast %251 : vector<1x16xf32> to vector<5x16xf32>
    %284 = arith.addf %282, %283 : vector<5x16xf32>
    %cst_172 = arith.constant dense<0.000000e+00> : vector<8x16xf32>
    %285 = tpu.matmul %273, %284, %cst_172 {dimension_numbers = #tpu.dot_dimension_numbers<[1], [0], [0], [1], [0, 0, 1, 1], [], []>} : vector<8x5xf32>, vector<5x16xf32>, vector<8x16xf32> -> vector<8x16xf32>
    %cst_173 = arith.constant dense<0.000000e+00> : vector<8x16xf32>
    %286 = tpu.matmul %231, %245, %cst_173 {dimension_numbers = #tpu.dot_dimension_numbers<[1], [0], [0], [1], [0, 0, 1, 1], [], []>} : vector<8x32xf32>, vector<32x16xf32>, vector<8x16xf32> -> vector<8x16xf32>
    %287 = vector.broadcast %251 : vector<1x16xf32> to vector<8x16xf32>
    %288 = arith.addf %286, %287 : vector<8x16xf32>
    %cst_174 = arith.constant dense<0.000000e+00> : vector<8x16xf32>
    %289 = tpu.matmul %276, %288, %cst_174 {dimension_numbers = #tpu.dot_dimension_numbers<[1], [0], [0], [1], [0, 0, 1, 1], [], []>} : vector<8x8xf32>, vector<8x16xf32>, vector<8x16xf32> -> vector<8x16xf32>
    %290 = arith.addf %285, %289 : vector<8x16xf32>
    %291 = tpu.reciprocal %281 : vector<8x1xf32> -> vector<8x1xf32>
    %292 = vector.broadcast %291 : vector<8x1xf32> to vector<8x16xf32>
    %293 = arith.mulf %290, %292 : vector<8x16xf32>
    %c0_175 = arith.constant 0 : index
    %c0_176 = arith.constant 0 : index
    %c0_177 = arith.constant 0 : index
    %294 = vector.load %arg11[%c0_175, %c0_176, %c0_177] : memref<2x16x32xf32, #tpu.memory_space<vmem>>, vector<1x16x32xf32>
    %295 = vector.shape_cast %294 : vector<1x16x32xf32> to vector<16x32xf32>
    %cst_178 = arith.constant dense<0.000000e+00> : vector<8x32xf32>
    %296 = tpu.matmul %293, %295, %cst_178 {dimension_numbers = #tpu.dot_dimension_numbers<[1], [0], [0], [1], [0, 0, 1, 1], [], []>} : vector<8x16xf32>, vector<16x32xf32>, vector<8x32xf32> -> vector<8x32xf32>
    %297 = arith.addf %239, %296 : vector<8x32xf32>
    %c1_179 = arith.constant 1 : index
    %c0_180 = arith.constant 0 : index
    %c0_181 = arith.constant 0 : index
    %298 = vector.load %arg5[%c1_179, %c0_180, %c0_181] : memref<2x32x16xf32, #tpu.memory_space<vmem>>, vector<1x32x16xf32>
    %299 = vector.shape_cast %298 : vector<1x32x16xf32> to vector<32x16xf32>
    %c1_182 = arith.constant 1 : index
    %c0_183 = arith.constant 0 : index
    %c0_184 = arith.constant 0 : index
    %300 = vector.load %arg6[%c1_182, %c0_183, %c0_184] : memref<2x32x16xf32, #tpu.memory_space<vmem>>, vector<1x32x16xf32>
    %301 = vector.shape_cast %300 : vector<1x32x16xf32> to vector<32x16xf32>
    %c1_185 = arith.constant 1 : index
    %c0_186 = arith.constant 0 : index
    %c0_187 = arith.constant 0 : index
    %302 = vector.load %arg7[%c1_185, %c0_186, %c0_187] : memref<2x32x16xf32, #tpu.memory_space<vmem>>, vector<1x32x16xf32>
    %303 = vector.shape_cast %302 : vector<1x32x16xf32> to vector<32x16xf32>
    %c1_188 = arith.constant 1 : index
    %c0_189 = arith.constant 0 : index
    %c0_190 = arith.constant 0 : index
    %304 = vector.load %arg8[%c1_188, %c0_189, %c0_190] : memref<2x1x16xf32, #tpu.memory_space<vmem>>, vector<1x1x16xf32>
    %305 = vector.shape_cast %304 : vector<1x1x16xf32> to vector<1x16xf32>
    %c1_191 = arith.constant 1 : index
    %c0_192 = arith.constant 0 : index
    %c0_193 = arith.constant 0 : index
    %306 = vector.load %arg9[%c1_191, %c0_192, %c0_193] : memref<2x1x16xf32, #tpu.memory_space<vmem>>, vector<1x1x16xf32>
    %307 = vector.shape_cast %306 : vector<1x1x16xf32> to vector<1x16xf32>
    %c1_194 = arith.constant 1 : index
    %c0_195 = arith.constant 0 : index
    %c0_196 = arith.constant 0 : index
    %308 = vector.load %arg10[%c1_194, %c0_195, %c0_196] : memref<2x1x16xf32, #tpu.memory_space<vmem>>, vector<1x1x16xf32>
    %309 = vector.shape_cast %308 : vector<1x1x16xf32> to vector<1x16xf32>
    %cst_197 = arith.constant dense<0.000000e+00> : vector<8x16xf32>
    %310 = tpu.matmul %231, %299, %cst_197 {dimension_numbers = #tpu.dot_dimension_numbers<[1], [0], [0], [1], [0, 0, 1, 1], [], []>} : vector<8x32xf32>, vector<32x16xf32>, vector<8x16xf32> -> vector<8x16xf32>
    %311 = vector.broadcast %305 : vector<1x16xf32> to vector<8x16xf32>
    %312 = arith.addf %310, %311 : vector<8x16xf32>
    %cst_198 = arith.constant 2.500000e-01 : f32
    %313 = vector.broadcast %cst_198 : f32 to vector<8x16xf32>
    %314 = arith.mulf %312, %313 : vector<8x16xf32>
    %cst_199 = arith.constant dense<0.000000e+00> : vector<5x16xf32>
    %315 = tpu.matmul %236, %301, %cst_199 {dimension_numbers = #tpu.dot_dimension_numbers<[1], [0], [0], [1], [0, 0, 1, 1], [], []>} : vector<5x32xf32>, vector<32x16xf32>, vector<5x16xf32> -> vector<5x16xf32>
    %316 = vector.broadcast %307 : vector<1x16xf32> to vector<5x16xf32>
    %317 = arith.addf %315, %316 : vector<5x16xf32>
    %cst_200 = arith.constant dense<0.000000e+00> : vector<8x5xf32>
    %318 = tpu.matmul %314, %317, %cst_200 {dimension_numbers = #tpu.dot_dimension_numbers<[1], [1], [0], [0], [0, 0, 1, 0], [], []>} : vector<8x16xf32>, vector<5x16xf32>, vector<8x5xf32> -> vector<8x5xf32>
    %cst_201 = arith.constant dense<0.000000e+00> : vector<8x16xf32>
    %319 = tpu.matmul %231, %301, %cst_201 {dimension_numbers = #tpu.dot_dimension_numbers<[1], [0], [0], [1], [0, 0, 1, 1], [], []>} : vector<8x32xf32>, vector<32x16xf32>, vector<8x16xf32> -> vector<8x16xf32>
    %320 = vector.broadcast %307 : vector<1x16xf32> to vector<8x16xf32>
    %321 = arith.addf %319, %320 : vector<8x16xf32>
    %cst_202 = arith.constant dense<0.000000e+00> : vector<8x8xf32>
    %322 = tpu.matmul %314, %321, %cst_202 {dimension_numbers = #tpu.dot_dimension_numbers<[1], [1], [0], [0], [0, 0, 1, 0], [], []>} : vector<8x16xf32>, vector<8x16xf32>, vector<8x8xf32> -> vector<8x8xf32>
    %323 = arith.addf %322, %238 : vector<8x8xf32>
    %cst_203 = arith.constant dense<0xFF800000> : vector<8xf32>
    %324 = vector.multi_reduction <maximumf>, %318, %cst_203 [1] : vector<8x5xf32> to vector<8xf32>
    %325 = vector.shape_cast %324 : vector<8xf32> to vector<8x1xf32>
    %cst_204 = arith.constant dense<0xFF800000> : vector<8xf32>
    %326 = vector.multi_reduction <maximumf>, %323, %cst_204 [1] : vector<8x8xf32> to vector<8xf32>
    %327 = vector.shape_cast %326 : vector<8xf32> to vector<8x1xf32>
    %328 = arith.maximumf %325, %327 : vector<8x1xf32>
    %329 = vector.broadcast %328 : vector<8x1xf32> to vector<8x5xf32>
    %330 = arith.subf %318, %329 : vector<8x5xf32>
    %331 = math.exp %330 : vector<8x5xf32>
    %332 = vector.broadcast %328 : vector<8x1xf32> to vector<8x8xf32>
    %333 = arith.subf %323, %332 : vector<8x8xf32>
    %334 = math.exp %333 : vector<8x8xf32>
    %cst_205 = arith.constant dense<0.000000e+00> : vector<8xf32>
    %335 = vector.multi_reduction <add>, %331, %cst_205 [1] : vector<8x5xf32> to vector<8xf32>
    %336 = vector.shape_cast %335 : vector<8xf32> to vector<8x1xf32>
    %cst_206 = arith.constant dense<0.000000e+00> : vector<8xf32>
    %337 = vector.multi_reduction <add>, %334, %cst_206 [1] : vector<8x8xf32> to vector<8xf32>
    %338 = vector.shape_cast %337 : vector<8xf32> to vector<8x1xf32>
    %339 = arith.addf %336, %338 : vector<8x1xf32>
    %cst_207 = arith.constant dense<0.000000e+00> : vector<5x16xf32>
    %340 = tpu.matmul %236, %303, %cst_207 {dimension_numbers = #tpu.dot_dimension_numbers<[1], [0], [0], [1], [0, 0, 1, 1], [], []>} : vector<5x32xf32>, vector<32x16xf32>, vector<5x16xf32> -> vector<5x16xf32>
    %341 = vector.broadcast %309 : vector<1x16xf32> to vector<5x16xf32>
    %342 = arith.addf %340, %341 : vector<5x16xf32>
    %cst_208 = arith.constant dense<0.000000e+00> : vector<8x16xf32>
    %343 = tpu.matmul %331, %342, %cst_208 {dimension_numbers = #tpu.dot_dimension_numbers<[1], [0], [0], [1], [0, 0, 1, 1], [], []>} : vector<8x5xf32>, vector<5x16xf32>, vector<8x16xf32> -> vector<8x16xf32>
    %cst_209 = arith.constant dense<0.000000e+00> : vector<8x16xf32>
    %344 = tpu.matmul %231, %303, %cst_209 {dimension_numbers = #tpu.dot_dimension_numbers<[1], [0], [0], [1], [0, 0, 1, 1], [], []>} : vector<8x32xf32>, vector<32x16xf32>, vector<8x16xf32> -> vector<8x16xf32>
    %345 = vector.broadcast %309 : vector<1x16xf32> to vector<8x16xf32>
    %346 = arith.addf %344, %345 : vector<8x16xf32>
    %cst_210 = arith.constant dense<0.000000e+00> : vector<8x16xf32>
    %347 = tpu.matmul %334, %346, %cst_210 {dimension_numbers = #tpu.dot_dimension_numbers<[1], [0], [0], [1], [0, 0, 1, 1], [], []>} : vector<8x8xf32>, vector<8x16xf32>, vector<8x16xf32> -> vector<8x16xf32>
    %348 = arith.addf %343, %347 : vector<8x16xf32>
    %349 = tpu.reciprocal %339 : vector<8x1xf32> -> vector<8x1xf32>
    %350 = vector.broadcast %349 : vector<8x1xf32> to vector<8x16xf32>
    %351 = arith.mulf %348, %350 : vector<8x16xf32>
    %c1_211 = arith.constant 1 : index
    %c0_212 = arith.constant 0 : index
    %c0_213 = arith.constant 0 : index
    %352 = vector.load %arg11[%c1_211, %c0_212, %c0_213] : memref<2x16x32xf32, #tpu.memory_space<vmem>>, vector<1x16x32xf32>
    %353 = vector.shape_cast %352 : vector<1x16x32xf32> to vector<16x32xf32>
    %cst_214 = arith.constant dense<0.000000e+00> : vector<8x32xf32>
    %354 = tpu.matmul %351, %353, %cst_214 {dimension_numbers = #tpu.dot_dimension_numbers<[1], [0], [0], [1], [0, 0, 1, 1], [], []>} : vector<8x16xf32>, vector<16x32xf32>, vector<8x32xf32> -> vector<8x32xf32>
    %355 = arith.addf %297, %354 : vector<8x32xf32>
    %356 = arith.addf %231, %355 : vector<8x32xf32>
    %357 = vector.broadcast %2 : vector<1x32xf32> to vector<8x32xf32>
    %358 = arith.addf %356, %357 : vector<8x32xf32>
    %cst_215 = arith.constant dense<0.000000e+00> : vector<8xf32>
    %359 = vector.multi_reduction <add>, %358, %cst_215 [1] : vector<8x32xf32> to vector<8xf32>
    %360 = vector.shape_cast %359 : vector<8xf32> to vector<8x1xf32>
    %cst_216 = arith.constant 3.200000e+01 : f32
    %361 = vector.broadcast %cst_216 : f32 to vector<8x1xf32>
    %362 = arith.divf %360, %361 : vector<8x1xf32>
    %363 = vector.broadcast %362 : vector<8x1xf32> to vector<8x32xf32>
    %364 = arith.subf %358, %363 : vector<8x32xf32>
    %365 = arith.mulf %364, %364 : vector<8x32xf32>
    %cst_217 = arith.constant dense<0.000000e+00> : vector<8xf32>
    %366 = vector.multi_reduction <add>, %365, %cst_217 [1] : vector<8x32xf32> to vector<8xf32>
    %367 = vector.shape_cast %366 : vector<8xf32> to vector<8x1xf32>
    %cst_218 = arith.constant 3.200000e+01 : f32
    %368 = vector.broadcast %cst_218 : f32 to vector<8x1xf32>
    %369 = arith.divf %367, %368 : vector<8x1xf32>
    %cst_219 = arith.constant 9.99999974E-6 : f32
    %370 = vector.broadcast %cst_219 : f32 to vector<8x1xf32>
    %371 = arith.addf %369, %370 : vector<8x1xf32>
    %372 = math.rsqrt %371 : vector<8x1xf32>
    %373 = vector.broadcast %372 : vector<8x1xf32> to vector<8x32xf32>
    %374 = arith.mulf %364, %373 : vector<8x32xf32>
    %375 = vector.broadcast %7 : vector<1x32xf32> to vector<8x32xf32>
    %376 = arith.mulf %374, %375 : vector<8x32xf32>
    %377 = vector.broadcast %8 : vector<1x32xf32> to vector<8x32xf32>
    %378 = arith.addf %376, %377 : vector<8x32xf32>
    %cst_220 = arith.constant dense<0.000000e+00> : vector<8x64xf32>
    %379 = tpu.matmul %378, %3, %cst_220 {dimension_numbers = #tpu.dot_dimension_numbers<[1], [0], [0], [1], [0, 0, 1, 1], [], []>} : vector<8x32xf32>, vector<32x64xf32>, vector<8x64xf32> -> vector<8x64xf32>
    %380 = vector.broadcast %4 : vector<1x64xf32> to vector<8x64xf32>
    %381 = arith.addf %379, %380 : vector<8x64xf32>
    %cst_221 = arith.constant 5.000000e-01 : f32
    %382 = vector.broadcast %cst_221 : f32 to vector<8x64xf32>
    %383 = arith.mulf %382, %381 : vector<8x64xf32>
    %cst_222 = arith.constant 0.707106769 : f32
    %384 = vector.broadcast %cst_222 : f32 to vector<8x64xf32>
    %385 = arith.mulf %381, %384 : vector<8x64xf32>
    %386 = math.absf %385 : vector<8x64xf32>
    %cst_223 = arith.constant 0.327591091 : f32
    %387 = vector.broadcast %cst_223 : f32 to vector<8x64xf32>
    %388 = arith.mulf %387, %386 : vector<8x64xf32>
    %cst_224 = arith.constant 1.000000e+00 : f32
    %389 = vector.broadcast %cst_224 : f32 to vector<8x64xf32>
    %390 = arith.addf %389, %388 : vector<8x64xf32>
    %cst_225 = arith.constant 1.000000e+00 : f32
    %391 = vector.broadcast %cst_225 : f32 to vector<8x64xf32>
    %392 = arith.divf %391, %390 : vector<8x64xf32>
    %cst_226 = arith.constant 1.06140542 : f32
    %393 = vector.broadcast %cst_226 : f32 to vector<8x64xf32>
    %394 = arith.mulf %393, %392 : vector<8x64xf32>
    %cst_227 = arith.constant -1.45315206 : f32
    %395 = vector.broadcast %cst_227 : f32 to vector<8x64xf32>
    %396 = arith.addf %394, %395 : vector<8x64xf32>
    %397 = arith.mulf %396, %392 : vector<8x64xf32>
    %cst_228 = arith.constant 1.42141378 : f32
    %398 = vector.broadcast %cst_228 : f32 to vector<8x64xf32>
    %399 = arith.addf %397, %398 : vector<8x64xf32>
    %400 = arith.mulf %399, %392 : vector<8x64xf32>
    %cst_229 = arith.constant -0.284496725 : f32
    %401 = vector.broadcast %cst_229 : f32 to vector<8x64xf32>
    %402 = arith.addf %400, %401 : vector<8x64xf32>
    %403 = arith.mulf %402, %392 : vector<8x64xf32>
    %cst_230 = arith.constant 0.254829586 : f32
    %404 = vector.broadcast %cst_230 : f32 to vector<8x64xf32>
    %405 = arith.addf %403, %404 : vector<8x64xf32>
    %406 = arith.mulf %405, %392 : vector<8x64xf32>
    %cst_231 = arith.constant 0.000000e+00 : f32
    %407 = vector.broadcast %cst_231 : f32 to vector<8x64xf32>
    %408 = arith.subf %407, %386 : vector<8x64xf32>
    %409 = arith.mulf %408, %386 : vector<8x64xf32>
    %410 = math.exp %409 : vector<8x64xf32>
    %411 = arith.mulf %406, %410 : vector<8x64xf32>
    %cst_232 = arith.constant 1.000000e+00 : f32
    %412 = vector.broadcast %cst_232 : f32 to vector<8x64xf32>
    %413 = arith.subf %412, %411 : vector<8x64xf32>
    %cst_233 = arith.constant 0.000000e+00 : f32
    %414 = vector.broadcast %cst_233 : f32 to vector<8x64xf32>
    %415 = arith.cmpf olt, %385, %414 : vector<8x64xf32>
    %cst_234 = arith.constant 0.000000e+00 : f32
    %416 = vector.broadcast %cst_234 : f32 to vector<8x64xf32>
    %417 = arith.subf %416, %413 : vector<8x64xf32>
    %418 = arith.select %415, %417, %413 : vector<8x64xi1>, vector<8x64xf32>
    %cst_235 = arith.constant 1.000000e+00 : f32
    %419 = vector.broadcast %cst_235 : f32 to vector<8x64xf32>
    %420 = arith.addf %419, %418 : vector<8x64xf32>
    %421 = arith.mulf %383, %420 : vector<8x64xf32>
    %cst_236 = arith.constant dense<0.000000e+00> : vector<8x32xf32>
    %422 = tpu.matmul %421, %5, %cst_236 {dimension_numbers = #tpu.dot_dimension_numbers<[1], [0], [0], [1], [0, 0, 1, 1], [], []>} : vector<8x64xf32>, vector<64x32xf32>, vector<8x32xf32> -> vector<8x32xf32>
    %423 = vector.broadcast %6 : vector<1x32xf32> to vector<8x32xf32>
    %424 = arith.addf %422, %423 : vector<8x32xf32>
    %425 = arith.addf %378, %424 : vector<8x32xf32>
    %cst_237 = arith.constant dense<0.000000e+00> : vector<8xf32>
    %426 = vector.multi_reduction <add>, %425, %cst_237 [1] : vector<8x32xf32> to vector<8xf32>
    %427 = vector.shape_cast %426 : vector<8xf32> to vector<8x1xf32>
    %cst_238 = arith.constant 3.200000e+01 : f32
    %428 = vector.broadcast %cst_238 : f32 to vector<8x1xf32>
    %429 = arith.divf %427, %428 : vector<8x1xf32>
    %430 = vector.broadcast %429 : vector<8x1xf32> to vector<8x32xf32>
    %431 = arith.subf %425, %430 : vector<8x32xf32>
    %432 = arith.mulf %431, %431 : vector<8x32xf32>
    %cst_239 = arith.constant dense<0.000000e+00> : vector<8xf32>
    %433 = vector.multi_reduction <add>, %432, %cst_239 [1] : vector<8x32xf32> to vector<8xf32>
    %434 = vector.shape_cast %433 : vector<8xf32> to vector<8x1xf32>
    %cst_240 = arith.constant 3.200000e+01 : f32
    %435 = vector.broadcast %cst_240 : f32 to vector<8x1xf32>
    %436 = arith.divf %434, %435 : vector<8x1xf32>
    %cst_241 = arith.constant 9.99999974E-6 : f32
    %437 = vector.broadcast %cst_241 : f32 to vector<8x1xf32>
    %438 = arith.addf %436, %437 : vector<8x1xf32>
    %439 = math.rsqrt %438 : vector<8x1xf32>
    %440 = vector.broadcast %439 : vector<8x1xf32> to vector<8x32xf32>
    %441 = arith.mulf %431, %440 : vector<8x32xf32>
    %442 = vector.broadcast %9 : vector<1x32xf32> to vector<8x32xf32>
    %443 = arith.mulf %441, %442 : vector<8x32xf32>
    %444 = vector.broadcast %10 : vector<1x32xf32> to vector<8x32xf32>
    %445 = arith.addf %443, %444 : vector<8x32xf32>
    %c1_242 = arith.constant 1 : index
    %c0_243 = arith.constant 0 : index
    %c0_244 = arith.constant 0 : index
    %446 = vector.load %arg21[%c1_242, %c0_243, %c0_244] : memref<2x8x32xf32, #tpu.memory_space<vmem>>, vector<1x8x32xf32>
    %447 = vector.shape_cast %446 : vector<1x8x32xf32> to vector<8x32xf32>
    %448 = vector.shape_cast %445 : vector<8x32xf32> to vector<1x8x32xf32>
    tpu.vector_store %arg21[%c1_242, %c0_243, %c0_244], %448 {strides = array<i32>} : memref<2x8x32xf32, #tpu.memory_space<vmem>>, vector<1x8x32xf32>,
    return
  }
}

</mosaic_0001>

<llo_original>
// kernel: transformer_vae_v4_forward.12
$region0: #{transformer_vae_v4_forward.12}
  #allocation0 [shape = 'u32[]', space=smem, size = 0x4, offset = 0x4, fixed_abs, tag = 'smem constant byte address 0x4 - core index']
  #allocation1 [shape = 'u32[72,128]{1,0:T(1,128)}', space=vmem, size = 0x9000, scoped, tag = 'internal scratch']
  %s0 = inlined_call_operand.vmem [shape: f32[2,5], index: 0, kind: input, shape index: {}]
  %s1 = inlined_call_operand.vmem [shape: f32[5,64], index: 1, kind: input, shape index: {}]
  %s2 = inlined_call_operand.vmem [shape: f32[2,64], index: 2, kind: output, shape index: {}]
  %s3 = sld [smem:[#allocation0]]
  $region18: #{transformer_vae_v4_forward.12} parent=0
    _
  %s5 = ssub.s32 1, %s3
  %s6 = scalar_select 0, %s5, %s3
  // Predicated region
  $region2: #{transformer_vae_v4_forward.12} parent=0 // pred_check
    _
  $region3: #{transformer_vae_v4_forward.12} parent=0 // pred_check_branch
    %8 = sbr.rel (0) target = $region5
  $region4: #{transformer_vae_v4_forward.12} parent=0 // pred_region
    _
  $region5: #{transformer_vae_v4_forward.12} parent=0 // pred_fallthru
    _
  // Predicated region
  $region6: #{transformer_vae_v4_forward.12} parent=0 // pred_check
    _
  $region7: #{transformer_vae_v4_forward.12} parent=0 // pred_check_branch
    %10 = sbr.rel (0) target = $region9
  $region8: #{transformer_vae_v4_forward.12} parent=0 // pred_region
    _
  $region9: #{transformer_vae_v4_forward.12} parent=0 // pred_fallthru
    _
  %v11 = vld [vmem:[%s0] sm:$0x3]
  %v12 = vld [vmem:[%s1] sm:$0x1f]
  %vm13 = vcmask 39936
  %v15 = vsel %vm13, %v11, 0
  %vm17 = vcmask 1044480
  %v19 = vsel %vm17, %v12, 0
  %21 = vmatpush.msra.mxu0 0.0
  %22 = vmatpush.msra.mxu0 0.0
  %23 = vmatpush.msra.mxu0 0.0
  %24 = vmatpush.msra.mxu0 0.0
  %25 = vmatpush.msra.mxu0 0.0
  %26 = vmatpush.msra.mxu0 0.0
  %27 = vmatpush.msra.mxu0 0.0
  %28 = vmatpush.msra.mxu0 0.0
  %29 = vmatpush.msra.mxu0 0.0
  %30 = vmatpush.msra.mxu0 0.0
  %31 = vmatpush.msra.mxu0 0.0
  %32 = vmatpush.msra.mxu0 0.0
  %33 = vmatpush.msra.mxu0 0.0
  %34 = vmatpush.msra.mxu0 0.0
  %35 = vmatpush.msra.mxu0 0.0
  %36 = vmatpush.msra.mxu0 %v19
  %37 = vmatmul.f32.gmra.mxu0 %v15
  %v38 = vpop.f32.mrf.mxu0
  %v39 = vadd.f32 0.0, %v38
  %40 = vdwg.mxu0
  %vm41 = vcmask 517120
  %42 = vst.msk [vmem:[%s2] sm:$0x3] %vm41, %v39
  // Predicated region
  $region10: #{transformer_vae_v4_forward.12} parent=0 // pred_check
    _
  $region11: #{transformer_vae_v4_forward.12} parent=0 // pred_check_branch
    %44 = sbr.rel (0) target = $region13
  $region12: #{transformer_vae_v4_forward.12} parent=0 // pred_region
    _
  $region13: #{transformer_vae_v4_forward.12} parent=0 // pred_fallthru
    _
  // Predicated region
  $region14: #{transformer_vae_v4_forward.12} parent=0 // pred_check
    _
  $region15: #{transformer_vae_v4_forward.12} parent=0 // pred_check_branch
    %46 = sbr.rel (0) target = $region17
  $region16: #{transformer_vae_v4_forward.12} parent=0 // pred_region
    _
  $region17: #{transformer_vae_v4_forward.12} parent=0 // pred_fallthru
    _

// kernel: transformer_vae_v4_forward.10
$region0: #{transformer_vae_v4_forward.10}
  #allocation0 [shape = 'u32[]', space=smem, size = 0x4, offset = 0x4, fixed_abs, tag = 'smem constant byte address 0x4 - core index']
  #allocation1 [shape = 'u32[72,128]{1,0:T(1,128)}', space=vmem, size = 0x9000, scoped, tag = 'internal scratch']
  %s0 = inlined_call_operand.vmem [shape: f32[8,6], index: 0, kind: input, shape index: {}]
  %s1 = inlined_call_operand.vmem [shape: f32[6,32], index: 1, kind: input, shape index: {}]
  %s2 = inlined_call_operand.vmem [shape: f32[1,32], index: 2, kind: input, shape index: {}]
  %s3 = inlined_call_operand.vmem [shape: f32[8,32], index: 3, kind: output, shape index: {}]
  %s4 = sld [smem:[#allocation0]]
  $region22: #{transformer_vae_v4_forward.10} parent=0
    _
  %s6 = ssub.s32 1, %s4
  %s7 = scalar_select 0, %s6, %s4
  // Predicated region
  $region2: #{transformer_vae_v4_forward.10} parent=0 // pred_check
    _
  $region3: #{transformer_vae_v4_forward.10} parent=0 // pred_check_branch
    %9 = sbr.rel (0) target = $region5
  $region4: #{transformer_vae_v4_forward.10} parent=0 // pred_region
    _
  $region5: #{transformer_vae_v4_forward.10} parent=0 // pred_fallthru
    _
  // Predicated region
  $region6: #{transformer_vae_v4_forward.10} parent=0 // pred_check
    _
  $region7: #{transformer_vae_v4_forward.10} parent=0 // pred_check_branch
    %11 = sbr.rel (0) target = $region9
  $region8: #{transformer_vae_v4_forward.10} parent=0 // pred_region
    _
  $region9: #{transformer_vae_v4_forward.10} parent=0 // pred_fallthru
    _
  // Predicated region
  $region10: #{transformer_vae_v4_forward.10} parent=0 // pred_check
    _
  $region11: #{transformer_vae_v4_forward.10} parent=0 // pred_check_branch
    %13 = sbr.rel (0) target = $region13
  $region12: #{transformer_vae_v4_forward.10} parent=0 // pred_region
    _
  $region13: #{transformer_vae_v4_forward.10} parent=0 // pred_fallthru
    _
  %v14 = vld [vmem:[%s0] sm:$0xff]
  %v15 = vld [vmem:[%s1] sm:$0x3f]
  %v16 = vld [vmem:[%s2] sm:$0x1]
  %v18 = vperm.slane %v16, 0
  %vm20 = vcmask 48128
  %v22 = vsel %vm20, %v14, 0
  %vm24 = vcmask 1045504
  %v26 = vsel %vm24, %v15, 0
  %28 = vmatpush.msra.mxu0 0.0
  %29 = vmatpush.msra.mxu0 0.0
  %30 = vmatpush.msra.mxu0 0.0
  %31 = vmatpush.msra.mxu0 0.0
  %32 = vmatpush.msra.mxu0 0.0
  %33 = vmatpush.msra.mxu0 0.0
  %34 = vmatpush.msra.mxu0 0.0
  %35 = vmatpush.msra.mxu0 0.0
  %36 = vmatpush.msra.mxu0 0.0
  %37 = vmatpush.msra.mxu0 0.0
  %38 = vmatpush.msra.mxu0 0.0
  %39 = vmatpush.msra.mxu0 0.0
  %40 = vmatpush.msra.mxu0 0.0
  %41 = vmatpush.msra.mxu0 0.0
  %42 = vmatpush.msra.mxu0 0.0
  %43 = vmatpush.msra.mxu0 %v26
  %44 = vmatmul.f32.gmra.mxu0 %v22
  %v45 = vpop.f32.mrf.mxu0
  %v46 = vadd.f32 %v18, %v45
  %47 = vdwg.mxu0
  %vm48 = vcmask 261120
  %49 = vst.msk [vmem:[%s3] sm:$0xff] %vm48, %v46
  // Predicated region
  $region14: #{transformer_vae_v4_forward.10} parent=0 // pred_check
    _
  $region15: #{transformer_vae_v4_forward.10} parent=0 // pred_check_branch
    %51 = sbr.rel (0) target = $region17
  $region16: #{transformer_vae_v4_forward.10} parent=0 // pred_region
    _
  $region17: #{transformer_vae_v4_forward.10} parent=0 // pred_fallthru
    _
  // Predicated region
  $region18: #{transformer_vae_v4_forward.10} parent=0 // pred_check
    _
  $region19: #{transformer_vae_v4_forward.10} parent=0 // pred_check_branch
    %53 = sbr.rel (0) target = $region21
  $region20: #{transformer_vae_v4_forward.10} parent=0 // pred_region
    _
  $region21: #{transformer_vae_v4_forward.10} parent=0 // pred_fallthru
    _

// kernel: transformer_vae_v4_forward.13
$region0: #{transformer_vae_v4_forward.13}
  #allocation0 [shape = 'u32[]', space=smem, size = 0x4, offset = 0x4, fixed_abs, tag = 'smem constant byte address 0x4 - core index']
  #allocation1 [shape = 'u32[72,128]{1,0:T(1,128)}', space=vmem, size = 0x9000, scoped, tag = 'internal scratch']
  %s0 = inlined_call_operand.vmem [shape: f32[16,6], index: 0, kind: input, shape index: {}]
  %s1 = inlined_call_operand.vmem [shape: f32[6,32], index: 1, kind: input, shape index: {}]
  %s2 = inlined_call_operand.vmem [shape: f32[1,32], index: 2, kind: input, shape index: {}]
  %s3 = inlined_call_operand.vmem [shape: f32[16,32], index: 3, kind: output, shape index: {}]
  %s4 = sld [smem:[#allocation0]]
  $region22: #{transformer_vae_v4_forward.13} parent=0
    _
  %s6 = ssub.s32 1, %s4
  %s7 = scalar_select 0, %s6, %s4
  // Predicated region
  $region2: #{transformer_vae_v4_forward.13} parent=0 // pred_check
    _
  $region3: #{transformer_vae_v4_forward.13} parent=0 // pred_check_branch
    %9 = sbr.rel (0) target = $region5
  $region4: #{transformer_vae_v4_forward.13} parent=0 // pred_region
    _
  $region5: #{transformer_vae_v4_forward.13} parent=0 // pred_fallthru
    _
  // Predicated region
  $region6: #{transformer_vae_v4_forward.13} parent=0 // pred_check
    _
  $region7: #{transformer_vae_v4_forward.13} parent=0 // pred_check_branch
    %11 = sbr.rel (0) target = $region9
  $region8: #{transformer_vae_v4_forward.13} parent=0 // pred_region
    _
  $region9: #{transformer_vae_v4_forward.13} parent=0 // pred_fallthru
    _
  // Predicated region
  $region10: #{transformer_vae_v4_forward.13} parent=0 // pred_check
    _
  $region11: #{transformer_vae_v4_forward.13} parent=0 // pred_check_branch
    %13 = sbr.rel (0) target = $region13
  $region12: #{transformer_vae_v4_forward.13} parent=0 // pred_region
    _
  $region13: #{transformer_vae_v4_forward.13} parent=0 // pred_fallthru
    _
  %v14 = vld [vmem:[%s0] sm:$0xff]
  %v15 = vld [vmem:[%s0 + $0x8] sm:$0xff]
  %v16 = vld [vmem:[%s1] sm:$0x3f]
  %v17 = vld [vmem:[%s2] sm:$0x1]
  %v19 = vperm.slane %v17, 0
  %vm21 = vcmask 48128
  %v23 = vsel %vm21, %v14, 0
  %v26 = vsel %vm21, %v15, 0
  %vm28 = vcmask 1045504
  %v30 = vsel %vm28, %v16, 0
  %32 = vmatpush.msra.mxu0 0.0
  %33 = vmatpush.msra.mxu0 0.0
  %34 = vmatpush.msra.mxu0 0.0
  %35 = vmatpush.msra.mxu0 0.0
  %36 = vmatpush.msra.mxu0 0.0
  %37 = vmatpush.msra.mxu0 0.0
  %38 = vmatpush.msra.mxu0 0.0
  %39 = vmatpush.msra.mxu0 0.0
  %40 = vmatpush.msra.mxu0 0.0
  %41 = vmatpush.msra.mxu0 0.0
  %42 = vmatpush.msra.mxu0 0.0
  %43 = vmatpush.msra.mxu0 0.0
  %44 = vmatpush.msra.mxu0 0.0
  %45 = vmatpush.msra.mxu0 0.0
  %46 = vmatpush.msra.mxu0 0.0
  %47 = vmatpush.msra.mxu0 %v30
  %48 = vmatmul.f32.gmra.mxu0 %v23
  %v49 = vpop.f32.mrf.mxu0
  %v50 = vadd.f32 %v19, %v49
  %51 = vmatmul.f32.gmra.mxu0 %v26
  %v52 = vpop.f32.mrf.mxu0
  %v53 = vadd.f32 %v19, %v52
  %54 = vdwg.mxu0
  %vm55 = vcmask 261120
  %56 = vst.msk [vmem:[%s3] sm:$0xff] %vm55, %v50
  %57 = vst.msk [vmem:[%s3 + $0x8] sm:$0xff] %vm55, %v53
  // Predicated region
  $region14: #{transformer_vae_v4_forward.13} parent=0 // pred_check
    _
  $region15: #{transformer_vae_v4_forward.13} parent=0 // pred_check_branch
    %59 = sbr.rel (0) target = $region17
  $region16: #{transformer_vae_v4_forward.13} parent=0 // pred_region
    _
  $region17: #{transformer_vae_v4_forward.13} parent=0 // pred_fallthru
    _
  // Predicated region
  $region18: #{transformer_vae_v4_forward.13} parent=0 // pred_check
    _
  $region19: #{transformer_vae_v4_forward.13} parent=0 // pred_check_branch
    %61 = sbr.rel (0) target = $region21
  $region20: #{transformer_vae_v4_forward.13} parent=0 // pred_region
    _
  $region21: #{transformer_vae_v4_forward.13} parent=0 // pred_fallthru
    _

// kernel: transformer_vae_v4_forward.16
$region0: #{transformer_vae_v4_forward.16}
  #allocation0 [shape = 'u32[]', space=smem, size = 0x4, offset = 0x4, fixed_abs, tag = 'smem constant byte address 0x4 - core index']
  #allocation1 [shape = 'u32[72,128]{1,0:T(1,128)}', space=vmem, size = 0x9000, scoped, tag = 'internal scratch']
  %s0 = inlined_call_operand.vmem [shape: f32[2,5], index: 0, kind: input, shape index: {}]
  %s1 = inlined_call_operand.vmem [shape: f32[5,32], index: 1, kind: input, shape index: {}]
  %s2 = inlined_call_operand.vmem [shape: f32[2,32], index: 2, kind: output, shape index: {}]
  %s3 = sld [smem:[#allocation0]]
  $region18: #{transformer_vae_v4_forward.16} parent=0
    _
  %s5 = ssub.s32 1, %s3
  %s6 = scalar_select 0, %s5, %s3
  // Predicated region
  $region2: #{transformer_vae_v4_forward.16} parent=0 // pred_check
    _
  $region3: #{transformer_vae_v4_forward.16} parent=0 // pred_check_branch
    %8 = sbr.rel (0) target = $region5
  $region4: #{transformer_vae_v4_forward.16} parent=0 // pred_region
    _
  $region5: #{transformer_vae_v4_forward.16} parent=0 // pred_fallthru
    _
  // Predicated region
  $region6: #{transformer_vae_v4_forward.16} parent=0 // pred_check
    _
  $region7: #{transformer_vae_v4_forward.16} parent=0 // pred_check_branch
    %10 = sbr.rel (0) target = $region9
  $region8: #{transformer_vae_v4_forward.16} parent=0 // pred_region
    _
  $region9: #{transformer_vae_v4_forward.16} parent=0 // pred_fallthru
    _
  %v11 = vld [vmem:[%s0] sm:$0x3]
  %v12 = vld [vmem:[%s1] sm:$0x1f]
  %vm13 = vcmask 39936
  %v15 = vsel %vm13, %v11, 0
  %vm17 = vcmask 1044480
  %v19 = vsel %vm17, %v12, 0
  %21 = vmatpush.msra.mxu0 0.0
  %22 = vmatpush.msra.mxu0 0.0
  %23 = vmatpush.msra.mxu0 0.0
  %24 = vmatpush.msra.mxu0 0.0
  %25 = vmatpush.msra.mxu0 0.0
  %26 = vmatpush.msra.mxu0 0.0
  %27 = vmatpush.msra.mxu0 0.0
  %28 = vmatpush.msra.mxu0 0.0
  %29 = vmatpush.msra.mxu0 0.0
  %30 = vmatpush.msra.mxu0 0.0
  %31 = vmatpush.msra.mxu0 0.0
  %32 = vmatpush.msra.mxu0 0.0
  %33 = vmatpush.msra.mxu0 0.0
  %34 = vmatpush.msra.mxu0 0.0
  %35 = vmatpush.msra.mxu0 0.0
  %36 = vmatpush.msra.mxu0 %v19
  %37 = vmatmul.f32.gmra.mxu0 %v15
  %v38 = vpop.f32.mrf.mxu0
  %v39 = vadd.f32 0.0, %v38
  %40 = vdwg.mxu0
  %vm41 = vcmask 254976
  %42 = vst.msk [vmem:[%s2] sm:$0x3] %vm41, %v39
  // Predicated region
  $region10: #{transformer_vae_v4_forward.16} parent=0 // pred_check
    _
  $region11: #{transformer_vae_v4_forward.16} parent=0 // pred_check_branch
    %44 = sbr.rel (0) target = $region13
  $region12: #{transformer_vae_v4_forward.16} parent=0 // pred_region
    _
  $region13: #{transformer_vae_v4_forward.16} parent=0 // pred_fallthru
    _
  // Predicated region
  $region14: #{transformer_vae_v4_forward.16} parent=0 // pred_check
    _
  $region15: #{transformer_vae_v4_forward.16} parent=0 // pred_check_branch
    %46 = sbr.rel (0) target = $region17
  $region16: #{transformer_vae_v4_forward.16} parent=0 // pred_region
    _
  $region17: #{transformer_vae_v4_forward.16} parent=0 // pred_fallthru
    _

// kernel: transformer_vae_v4_forward.11
$region0: #{transformer_vae_v4_forward.11}
  #allocation0 [shape = 'u32[]', space=smem, size = 0x4, offset = 0x4, fixed_abs, tag = 'smem constant byte address 0x4 - core index']
  #allocation1 [shape = 'u32[72,128]{1,0:T(1,128)}', space=vmem, size = 0x9000, scoped, tag = 'internal scratch']
  %s0 = inlined_call_operand.vmem [shape: f32[2,4,32], index: 0, kind: input, shape index: {}]
  %s1 = inlined_call_operand.vmem [shape: f32[2,32,16], index: 1, kind: input, shape index: {}]
  %s2 = inlined_call_operand.vmem [shape: f32[2,32,16], index: 2, kind: input, shape index: {}]
  %s3 = inlined_call_operand.vmem [shape: f32[2,32,16], index: 3, kind: input, shape index: {}]
  %s4 = inlined_call_operand.vmem [shape: f32[2,1,16], index: 4, kind: input, shape index: {}]
  %s5 = inlined_call_operand.vmem [shape: f32[2,1,16], index: 5, kind: input, shape index: {}]
  %s6 = inlined_call_operand.vmem [shape: f32[2,1,16], index: 6, kind: input, shape index: {}]
  %s7 = inlined_call_operand.vmem [shape: f32[2,16,32], index: 7, kind: input, shape index: {}]
  %s8 = inlined_call_operand.vmem [shape: f32[1,32], index: 8, kind: input, shape index: {}]
  %s9 = inlined_call_operand.vmem [shape: f32[32,64], index: 9, kind: input, shape index: {}]
  %s10 = inlined_call_operand.vmem [shape: f32[1,64], index: 10, kind: input, shape index: {}]
  %s11 = inlined_call_operand.vmem [shape: f32[64,32], index: 11, kind: input, shape index: {}]
  %s12 = inlined_call_operand.vmem [shape: f32[1,32], index: 12, kind: input, shape index: {}]
  %s13 = inlined_call_operand.vmem [shape: f32[1,32], index: 13, kind: input, shape index: {}]
  %s14 = inlined_call_operand.vmem [shape: f32[1,32], index: 14, kind: input, shape index: {}]
  %s15 = inlined_call_operand.vmem [shape: f32[1,32], index: 15, kind: input, shape index: {}]
  %s16 = inlined_call_operand.vmem [shape: f32[1,32], index: 16, kind: input, shape index: {}]
  %s17 = inlined_call_operand.vmem [shape: f32[2,4,32], index: 17, kind: output, shape index: {}]
  %s18 = sld [smem:[#allocation0]]
  $region78: #{transformer_vae_v4_forward.11} parent=0
    _
  %s20 = ssub.s32 1, %s18
  %s21 = scalar_select 0, %s20, %s18
  // Predicated region
  $region2: #{transformer_vae_v4_forward.11} parent=0 // pred_check
    _
  $region3: #{transformer_vae_v4_forward.11} parent=0 // pred_check_branch
    %23 = sbr.rel (0) target = $region5
  $region4: #{transformer_vae_v4_forward.11} parent=0 // pred_region
    _
  $region5: #{transformer_vae_v4_forward.11} parent=0 // pred_fallthru
    _
  // Predicated region
  $region6: #{transformer_vae_v4_forward.11} parent=0 // pred_check
    _
  $region7: #{transformer_vae_v4_forward.11} parent=0 // pred_check_branch
    %25 = sbr.rel (0) target = $region9
  $region8: #{transformer_vae_v4_forward.11} parent=0 // pred_region
    _
  $region9: #{transformer_vae_v4_forward.11} parent=0 // pred_fallthru
    _
  // Predicated region
  $region10: #{transformer_vae_v4_forward.11} parent=0 // pred_check
    _
  $region11: #{transformer_vae_v4_forward.11} parent=0 // pred_check_branch
    %27 = sbr.rel (0) target = $region13
  $region12: #{transformer_vae_v4_forward.11} parent=0 // pred_region
    _
  $region13: #{transformer_vae_v4_forward.11} parent=0 // pred_fallthru
    _
  // Predicated region
  $region14: #{transformer_vae_v4_forward.11} parent=0 // pred_check
    _
  $region15: #{transformer_vae_v4_forward.11} parent=0 // pred_check_branch
    %29 = sbr.rel (0) target = $region17
  $region16: #{transformer_vae_v4_forward.11} parent=0 // pred_region
    _
  $region17: #{transformer_vae_v4_forward.11} parent=0 // pred_fallthru
    _
  // Predicated region
  $region18: #{transformer_vae_v4_forward.11} parent=0 // pred_check
    _
  $region19: #{transformer_vae_v4_forward.11} parent=0 // pred_check_branch
    %31 = sbr.rel (0) target = $region21
  $region20: #{transformer_vae_v4_forward.11} parent=0 // pred_region
    _
  $region21: #{transformer_vae_v4_forward.11} parent=0 // pred_fallthru
    _
  // Predicated region
  $region22: #{transformer_vae_v4_forward.11} parent=0 // pred_check
    _
  $region23: #{transformer_vae_v4_forward.11} parent=0 // pred_check_branch
    %33 = sbr.rel (0) target = $region25
  $region24: #{transformer_vae_v4_forward.11} parent=0 // pred_region
    _
  $region25: #{transformer_vae_v4_forward.11} parent=0 // pred_fallthru
    _
  // Predicated region
  $region26: #{transformer_vae_v4_forward.11} parent=0 // pred_check
    _
  $region27: #{transformer_vae_v4_forward.11} parent=0 // pred_check_branch
    %35 = sbr.rel (0) target = $region29
  $region28: #{transformer_vae_v4_forward.11} parent=0 // pred_region
    _
  $region29: #{transformer_vae_v4_forward.11} parent=0 // pred_fallthru
    _
  // Predicated region
  $region30: #{transformer_vae_v4_forward.11} parent=0 // pred_check
    _
  $region31: #{transformer_vae_v4_forward.11} parent=0 // pred_check_branch
    %37 = sbr.rel (0) target = $region33
  $region32: #{transformer_vae_v4_forward.11} parent=0 // pred_region
    _
  $region33: #{transformer_vae_v4_forward.11} parent=0 // pred_fallthru
    _
  // Predicated region
  $region34: #{transformer_vae_v4_forward.11} parent=0 // pred_check
    _
  $region35: #{transformer_vae_v4_forward.11} parent=0 // pred_check_branch
    %39 = sbr.rel (0) target = $region37
  $region36: #{transformer_vae_v4_forward.11} parent=0 // pred_region
    _
  $region37: #{transformer_vae_v4_forward.11} parent=0 // pred_fallthru
    _
  // Predicated region
  $region38: #{transformer_vae_v4_forward.11} parent=0 // pred_check
    _
  $region39: #{transformer_vae_v4_forward.11} parent=0 // pred_check_branch
    %41 = sbr.rel (0) target = $region41
  $region40: #{transformer_vae_v4_forward.11} parent=0 // pred_region
    _
  $region41: #{transformer_vae_v4_forward.11} parent=0 // pred_fallthru
    _
  // Predicated region
  $region42: #{transformer_vae_v4_forward.11} parent=0 // pred_check
    _
  $region43: #{transformer_vae_v4_forward.11} parent=0 // pred_check_branch
    %43 = sbr.rel (0) target = $region45
  $region44: #{transformer_vae_v4_forward.11} parent=0 // pred_region
    _
  $region45: #{transformer_vae_v4_forward.11} parent=0 // pred_fallthru
    _
  // Predicated region
  $region46: #{transformer_vae_v4_forward.11} parent=0 // pred_check
    _
  $region47: #{transformer_vae_v4_forward.11} parent=0 // pred_check_branch
    %45 = sbr.rel (0) target = $region49
  $region48: #{transformer_vae_v4_forward.11} parent=0 // pred_region
    _
  $region49: #{transformer_vae_v4_forward.11} parent=0 // pred_fallthru
    _
  // Predicated region
  $region50: #{transformer_vae_v4_forward.11} parent=0 // pred_check
    _
  $region51: #{transformer_vae_v4_forward.11} parent=0 // pred_check_branch
    %47 = sbr.rel (0) target = $region53
  $region52: #{transformer_vae_v4_forward.11} parent=0 // pred_region
    _
  $region53: #{transformer_vae_v4_forward.11} parent=0 // pred_fallthru
    _
  // Predicated region
  $region54: #{transformer_vae_v4_forward.11} parent=0 // pred_check
    _
  $region55: #{transformer_vae_v4_forward.11} parent=0 // pred_check_branch
    %49 = sbr.rel (0) target = $region57
  $region56: #{transformer_vae_v4_forward.11} parent=0 // pred_region
    _
  $region57: #{transformer_vae_v4_forward.11} parent=0 // pred_fallthru
    _
  // Predicated region
  $region58: #{transformer_vae_v4_forward.11} parent=0 // pred_check
    _
  $region59: #{transformer_vae_v4_forward.11} parent=0 // pred_check_branch
    %51 = sbr.rel (0) target = $region61
  $region60: #{transformer_vae_v4_forward.11} parent=0 // pred_region
    _
  $region61: #{transformer_vae_v4_forward.11} parent=0 // pred_fallthru
    _
  // Predicated region
  $region62: #{transformer_vae_v4_forward.11} parent=0 // pred_check
    _
  $region63: #{transformer_vae_v4_forward.11} parent=0 // pred_check_branch
    %53 = sbr.rel (0) target = $region65
  $region64: #{transformer_vae_v4_forward.11} parent=0 // pred_region
    _
  $region65: #{transformer_vae_v4_forward.11} parent=0 // pred_fallthru
    _
  // Predicated region
  $region66: #{transformer_vae_v4_forward.11} parent=0 // pred_check
    _
  $region67: #{transformer_vae_v4_forward.11} parent=0 // pred_check_branch
    %55 = sbr.rel (0) target = $region69
  $region68: #{transformer_vae_v4_forward.11} parent=0 // pred_region
    _
  $region69: #{transformer_vae_v4_forward.11} parent=0 // pred_fallthru
    _
  %v56 = vld [vmem:[%s8] sm:$0x1]
  %v57 = vld [vmem:[%s9] sm:$0xff]
  %v58 = vld [vmem:[%s9 + $0x8] sm:$0xff]
  %v59 = vld [vmem:[%s9 + $0x10] sm:$0xff]
  %v60 = vld [vmem:[%s9 + $0x18] sm:$0xff]
  %v61 = vld [vmem:[%s10] sm:$0x1]
  %v62 = vld [vmem:[%s11] sm:$0xff]
  %v63 = vld [vmem:[%s11 + $0x8] sm:$0xff]
  %v64 = vld [vmem:[%s11 + $0x10] sm:$0xff]
  %v65 = vld [vmem:[%s11 + $0x18] sm:$0xff]
  %v66 = vld [vmem:[%s11 + $0x20] sm:$0xff]
  %v67 = vld [vmem:[%s11 + $0x28] sm:$0xff]
  %v68 = vld [vmem:[%s11 + $0x30] sm:$0xff]
  %v69 = vld [vmem:[%s11 + $0x38] sm:$0xff]
  %v70 = vld [vmem:[%s12] sm:$0x1]
  %v71 = vld [vmem:[%s13] sm:$0x1]
  %v72 = vld [vmem:[%s14] sm:$0x1]
  %v73 = vld [vmem:[%s15] sm:$0x1]
  %v74 = vld [vmem:[%s16] sm:$0x1]
  %v75 = vld [vmem:[%s0] sm:$0xf]
  %v76 = vld [vmem:[%s1] sm:$0xff]
  %v77 = vld [vmem:[%s1 + $0x8] sm:$0xff]
  %v78 = vld [vmem:[%s1 + $0x10] sm:$0xff]
  %v79 = vld [vmem:[%s1 + $0x18] sm:$0xff]
  %v80 = vld [vmem:[%s2] sm:$0xff]
  %v81 = vld [vmem:[%s2 + $0x8] sm:$0xff]
  %v82 = vld [vmem:[%s2 + $0x10] sm:$0xff]
  %v83 = vld [vmem:[%s2 + $0x18] sm:$0xff]
  %v84 = vld [vmem:[%s3] sm:$0xff]
  %v85 = vld [vmem:[%s3 + $0x8] sm:$0xff]
  %v86 = vld [vmem:[%s3 + $0x10] sm:$0xff]
  %v87 = vld [vmem:[%s3 + $0x18] sm:$0xff]
  %v88 = vld [vmem:[%s4] sm:$0x1]
  %v89 = vld [vmem:[%s5] sm:$0x1]
  %v90 = vld [vmem:[%s6] sm:$0x1]
  %v92 = vperm.slane %v88, 0
  %vm94 = vcmask 261120
  %v96 = vsel %vm94, %v75, 0
  %98 = vmatpush.msra.mxu0 0.0
  %99 = vmatpush.msra.mxu0 0.0
  %100 = vmatpush.msra.mxu0 0.0
  %101 = vmatpush.msra.mxu0 0.0
  %102 = vmatpush.msra.mxu0 0.0
  %103 = vmatpush.msra.mxu0 0.0
  %104 = vmatpush.msra.mxu0 0.0
  %105 = vmatpush.msra.mxu0 0.0
  %106 = vmatpush.msra.mxu0 0.0
  %107 = vmatpush.msra.mxu0 0.0
  %108 = vmatpush.msra.mxu0 0.0
  %109 = vmatpush.msra.mxu0 0.0
  %110 = vmatpush.msra.mxu0 %v79
  %111 = vmatpush.msra.mxu0 %v78
  %112 = vmatpush.msra.mxu0 %v77
  %113 = vmatpush.msra.mxu0 %v76
  %114 = vmatmul.f32.gmra.mxu0 %v96
  %v115 = vpop.f32.mrf.mxu0
  %v116 = vadd.f32 %v92, %v115
  %117 = vdwg.mxu0
  %v118 = vmul.f32 %v116, 0.25
  %v120 = vperm.slane %v89, 0
  %122 = vmatpush.msra.mxu0 0.0
  %123 = vmatpush.msra.mxu0 0.0
  %124 = vmatpush.msra.mxu0 0.0
  %125 = vmatpush.msra.mxu0 0.0
  %126 = vmatpush.msra.mxu0 0.0
  %127 = vmatpush.msra.mxu0 0.0
  %128 = vmatpush.msra.mxu0 0.0
  %129 = vmatpush.msra.mxu0 0.0
  %130 = vmatpush.msra.mxu0 0.0
  %131 = vmatpush.msra.mxu0 0.0
  %132 = vmatpush.msra.mxu0 0.0
  %133 = vmatpush.msra.mxu0 0.0
  %134 = vmatpush.msra.mxu0 %v83
  %135 = vmatpush.msra.mxu0 %v82
  %136 = vmatpush.msra.mxu0 %v81
  %137 = vmatpush.msra.mxu0 %v80
  %138 = vmatmul.f32.gmra.mxu0 %v96
  %v139 = vpop.f32.mrf.mxu0
  %v140 = vadd.f32 %v120, %v139
  %141 = vdwg.mxu0
  %vm142 = vcmask 130048
  %v144 = vsel %vm142, %v118, 0
  %v147 = vsel %vm142, %v140, 0
  %149 = vmatpush.xpose.msra.mxu0 0.0
  %150 = vmatpush.xpose.msra.mxu0 0.0
  %151 = vmatpush.xpose.msra.mxu0 0.0
  %152 = vmatpush.xpose.msra.mxu0 0.0
  %153 = vmatpush.xpose.msra.mxu0 0.0
  %154 = vmatpush.xpose.msra.mxu0 0.0
  %155 = vmatpush.xpose.msra.mxu0 0.0
  %156 = vmatpush.xpose.msra.mxu0 0.0
  %157 = vmatpush.xpose.msra.mxu0 0.0
  %158 = vmatpush.xpose.msra.mxu0 0.0
  %159 = vmatpush.xpose.msra.mxu0 0.0
  %160 = vmatpush.xpose.msra.mxu0 0.0
  %161 = vmatpush.xpose.msra.mxu0 0.0
  %162 = vmatpush.xpose.msra.mxu0 0.0
  %163 = vmatpush.xpose.msra.mxu0 0.0
  %164 = vmatpush.xpose.msra.mxu0 %v147
  %165 = vmatmul.f32.gmra.mxu0 %v144
  %v166 = vpop.f32.mrf.mxu0
  %v167 = vadd.f32 0.0, %v166
  %168 = vdwg.mxu0
  %vm169 = vcmask 27648
  %v170 = vsel %vm169, %v167, -inf
  %171 = vmax.xlane.f32.xlu0 %v170
  %v172 = vpop.xlane.xlu0 %171
  %v173 = vsub.f32 %v167, %v172
  %v174 = vmul.f32 %v173, 1.442695
  %v175 = vpow.pop %v174
  %v176 = vsel %vm169, %v175, 0.0
  %177 = vadd.xlane.f32.xlu0 %v176
  %v178 = vpop.xlane.xlu0 %177
  %v180 = vperm.slane %v90, 0
  %182 = vmatpush.msra.mxu0 0.0
  %183 = vmatpush.msra.mxu0 0.0
  %184 = vmatpush.msra.mxu0 0.0
  %185 = vmatpush.msra.mxu0 0.0
  %186 = vmatpush.msra.mxu0 0.0
  %187 = vmatpush.msra.mxu0 0.0
  %188 = vmatpush.msra.mxu0 0.0
  %189 = vmatpush.msra.mxu0 0.0
  %190 = vmatpush.msra.mxu0 0.0
  %191 = vmatpush.msra.mxu0 0.0
  %192 = vmatpush.msra.mxu0 0.0
  %193 = vmatpush.msra.mxu0 0.0
  %194 = vmatpush.msra.mxu0 %v87
  %195 = vmatpush.msra.mxu0 %v86
  %196 = vmatpush.msra.mxu0 %v85
  %197 = vmatpush.msra.mxu0 %v84
  %198 = vmatmul.f32.gmra.mxu0 %v96
  %v199 = vpop.f32.mrf.mxu0
  %v200 = vadd.f32 %v180, %v199
  %201 = vdwg.mxu0
  %vm202 = vcmask 31744
  %v204 = vsel %vm202, %v175, 0
  %vm206 = vcmask 1043456
  %v208 = vsel %vm206, %v200, 0
  %210 = vmatpush.msra.mxu0 0.0
  %211 = vmatpush.msra.mxu0 0.0
  %212 = vmatpush.msra.mxu0 0.0
  %213 = vmatpush.msra.mxu0 0.0
  %214 = vmatpush.msra.mxu0 0.0
  %215 = vmatpush.msra.mxu0 0.0
  %216 = vmatpush.msra.mxu0 0.0
  %217 = vmatpush.msra.mxu0 0.0
  %218 = vmatpush.msra.mxu0 0.0
  %219 = vmatpush.msra.mxu0 0.0
  %220 = vmatpush.msra.mxu0 0.0
  %221 = vmatpush.msra.mxu0 0.0
  %222 = vmatpush.msra.mxu0 0.0
  %223 = vmatpush.msra.mxu0 0.0
  %224 = vmatpush.msra.mxu0 0.0
  %225 = vmatpush.msra.mxu0 %v208
  %226 = vmatmul.f32.gmra.mxu0 %v204
  %v227 = vpop.f32.mrf.mxu0
  %v228 = vadd.f32 0.0, %v227
  %229 = vdwg.mxu0
  %v230 = vrcp.pop %v178
  %v231 = vmul.f32 %v178, %v230
  %v232 = vsub.f32 1.0, %v231
  %v233 = vmul.f32 %v230, %v232
  %v234 = vadd.f32 %v230, %v233
  %vm235 = vweird.f32 %v178
  %vm236 = vweird.f32 %v230
  %vm237 = vmor %vm235, %vm236
  %v238 = vsel %vm237, %v230, %v234
  %v239 = vand.u32 2147483647, %v178
  %vm240 = vcmp.eq.f32.partialorder %v239, 8.507059e+37
  %v241 = vand.u32 %v178, 2147483648
  %v242 = vor.u32 1.1754944e-38, %v241
  %v243 = vsel %vm240, %v242, %v238
  %v244 = vmul.f32 %v228, %v243
  %v245 = vld [vmem:[%s7] sm:$0xff]
  %v246 = vld [vmem:[%s7 + $0x8] sm:$0xff]
  %s247 = scalar_lea.vmem %s1, 32
  %v248 = vld [vmem:[%s247] sm:$0xff]
  %v249 = vld [vmem:[%s247 + $0x8] sm:$0xff]
  %v250 = vld [vmem:[%s247 + $0x10] sm:$0xff]
  %v251 = vld [vmem:[%s247 + $0x18] sm:$0xff]
  %s252 = scalar_lea.vmem %s2, 32
  %v253 = vld [vmem:[%s252] sm:$0xff]
  %v254 = vld [vmem:[%s252 + $0x8] sm:$0xff]
  %v255 = vld [vmem:[%s252 + $0x10] sm:$0xff]
  %v256 = vld [vmem:[%s252 + $0x18] sm:$0xff]
  %s257 = scalar_lea.vmem %s3, 32
  %v258 = vld [vmem:[%s257] sm:$0xff]
  %v259 = vld [vmem:[%s257 + $0x8] sm:$0xff]
  %v260 = vld [vmem:[%s257 + $0x10] sm:$0xff]
  %v261 = vld [vmem:[%s257 + $0x18] sm:$0xff]
  %s262 = scalar_lea.vmem %s4, 1
  %v263 = vld [vmem:[%s262] sm:$0x1]
  %s264 = scalar_lea.vmem %s5, 1
  %v265 = vld [vmem:[%s264] sm:$0x1]
  %s266 = scalar_lea.vmem %s6, 1
  %v267 = vld [vmem:[%s266] sm:$0x1]
  %v269 = vperm.slane %v263, 0
  %271 = vmatpush.msra.mxu0 0.0
  %272 = vmatpush.msra.mxu0 0.0
  %273 = vmatpush.msra.mxu0 0.0
  %274 = vmatpush.msra.mxu0 0.0
  %275 = vmatpush.msra.mxu0 0.0
  %276 = vmatpush.msra.mxu0 0.0
  %277 = vmatpush.msra.mxu0 0.0
  %278 = vmatpush.msra.mxu0 0.0
  %279 = vmatpush.msra.mxu0 0.0
  %280 = vmatpush.msra.mxu0 0.0
  %281 = vmatpush.msra.mxu0 0.0
  %282 = vmatpush.msra.mxu0 0.0
  %283 = vmatpush.msra.mxu0 %v251
  %284 = vmatpush.msra.mxu0 %v250
  %285 = vmatpush.msra.mxu0 %v249
  %286 = vmatpush.msra.mxu0 %v248
  %287 = vmatmul.f32.gmra.mxu0 %v96
  %v288 = vpop.f32.mrf.mxu0
  %v289 = vadd.f32 %v269, %v288
  %290 = vdwg.mxu0
  %v291 = vmul.f32 %v289, 0.25
  %v293 = vperm.slane %v265, 0
  %295 = vmatpush.msra.mxu0 0.0
  %296 = vmatpush.msra.mxu0 0.0
  %297 = vmatpush.msra.mxu0 0.0
  %298 = vmatpush.msra.mxu0 0.0
  %299 = vmatpush.msra.mxu0 0.0
  %300 = vmatpush.msra.mxu0 0.0
  %301 = vmatpush.msra.mxu0 0.0
  %302 = vmatpush.msra.mxu0 0.0
  %303 = vmatpush.msra.mxu0 0.0
  %304 = vmatpush.msra.mxu0 0.0
  %305 = vmatpush.msra.mxu0 0.0
  %306 = vmatpush.msra.mxu0 0.0
  %307 = vmatpush.msra.mxu0 %v256
  %308 = vmatpush.msra.mxu0 %v255
  %309 = vmatpush.msra.mxu0 %v254
  %310 = vmatpush.msra.mxu0 %v253
  %311 = vmatmul.f32.gmra.mxu0 %v96
  %v312 = vpop.f32.mrf.mxu0
  %v313 = vadd.f32 %v293, %v312
  %314 = vdwg.mxu0
  %v316 = vsel %vm142, %v291, 0
  %v319 = vsel %vm142, %v313, 0
  %321 = vmatpush.xpose.msra.mxu0 0.0
  %322 = vmatpush.xpose.msra.mxu0 0.0
  %323 = vmatpush.xpose.msra.mxu0 0.0
  %324 = vmatpush.xpose.msra.mxu0 0.0
  %325 = vmatpush.xpose.msra.mxu0 0.0
  %326 = vmatpush.xpose.msra.mxu0 0.0
  %327 = vmatpush.xpose.msra.mxu0 0.0
  %328 = vmatpush.xpose.msra.mxu0 0.0
  %329 = vmatpush.xpose.msra.mxu0 0.0
  %330 = vmatpush.xpose.msra.mxu0 0.0
  %331 = vmatpush.xpose.msra.mxu0 0.0
  %332 = vmatpush.xpose.msra.mxu0 0.0
  %333 = vmatpush.xpose.msra.mxu0 0.0
  %334 = vmatpush.xpose.msra.mxu0 0.0
  %335 = vmatpush.xpose.msra.mxu0 0.0
  %336 = vmatpush.xpose.msra.mxu0 %v319
  %337 = vmatmul.f32.gmra.mxu0 %v316
  %v338 = vpop.f32.mrf.mxu0
  %v339 = vadd.f32 0.0, %v338
  %340 = vdwg.mxu0
  %v341 = vsel %vm169, %v339, -inf
  %342 = vmax.xlane.f32.xlu0 %v341
  %v343 = vpop.xlane.xlu0 %342
  %v344 = vsub.f32 %v339, %v343
  %v345 = vmul.f32 %v344, 1.442695
  %v346 = vpow.pop %v345
  %v347 = vsel %vm169, %v346, 0.0
  %348 = vadd.xlane.f32.xlu0 %v347
  %v349 = vpop.xlane.xlu0 %348
  %v351 = vperm.slane %v267, 0
  %353 = vmatpush.msra.mxu0 0.0
  %354 = vmatpush.msra.mxu0 0.0
  %355 = vmatpush.msra.mxu0 0.0
  %356 = vmatpush.msra.mxu0 0.0
  %357 = vmatpush.msra.mxu0 0.0
  %358 = vmatpush.msra.mxu0 0.0
  %359 = vmatpush.msra.mxu0 0.0
  %360 = vmatpush.msra.mxu0 0.0
  %361 = vmatpush.msra.mxu0 0.0
  %362 = vmatpush.msra.mxu0 0.0
  %363 = vmatpush.msra.mxu0 0.0
  %364 = vmatpush.msra.mxu0 0.0
  %365 = vmatpush.msra.mxu0 %v261
  %366 = vmatpush.msra.mxu0 %v260
  %367 = vmatpush.msra.mxu0 %v259
  %368 = vmatpush.msra.mxu0 %v258
  %369 = vmatmul.f32.gmra.mxu0 %v96
  %v370 = vpop.f32.mrf.mxu0
  %v371 = vadd.f32 %v351, %v370
  %372 = vdwg.mxu0
  %v374 = vsel %vm202, %v346, 0
  %v377 = vsel %vm206, %v371, 0
  %379 = vmatpush.msra.mxu0 0.0
  %380 = vmatpush.msra.mxu0 0.0
  %381 = vmatpush.msra.mxu0 0.0
  %382 = vmatpush.msra.mxu0 0.0
  %383 = vmatpush.msra.mxu0 0.0
  %384 = vmatpush.msra.mxu0 0.0
  %385 = vmatpush.msra.mxu0 0.0
  %386 = vmatpush.msra.mxu0 0.0
  %387 = vmatpush.msra.mxu0 0.0
  %388 = vmatpush.msra.mxu0 0.0
  %389 = vmatpush.msra.mxu0 0.0
  %390 = vmatpush.msra.mxu0 0.0
  %391 = vmatpush.msra.mxu0 0.0
  %392 = vmatpush.msra.mxu0 0.0
  %393 = vmatpush.msra.mxu0 0.0
  %394 = vmatpush.msra.mxu0 %v377
  %395 = vmatmul.f32.gmra.mxu0 %v374
  %v396 = vpop.f32.mrf.mxu0
  %v397 = vadd.f32 0.0, %v396
  %398 = vdwg.mxu0
  %v399 = vrcp.pop %v349
  %v400 = vmul.f32 %v349, %v399
  %v401 = vsub.f32 1.0, %v400
  %v402 = vmul.f32 %v399, %v401
  %v403 = vadd.f32 %v399, %v402
  %vm404 = vweird.f32 %v349
  %vm405 = vweird.f32 %v399
  %vm406 = vmor %vm404, %vm405
  %v407 = vsel %vm406, %v399, %v403
  %v408 = vand.u32 2147483647, %v349
  %vm409 = vcmp.eq.f32.partialorder %v408, 8.507059e+37
  %v410 = vand.u32 %v349, 2147483648
  %v411 = vor.u32 1.1754944e-38, %v410
  %v412 = vsel %vm409, %v411, %v407
  %v413 = vmul.f32 %v397, %v412
  %s414 = scalar_lea.vmem %s7, 16
  %v415 = vld [vmem:[%s414] sm:$0xff]
  %v416 = vld [vmem:[%s414 + $0x8] sm:$0xff]
  %v418 = vsel %vm142, %v413, 0
  %420 = vmatpush.msra.mxu0 0.0
  %421 = vmatpush.msra.mxu0 0.0
  %422 = vmatpush.msra.mxu0 0.0
  %423 = vmatpush.msra.mxu0 0.0
  %424 = vmatpush.msra.mxu0 0.0
  %425 = vmatpush.msra.mxu0 0.0
  %426 = vmatpush.msra.mxu0 0.0
  %427 = vmatpush.msra.mxu0 0.0
  %428 = vmatpush.msra.mxu0 0.0
  %429 = vmatpush.msra.mxu0 0.0
  %430 = vmatpush.msra.mxu0 0.0
  %431 = vmatpush.msra.mxu0 0.0
  %432 = vmatpush.msra.mxu0 0.0
  %433 = vmatpush.msra.mxu0 0.0
  %434 = vmatpush.msra.mxu0 %v416
  %435 = vmatpush.msra.mxu0 %v415
  %436 = vmatmul.f32.gmra.mxu0 %v418
  %v437 = vpop.f32.mrf.mxu0
  %v438 = vadd.f32 0.0, %v437
  %439 = vdwg.mxu0
  %v441 = vsel %vm142, %v244, 0
  %443 = vmatpush.msra.mxu0 0.0
  %444 = vmatpush.msra.mxu0 0.0
  %445 = vmatpush.msra.mxu0 0.0
  %446 = vmatpush.msra.mxu0 0.0
  %447 = vmatpush.msra.mxu0 0.0
  %448 = vmatpush.msra.mxu0 0.0
  %449 = vmatpush.msra.mxu0 0.0
  %450 = vmatpush.msra.mxu0 0.0
  %451 = vmatpush.msra.mxu0 0.0
  %452 = vmatpush.msra.mxu0 0.0
  %453 = vmatpush.msra.mxu0 0.0
  %454 = vmatpush.msra.mxu0 0.0
  %455 = vmatpush.msra.mxu0 0.0
  %456 = vmatpush.msra.mxu0 0.0
  %457 = vmatpush.msra.mxu0 %v246
  %458 = vmatpush.msra.mxu0 %v245
  %459 = vmatmul.f32.gmra.mxu0 %v441
  %v460 = vpop.f32.mrf.mxu0
  %v461 = vadd.f32 %v438, %v460
  %462 = vdwg.mxu0
  %v463 = vadd.f32 %v75, %v461
  %v465 = vperm.slane %v56, 0
  %v467 = vadd.f32 %v463, %v465
  %vm468 = vcmask 257024
  %v469 = vsel %vm468, %v467, 0.0
  %470 = vadd.xlane.f32.xlu0 %v469
  %v471 = vpop.xlane.xlu0 %470
  %v472 = vrcp.pop 32.0
  %v473 = vmul.f32 32.0, %v472
  %v474 = vsub.f32 1.0, %v473
  %v475 = vmul.f32 %v472, %v474
  %v476 = vadd.f32 %v472, %v475
  %vm477 = vweird.f32 %v472
  %v478 = vsel %vm477, %v472, %v476
  %v479 = vmul.f32 %v471, %v478
  %v480 = vsub.f32 %v467, %v479
  %v481 = vmul.f32 %v480, %v480
  %v482 = vsel %vm468, %v481, 0.0
  %483 = vadd.xlane.f32.xlu0 %v482
  %v484 = vpop.xlane.xlu0 %483
  %v485 = vmul.f32 %v484, %v478
  %v486 = vadd.f32 %v485, 1e-05
  %v487 = vrsqrt.pop %v486
  %v488 = vmul.f32 %v487, %v486
  %v489 = vmul.f32 %v488, %v487
  %v490 = vmul.f32 0.5, %v489
  %v491 = vsub.f32 1.5, %v490
  %v492 = vmul.f32 %v487, %v491
  %vm493 = vweird.f32 %v486
  %vm494 = vweird.f32 %v487
  %vm495 = vmor %vm493, %vm494
  %v496 = vsel %vm495, %v487, %v492
  %v497 = vmul.f32 %v480, %v496
  %v499 = vperm.slane %v71, 0
  %v501 = vmul.f32 %v497, %v499
  %v503 = vperm.slane %v72, 0
  %v505 = vadd.f32 %v501, %v503
  %v507 = vperm.slane %v61, 0
  %v510 = vsel %vm94, %v505, 0
  %512 = vmatpush.msra.mxu0 0.0
  %513 = vmatpush.msra.mxu0 0.0
  %514 = vmatpush.msra.mxu0 0.0
  %515 = vmatpush.msra.mxu0 0.0
  %516 = vmatpush.msra.mxu0 0.0
  %517 = vmatpush.msra.mxu0 0.0
  %518 = vmatpush.msra.mxu0 0.0
  %519 = vmatpush.msra.mxu0 0.0
  %520 = vmatpush.msra.mxu0 0.0
  %521 = vmatpush.msra.mxu0 0.0
  %522 = vmatpush.msra.mxu0 0.0
  %523 = vmatpush.msra.mxu0 0.0
  %524 = vmatpush.msra.mxu0 %v60
  %525 = vmatpush.msra.mxu0 %v59
  %526 = vmatpush.msra.mxu0 %v58
  %527 = vmatpush.msra.mxu0 %v57
  %528 = vmatmul.f32.gmra.mxu0 %v510
  %v529 = vpop.f32.mrf.mxu0
  %v530 = vadd.f32 %v507, %v529
  %531 = vdwg.mxu0
  %v532 = vmul.f32 %v530, 0.5
  %v533 = vmul.f32 %v530, 0.70710677
  %v534 = vand.u32 2147483647, %v533
  %v535 = vmul.f32 %v534, 0.3275911
  %v536 = vadd.f32 %v535, 1.0
  %v537 = vrcp.pop %v536
  %v538 = vmul.f32 %v536, %v537
  %v539 = vsub.f32 1.0, %v538
  %v540 = vmul.f32 %v537, %v539
  %v541 = vadd.f32 %v537, %v540
  %vm542 = vweird.f32 %v536
  %vm543 = vweird.f32 %v537
  %vm544 = vmor %vm542, %vm543
  %v545 = vsel %vm544, %v537, %v541
  %v546 = vand.u32 2147483647, %v536
  %vm547 = vcmp.eq.f32.partialorder %v546, 8.507059e+37
  %v548 = vand.u32 %v536, 2147483648
  %v549 = vor.u32 1.1754944e-38, %v548
  %v550 = vsel %vm547, %v549, %v545
  %v551 = vmul.f32 1.0, %v550
  %v552 = vmul.f32 %v551, 1.0614054
  %v553 = vadd.f32 %v552, -1.4531521
  %v554 = vmul.f32 %v553, %v551
  %v555 = vadd.f32 %v554, 1.4214138
  %v556 = vmul.f32 %v555, %v551
  %v557 = vadd.f32 %v556, -0.28449672
  %v558 = vmul.f32 %v557, %v551
  %v559 = vadd.f32 %v558, 0.2548296
  %v560 = vmul.f32 %v559, %v551
  %v561 = vsub.f32 0.0, %v534
  %v562 = vmul.f32 %v561, %v534
  %v563 = vmul.f32 %v562, 1.442695
  %v564 = vpow.pop %v563
  %v565 = vmul.f32 %v560, %v564
  %v566 = vsub.f32 1.0, %v565
  %vm567 = vcmp.lt.f32.partialorder %v533, 0.0
  %v568 = vsub.f32 0.0, %v566
  %v569 = vsel %vm567, %v568, %v566
  %v570 = vadd.f32 %v569, 1.0
  %v571 = vmul.f32 %v532, %v570
  %v573 = vperm.slane %v70, 0
  %vm575 = vcmask 523264
  %v577 = vsel %vm575, %v571, 0
  %579 = vmatpush.msra.mxu0 0.0
  %580 = vmatpush.msra.mxu0 0.0
  %581 = vmatpush.msra.mxu0 0.0
  %582 = vmatpush.msra.mxu0 0.0
  %583 = vmatpush.msra.mxu0 0.0
  %584 = vmatpush.msra.mxu0 0.0
  %585 = vmatpush.msra.mxu0 0.0
  %586 = vmatpush.msra.mxu0 0.0
  %587 = vmatpush.msra.mxu0 %v69
  %588 = vmatpush.msra.mxu0 %v68
  %589 = vmatpush.msra.mxu0 %v67
  %590 = vmatpush.msra.mxu0 %v66
  %591 = vmatpush.msra.mxu0 %v65
  %592 = vmatpush.msra.mxu0 %v64
  %593 = vmatpush.msra.mxu0 %v63
  %594 = vmatpush.msra.mxu0 %v62
  %595 = vmatmul.f32.gmra.mxu0 %v577
  %v596 = vpop.f32.mrf.mxu0
  %v597 = vadd.f32 %v573, %v596
  %598 = vdwg.mxu0
  %v599 = vadd.f32 %v505, %v597
  %v600 = vsel %vm468, %v599, 0.0
  %601 = vadd.xlane.f32.xlu0 %v600
  %v602 = vpop.xlane.xlu0 %601
  %v603 = vmul.f32 %v602, %v478
  %v604 = vsub.f32 %v599, %v603
  %v605 = vmul.f32 %v604, %v604
  %v606 = vsel %vm468, %v605, 0.0
  %607 = vadd.xlane.f32.xlu0 %v606
  %v608 = vpop.xlane.xlu0 %607
  %v609 = vmul.f32 %v608, %v478
  %v610 = vadd.f32 %v609, 1e-05
  %v611 = vrsqrt.pop %v610
  %v612 = vmul.f32 %v611, %v610
  %v613 = vmul.f32 %v612, %v611
  %v614 = vmul.f32 0.5, %v613
  %v615 = vsub.f32 1.5, %v614
  %v616 = vmul.f32 %v611, %v615
  %vm617 = vweird.f32 %v610
  %vm618 = vweird.f32 %v611
  %vm619 = vmor %vm617, %vm618
  %v620 = vsel %vm619, %v611, %v616
  %v621 = vmul.f32 %v604, %v620
  %v623 = vperm.slane %v73, 0
  %v625 = vmul.f32 %v621, %v623
  %v627 = vperm.slane %v74, 0
  %v629 = vadd.f32 %v625, %v627
  %630 = vst.msk [vmem:[%s17] sm:$0xf] %vm468, %v629
  %s631 = scalar_lea.vmem %s0, 4
  %v632 = vld [vmem:[%s631] sm:$0xf]
  %v633 = vld [vmem:[%s1] sm:$0xff]
  %v634 = vld [vmem:[%s1 + $0x8] sm:$0xff]
  %v635 = vld [vmem:[%s1 + $0x10] sm:$0xff]
  %v636 = vld [vmem:[%s1 + $0x18] sm:$0xff]
  %v637 = vld [vmem:[%s2] sm:$0xff]
  %v638 = vld [vmem:[%s2 + $0x8] sm:$0xff]
  %v639 = vld [vmem:[%s2 + $0x10] sm:$0xff]
  %v640 = vld [vmem:[%s2 + $0x18] sm:$0xff]
  %v641 = vld [vmem:[%s3] sm:$0xff]
  %v642 = vld [vmem:[%s3 + $0x8] sm:$0xff]
  %v643 = vld [vmem:[%s3 + $0x10] sm:$0xff]
  %v644 = vld [vmem:[%s3 + $0x18] sm:$0xff]
  %v645 = vld [vmem:[%s4] sm:$0x1]
  %v646 = vld [vmem:[%s5] sm:$0x1]
  %v647 = vld [vmem:[%s6] sm:$0x1]
  %v649 = vperm.slane %v645, 0
  %v652 = vsel %vm94, %v632, 0
  %654 = vmatpush.msra.mxu0 0.0
  %655 = vmatpush.msra.mxu0 0.0
  %656 = vmatpush.msra.mxu0 0.0
  %657 = vmatpush.msra.mxu0 0.0
  %658 = vmatpush.msra.mxu0 0.0
  %659 = vmatpush.msra.mxu0 0.0
  %660 = vmatpush.msra.mxu0 0.0
  %661 = vmatpush.msra.mxu0 0.0
  %662 = vmatpush.msra.mxu0 0.0
  %663 = vmatpush.msra.mxu0 0.0
  %664 = vmatpush.msra.mxu0 0.0
  %665 = vmatpush.msra.mxu0 0.0
  %666 = vmatpush.msra.mxu0 %v636
  %667 = vmatpush.msra.mxu0 %v635
  %668 = vmatpush.msra.mxu0 %v634
  %669 = vmatpush.msra.mxu0 %v633
  %670 = vmatmul.f32.gmra.mxu0 %v652
  %v671 = vpop.f32.mrf.mxu0
  %v672 = vadd.f32 %v649, %v671
  %673 = vdwg.mxu0
  %v674 = vmul.f32 %v672, 0.25
  %v676 = vperm.slane %v646, 0
  %678 = vmatpush.msra.mxu0 0.0
  %679 = vmatpush.msra.mxu0 0.0
  %680 = vmatpush.msra.mxu0 0.0
  %681 = vmatpush.msra.mxu0 0.0
  %682 = vmatpush.msra.mxu0 0.0
  %683 = vmatpush.msra.mxu0 0.0
  %684 = vmatpush.msra.mxu0 0.0
  %685 = vmatpush.msra.mxu0 0.0
  %686 = vmatpush.msra.mxu0 0.0
  %687 = vmatpush.msra.mxu0 0.0
  %688 = vmatpush.msra.mxu0 0.0
  %689 = vmatpush.msra.mxu0 0.0
  %690 = vmatpush.msra.mxu0 %v640
  %691 = vmatpush.msra.mxu0 %v639
  %692 = vmatpush.msra.mxu0 %v638
  %693 = vmatpush.msra.mxu0 %v637
  %694 = vmatmul.f32.gmra.mxu0 %v652
  %v695 = vpop.f32.mrf.mxu0
  %v696 = vadd.f32 %v676, %v695
  %697 = vdwg.mxu0
  %v699 = vsel %vm142, %v674, 0
  %v702 = vsel %vm142, %v696, 0
  %704 = vmatpush.xpose.msra.mxu0 0.0
  %705 = vmatpush.xpose.msra.mxu0 0.0
  %706 = vmatpush.xpose.msra.mxu0 0.0
  %707 = vmatpush.xpose.msra.mxu0 0.0
  %708 = vmatpush.xpose.msra.mxu0 0.0
  %709 = vmatpush.xpose.msra.mxu0 0.0
  %710 = vmatpush.xpose.msra.mxu0 0.0
  %711 = vmatpush.xpose.msra.mxu0 0.0
  %712 = vmatpush.xpose.msra.mxu0 0.0
  %713 = vmatpush.xpose.msra.mxu0 0.0
  %714 = vmatpush.xpose.msra.mxu0 0.0
  %715 = vmatpush.xpose.msra.mxu0 0.0
  %716 = vmatpush.xpose.msra.mxu0 0.0
  %717 = vmatpush.xpose.msra.mxu0 0.0
  %718 = vmatpush.xpose.msra.mxu0 0.0
  %719 = vmatpush.xpose.msra.mxu0 %v702
  %720 = vmatmul.f32.gmra.mxu0 %v699
  %v721 = vpop.f32.mrf.mxu0
  %v722 = vadd.f32 0.0, %v721
  %723 = vdwg.mxu0
  %v724 = vsel %vm169, %v722, -inf
  %725 = vmax.xlane.f32.xlu0 %v724
  %v726 = vpop.xlane.xlu0 %725
  %v727 = vsub.f32 %v722, %v726
  %v728 = vmul.f32 %v727, 1.442695
  %v729 = vpow.pop %v728
  %v730 = vsel %vm169, %v729, 0.0
  %731 = vadd.xlane.f32.xlu0 %v730
  %v732 = vpop.xlane.xlu0 %731
  %v734 = vperm.slane %v647, 0
  %736 = vmatpush.msra.mxu0 0.0
  %737 = vmatpush.msra.mxu0 0.0
  %738 = vmatpush.msra.mxu0 0.0
  %739 = vmatpush.msra.mxu0 0.0
  %740 = vmatpush.msra.mxu0 0.0
  %741 = vmatpush.msra.mxu0 0.0
  %742 = vmatpush.msra.mxu0 0.0
  %743 = vmatpush.msra.mxu0 0.0
  %744 = vmatpush.msra.mxu0 0.0
  %745 = vmatpush.msra.mxu0 0.0
  %746 = vmatpush.msra.mxu0 0.0
  %747 = vmatpush.msra.mxu0 0.0
  %748 = vmatpush.msra.mxu0 %v644
  %749 = vmatpush.msra.mxu0 %v643
  %750 = vmatpush.msra.mxu0 %v642
  %751 = vmatpush.msra.mxu0 %v641
  %752 = vmatmul.f32.gmra.mxu0 %v652
  %v753 = vpop.f32.mrf.mxu0
  %v754 = vadd.f32 %v734, %v753
  %755 = vdwg.mxu0
  %v757 = vsel %vm202, %v729, 0
  %v760 = vsel %vm206, %v754, 0
  %762 = vmatpush.msra.mxu0 0.0
  %763 = vmatpush.msra.mxu0 0.0
  %764 = vmatpush.msra.mxu0 0.0
  %765 = vmatpush.msra.mxu0 0.0
  %766 = vmatpush.msra.mxu0 0.0
  %767 = vmatpush.msra.mxu0 0.0
  %768 = vmatpush.msra.mxu0 0.0
  %769 = vmatpush.msra.mxu0 0.0
  %770 = vmatpush.msra.mxu0 0.0
  %771 = vmatpush.msra.mxu0 0.0
  %772 = vmatpush.msra.mxu0 0.0
  %773 = vmatpush.msra.mxu0 0.0
  %774 = vmatpush.msra.mxu0 0.0
  %775 = vmatpush.msra.mxu0 0.0
  %776 = vmatpush.msra.mxu0 0.0
  %777 = vmatpush.msra.mxu0 %v760
  %778 = vmatmul.f32.gmra.mxu0 %v757
  %v779 = vpop.f32.mrf.mxu0
  %v780 = vadd.f32 0.0, %v779
  %781 = vdwg.mxu0
  %v782 = vrcp.pop %v732
  %v783 = vmul.f32 %v732, %v782
  %v784 = vsub.f32 1.0, %v783
  %v785 = vmul.f32 %v782, %v784
  %v786 = vadd.f32 %v782, %v785
  %vm787 = vweird.f32 %v732
  %vm788 = vweird.f32 %v782
  %vm789 = vmor %vm787, %vm788
  %v790 = vsel %vm789, %v782, %v786
  %v791 = vand.u32 2147483647, %v732
  %vm792 = vcmp.eq.f32.partialorder %v791, 8.507059e+37
  %v793 = vand.u32 %v732, 2147483648
  %v794 = vor.u32 1.1754944e-38, %v793
  %v795 = vsel %vm792, %v794, %v790
  %v796 = vmul.f32 %v780, %v795
  %v797 = vld [vmem:[%s7] sm:$0xff]
  %v798 = vld [vmem:[%s7 + $0x8] sm:$0xff]
  %v799 = vld [vmem:[%s247] sm:$0xff]
  %v800 = vld [vmem:[%s247 + $0x8] sm:$0xff]
  %v801 = vld [vmem:[%s247 + $0x10] sm:$0xff]
  %v802 = vld [vmem:[%s247 + $0x18] sm:$0xff]
  %v803 = vld [vmem:[%s252] sm:$0xff]
  %v804 = vld [vmem:[%s252 + $0x8] sm:$0xff]
  %v805 = vld [vmem:[%s252 + $0x10] sm:$0xff]
  %v806 = vld [vmem:[%s252 + $0x18] sm:$0xff]
  %v807 = vld [vmem:[%s257] sm:$0xff]
  %v808 = vld [vmem:[%s257 + $0x8] sm:$0xff]
  %v809 = vld [vmem:[%s257 + $0x10] sm:$0xff]
  %v810 = vld [vmem:[%s257 + $0x18] sm:$0xff]
  %v811 = vld [vmem:[%s262] sm:$0x1]
  %v812 = vld [vmem:[%s264] sm:$0x1]
  %v813 = vld [vmem:[%s266] sm:$0x1]
  %v815 = vperm.slane %v811, 0
  %817 = vmatpush.msra.mxu0 0.0
  %818 = vmatpush.msra.mxu0 0.0
  %819 = vmatpush.msra.mxu0 0.0
  %820 = vmatpush.msra.mxu0 0.0
  %821 = vmatpush.msra.mxu0 0.0
  %822 = vmatpush.msra.mxu0 0.0
  %823 = vmatpush.msra.mxu0 0.0
  %824 = vmatpush.msra.mxu0 0.0
  %825 = vmatpush.msra.mxu0 0.0
  %826 = vmatpush.msra.mxu0 0.0
  %827 = vmatpush.msra.mxu0 0.0
  %828 = vmatpush.msra.mxu0 0.0
  %829 = vmatpush.msra.mxu0 %v802
  %830 = vmatpush.msra.mxu0 %v801
  %831 = vmatpush.msra.mxu0 %v800
  %832 = vmatpush.msra.mxu0 %v799
  %833 = vmatmul.f32.gmra.mxu0 %v652
  %v834 = vpop.f32.mrf.mxu0
  %v835 = vadd.f32 %v815, %v834
  %836 = vdwg.mxu0
  %v837 = vmul.f32 %v835, 0.25
  %v839 = vperm.slane %v812, 0
  %841 = vmatpush.msra.mxu0 0.0
  %842 = vmatpush.msra.mxu0 0.0
  %843 = vmatpush.msra.mxu0 0.0
  %844 = vmatpush.msra.mxu0 0.0
  %845 = vmatpush.msra.mxu0 0.0
  %846 = vmatpush.msra.mxu0 0.0
  %847 = vmatpush.msra.mxu0 0.0
  %848 = vmatpush.msra.mxu0 0.0
  %849 = vmatpush.msra.mxu0 0.0
  %850 = vmatpush.msra.mxu0 0.0
  %851 = vmatpush.msra.mxu0 0.0
  %852 = vmatpush.msra.mxu0 0.0
  %853 = vmatpush.msra.mxu0 %v806
  %854 = vmatpush.msra.mxu0 %v805
  %855 = vmatpush.msra.mxu0 %v804
  %856 = vmatpush.msra.mxu0 %v803
  %857 = vmatmul.f32.gmra.mxu0 %v652
  %v858 = vpop.f32.mrf.mxu0
  %v859 = vadd.f32 %v839, %v858
  %860 = vdwg.mxu0
  %v862 = vsel %vm142, %v837, 0
  %v865 = vsel %vm142, %v859, 0
  %867 = vmatpush.xpose.msra.mxu0 0.0
  %868 = vmatpush.xpose.msra.mxu0 0.0
  %869 = vmatpush.xpose.msra.mxu0 0.0
  %870 = vmatpush.xpose.msra.mxu0 0.0
  %871 = vmatpush.xpose.msra.mxu0 0.0
  %872 = vmatpush.xpose.msra.mxu0 0.0
  %873 = vmatpush.xpose.msra.mxu0 0.0
  %874 = vmatpush.xpose.msra.mxu0 0.0
  %875 = vmatpush.xpose.msra.mxu0 0.0
  %876 = vmatpush.xpose.msra.mxu0 0.0
  %877 = vmatpush.xpose.msra.mxu0 0.0
  %878 = vmatpush.xpose.msra.mxu0 0.0
  %879 = vmatpush.xpose.msra.mxu0 0.0
  %880 = vmatpush.xpose.msra.mxu0 0.0
  %881 = vmatpush.xpose.msra.mxu0 0.0
  %882 = vmatpush.xpose.msra.mxu0 %v865
  %883 = vmatmul.f32.gmra.mxu0 %v862
  %v884 = vpop.f32.mrf.mxu0
  %v885 = vadd.f32 0.0, %v884
  %886 = vdwg.mxu0
  %v887 = vsel %vm169, %v885, -inf
  %888 = vmax.xlane.f32.xlu0 %v887
  %v889 = vpop.xlane.xlu0 %888
  %v890 = vsub.f32 %v885, %v889
  %v891 = vmul.f32 %v890, 1.442695
  %v892 = vpow.pop %v891
  %v893 = vsel %vm169, %v892, 0.0
  %894 = vadd.xlane.f32.xlu0 %v893
  %v895 = vpop.xlane.xlu0 %894
  %v897 = vperm.slane %v813, 0
  %899 = vmatpush.msra.mxu0 0.0
  %900 = vmatpush.msra.mxu0 0.0
  %901 = vmatpush.msra.mxu0 0.0
  %902 = vmatpush.msra.mxu0 0.0
  %903 = vmatpush.msra.mxu0 0.0
  %904 = vmatpush.msra.mxu0 0.0
  %905 = vmatpush.msra.mxu0 0.0
  %906 = vmatpush.msra.mxu0 0.0
  %907 = vmatpush.msra.mxu0 0.0
  %908 = vmatpush.msra.mxu0 0.0
  %909 = vmatpush.msra.mxu0 0.0
  %910 = vmatpush.msra.mxu0 0.0
  %911 = vmatpush.msra.mxu0 %v810
  %912 = vmatpush.msra.mxu0 %v809
  %913 = vmatpush.msra.mxu0 %v808
  %914 = vmatpush.msra.mxu0 %v807
  %915 = vmatmul.f32.gmra.mxu0 %v652
  %v916 = vpop.f32.mrf.mxu0
  %v917 = vadd.f32 %v897, %v916
  %918 = vdwg.mxu0
  %v920 = vsel %vm202, %v892, 0
  %v923 = vsel %vm206, %v917, 0
  %925 = vmatpush.msra.mxu0 0.0
  %926 = vmatpush.msra.mxu0 0.0
  %927 = vmatpush.msra.mxu0 0.0
  %928 = vmatpush.msra.mxu0 0.0
  %929 = vmatpush.msra.mxu0 0.0
  %930 = vmatpush.msra.mxu0 0.0
  %931 = vmatpush.msra.mxu0 0.0
  %932 = vmatpush.msra.mxu0 0.0
  %933 = vmatpush.msra.mxu0 0.0
  %934 = vmatpush.msra.mxu0 0.0
  %935 = vmatpush.msra.mxu0 0.0
  %936 = vmatpush.msra.mxu0 0.0
  %937 = vmatpush.msra.mxu0 0.0
  %938 = vmatpush.msra.mxu0 0.0
  %939 = vmatpush.msra.mxu0 0.0
  %940 = vmatpush.msra.mxu0 %v923
  %941 = vmatmul.f32.gmra.mxu0 %v920
  %v942 = vpop.f32.mrf.mxu0
  %v943 = vadd.f32 0.0, %v942
  %944 = vdwg.mxu0
  %v945 = vrcp.pop %v895
  %v946 = vmul.f32 %v895, %v945
  %v947 = vsub.f32 1.0, %v946
  %v948 = vmul.f32 %v945, %v947
  %v949 = vadd.f32 %v945, %v948
  %vm950 = vweird.f32 %v895
  %vm951 = vweird.f32 %v945
  %vm952 = vmor %vm950, %vm951
  %v953 = vsel %vm952, %v945, %v949
  %v954 = vand.u32 2147483647, %v895
  %vm955 = vcmp.eq.f32.partialorder %v954, 8.507059e+37
  %v956 = vand.u32 %v895, 2147483648
  %v957 = vor.u32 1.1754944e-38, %v956
  %v958 = vsel %vm955, %v957, %v953
  %v959 = vmul.f32 %v943, %v958
  %v960 = vld [vmem:[%s414] sm:$0xff]
  %v961 = vld [vmem:[%s414 + $0x8] sm:$0xff]
  %v963 = vsel %vm142, %v959, 0
  %965 = vmatpush.msra.mxu0 0.0
  %966 = vmatpush.msra.mxu0 0.0
  %967 = vmatpush.msra.mxu0 0.0
  %968 = vmatpush.msra.mxu0 0.0
  %969 = vmatpush.msra.mxu0 0.0
  %970 = vmatpush.msra.mxu0 0.0
  %971 = vmatpush.msra.mxu0 0.0
  %972 = vmatpush.msra.mxu0 0.0
  %973 = vmatpush.msra.mxu0 0.0
  %974 = vmatpush.msra.mxu0 0.0
  %975 = vmatpush.msra.mxu0 0.0
  %976 = vmatpush.msra.mxu0 0.0
  %977 = vmatpush.msra.mxu0 0.0
  %978 = vmatpush.msra.mxu0 0.0
  %979 = vmatpush.msra.mxu0 %v961
  %980 = vmatpush.msra.mxu0 %v960
  %981 = vmatmul.f32.gmra.mxu0 %v963
  %v982 = vpop.f32.mrf.mxu0
  %v983 = vadd.f32 0.0, %v982
  %984 = vdwg.mxu0
  %v986 = vsel %vm142, %v796, 0
  %988 = vmatpush.msra.mxu0 0.0
  %989 = vmatpush.msra.mxu0 0.0
  %990 = vmatpush.msra.mxu0 0.0
  %991 = vmatpush.msra.mxu0 0.0
  %992 = vmatpush.msra.mxu0 0.0
  %993 = vmatpush.msra.mxu0 0.0
  %994 = vmatpush.msra.mxu0 0.0
  %995 = vmatpush.msra.mxu0 0.0
  %996 = vmatpush.msra.mxu0 0.0
  %997 = vmatpush.msra.mxu0 0.0
  %998 = vmatpush.msra.mxu0 0.0
  %999 = vmatpush.msra.mxu0 0.0
  %1000 = vmatpush.msra.mxu0 0.0
  %1001 = vmatpush.msra.mxu0 0.0
  %1002 = vmatpush.msra.mxu0 %v798
  %1003 = vmatpush.msra.mxu0 %v797
  %1004 = vmatmul.f32.gmra.mxu0 %v986
  %v1005 = vpop.f32.mrf.mxu0
  %v1006 = vadd.f32 %v983, %v1005
  %1007 = vdwg.mxu0
  %v1008 = vadd.f32 %v632, %v1006
  %v1009 = vadd.f32 %v1008, %v465
  %v1010 = vsel %vm468, %v1009, 0.0
  %1011 = vadd.xlane.f32.xlu0 %v1010
  %v1012 = vpop.xlane.xlu0 %1011
  %v1013 = vmul.f32 %v1012, %v478
  %v1014 = vsub.f32 %v1009, %v1013
  %v1015 = vmul.f32 %v1014, %v1014
  %v1016 = vsel %vm468, %v1015, 0.0
  %1017 = vadd.xlane.f32.xlu0 %v1016
  %v1018 = vpop.xlane.xlu0 %1017
  %v1019 = vmul.f32 %v1018, %v478
  %v1020 = vadd.f32 %v1019, 1e-05
  %v1021 = vrsqrt.pop %v1020
  %v1022 = vmul.f32 %v1021, %v1020
  %v1023 = vmul.f32 %v1022, %v1021
  %v1024 = vmul.f32 0.5, %v1023
  %v1025 = vsub.f32 1.5, %v1024
  %v1026 = vmul.f32 %v1021, %v1025
  %vm1027 = vweird.f32 %v1020
  %vm1028 = vweird.f32 %v1021
  %vm1029 = vmor %vm1027, %vm1028
  %v1030 = vsel %vm1029, %v1021, %v1026
  %v1031 = vmul.f32 %v1014, %v1030
  %v1032 = vmul.f32 %v1031, %v499
  %v1033 = vadd.f32 %v1032, %v503
  %v1035 = vsel %vm94, %v1033, 0
  %1037 = vmatpush.msra.mxu0 0.0
  %1038 = vmatpush.msra.mxu0 0.0
  %1039 = vmatpush.msra.mxu0 0.0
  %1040 = vmatpush.msra.mxu0 0.0
  %1041 = vmatpush.msra.mxu0 0.0
  %1042 = vmatpush.msra.mxu0 0.0
  %1043 = vmatpush.msra.mxu0 0.0
  %1044 = vmatpush.msra.mxu0 0.0
  %1045 = vmatpush.msra.mxu0 0.0
  %1046 = vmatpush.msra.mxu0 0.0
  %1047 = vmatpush.msra.mxu0 0.0
  %1048 = vmatpush.msra.mxu0 0.0
  %1049 = vmatpush.msra.mxu0 %v60
  %1050 = vmatpush.msra.mxu0 %v59
  %1051 = vmatpush.msra.mxu0 %v58
  %1052 = vmatpush.msra.mxu0 %v57
  %1053 = vmatmul.f32.gmra.mxu0 %v1035
  %v1054 = vpop.f32.mrf.mxu0
  %v1055 = vadd.f32 %v507, %v1054
  %1056 = vdwg.mxu0
  %v1057 = vmul.f32 %v1055, 0.5
  %v1058 = vmul.f32 %v1055, 0.70710677
  %v1059 = vand.u32 2147483647, %v1058
  %v1060 = vmul.f32 %v1059, 0.3275911
  %v1061 = vadd.f32 %v1060, 1.0
  %v1062 = vrcp.pop %v1061
  %v1063 = vmul.f32 %v1061, %v1062
  %v1064 = vsub.f32 1.0, %v1063
  %v1065 = vmul.f32 %v1062, %v1064
  %v1066 = vadd.f32 %v1062, %v1065
  %vm1067 = vweird.f32 %v1061
  %vm1068 = vweird.f32 %v1062
  %vm1069 = vmor %vm1067, %vm1068
  %v1070 = vsel %vm1069, %v1062, %v1066
  %v1071 = vand.u32 2147483647, %v1061
  %vm1072 = vcmp.eq.f32.partialorder %v1071, 8.507059e+37
  %v1073 = vand.u32 %v1061, 2147483648
  %v1074 = vor.u32 1.1754944e-38, %v1073
  %v1075 = vsel %vm1072, %v1074, %v1070
  %v1076 = vmul.f32 1.0, %v1075
  %v1077 = vmul.f32 %v1076, 1.0614054
  %v1078 = vadd.f32 %v1077, -1.4531521
  %v1079 = vmul.f32 %v1078, %v1076
  %v1080 = vadd.f32 %v1079, 1.4214138
  %v1081 = vmul.f32 %v1080, %v1076
  %v1082 = vadd.f32 %v1081, -0.28449672
  %v1083 = vmul.f32 %v1082, %v1076
  %v1084 = vadd.f32 %v1083, 0.2548296
  %v1085 = vmul.f32 %v1084, %v1076
  %v1086 = vsub.f32 0.0, %v1059
  %v1087 = vmul.f32 %v1086, %v1059
  %v1088 = vmul.f32 %v1087, 1.442695
  %v1089 = vpow.pop %v1088
  %v1090 = vmul.f32 %v1085, %v1089
  %v1091 = vsub.f32 1.0, %v1090
  %vm1092 = vcmp.lt.f32.partialorder %v1058, 0.0
  %v1093 = vsub.f32 0.0, %v1091
  %v1094 = vsel %vm1092, %v1093, %v1091
  %v1095 = vadd.f32 %v1094, 1.0
  %v1096 = vmul.f32 %v1057, %v1095
  %v1098 = vsel %vm575, %v1096, 0
  %1100 = vmatpush.msra.mxu0 0.0
  %1101 = vmatpush.msra.mxu0 0.0
  %1102 = vmatpush.msra.mxu0 0.0
  %1103 = vmatpush.msra.mxu0 0.0
  %1104 = vmatpush.msra.mxu0 0.0
  %1105 = vmatpush.msra.mxu0 0.0
  %1106 = vmatpush.msra.mxu0 0.0
  %1107 = vmatpush.msra.mxu0 0.0
  %1108 = vmatpush.msra.mxu0 %v69
  %1109 = vmatpush.msra.mxu0 %v68
  %1110 = vmatpush.msra.mxu0 %v67
  %1111 = vmatpush.msra.mxu0 %v66
  %1112 = vmatpush.msra.mxu0 %v65
  %1113 = vmatpush.msra.mxu0 %v64
  %1114 = vmatpush.msra.mxu0 %v63
  %1115 = vmatpush.msra.mxu0 %v62
  %1116 = vmatmul.f32.gmra.mxu0 %v1098
  %v1117 = vpop.f32.mrf.mxu0
  %v1118 = vadd.f32 %v573, %v1117
  %1119 = vdwg.mxu0
  %v1120 = vadd.f32 %v1033, %v1118
  %v1121 = vsel %vm468, %v1120, 0.0
  %1122 = vadd.xlane.f32.xlu0 %v1121
  %v1123 = vpop.xlane.xlu0 %1122
  %v1124 = vmul.f32 %v1123, %v478
  %v1125 = vsub.f32 %v1120, %v1124
  %v1126 = vmul.f32 %v1125, %v1125
  %v1127 = vsel %vm468, %v1126, 0.0
  %1128 = vadd.xlane.f32.xlu0 %v1127
  %v1129 = vpop.xlane.xlu0 %1128
  %v1130 = vmul.f32 %v1129, %v478
  %v1131 = vadd.f32 %v1130, 1e-05
  %v1132 = vrsqrt.pop %v1131
  %v1133 = vmul.f32 %v1132, %v1131
  %v1134 = vmul.f32 %v1133, %v1132
  %v1135 = vmul.f32 0.5, %v1134
  %v1136 = vsub.f32 1.5, %v1135
  %v1137 = vmul.f32 %v1132, %v1136
  %vm1138 = vweird.f32 %v1131
  %vm1139 = vweird.f32 %v1132
  %vm1140 = vmor %vm1138, %vm1139
  %v1141 = vsel %vm1140, %v1132, %v1137
  %v1142 = vmul.f32 %v1125, %v1141
  %v1143 = vmul.f32 %v1142, %v623
  %v1144 = vadd.f32 %v1143, %v627
  %s1145 = scalar_lea.vmem %s17, 4
  %1146 = vst.msk [vmem:[%s1145] sm:$0xf] %vm468, %v1144
  // Predicated region
  $region70: #{transformer_vae_v4_forward.11} parent=0 // pred_check
    _
  $region71: #{transformer_vae_v4_forward.11} parent=0 // pred_check_branch
    %1148 = sbr.rel (0) target = $region73
  $region72: #{transformer_vae_v4_forward.11} parent=0 // pred_region
    _
  $region73: #{transformer_vae_v4_forward.11} parent=0 // pred_fallthru
    _
  // Predicated region
  $region74: #{transformer_vae_v4_forward.11} parent=0 // pred_check
    _
  $region75: #{transformer_vae_v4_forward.11} parent=0 // pred_check_branch
    %1150 = sbr.rel (0) target = $region77
  $region76: #{transformer_vae_v4_forward.11} parent=0 // pred_region
    _
  $region77: #{transformer_vae_v4_forward.11} parent=0 // pred_fallthru
    _

// kernel: transformer_vae_v4_forward.19
$region0: #{transformer_vae_v4_forward.19}
  #allocation0 [shape = 'u32[]', space=smem, size = 0x4, offset = 0x4, fixed_abs, tag = 'smem constant byte address 0x4 - core index']
  #allocation1 [shape = 'u32[72,128]{1,0:T(1,128)}', space=vmem, size = 0x9000, scoped, tag = 'internal scratch']
  %s0 = inlined_call_operand.vmem [shape: f32[16,32], index: 0, kind: input, shape index: {}]
  %s1 = inlined_call_operand.vmem [shape: f32[32,6], index: 1, kind: input, shape index: {}]
  %s2 = inlined_call_operand.vmem [shape: f32[1,6], index: 2, kind: input, shape index: {}]
  %s3 = inlined_call_operand.vmem [shape: f32[16,6], index: 3, kind: output, shape index: {}]
  %s4 = sld [smem:[#allocation0]]
  $region22: #{transformer_vae_v4_forward.19} parent=0
    _
  %s6 = ssub.s32 1, %s4
  %s7 = scalar_select 0, %s6, %s4
  // Predicated region
  $region2: #{transformer_vae_v4_forward.19} parent=0 // pred_check
    _
  $region3: #{transformer_vae_v4_forward.19} parent=0 // pred_check_branch
    %9 = sbr.rel (0) target = $region5
  $region4: #{transformer_vae_v4_forward.19} parent=0 // pred_region
    _
  $region5: #{transformer_vae_v4_forward.19} parent=0 // pred_fallthru
    _
  // Predicated region
  $region6: #{transformer_vae_v4_forward.19} parent=0 // pred_check
    _
  $region7: #{transformer_vae_v4_forward.19} parent=0 // pred_check_branch
    %11 = sbr.rel (0) target = $region9
  $region8: #{transformer_vae_v4_forward.19} parent=0 // pred_region
    _
  $region9: #{transformer_vae_v4_forward.19} parent=0 // pred_fallthru
    _
  // Predicated region
  $region10: #{transformer_vae_v4_forward.19} parent=0 // pred_check
    _
  $region11: #{transformer_vae_v4_forward.19} parent=0 // pred_check_branch
    %13 = sbr.rel (0) target = $region13
  $region12: #{transformer_vae_v4_forward.19} parent=0 // pred_region
    _
  $region13: #{transformer_vae_v4_forward.19} parent=0 // pred_fallthru
    _
  %v14 = vld [vmem:[%s0] sm:$0xff]
  %v15 = vld [vmem:[%s0 + $0x8] sm:$0xff]
  %v16 = vld [vmem:[%s1] sm:$0xff]
  %v17 = vld [vmem:[%s1 + $0x8] sm:$0xff]
  %v18 = vld [vmem:[%s1 + $0x10] sm:$0xff]
  %v19 = vld [vmem:[%s1 + $0x18] sm:$0xff]
  %v20 = vld [vmem:[%s2] sm:$0x1]
  %v22 = vperm.slane %v20, 0
  %vm24 = vcmask 261120
  %v26 = vsel %vm24, %v14, 0
  %v29 = vsel %vm24, %v15, 0
  %31 = vmatpush.msra.mxu0 0.0
  %32 = vmatpush.msra.mxu0 0.0
  %33 = vmatpush.msra.mxu0 0.0
  %34 = vmatpush.msra.mxu0 0.0
  %35 = vmatpush.msra.mxu0 0.0
  %36 = vmatpush.msra.mxu0 0.0
  %37 = vmatpush.msra.mxu0 0.0
  %38 = vmatpush.msra.mxu0 0.0
  %39 = vmatpush.msra.mxu0 0.0
  %40 = vmatpush.msra.mxu0 0.0
  %41 = vmatpush.msra.mxu0 0.0
  %42 = vmatpush.msra.mxu0 0.0
  %43 = vmatpush.msra.mxu0 %v19
  %44 = vmatpush.msra.mxu0 %v18
  %45 = vmatpush.msra.mxu0 %v17
  %46 = vmatpush.msra.mxu0 %v16
  %47 = vmatmul.f32.gmra.mxu0 %v26
  %v48 = vpop.f32.mrf.mxu0
  %v49 = vadd.f32 %v22, %v48
  %50 = vmatmul.f32.gmra.mxu0 %v29
  %v51 = vpop.f32.mrf.mxu0
  %v52 = vadd.f32 %v22, %v51
  %53 = vdwg.mxu0
  %vm54 = vcmask 48128
  %55 = vst.msk [vmem:[%s3] sm:$0xff] %vm54, %v49
  %56 = vst.msk [vmem:[%s3 + $0x8] sm:$0xff] %vm54, %v52
  // Predicated region
  $region14: #{transformer_vae_v4_forward.19} parent=0 // pred_check
    _
  $region15: #{transformer_vae_v4_forward.19} parent=0 // pred_check_branch
    %58 = sbr.rel (0) target = $region17
  $region16: #{transformer_vae_v4_forward.19} parent=0 // pred_region
    _
  $region17: #{transformer_vae_v4_forward.19} parent=0 // pred_fallthru
    _
  // Predicated region
  $region18: #{transformer_vae_v4_forward.19} parent=0 // pred_check
    _
  $region19: #{transformer_vae_v4_forward.19} parent=0 // pred_check_branch
    %60 = sbr.rel (0) target = $region21
  $region20: #{transformer_vae_v4_forward.19} parent=0 // pred_region
    _
  $region21: #{transformer_vae_v4_forward.19} parent=0 // pred_fallthru
    _

// kernel: transformer_vae_v4_forward.14
$region0: #{transformer_vae_v4_forward.14}
  #allocation0 [shape = 'u32[]', space=smem, size = 0x4, offset = 0x4, fixed_abs, tag = 'smem constant byte address 0x4 - core index']
  #allocation1 [shape = 'u32[72,128]{1,0:T(1,128)}', space=vmem, size = 0x9000, scoped, tag = 'internal scratch']
  %s0 = inlined_call_operand.vmem [shape: f32[2,4,32], index: 0, kind: input, shape index: {}]
  %s1 = inlined_call_operand.vmem [shape: f32[2,10,32], index: 1, kind: input, shape index: {}]
  %s2 = inlined_call_operand.vmem [shape: f32[2,10,10], index: 2, kind: input, shape index: {}]
  %s3 = inlined_call_operand.vmem [shape: f32[32,32], index: 3, kind: input, shape index: {}]
  %s4 = inlined_call_operand.vmem [shape: f32[1,32], index: 4, kind: input, shape index: {}]
  %s5 = inlined_call_operand.vmem [shape: f32[2,32,16], index: 5, kind: input, shape index: {}]
  %s6 = inlined_call_operand.vmem [shape: f32[2,32,16], index: 6, kind: input, shape index: {}]
  %s7 = inlined_call_operand.vmem [shape: f32[2,32,16], index: 7, kind: input, shape index: {}]
  %s8 = inlined_call_operand.vmem [shape: f32[2,1,16], index: 8, kind: input, shape index: {}]
  %s9 = inlined_call_operand.vmem [shape: f32[2,1,16], index: 9, kind: input, shape index: {}]
  %s10 = inlined_call_operand.vmem [shape: f32[2,1,16], index: 10, kind: input, shape index: {}]
  %s11 = inlined_call_operand.vmem [shape: f32[2,16,32], index: 11, kind: input, shape index: {}]
  %s12 = inlined_call_operand.vmem [shape: f32[1,32], index: 12, kind: input, shape index: {}]
  %s13 = inlined_call_operand.vmem [shape: f32[32,64], index: 13, kind: input, shape index: {}]
  %s14 = inlined_call_operand.vmem [shape: f32[1,64], index: 14, kind: input, shape index: {}]
  %s15 = inlined_call_operand.vmem [shape: f32[64,32], index: 15, kind: input, shape index: {}]
  %s16 = inlined_call_operand.vmem [shape: f32[1,32], index: 16, kind: input, shape index: {}]
  %s17 = inlined_call_operand.vmem [shape: f32[1,32], index: 17, kind: input, shape index: {}]
  %s18 = inlined_call_operand.vmem [shape: f32[1,32], index: 18, kind: input, shape index: {}]
  %s19 = inlined_call_operand.vmem [shape: f32[1,32], index: 19, kind: input, shape index: {}]
  %s20 = inlined_call_operand.vmem [shape: f32[1,32], index: 20, kind: input, shape index: {}]
  %s21 = inlined_call_operand.vmem [shape: f32[2,10,32], index: 21, kind: output, shape index: {}]
  %s22 = sld [smem:[#allocation0]]
  $region94: #{transformer_vae_v4_forward.14} parent=0
    _
  %s24 = ssub.s32 1, %s22
  %s25 = scalar_select 0, %s24, %s22
  // Predicated region
  $region2: #{transformer_vae_v4_forward.14} parent=0 // pred_check
    _
  $region3: #{transformer_vae_v4_forward.14} parent=0 // pred_check_branch
    %27 = sbr.rel (0) target = $region5
  $region4: #{transformer_vae_v4_forward.14} parent=0 // pred_region
    _
  $region5: #{transformer_vae_v4_forward.14} parent=0 // pred_fallthru
    _
  // Predicated region
  $region6: #{transformer_vae_v4_forward.14} parent=0 // pred_check
    _
  $region7: #{transformer_vae_v4_forward.14} parent=0 // pred_check_branch
    %29 = sbr.rel (0) target = $region9
  $region8: #{transformer_vae_v4_forward.14} parent=0 // pred_region
    _
  $region9: #{transformer_vae_v4_forward.14} parent=0 // pred_fallthru
    _
  // Predicated region
  $region10: #{transformer_vae_v4_forward.14} parent=0 // pred_check
    _
  $region11: #{transformer_vae_v4_forward.14} parent=0 // pred_check_branch
    %31 = sbr.rel (0) target = $region13
  $region12: #{transformer_vae_v4_forward.14} parent=0 // pred_region
    _
  $region13: #{transformer_vae_v4_forward.14} parent=0 // pred_fallthru
    _
  // Predicated region
  $region14: #{transformer_vae_v4_forward.14} parent=0 // pred_check
    _
  $region15: #{transformer_vae_v4_forward.14} parent=0 // pred_check_branch
    %33 = sbr.rel (0) target = $region17
  $region16: #{transformer_vae_v4_forward.14} parent=0 // pred_region
    _
  $region17: #{transformer_vae_v4_forward.14} parent=0 // pred_fallthru
    _
  // Predicated region
  $region18: #{transformer_vae_v4_forward.14} parent=0 // pred_check
    _
  $region19: #{transformer_vae_v4_forward.14} parent=0 // pred_check_branch
    %35 = sbr.rel (0) target = $region21
  $region20: #{transformer_vae_v4_forward.14} parent=0 // pred_region
    _
  $region21: #{transformer_vae_v4_forward.14} parent=0 // pred_fallthru
    _
  // Predicated region
  $region22: #{transformer_vae_v4_forward.14} parent=0 // pred_check
    _
  $region23: #{transformer_vae_v4_forward.14} parent=0 // pred_check_branch
    %37 = sbr.rel (0) target = $region25
  $region24: #{transformer_vae_v4_forward.14} parent=0 // pred_region
    _
  $region25: #{transformer_vae_v4_forward.14} parent=0 // pred_fallthru
    _
  // Predicated region
  $region26: #{transformer_vae_v4_forward.14} parent=0 // pred_check
    _
  $region27: #{transformer_vae_v4_forward.14} parent=0 // pred_check_branch
    %39 = sbr.rel (0) target = $region29
  $region28: #{transformer_vae_v4_forward.14} parent=0 // pred_region
    _
  $region29: #{transformer_vae_v4_forward.14} parent=0 // pred_fallthru
    _
  // Predicated region
  $region30: #{transformer_vae_v4_forward.14} parent=0 // pred_check
    _
  $region31: #{transformer_vae_v4_forward.14} parent=0 // pred_check_branch
    %41 = sbr.rel (0) target = $region33
  $region32: #{transformer_vae_v4_forward.14} parent=0 // pred_region
    _
  $region33: #{transformer_vae_v4_forward.14} parent=0 // pred_fallthru
    _
  // Predicated region
  $region34: #{transformer_vae_v4_forward.14} parent=0 // pred_check
    _
  $region35: #{transformer_vae_v4_forward.14} parent=0 // pred_check_branch
    %43 = sbr.rel (0) target = $region37
  $region36: #{transformer_vae_v4_forward.14} parent=0 // pred_region
    _
  $region37: #{transformer_vae_v4_forward.14} parent=0 // pred_fallthru
    _
  // Predicated region
  $region38: #{transformer_vae_v4_forward.14} parent=0 // pred_check
    _
  $region39: #{transformer_vae_v4_forward.14} parent=0 // pred_check_branch
    %45 = sbr.rel (0) target = $region41
  $region40: #{transformer_vae_v4_forward.14} parent=0 // pred_region
    _
  $region41: #{transformer_vae_v4_forward.14} parent=0 // pred_fallthru
    _
  // Predicated region
  $region42: #{transformer_vae_v4_forward.14} parent=0 // pred_check
    _
  $region43: #{transformer_vae_v4_forward.14} parent=0 // pred_check_branch
    %47 = sbr.rel (0) target = $region45
  $region44: #{transformer_vae_v4_forward.14} parent=0 // pred_region
    _
  $region45: #{transformer_vae_v4_forward.14} parent=0 // pred_fallthru
    _
  // Predicated region
  $region46: #{transformer_vae_v4_forward.14} parent=0 // pred_check
    _
  $region47: #{transformer_vae_v4_forward.14} parent=0 // pred_check_branch
    %49 = sbr.rel (0) target = $region49
  $region48: #{transformer_vae_v4_forward.14} parent=0 // pred_region
    _
  $region49: #{transformer_vae_v4_forward.14} parent=0 // pred_fallthru
    _
  // Predicated region
  $region50: #{transformer_vae_v4_forward.14} parent=0 // pred_check
    _
  $region51: #{transformer_vae_v4_forward.14} parent=0 // pred_check_branch
    %51 = sbr.rel (0) target = $region53
  $region52: #{transformer_vae_v4_forward.14} parent=0 // pred_region
    _
  $region53: #{transformer_vae_v4_forward.14} parent=0 // pred_fallthru
    _
  // Predicated region
  $region54: #{transformer_vae_v4_forward.14} parent=0 // pred_check
    _
  $region55: #{transformer_vae_v4_forward.14} parent=0 // pred_check_branch
    %53 = sbr.rel (0) target = $region57
  $region56: #{transformer_vae_v4_forward.14} parent=0 // pred_region
    _
  $region57: #{transformer_vae_v4_forward.14} parent=0 // pred_fallthru
    _
  // Predicated region
  $region58: #{transformer_vae_v4_forward.14} parent=0 // pred_check
    _
  $region59: #{transformer_vae_v4_forward.14} parent=0 // pred_check_branch
    %55 = sbr.rel (0) target = $region61
  $region60: #{transformer_vae_v4_forward.14} parent=0 // pred_region
    _
  $region61: #{transformer_vae_v4_forward.14} parent=0 // pred_fallthru
    _
  // Predicated region
  $region62: #{transformer_vae_v4_forward.14} parent=0 // pred_check
    _
  $region63: #{transformer_vae_v4_forward.14} parent=0 // pred_check_branch
    %57 = sbr.rel (0) target = $region65
  $region64: #{transformer_vae_v4_forward.14} parent=0 // pred_region
    _
  $region65: #{transformer_vae_v4_forward.14} parent=0 // pred_fallthru
    _
  // Predicated region
  $region66: #{transformer_vae_v4_forward.14} parent=0 // pred_check
    _
  $region67: #{transformer_vae_v4_forward.14} parent=0 // pred_check_branch
    %59 = sbr.rel (0) target = $region69
  $region68: #{transformer_vae_v4_forward.14} parent=0 // pred_region
    _
  $region69: #{transformer_vae_v4_forward.14} parent=0 // pred_fallthru
    _
  // Predicated region
  $region70: #{transformer_vae_v4_forward.14} parent=0 // pred_check
    _
  $region71: #{transformer_vae_v4_forward.14} parent=0 // pred_check_branch
    %61 = sbr.rel (0) target = $region73
  $region72: #{transformer_vae_v4_forward.14} parent=0 // pred_region
    _
  $region73: #{transformer_vae_v4_forward.14} parent=0 // pred_fallthru
    _
  // Predicated region
  $region74: #{transformer_vae_v4_forward.14} parent=0 // pred_check
    _
  $region75: #{transformer_vae_v4_forward.14} parent=0 // pred_check_branch
    %63 = sbr.rel (0) target = $region77
  $region76: #{transformer_vae_v4_forward.14} parent=0 // pred_region
    _
  $region77: #{transformer_vae_v4_forward.14} parent=0 // pred_fallthru
    _
  // Predicated region
  $region78: #{transformer_vae_v4_forward.14} parent=0 // pred_check
    _
  $region79: #{transformer_vae_v4_forward.14} parent=0 // pred_check_branch
    %65 = sbr.rel (0) target = $region81
  $region80: #{transformer_vae_v4_forward.14} parent=0 // pred_region
    _
  $region81: #{transformer_vae_v4_forward.14} parent=0 // pred_fallthru
    _
  // Predicated region
  $region82: #{transformer_vae_v4_forward.14} parent=0 // pred_check
    _
  $region83: #{transformer_vae_v4_forward.14} parent=0 // pred_check_branch
    %67 = sbr.rel (0) target = $region85
  $region84: #{transformer_vae_v4_forward.14} parent=0 // pred_region
    _
  $region85: #{transformer_vae_v4_forward.14} parent=0 // pred_fallthru
    _
  %v68 = vld [vmem:[%s3] sm:$0xff]
  %v69 = vld [vmem:[%s3 + $0x8] sm:$0xff]
  %v70 = vld [vmem:[%s3 + $0x10] sm:$0xff]
  %v71 = vld [vmem:[%s3 + $0x18] sm:$0xff]
  %v72 = vld [vmem:[%s4] sm:$0x1]
  %v73 = vld [vmem:[%s12] sm:$0x1]
  %v74 = vld [vmem:[%s13] sm:$0xff]
  %v75 = vld [vmem:[%s13 + $0x8] sm:$0xff]
  %v76 = vld [vmem:[%s13 + $0x10] sm:$0xff]
  %v77 = vld [vmem:[%s13 + $0x18] sm:$0xff]
  %v78 = vld [vmem:[%s14] sm:$0x1]
  %v79 = vld [vmem:[%s15] sm:$0xff]
  %v80 = vld [vmem:[%s15 + $0x8] sm:$0xff]
  %v81 = vld [vmem:[%s15 + $0x10] sm:$0xff]
  %v82 = vld [vmem:[%s15 + $0x18] sm:$0xff]
  %v83 = vld [vmem:[%s15 + $0x20] sm:$0xff]
  %v84 = vld [vmem:[%s15 + $0x28] sm:$0xff]
  %v85 = vld [vmem:[%s15 + $0x30] sm:$0xff]
  %v86 = vld [vmem:[%s15 + $0x38] sm:$0xff]
  %v87 = vld [vmem:[%s16] sm:$0x1]
  %v88 = vld [vmem:[%s17] sm:$0x1]
  %v89 = vld [vmem:[%s18] sm:$0x1]
  %v90 = vld [vmem:[%s19] sm:$0x1]
  %v91 = vld [vmem:[%s20] sm:$0x1]
  %v92 = vld [vmem:[%s1] sm:$0xff]
  %v93 = vld [vmem:[%s1 + $0x8] sm:$0x3]
  %v94 = vld [vmem:[%s0] sm:$0xf]
  %v96 = vperm.slane %v72, 0
  %vm98 = vcmask 261120
  %v100 = vsel %vm98, %v94, 0
  %102 = vmatpush.msra.mxu0 0.0
  %103 = vmatpush.msra.mxu0 0.0
  %104 = vmatpush.msra.mxu0 0.0
  %105 = vmatpush.msra.mxu0 0.0
  %106 = vmatpush.msra.mxu0 0.0
  %107 = vmatpush.msra.mxu0 0.0
  %108 = vmatpush.msra.mxu0 0.0
  %109 = vmatpush.msra.mxu0 0.0
  %110 = vmatpush.msra.mxu0 0.0
  %111 = vmatpush.msra.mxu0 0.0
  %112 = vmatpush.msra.mxu0 0.0
  %113 = vmatpush.msra.mxu0 0.0
  %114 = vmatpush.msra.mxu0 %v71
  %115 = vmatpush.msra.mxu0 %v70
  %116 = vmatpush.msra.mxu0 %v69
  %117 = vmatpush.msra.mxu0 %v68
  %118 = vmatmul.f32.gmra.mxu0 %v100
  %v119 = vpop.f32.mrf.mxu0
  %v120 = vadd.f32 %v96, %v119
  %121 = vdwg.mxu0
  %v122 = vld [vmem:[%s2] sm:$0xff]
  %v123 = vld [vmem:[%s2 + $0x8] sm:$0x3]
  %v124 = vld [vmem:[%s5] sm:$0xff]
  %v125 = vld [vmem:[%s5 + $0x8] sm:$0xff]
  %v126 = vld [vmem:[%s5 + $0x10] sm:$0xff]
  %v127 = vld [vmem:[%s5 + $0x18] sm:$0xff]
  %v128 = vld [vmem:[%s6] sm:$0xff]
  %v129 = vld [vmem:[%s6 + $0x8] sm:$0xff]
  %v130 = vld [vmem:[%s6 + $0x10] sm:$0xff]
  %v131 = vld [vmem:[%s6 + $0x18] sm:$0xff]
  %v132 = vld [vmem:[%s7] sm:$0xff]
  %v133 = vld [vmem:[%s7 + $0x8] sm:$0xff]
  %v134 = vld [vmem:[%s7 + $0x10] sm:$0xff]
  %v135 = vld [vmem:[%s7 + $0x18] sm:$0xff]
  %v136 = vld [vmem:[%s8] sm:$0x1]
  %v137 = vld [vmem:[%s9] sm:$0x1]
  %v138 = vld [vmem:[%s10] sm:$0x1]
  %v140 = vperm.slane %v136, 0
  %v143 = vsel %vm98, %v92, 0
  %v146 = vsel %vm98, %v93, 0
  %148 = vmatpush.msra.mxu0 0.0
  %149 = vmatpush.msra.mxu0 0.0
  %150 = vmatpush.msra.mxu0 0.0
  %151 = vmatpush.msra.mxu0 0.0
  %152 = vmatpush.msra.mxu0 0.0
  %153 = vmatpush.msra.mxu0 0.0
  %154 = vmatpush.msra.mxu0 0.0
  %155 = vmatpush.msra.mxu0 0.0
  %156 = vmatpush.msra.mxu0 0.0
  %157 = vmatpush.msra.mxu0 0.0
  %158 = vmatpush.msra.mxu0 0.0
  %159 = vmatpush.msra.mxu0 0.0
  %160 = vmatpush.msra.mxu0 %v127
  %161 = vmatpush.msra.mxu0 %v126
  %162 = vmatpush.msra.mxu0 %v125
  %163 = vmatpush.msra.mxu0 %v124
  %164 = vmatmul.f32.gmra.mxu0 %v143
  %v165 = vpop.f32.mrf.mxu0
  %v166 = vadd.f32 %v140, %v165
  %167 = vmatmul.f32.gmra.mxu0 %v146
  %v168 = vpop.f32.mrf.mxu0
  %v169 = vadd.f32 %v140, %v168
  %170 = vdwg.mxu0
  %v171 = vmul.f32 %v166, 0.25
  %v172 = vmul.f32 %v169, 0.25
  %v174 = vperm.slane %v137, 0
  %v177 = vsel %vm98, %v120, 0
  %179 = vmatpush.msra.mxu0 0.0
  %180 = vmatpush.msra.mxu0 0.0
  %181 = vmatpush.msra.mxu0 0.0
  %182 = vmatpush.msra.mxu0 0.0
  %183 = vmatpush.msra.mxu0 0.0
  %184 = vmatpush.msra.mxu0 0.0
  %185 = vmatpush.msra.mxu0 0.0
  %186 = vmatpush.msra.mxu0 0.0
  %187 = vmatpush.msra.mxu0 0.0
  %188 = vmatpush.msra.mxu0 0.0
  %189 = vmatpush.msra.mxu0 0.0
  %190 = vmatpush.msra.mxu0 0.0
  %191 = vmatpush.msra.mxu0 %v131
  %192 = vmatpush.msra.mxu0 %v130
  %193 = vmatpush.msra.mxu0 %v129
  %194 = vmatpush.msra.mxu0 %v128
  %195 = vmatmul.f32.gmra.mxu0 %v177
  %v196 = vpop.f32.mrf.mxu0
  %v197 = vadd.f32 %v174, %v196
  %198 = vdwg.mxu0
  %vm199 = vcmask 130048
  %v201 = vsel %vm199, %v171, 0
  %v204 = vsel %vm199, %v172, 0
  %v207 = vsel %vm199, %v197, 0
  %209 = vmatpush.xpose.msra.mxu0 0.0
  %210 = vmatpush.xpose.msra.mxu0 0.0
  %211 = vmatpush.xpose.msra.mxu0 0.0
  %212 = vmatpush.xpose.msra.mxu0 0.0
  %213 = vmatpush.xpose.msra.mxu0 0.0
  %214 = vmatpush.xpose.msra.mxu0 0.0
  %215 = vmatpush.xpose.msra.mxu0 0.0
  %216 = vmatpush.xpose.msra.mxu0 0.0
  %217 = vmatpush.xpose.msra.mxu0 0.0
  %218 = vmatpush.xpose.msra.mxu0 0.0
  %219 = vmatpush.xpose.msra.mxu0 0.0
  %220 = vmatpush.xpose.msra.mxu0 0.0
  %221 = vmatpush.xpose.msra.mxu0 0.0
  %222 = vmatpush.xpose.msra.mxu0 0.0
  %223 = vmatpush.xpose.msra.mxu0 0.0
  %224 = vmatpush.xpose.msra.mxu0 %v207
  %225 = vmatmul.f32.gmra.mxu0 %v201
  %v226 = vpop.f32.mrf.mxu0
  %v227 = vadd.f32 0.0, %v226
  %228 = vmatmul.f32.gmra.mxu0 %v204
  %v229 = vpop.f32.mrf.mxu0
  %v230 = vadd.f32 0.0, %v229
  %231 = vdwg.mxu0
  %232 = vmatpush.msra.mxu0 0.0
  %233 = vmatpush.msra.mxu0 0.0
  %234 = vmatpush.msra.mxu0 0.0
  %235 = vmatpush.msra.mxu0 0.0
  %236 = vmatpush.msra.mxu0 0.0
  %237 = vmatpush.msra.mxu0 0.0
  %238 = vmatpush.msra.mxu0 0.0
  %239 = vmatpush.msra.mxu0 0.0
  %240 = vmatpush.msra.mxu0 0.0
  %241 = vmatpush.msra.mxu0 0.0
  %242 = vmatpush.msra.mxu0 0.0
  %243 = vmatpush.msra.mxu0 0.0
  %244 = vmatpush.msra.mxu0 %v131
  %245 = vmatpush.msra.mxu0 %v130
  %246 = vmatpush.msra.mxu0 %v129
  %247 = vmatpush.msra.mxu0 %v128
  %248 = vmatmul.f32.gmra.mxu0 %v143
  %v249 = vpop.f32.mrf.mxu0
  %v250 = vadd.f32 %v174, %v249
  %251 = vmatmul.f32.gmra.mxu0 %v146
  %v252 = vpop.f32.mrf.mxu0
  %v253 = vadd.f32 %v174, %v252
  %254 = vdwg.mxu0
  %v256 = vsel %vm199, %v250, 0
  %v259 = vsel %vm199, %v253, 0
  %261 = vmatpush.xpose.msra.mxu0 0.0
  %262 = vmatpush.xpose.msra.mxu0 0.0
  %263 = vmatpush.xpose.msra.mxu0 0.0
  %264 = vmatpush.xpose.msra.mxu0 0.0
  %265 = vmatpush.xpose.msra.mxu0 0.0
  %266 = vmatpush.xpose.msra.mxu0 0.0
  %267 = vmatpush.xpose.msra.mxu0 0.0
  %268 = vmatpush.xpose.msra.mxu0 0.0
  %269 = vmatpush.xpose.msra.mxu0 0.0
  %270 = vmatpush.xpose.msra.mxu0 0.0
  %271 = vmatpush.xpose.msra.mxu0 0.0
  %272 = vmatpush.xpose.msra.mxu0 0.0
  %273 = vmatpush.xpose.msra.mxu0 0.0
  %274 = vmatpush.xpose.msra.mxu0 0.0
  %275 = vmatpush.xpose.msra.mxu0 %v259
  %276 = vmatpush.xpose.msra.mxu0 %v256
  %277 = vmatmul.f32.gmra.mxu0 %v201
  %v278 = vpop.f32.mrf.mxu0
  %v279 = vadd.f32 %v122, %v278
  %280 = vmatmul.f32.gmra.mxu0 %v204
  %v281 = vpop.f32.mrf.mxu0
  %v282 = vadd.f32 %v123, %v281
  %283 = vdwg.mxu0
  %vm284 = vcmask 31744
  %v285 = vsel %vm284, %v227, -inf
  %286 = vmax.xlane.f32.xlu0 %v285
  %v287 = vpop.xlane.xlu0 %286
  %vm288 = vcmask 25600
  %v289 = vsel %vm288, %v230, -inf
  %290 = vmax.xlane.f32.xlu0 %v289
  %v291 = vpop.xlane.xlu0 %290
  %vm292 = vcmask 80896
  %v293 = vsel %vm292, %v279, -inf
  %294 = vmax.xlane.f32.xlu0 %v293
  %v295 = vpop.xlane.xlu0 %294
  %vm296 = vcmask 74752
  %v297 = vsel %vm296, %v282, -inf
  %298 = vmax.xlane.f32.xlu0 %v297
  %v299 = vpop.xlane.xlu0 %298
  %v300 = vmax.f32 %v287, %v295
  %v301 = vmax.f32 %v291, %v299
  %v302 = vsub.f32 %v227, %v300
  %v303 = vsub.f32 %v230, %v301
  %v304 = vmul.f32 %v302, 1.442695
  %v305 = vpow.pop %v304
  %v306 = vmul.f32 %v303, 1.442695
  %v307 = vpow.pop %v306
  %v308 = vsub.f32 %v279, %v300
  %v309 = vsub.f32 %v282, %v301
  %v310 = vmul.f32 %v308, 1.442695
  %v311 = vpow.pop %v310
  %v312 = vmul.f32 %v309, 1.442695
  %v313 = vpow.pop %v312
  %v314 = vsel %vm284, %v305, 0.0
  %315 = vadd.xlane.f32.xlu0 %v314
  %v316 = vpop.xlane.xlu0 %315
  %v317 = vsel %vm288, %v307, 0.0
  %318 = vadd.xlane.f32.xlu0 %v317
  %v319 = vpop.xlane.xlu0 %318
  %v320 = vsel %vm292, %v311, 0.0
  %321 = vadd.xlane.f32.xlu0 %v320
  %v322 = vpop.xlane.xlu0 %321
  %v323 = vsel %vm296, %v313, 0.0
  %324 = vadd.xlane.f32.xlu0 %v323
  %v325 = vpop.xlane.xlu0 %324
  %v326 = vadd.f32 %v316, %v322
  %v327 = vadd.f32 %v319, %v325
  %v329 = vperm.slane %v138, 0
  %331 = vmatpush.msra.mxu0 0.0
  %332 = vmatpush.msra.mxu0 0.0
  %333 = vmatpush.msra.mxu0 0.0
  %334 = vmatpush.msra.mxu0 0.0
  %335 = vmatpush.msra.mxu0 0.0
  %336 = vmatpush.msra.mxu0 0.0
  %337 = vmatpush.msra.mxu0 0.0
  %338 = vmatpush.msra.mxu0 0.0
  %339 = vmatpush.msra.mxu0 0.0
  %340 = vmatpush.msra.mxu0 0.0
  %341 = vmatpush.msra.mxu0 0.0
  %342 = vmatpush.msra.mxu0 0.0
  %343 = vmatpush.msra.mxu0 %v135
  %344 = vmatpush.msra.mxu0 %v134
  %345 = vmatpush.msra.mxu0 %v133
  %346 = vmatpush.msra.mxu0 %v132
  %347 = vmatmul.f32.gmra.mxu0 %v177
  %v348 = vpop.f32.mrf.mxu0
  %v349 = vadd.f32 %v329, %v348
  %350 = vdwg.mxu0
  %351 = vmatpush.msra.mxu0 0.0
  %352 = vmatpush.msra.mxu0 0.0
  %353 = vmatpush.msra.mxu0 0.0
  %354 = vmatpush.msra.mxu0 0.0
  %355 = vmatpush.msra.mxu0 0.0
  %356 = vmatpush.msra.mxu0 0.0
  %357 = vmatpush.msra.mxu0 0.0
  %358 = vmatpush.msra.mxu0 0.0
  %359 = vmatpush.msra.mxu0 0.0
  %360 = vmatpush.msra.mxu0 0.0
  %361 = vmatpush.msra.mxu0 0.0
  %362 = vmatpush.msra.mxu0 0.0
  %363 = vmatpush.msra.mxu0 %v135
  %364 = vmatpush.msra.mxu0 %v134
  %365 = vmatpush.msra.mxu0 %v133
  %366 = vmatpush.msra.mxu0 %v132
  %367 = vmatmul.f32.gmra.mxu0 %v143
  %v368 = vpop.f32.mrf.mxu0
  %v369 = vadd.f32 %v329, %v368
  %370 = vmatmul.f32.gmra.mxu0 %v146
  %v371 = vpop.f32.mrf.mxu0
  %v372 = vadd.f32 %v329, %v371
  %373 = vdwg.mxu0
  %v375 = vsel %vm292, %v311, 0
  %v378 = vsel %vm292, %v313, 0
  %vm380 = vcmask 1041408
  %v382 = vsel %vm380, %v372, 0
  %384 = vmatpush.msra.mxu0 0.0
  %385 = vmatpush.msra.mxu0 0.0
  %386 = vmatpush.msra.mxu0 0.0
  %387 = vmatpush.msra.mxu0 0.0
  %388 = vmatpush.msra.mxu0 0.0
  %389 = vmatpush.msra.mxu0 0.0
  %390 = vmatpush.msra.mxu0 0.0
  %391 = vmatpush.msra.mxu0 0.0
  %392 = vmatpush.msra.mxu0 0.0
  %393 = vmatpush.msra.mxu0 0.0
  %394 = vmatpush.msra.mxu0 0.0
  %395 = vmatpush.msra.mxu0 0.0
  %396 = vmatpush.msra.mxu0 0.0
  %397 = vmatpush.msra.mxu0 0.0
  %398 = vmatpush.msra.mxu0 %v382
  %399 = vmatpush.msra.mxu0 %v369
  %400 = vmatmul.f32.gmra.mxu0 %v375
  %v401 = vpop.f32.mrf.mxu0
  %v402 = vadd.f32 0.0, %v401
  %403 = vmatmul.f32.gmra.mxu0 %v378
  %v404 = vpop.f32.mrf.mxu0
  %v405 = vadd.f32 0.0, %v404
  %406 = vdwg.mxu0
  %v408 = vsel %vm284, %v305, 0
  %v411 = vsel %vm284, %v307, 0
  %vm413 = vcmask 1043456
  %v415 = vsel %vm413, %v349, 0
  %417 = vmatpush.msra.mxu0 0.0
  %418 = vmatpush.msra.mxu0 0.0
  %419 = vmatpush.msra.mxu0 0.0
  %420 = vmatpush.msra.mxu0 0.0
  %421 = vmatpush.msra.mxu0 0.0
  %422 = vmatpush.msra.mxu0 0.0
  %423 = vmatpush.msra.mxu0 0.0
  %424 = vmatpush.msra.mxu0 0.0
  %425 = vmatpush.msra.mxu0 0.0
  %426 = vmatpush.msra.mxu0 0.0
  %427 = vmatpush.msra.mxu0 0.0
  %428 = vmatpush.msra.mxu0 0.0
  %429 = vmatpush.msra.mxu0 0.0
  %430 = vmatpush.msra.mxu0 0.0
  %431 = vmatpush.msra.mxu0 0.0
  %432 = vmatpush.msra.mxu0 %v415
  %433 = vmatmul.f32.gmra.mxu0 %v408
  %v434 = vpop.f32.mrf.mxu0
  %v435 = vadd.f32 %v402, %v434
  %436 = vmatmul.f32.gmra.mxu0 %v411
  %v437 = vpop.f32.mrf.mxu0
  %v438 = vadd.f32 %v405, %v437
  %439 = vdwg.mxu0
  %v440 = vrcp.pop %v326
  %v441 = vmul.f32 %v326, %v440
  %v442 = vsub.f32 1.0, %v441
  %v443 = vmul.f32 %v440, %v442
  %v444 = vadd.f32 %v440, %v443
  %vm445 = vweird.f32 %v326
  %vm446 = vweird.f32 %v440
  %vm447 = vmor %vm445, %vm446
  %v448 = vsel %vm447, %v440, %v444
  %v449 = vand.u32 2147483647, %v326
  %vm450 = vcmp.eq.f32.partialorder %v449, 8.507059e+37
  %v451 = vand.u32 %v326, 2147483648
  %v452 = vor.u32 1.1754944e-38, %v451
  %v453 = vsel %vm450, %v452, %v448
  %v454 = vrcp.pop %v327
  %v455 = vmul.f32 %v327, %v454
  %v456 = vsub.f32 1.0, %v455
  %v457 = vmul.f32 %v454, %v456
  %v458 = vadd.f32 %v454, %v457
  %vm459 = vweird.f32 %v327
  %vm460 = vweird.f32 %v454
  %vm461 = vmor %vm459, %vm460
  %v462 = vsel %vm461, %v454, %v458
  %v463 = vand.u32 2147483647, %v327
  %vm464 = vcmp.eq.f32.partialorder %v463, 8.507059e+37
  %v465 = vand.u32 %v327, 2147483648
  %v466 = vor.u32 1.1754944e-38, %v465
  %v467 = vsel %vm464, %v466, %v462
  %v468 = vmul.f32 %v435, %v453
  %v469 = vmul.f32 %v438, %v467
  %v470 = vld [vmem:[%s11] sm:$0xff]
  %v471 = vld [vmem:[%s11 + $0x8] sm:$0xff]
  %s472 = scalar_lea.vmem %s5, 32
  %v473 = vld [vmem:[%s472] sm:$0xff]
  %v474 = vld [vmem:[%s472 + $0x8] sm:$0xff]
  %v475 = vld [vmem:[%s472 + $0x10] sm:$0xff]
  %v476 = vld [vmem:[%s472 + $0x18] sm:$0xff]
  %s477 = scalar_lea.vmem %s6, 32
  %v478 = vld [vmem:[%s477] sm:$0xff]
  %v479 = vld [vmem:[%s477 + $0x8] sm:$0xff]
  %v480 = vld [vmem:[%s477 + $0x10] sm:$0xff]
  %v481 = vld [vmem:[%s477 + $0x18] sm:$0xff]
  %s482 = scalar_lea.vmem %s7, 32
  %v483 = vld [vmem:[%s482] sm:$0xff]
  %v484 = vld [vmem:[%s482 + $0x8] sm:$0xff]
  %v485 = vld [vmem:[%s482 + $0x10] sm:$0xff]
  %v486 = vld [vmem:[%s482 + $0x18] sm:$0xff]
  %s487 = scalar_lea.vmem %s8, 1
  %v488 = vld [vmem:[%s487] sm:$0x1]
  %s489 = scalar_lea.vmem %s9, 1
  %v490 = vld [vmem:[%s489] sm:$0x1]
  %s491 = scalar_lea.vmem %s10, 1
  %v492 = vld [vmem:[%s491] sm:$0x1]
  %v494 = vperm.slane %v488, 0
  %496 = vmatpush.msra.mxu0 0.0
  %497 = vmatpush.msra.mxu0 0.0
  %498 = vmatpush.msra.mxu0 0.0
  %499 = vmatpush.msra.mxu0 0.0
  %500 = vmatpush.msra.mxu0 0.0
  %501 = vmatpush.msra.mxu0 0.0
  %502 = vmatpush.msra.mxu0 0.0
  %503 = vmatpush.msra.mxu0 0.0
  %504 = vmatpush.msra.mxu0 0.0
  %505 = vmatpush.msra.mxu0 0.0
  %506 = vmatpush.msra.mxu0 0.0
  %507 = vmatpush.msra.mxu0 0.0
  %508 = vmatpush.msra.mxu0 %v476
  %509 = vmatpush.msra.mxu0 %v475
  %510 = vmatpush.msra.mxu0 %v474
  %511 = vmatpush.msra.mxu0 %v473
  %512 = vmatmul.f32.gmra.mxu0 %v143
  %v513 = vpop.f32.mrf.mxu0
  %v514 = vadd.f32 %v494, %v513
  %515 = vmatmul.f32.gmra.mxu0 %v146
  %v516 = vpop.f32.mrf.mxu0
  %v517 = vadd.f32 %v494, %v516
  %518 = vdwg.mxu0
  %v519 = vmul.f32 %v514, 0.25
  %v520 = vmul.f32 %v517, 0.25
  %v522 = vperm.slane %v490, 0
  %524 = vmatpush.msra.mxu0 0.0
  %525 = vmatpush.msra.mxu0 0.0
  %526 = vmatpush.msra.mxu0 0.0
  %527 = vmatpush.msra.mxu0 0.0
  %528 = vmatpush.msra.mxu0 0.0
  %529 = vmatpush.msra.mxu0 0.0
  %530 = vmatpush.msra.mxu0 0.0
  %531 = vmatpush.msra.mxu0 0.0
  %532 = vmatpush.msra.mxu0 0.0
  %533 = vmatpush.msra.mxu0 0.0
  %534 = vmatpush.msra.mxu0 0.0
  %535 = vmatpush.msra.mxu0 0.0
  %536 = vmatpush.msra.mxu0 %v481
  %537 = vmatpush.msra.mxu0 %v480
  %538 = vmatpush.msra.mxu0 %v479
  %539 = vmatpush.msra.mxu0 %v478
  %540 = vmatmul.f32.gmra.mxu0 %v177
  %v541 = vpop.f32.mrf.mxu0
  %v542 = vadd.f32 %v522, %v541
  %543 = vdwg.mxu0
  %v545 = vsel %vm199, %v519, 0
  %v548 = vsel %vm199, %v520, 0
  %v551 = vsel %vm199, %v542, 0
  %553 = vmatpush.xpose.msra.mxu0 0.0
  %554 = vmatpush.xpose.msra.mxu0 0.0
  %555 = vmatpush.xpose.msra.mxu0 0.0
  %556 = vmatpush.xpose.msra.mxu0 0.0
  %557 = vmatpush.xpose.msra.mxu0 0.0
  %558 = vmatpush.xpose.msra.mxu0 0.0
  %559 = vmatpush.xpose.msra.mxu0 0.0
  %560 = vmatpush.xpose.msra.mxu0 0.0
  %561 = vmatpush.xpose.msra.mxu0 0.0
  %562 = vmatpush.xpose.msra.mxu0 0.0
  %563 = vmatpush.xpose.msra.mxu0 0.0
  %564 = vmatpush.xpose.msra.mxu0 0.0
  %565 = vmatpush.xpose.msra.mxu0 0.0
  %566 = vmatpush.xpose.msra.mxu0 0.0
  %567 = vmatpush.xpose.msra.mxu0 0.0
  %568 = vmatpush.xpose.msra.mxu0 %v551
  %569 = vmatmul.f32.gmra.mxu0 %v545
  %v570 = vpop.f32.mrf.mxu0
  %v571 = vadd.f32 0.0, %v570
  %572 = vmatmul.f32.gmra.mxu0 %v548
  %v573 = vpop.f32.mrf.mxu0
  %v574 = vadd.f32 0.0, %v573
  %575 = vdwg.mxu0
  %576 = vmatpush.msra.mxu0 0.0
  %577 = vmatpush.msra.mxu0 0.0
  %578 = vmatpush.msra.mxu0 0.0
  %579 = vmatpush.msra.mxu0 0.0
  %580 = vmatpush.msra.mxu0 0.0
  %581 = vmatpush.msra.mxu0 0.0
  %582 = vmatpush.msra.mxu0 0.0
  %583 = vmatpush.msra.mxu0 0.0
  %584 = vmatpush.msra.mxu0 0.0
  %585 = vmatpush.msra.mxu0 0.0
  %586 = vmatpush.msra.mxu0 0.0
  %587 = vmatpush.msra.mxu0 0.0
  %588 = vmatpush.msra.mxu0 %v481
  %589 = vmatpush.msra.mxu0 %v480
  %590 = vmatpush.msra.mxu0 %v479
  %591 = vmatpush.msra.mxu0 %v478
  %592 = vmatmul.f32.gmra.mxu0 %v143
  %v593 = vpop.f32.mrf.mxu0
  %v594 = vadd.f32 %v522, %v593
  %595 = vmatmul.f32.gmra.mxu0 %v146
  %v596 = vpop.f32.mrf.mxu0
  %v597 = vadd.f32 %v522, %v596
  %598 = vdwg.mxu0
  %v600 = vsel %vm199, %v594, 0
  %v603 = vsel %vm199, %v597, 0
  %605 = vmatpush.xpose.msra.mxu0 0.0
  %606 = vmatpush.xpose.msra.mxu0 0.0
  %607 = vmatpush.xpose.msra.mxu0 0.0
  %608 = vmatpush.xpose.msra.mxu0 0.0
  %609 = vmatpush.xpose.msra.mxu0 0.0
  %610 = vmatpush.xpose.msra.mxu0 0.0
  %611 = vmatpush.xpose.msra.mxu0 0.0
  %612 = vmatpush.xpose.msra.mxu0 0.0
  %613 = vmatpush.xpose.msra.mxu0 0.0
  %614 = vmatpush.xpose.msra.mxu0 0.0
  %615 = vmatpush.xpose.msra.mxu0 0.0
  %616 = vmatpush.xpose.msra.mxu0 0.0
  %617 = vmatpush.xpose.msra.mxu0 0.0
  %618 = vmatpush.xpose.msra.mxu0 0.0
  %619 = vmatpush.xpose.msra.mxu0 %v603
  %620 = vmatpush.xpose.msra.mxu0 %v600
  %621 = vmatmul.f32.gmra.mxu0 %v545
  %v622 = vpop.f32.mrf.mxu0
  %v623 = vadd.f32 %v122, %v622
  %624 = vmatmul.f32.gmra.mxu0 %v548
  %v625 = vpop.f32.mrf.mxu0
  %v626 = vadd.f32 %v123, %v625
  %627 = vdwg.mxu0
  %v628 = vsel %vm284, %v571, -inf
  %629 = vmax.xlane.f32.xlu0 %v628
  %v630 = vpop.xlane.xlu0 %629
  %v631 = vsel %vm288, %v574, -inf
  %632 = vmax.xlane.f32.xlu0 %v631
  %v633 = vpop.xlane.xlu0 %632
  %v634 = vsel %vm292, %v623, -inf
  %635 = vmax.xlane.f32.xlu0 %v634
  %v636 = vpop.xlane.xlu0 %635
  %v637 = vsel %vm296, %v626, -inf
  %638 = vmax.xlane.f32.xlu0 %v637
  %v639 = vpop.xlane.xlu0 %638
  %v640 = vmax.f32 %v630, %v636
  %v641 = vmax.f32 %v633, %v639
  %v642 = vsub.f32 %v571, %v640
  %v643 = vsub.f32 %v574, %v641
  %v644 = vmul.f32 %v642, 1.442695
  %v645 = vpow.pop %v644
  %v646 = vmul.f32 %v643, 1.442695
  %v647 = vpow.pop %v646
  %v648 = vsub.f32 %v623, %v640
  %v649 = vsub.f32 %v626, %v641
  %v650 = vmul.f32 %v648, 1.442695
  %v651 = vpow.pop %v650
  %v652 = vmul.f32 %v649, 1.442695
  %v653 = vpow.pop %v652
  %v654 = vsel %vm284, %v645, 0.0
  %655 = vadd.xlane.f32.xlu0 %v654
  %v656 = vpop.xlane.xlu0 %655
  %v657 = vsel %vm288, %v647, 0.0
  %658 = vadd.xlane.f32.xlu0 %v657
  %v659 = vpop.xlane.xlu0 %658
  %v660 = vsel %vm292, %v651, 0.0
  %661 = vadd.xlane.f32.xlu0 %v660
  %v662 = vpop.xlane.xlu0 %661
  %v663 = vsel %vm296, %v653, 0.0
  %664 = vadd.xlane.f32.xlu0 %v663
  %v665 = vpop.xlane.xlu0 %664
  %v666 = vadd.f32 %v656, %v662
  %v667 = vadd.f32 %v659, %v665
  %v669 = vperm.slane %v492, 0
  %671 = vmatpush.msra.mxu0 0.0
  %672 = vmatpush.msra.mxu0 0.0
  %673 = vmatpush.msra.mxu0 0.0
  %674 = vmatpush.msra.mxu0 0.0
  %675 = vmatpush.msra.mxu0 0.0
  %676 = vmatpush.msra.mxu0 0.0
  %677 = vmatpush.msra.mxu0 0.0
  %678 = vmatpush.msra.mxu0 0.0
  %679 = vmatpush.msra.mxu0 0.0
  %680 = vmatpush.msra.mxu0 0.0
  %681 = vmatpush.msra.mxu0 0.0
  %682 = vmatpush.msra.mxu0 0.0
  %683 = vmatpush.msra.mxu0 %v486
  %684 = vmatpush.msra.mxu0 %v485
  %685 = vmatpush.msra.mxu0 %v484
  %686 = vmatpush.msra.mxu0 %v483
  %687 = vmatmul.f32.gmra.mxu0 %v177
  %v688 = vpop.f32.mrf.mxu0
  %v689 = vadd.f32 %v669, %v688
  %690 = vdwg.mxu0
  %691 = vmatpush.msra.mxu0 0.0
  %692 = vmatpush.msra.mxu0 0.0
  %693 = vmatpush.msra.mxu0 0.0
  %694 = vmatpush.msra.mxu0 0.0
  %695 = vmatpush.msra.mxu0 0.0
  %696 = vmatpush.msra.mxu0 0.0
  %697 = vmatpush.msra.mxu0 0.0
  %698 = vmatpush.msra.mxu0 0.0
  %699 = vmatpush.msra.mxu0 0.0
  %700 = vmatpush.msra.mxu0 0.0
  %701 = vmatpush.msra.mxu0 0.0
  %702 = vmatpush.msra.mxu0 0.0
  %703 = vmatpush.msra.mxu0 %v486
  %704 = vmatpush.msra.mxu0 %v485
  %705 = vmatpush.msra.mxu0 %v484
  %706 = vmatpush.msra.mxu0 %v483
  %707 = vmatmul.f32.gmra.mxu0 %v143
  %v708 = vpop.f32.mrf.mxu0
  %v709 = vadd.f32 %v669, %v708
  %710 = vmatmul.f32.gmra.mxu0 %v146
  %v711 = vpop.f32.mrf.mxu0
  %v712 = vadd.f32 %v669, %v711
  %713 = vdwg.mxu0
  %v715 = vsel %vm292, %v651, 0
  %v718 = vsel %vm292, %v653, 0
  %v721 = vsel %vm380, %v712, 0
  %723 = vmatpush.msra.mxu0 0.0
  %724 = vmatpush.msra.mxu0 0.0
  %725 = vmatpush.msra.mxu0 0.0
  %726 = vmatpush.msra.mxu0 0.0
  %727 = vmatpush.msra.mxu0 0.0
  %728 = vmatpush.msra.mxu0 0.0
  %729 = vmatpush.msra.mxu0 0.0
  %730 = vmatpush.msra.mxu0 0.0
  %731 = vmatpush.msra.mxu0 0.0
  %732 = vmatpush.msra.mxu0 0.0
  %733 = vmatpush.msra.mxu0 0.0
  %734 = vmatpush.msra.mxu0 0.0
  %735 = vmatpush.msra.mxu0 0.0
  %736 = vmatpush.msra.mxu0 0.0
  %737 = vmatpush.msra.mxu0 %v721
  %738 = vmatpush.msra.mxu0 %v709
  %739 = vmatmul.f32.gmra.mxu0 %v715
  %v740 = vpop.f32.mrf.mxu0
  %v741 = vadd.f32 0.0, %v740
  %742 = vmatmul.f32.gmra.mxu0 %v718
  %v743 = vpop.f32.mrf.mxu0
  %v744 = vadd.f32 0.0, %v743
  %745 = vdwg.mxu0
  %v747 = vsel %vm284, %v645, 0
  %v750 = vsel %vm284, %v647, 0
  %v753 = vsel %vm413, %v689, 0
  %755 = vmatpush.msra.mxu0 0.0
  %756 = vmatpush.msra.mxu0 0.0
  %757 = vmatpush.msra.mxu0 0.0
  %758 = vmatpush.msra.mxu0 0.0
  %759 = vmatpush.msra.mxu0 0.0
  %760 = vmatpush.msra.mxu0 0.0
  %761 = vmatpush.msra.mxu0 0.0
  %762 = vmatpush.msra.mxu0 0.0
  %763 = vmatpush.msra.mxu0 0.0
  %764 = vmatpush.msra.mxu0 0.0
  %765 = vmatpush.msra.mxu0 0.0
  %766 = vmatpush.msra.mxu0 0.0
  %767 = vmatpush.msra.mxu0 0.0
  %768 = vmatpush.msra.mxu0 0.0
  %769 = vmatpush.msra.mxu0 0.0
  %770 = vmatpush.msra.mxu0 %v753
  %771 = vmatmul.f32.gmra.mxu0 %v747
  %v772 = vpop.f32.mrf.mxu0
  %v773 = vadd.f32 %v741, %v772
  %774 = vmatmul.f32.gmra.mxu0 %v750
  %v775 = vpop.f32.mrf.mxu0
  %v776 = vadd.f32 %v744, %v775
  %777 = vdwg.mxu0
  %v778 = vrcp.pop %v666
  %v779 = vmul.f32 %v666, %v778
  %v780 = vsub.f32 1.0, %v779
  %v781 = vmul.f32 %v778, %v780
  %v782 = vadd.f32 %v778, %v781
  %vm783 = vweird.f32 %v666
  %vm784 = vweird.f32 %v778
  %vm785 = vmor %vm783, %vm784
  %v786 = vsel %vm785, %v778, %v782
  %v787 = vand.u32 2147483647, %v666
  %vm788 = vcmp.eq.f32.partialorder %v787, 8.507059e+37
  %v789 = vand.u32 %v666, 2147483648
  %v790 = vor.u32 1.1754944e-38, %v789
  %v791 = vsel %vm788, %v790, %v786
  %v792 = vrcp.pop %v667
  %v793 = vmul.f32 %v667, %v792
  %v794 = vsub.f32 1.0, %v793
  %v795 = vmul.f32 %v792, %v794
  %v796 = vadd.f32 %v792, %v795
  %vm797 = vweird.f32 %v667
  %vm798 = vweird.f32 %v792
  %vm799 = vmor %vm797, %vm798
  %v800 = vsel %vm799, %v792, %v796
  %v801 = vand.u32 2147483647, %v667
  %vm802 = vcmp.eq.f32.partialorder %v801, 8.507059e+37
  %v803 = vand.u32 %v667, 2147483648
  %v804 = vor.u32 1.1754944e-38, %v803
  %v805 = vsel %vm802, %v804, %v800
  %v806 = vmul.f32 %v773, %v791
  %v807 = vmul.f32 %v776, %v805
  %s808 = scalar_lea.vmem %s11, 16
  %v809 = vld [vmem:[%s808] sm:$0xff]
  %v810 = vld [vmem:[%s808 + $0x8] sm:$0xff]
  %v812 = vsel %vm199, %v806, 0
  %v815 = vsel %vm199, %v807, 0
  %817 = vmatpush.msra.mxu0 0.0
  %818 = vmatpush.msra.mxu0 0.0
  %819 = vmatpush.msra.mxu0 0.0
  %820 = vmatpush.msra.mxu0 0.0
  %821 = vmatpush.msra.mxu0 0.0
  %822 = vmatpush.msra.mxu0 0.0
  %823 = vmatpush.msra.mxu0 0.0
  %824 = vmatpush.msra.mxu0 0.0
  %825 = vmatpush.msra.mxu0 0.0
  %826 = vmatpush.msra.mxu0 0.0
  %827 = vmatpush.msra.mxu0 0.0
  %828 = vmatpush.msra.mxu0 0.0
  %829 = vmatpush.msra.mxu0 0.0
  %830 = vmatpush.msra.mxu0 0.0
  %831 = vmatpush.msra.mxu0 %v810
  %832 = vmatpush.msra.mxu0 %v809
  %833 = vmatmul.f32.gmra.mxu0 %v812
  %v834 = vpop.f32.mrf.mxu0
  %v835 = vadd.f32 0.0, %v834
  %836 = vmatmul.f32.gmra.mxu0 %v815
  %v837 = vpop.f32.mrf.mxu0
  %v838 = vadd.f32 0.0, %v837
  %839 = vdwg.mxu0
  %v841 = vsel %vm199, %v468, 0
  %v844 = vsel %vm199, %v469, 0
  %846 = vmatpush.msra.mxu0 0.0
  %847 = vmatpush.msra.mxu0 0.0
  %848 = vmatpush.msra.mxu0 0.0
  %849 = vmatpush.msra.mxu0 0.0
  %850 = vmatpush.msra.mxu0 0.0
  %851 = vmatpush.msra.mxu0 0.0
  %852 = vmatpush.msra.mxu0 0.0
  %853 = vmatpush.msra.mxu0 0.0
  %854 = vmatpush.msra.mxu0 0.0
  %855 = vmatpush.msra.mxu0 0.0
  %856 = vmatpush.msra.mxu0 0.0
  %857 = vmatpush.msra.mxu0 0.0
  %858 = vmatpush.msra.mxu0 0.0
  %859 = vmatpush.msra.mxu0 0.0
  %860 = vmatpush.msra.mxu0 %v471
  %861 = vmatpush.msra.mxu0 %v470
  %862 = vmatmul.f32.gmra.mxu0 %v841
  %v863 = vpop.f32.mrf.mxu0
  %v864 = vadd.f32 %v835, %v863
  %865 = vmatmul.f32.gmra.mxu0 %v844
  %v866 = vpop.f32.mrf.mxu0
  %v867 = vadd.f32 %v838, %v866
  %868 = vdwg.mxu0
  %v869 = vadd.f32 %v92, %v864
  %v870 = vadd.f32 %v93, %v867
  %v872 = vperm.slane %v73, 0
  %v874 = vadd.f32 %v869, %v872
  %v875 = vadd.f32 %v870, %v872
  %v876 = vsel %vm98, %v874, 0.0
  %877 = vadd.xlane.f32.xlu0 %v876
  %v878 = vpop.xlane.xlu0 %877
  %vm879 = vcmask 254976
  %v880 = vsel %vm879, %v875, 0.0
  %881 = vadd.xlane.f32.xlu0 %v880
  %v882 = vpop.xlane.xlu0 %881
  %v883 = vrcp.pop 32.0
  %v884 = vmul.f32 32.0, %v883
  %v885 = vsub.f32 1.0, %v884
  %v886 = vmul.f32 %v883, %v885
  %v887 = vadd.f32 %v883, %v886
  %vm888 = vweird.f32 %v883
  %v889 = vsel %vm888, %v883, %v887
  %v890 = vmul.f32 %v878, %v889
  %v891 = vmul.f32 %v882, %v889
  %v892 = vsub.f32 %v874, %v890
  %v893 = vsub.f32 %v875, %v891
  %v894 = vmul.f32 %v892, %v892
  %v895 = vmul.f32 %v893, %v893
  %v896 = vsel %vm98, %v894, 0.0
  %897 = vadd.xlane.f32.xlu0 %v896
  %v898 = vpop.xlane.xlu0 %897
  %v899 = vsel %vm879, %v895, 0.0
  %900 = vadd.xlane.f32.xlu0 %v899
  %v901 = vpop.xlane.xlu0 %900
  %v902 = vmul.f32 %v898, %v889
  %v903 = vmul.f32 %v901, %v889
  %v904 = vadd.f32 %v902, 1e-05
  %v905 = vadd.f32 %v903, 1e-05
  %v906 = vrsqrt.pop %v904
  %v907 = vmul.f32 %v906, %v904
  %v908 = vmul.f32 %v907, %v906
  %v909 = vmul.f32 0.5, %v908
  %v910 = vsub.f32 1.5, %v909
  %v911 = vmul.f32 %v906, %v910
  %vm912 = vweird.f32 %v904
  %vm913 = vweird.f32 %v906
  %vm914 = vmor %vm912, %vm913
  %v915 = vsel %vm914, %v906, %v911
  %v916 = vrsqrt.pop %v905
  %v917 = vmul.f32 %v916, %v905
  %v918 = vmul.f32 %v917, %v916
  %v919 = vmul.f32 0.5, %v918
  %v920 = vsub.f32 1.5, %v919
  %v921 = vmul.f32 %v916, %v920
  %vm922 = vweird.f32 %v905
  %vm923 = vweird.f32 %v916
  %vm924 = vmor %vm922, %vm923
  %v925 = vsel %vm924, %v916, %v921
  %v926 = vmul.f32 %v892, %v915
  %v927 = vmul.f32 %v893, %v925
  %v929 = vperm.slane %v88, 0
  %v931 = vmul.f32 %v926, %v929
  %v932 = vmul.f32 %v927, %v929
  %v934 = vperm.slane %v89, 0
  %v936 = vadd.f32 %v931, %v934
  %v937 = vadd.f32 %v932, %v934
  %v939 = vperm.slane %v78, 0
  %v942 = vsel %vm98, %v936, 0
  %v945 = vsel %vm98, %v937, 0
  %947 = vmatpush.msra.mxu0 0.0
  %948 = vmatpush.msra.mxu0 0.0
  %949 = vmatpush.msra.mxu0 0.0
  %950 = vmatpush.msra.mxu0 0.0
  %951 = vmatpush.msra.mxu0 0.0
  %952 = vmatpush.msra.mxu0 0.0
  %953 = vmatpush.msra.mxu0 0.0
  %954 = vmatpush.msra.mxu0 0.0
  %955 = vmatpush.msra.mxu0 0.0
  %956 = vmatpush.msra.mxu0 0.0
  %957 = vmatpush.msra.mxu0 0.0
  %958 = vmatpush.msra.mxu0 0.0
  %959 = vmatpush.msra.mxu0 %v77
  %960 = vmatpush.msra.mxu0 %v76
  %961 = vmatpush.msra.mxu0 %v75
  %962 = vmatpush.msra.mxu0 %v74
  %963 = vmatmul.f32.gmra.mxu0 %v942
  %v964 = vpop.f32.mrf.mxu0
  %v965 = vadd.f32 %v939, %v964
  %966 = vmatmul.f32.gmra.mxu0 %v945
  %v967 = vpop.f32.mrf.mxu0
  %v968 = vadd.f32 %v939, %v967
  %969 = vdwg.mxu0
  %v970 = vmul.f32 %v965, 0.5
  %v971 = vmul.f32 %v968, 0.5
  %v972 = vmul.f32 %v965, 0.70710677
  %v973 = vmul.f32 %v968, 0.70710677
  %v974 = vand.u32 2147483647, %v972
  %v975 = vand.u32 2147483647, %v973
  %v976 = vmul.f32 %v974, 0.3275911
  %v977 = vmul.f32 %v975, 0.3275911
  %v978 = vadd.f32 %v976, 1.0
  %v979 = vadd.f32 %v977, 1.0
  %v980 = vrcp.pop %v978
  %v981 = vmul.f32 %v978, %v980
  %v982 = vsub.f32 1.0, %v981
  %v983 = vmul.f32 %v980, %v982
  %v984 = vadd.f32 %v980, %v983
  %vm985 = vweird.f32 %v978
  %vm986 = vweird.f32 %v980
  %vm987 = vmor %vm985, %vm986
  %v988 = vsel %vm987, %v980, %v984
  %v989 = vand.u32 2147483647, %v978
  %vm990 = vcmp.eq.f32.partialorder %v989, 8.507059e+37
  %v991 = vand.u32 %v978, 2147483648
  %v992 = vor.u32 1.1754944e-38, %v991
  %v993 = vsel %vm990, %v992, %v988
  %v994 = vmul.f32 1.0, %v993
  %v995 = vrcp.pop %v979
  %v996 = vmul.f32 %v979, %v995
  %v997 = vsub.f32 1.0, %v996
  %v998 = vmul.f32 %v995, %v997
  %v999 = vadd.f32 %v995, %v998
  %vm1000 = vweird.f32 %v979
  %vm1001 = vweird.f32 %v995
  %vm1002 = vmor %vm1000, %vm1001
  %v1003 = vsel %vm1002, %v995, %v999
  %v1004 = vand.u32 2147483647, %v979
  %vm1005 = vcmp.eq.f32.partialorder %v1004, 8.507059e+37
  %v1006 = vand.u32 %v979, 2147483648
  %v1007 = vor.u32 1.1754944e-38, %v1006
  %v1008 = vsel %vm1005, %v1007, %v1003
  %v1009 = vmul.f32 1.0, %v1008
  %v1010 = vmul.f32 %v994, 1.0614054
  %v1011 = vmul.f32 %v1009, 1.0614054
  %v1012 = vadd.f32 %v1010, -1.4531521
  %v1013 = vadd.f32 %v1011, -1.4531521
  %v1014 = vmul.f32 %v1012, %v994
  %v1015 = vmul.f32 %v1013, %v1009
  %v1016 = vadd.f32 %v1014, 1.4214138
  %v1017 = vadd.f32 %v1015, 1.4214138
  %v1018 = vmul.f32 %v1016, %v994
  %v1019 = vmul.f32 %v1017, %v1009
  %v1020 = vadd.f32 %v1018, -0.28449672
  %v1021 = vadd.f32 %v1019, -0.28449672
  %v1022 = vmul.f32 %v1020, %v994
  %v1023 = vmul.f32 %v1021, %v1009
  %v1024 = vadd.f32 %v1022, 0.2548296
  %v1025 = vadd.f32 %v1023, 0.2548296
  %v1026 = vmul.f32 %v1024, %v994
  %v1027 = vmul.f32 %v1025, %v1009
  %v1028 = vsub.f32 0.0, %v974
  %v1029 = vsub.f32 0.0, %v975
  %v1030 = vmul.f32 %v1028, %v974
  %v1031 = vmul.f32 %v1029, %v975
  %v1032 = vmul.f32 %v1030, 1.442695
  %v1033 = vpow.pop %v1032
  %v1034 = vmul.f32 %v1031, 1.442695
  %v1035 = vpow.pop %v1034
  %v1036 = vmul.f32 %v1026, %v1033
  %v1037 = vmul.f32 %v1027, %v1035
  %v1038 = vsub.f32 1.0, %v1036
  %v1039 = vsub.f32 1.0, %v1037
  %vm1040 = vcmp.lt.f32.partialorder %v972, 0.0
  %vm1041 = vcmp.lt.f32.partialorder %v973, 0.0
  %v1042 = vsub.f32 0.0, %v1038
  %v1043 = vsub.f32 0.0, %v1039
  %v1044 = vsel %vm1040, %v1042, %v1038
  %v1045 = vsel %vm1041, %v1043, %v1039
  %v1046 = vadd.f32 %v1044, 1.0
  %v1047 = vadd.f32 %v1045, 1.0
  %v1048 = vmul.f32 %v970, %v1046
  %v1049 = vmul.f32 %v971, %v1047
  %v1051 = vperm.slane %v87, 0
  %vm1053 = vcmask 523264
  %v1055 = vsel %vm1053, %v1048, 0
  %v1058 = vsel %vm1053, %v1049, 0
  %1060 = vmatpush.msra.mxu0 0.0
  %1061 = vmatpush.msra.mxu0 0.0
  %1062 = vmatpush.msra.mxu0 0.0
  %1063 = vmatpush.msra.mxu0 0.0
  %1064 = vmatpush.msra.mxu0 0.0
  %1065 = vmatpush.msra.mxu0 0.0
  %1066 = vmatpush.msra.mxu0 0.0
  %1067 = vmatpush.msra.mxu0 0.0
  %1068 = vmatpush.msra.mxu0 %v86
  %1069 = vmatpush.msra.mxu0 %v85
  %1070 = vmatpush.msra.mxu0 %v84
  %1071 = vmatpush.msra.mxu0 %v83
  %1072 = vmatpush.msra.mxu0 %v82
  %1073 = vmatpush.msra.mxu0 %v81
  %1074 = vmatpush.msra.mxu0 %v80
  %1075 = vmatpush.msra.mxu0 %v79
  %1076 = vmatmul.f32.gmra.mxu0 %v1055
  %v1077 = vpop.f32.mrf.mxu0
  %v1078 = vadd.f32 %v1051, %v1077
  %1079 = vmatmul.f32.gmra.mxu0 %v1058
  %v1080 = vpop.f32.mrf.mxu0
  %v1081 = vadd.f32 %v1051, %v1080
  %1082 = vdwg.mxu0
  %v1083 = vadd.f32 %v936, %v1078
  %v1084 = vadd.f32 %v937, %v1081
  %v1085 = vsel %vm98, %v1083, 0.0
  %1086 = vadd.xlane.f32.xlu0 %v1085
  %v1087 = vpop.xlane.xlu0 %1086
  %v1088 = vsel %vm879, %v1084, 0.0
  %1089 = vadd.xlane.f32.xlu0 %v1088
  %v1090 = vpop.xlane.xlu0 %1089
  %v1091 = vmul.f32 %v1087, %v889
  %v1092 = vmul.f32 %v1090, %v889
  %v1093 = vsub.f32 %v1083, %v1091
  %v1094 = vsub.f32 %v1084, %v1092
  %v1095 = vmul.f32 %v1093, %v1093
  %v1096 = vmul.f32 %v1094, %v1094
  %v1097 = vsel %vm98, %v1095, 0.0
  %1098 = vadd.xlane.f32.xlu0 %v1097
  %v1099 = vpop.xlane.xlu0 %1098
  %v1100 = vsel %vm879, %v1096, 0.0
  %1101 = vadd.xlane.f32.xlu0 %v1100
  %v1102 = vpop.xlane.xlu0 %1101
  %v1103 = vmul.f32 %v1099, %v889
  %v1104 = vmul.f32 %v1102, %v889
  %v1105 = vadd.f32 %v1103, 1e-05
  %v1106 = vadd.f32 %v1104, 1e-05
  %v1107 = vrsqrt.pop %v1105
  %v1108 = vmul.f32 %v1107, %v1105
  %v1109 = vmul.f32 %v1108, %v1107
  %v1110 = vmul.f32 0.5, %v1109
  %v1111 = vsub.f32 1.5, %v1110
  %v1112 = vmul.f32 %v1107, %v1111
  %vm1113 = vweird.f32 %v1105
  %vm1114 = vweird.f32 %v1107
  %vm1115 = vmor %vm1113, %vm1114
  %v1116 = vsel %vm1115, %v1107, %v1112
  %v1117 = vrsqrt.pop %v1106
  %v1118 = vmul.f32 %v1117, %v1106
  %v1119 = vmul.f32 %v1118, %v1117
  %v1120 = vmul.f32 0.5, %v1119
  %v1121 = vsub.f32 1.5, %v1120
  %v1122 = vmul.f32 %v1117, %v1121
  %vm1123 = vweird.f32 %v1106
  %vm1124 = vweird.f32 %v1117
  %vm1125 = vmor %vm1123, %vm1124
  %v1126 = vsel %vm1125, %v1117, %v1122
  %v1127 = vmul.f32 %v1093, %v1116
  %v1128 = vmul.f32 %v1094, %v1126
  %v1130 = vperm.slane %v90, 0
  %v1132 = vmul.f32 %v1127, %v1130
  %v1133 = vmul.f32 %v1128, %v1130
  %v1135 = vperm.slane %v91, 0
  %v1137 = vadd.f32 %v1132, %v1135
  %v1138 = vadd.f32 %v1133, %v1135
  %1139 = vst.msk [vmem:[%s21] sm:$0xff] %vm98, %v1137
  %1140 = vst.msk [vmem:[%s21 + $0x8] sm:$0x3] %vm879, %v1138
  %s1141 = scalar_lea.vmem %s1, 16
  %v1142 = vld [vmem:[%s1141] sm:$0xff]
  %v1143 = vld [vmem:[%s1141 + $0x8] sm:$0x3]
  %s1144 = scalar_lea.vmem %s0, 4
  %v1145 = vld [vmem:[%s1144] sm:$0xf]
  %v1147 = vsel %vm98, %v1145, 0
  %1149 = vmatpush.msra.mxu0 0.0
  %1150 = vmatpush.msra.mxu0 0.0
  %1151 = vmatpush.msra.mxu0 0.0
  %1152 = vmatpush.msra.mxu0 0.0
  %1153 = vmatpush.msra.mxu0 0.0
  %1154 = vmatpush.msra.mxu0 0.0
  %1155 = vmatpush.msra.mxu0 0.0
  %1156 = vmatpush.msra.mxu0 0.0
  %1157 = vmatpush.msra.mxu0 0.0
  %1158 = vmatpush.msra.mxu0 0.0
  %1159 = vmatpush.msra.mxu0 0.0
  %1160 = vmatpush.msra.mxu0 0.0
  %1161 = vmatpush.msra.mxu0 %v71
  %1162 = vmatpush.msra.mxu0 %v70
  %1163 = vmatpush.msra.mxu0 %v69
  %1164 = vmatpush.msra.mxu0 %v68
  %1165 = vmatmul.f32.gmra.mxu0 %v1147
  %v1166 = vpop.f32.mrf.mxu0
  %v1167 = vadd.f32 %v96, %v1166
  %1168 = vdwg.mxu0
  %s1169 = scalar_lea.vmem %s2, 16
  %v1170 = vld [vmem:[%s1169] sm:$0xff]
  %v1171 = vld [vmem:[%s1169 + $0x8] sm:$0x3]
  %v1172 = vld [vmem:[%s5] sm:$0xff]
  %v1173 = vld [vmem:[%s5 + $0x8] sm:$0xff]
  %v1174 = vld [vmem:[%s5 + $0x10] sm:$0xff]
  %v1175 = vld [vmem:[%s5 + $0x18] sm:$0xff]
  %v1176 = vld [vmem:[%s6] sm:$0xff]
  %v1177 = vld [vmem:[%s6 + $0x8] sm:$0xff]
  %v1178 = vld [vmem:[%s6 + $0x10] sm:$0xff]
  %v1179 = vld [vmem:[%s6 + $0x18] sm:$0xff]
  %v1180 = vld [vmem:[%s7] sm:$0xff]
  %v1181 = vld [vmem:[%s7 + $0x8] sm:$0xff]
  %v1182 = vld [vmem:[%s7 + $0x10] sm:$0xff]
  %v1183 = vld [vmem:[%s7 + $0x18] sm:$0xff]
  %v1184 = vld [vmem:[%s8] sm:$0x1]
  %v1185 = vld [vmem:[%s9] sm:$0x1]
  %v1186 = vld [vmem:[%s10] sm:$0x1]
  %v1188 = vperm.slane %v1184, 0
  %v1191 = vsel %vm98, %v1142, 0
  %v1194 = vsel %vm98, %v1143, 0
  %1196 = vmatpush.msra.mxu0 0.0
  %1197 = vmatpush.msra.mxu0 0.0
  %1198 = vmatpush.msra.mxu0 0.0
  %1199 = vmatpush.msra.mxu0 0.0
  %1200 = vmatpush.msra.mxu0 0.0
  %1201 = vmatpush.msra.mxu0 0.0
  %1202 = vmatpush.msra.mxu0 0.0
  %1203 = vmatpush.msra.mxu0 0.0
  %1204 = vmatpush.msra.mxu0 0.0
  %1205 = vmatpush.msra.mxu0 0.0
  %1206 = vmatpush.msra.mxu0 0.0
  %1207 = vmatpush.msra.mxu0 0.0
  %1208 = vmatpush.msra.mxu0 %v1175
  %1209 = vmatpush.msra.mxu0 %v1174
  %1210 = vmatpush.msra.mxu0 %v1173
  %1211 = vmatpush.msra.mxu0 %v1172
  %1212 = vmatmul.f32.gmra.mxu0 %v1191
  %v1213 = vpop.f32.mrf.mxu0
  %v1214 = vadd.f32 %v1188, %v1213
  %1215 = vmatmul.f32.gmra.mxu0 %v1194
  %v1216 = vpop.f32.mrf.mxu0
  %v1217 = vadd.f32 %v1188, %v1216
  %1218 = vdwg.mxu0
  %v1219 = vmul.f32 %v1214, 0.25
  %v1220 = vmul.f32 %v1217, 0.25
  %v1222 = vperm.slane %v1185, 0
  %v1225 = vsel %vm98, %v1167, 0
  %1227 = vmatpush.msra.mxu0 0.0
  %1228 = vmatpush.msra.mxu0 0.0
  %1229 = vmatpush.msra.mxu0 0.0
  %1230 = vmatpush.msra.mxu0 0.0
  %1231 = vmatpush.msra.mxu0 0.0
  %1232 = vmatpush.msra.mxu0 0.0
  %1233 = vmatpush.msra.mxu0 0.0
  %1234 = vmatpush.msra.mxu0 0.0
  %1235 = vmatpush.msra.mxu0 0.0
  %1236 = vmatpush.msra.mxu0 0.0
  %1237 = vmatpush.msra.mxu0 0.0
  %1238 = vmatpush.msra.mxu0 0.0
  %1239 = vmatpush.msra.mxu0 %v1179
  %1240 = vmatpush.msra.mxu0 %v1178
  %1241 = vmatpush.msra.mxu0 %v1177
  %1242 = vmatpush.msra.mxu0 %v1176
  %1243 = vmatmul.f32.gmra.mxu0 %v1225
  %v1244 = vpop.f32.mrf.mxu0
  %v1245 = vadd.f32 %v1222, %v1244
  %1246 = vdwg.mxu0
  %v1248 = vsel %vm199, %v1219, 0
  %v1251 = vsel %vm199, %v1220, 0
  %v1254 = vsel %vm199, %v1245, 0
  %1256 = vmatpush.xpose.msra.mxu0 0.0
  %1257 = vmatpush.xpose.msra.mxu0 0.0
  %1258 = vmatpush.xpose.msra.mxu0 0.0
  %1259 = vmatpush.xpose.msra.mxu0 0.0
  %1260 = vmatpush.xpose.msra.mxu0 0.0
  %1261 = vmatpush.xpose.msra.mxu0 0.0
  %1262 = vmatpush.xpose.msra.mxu0 0.0
  %1263 = vmatpush.xpose.msra.mxu0 0.0
  %1264 = vmatpush.xpose.msra.mxu0 0.0
  %1265 = vmatpush.xpose.msra.mxu0 0.0
  %1266 = vmatpush.xpose.msra.mxu0 0.0
  %1267 = vmatpush.xpose.msra.mxu0 0.0
  %1268 = vmatpush.xpose.msra.mxu0 0.0
  %1269 = vmatpush.xpose.msra.mxu0 0.0
  %1270 = vmatpush.xpose.msra.mxu0 0.0
  %1271 = vmatpush.xpose.msra.mxu0 %v1254
  %1272 = vmatmul.f32.gmra.mxu0 %v1248
  %v1273 = vpop.f32.mrf.mxu0
  %v1274 = vadd.f32 0.0, %v1273
  %1275 = vmatmul.f32.gmra.mxu0 %v1251
  %v1276 = vpop.f32.mrf.mxu0
  %v1277 = vadd.f32 0.0, %v1276
  %1278 = vdwg.mxu0
  %1279 = vmatpush.msra.mxu0 0.0
  %1280 = vmatpush.msra.mxu0 0.0
  %1281 = vmatpush.msra.mxu0 0.0
  %1282 = vmatpush.msra.mxu0 0.0
  %1283 = vmatpush.msra.mxu0 0.0
  %1284 = vmatpush.msra.mxu0 0.0
  %1285 = vmatpush.msra.mxu0 0.0
  %1286 = vmatpush.msra.mxu0 0.0
  %1287 = vmatpush.msra.mxu0 0.0
  %1288 = vmatpush.msra.mxu0 0.0
  %1289 = vmatpush.msra.mxu0 0.0
  %1290 = vmatpush.msra.mxu0 0.0
  %1291 = vmatpush.msra.mxu0 %v1179
  %1292 = vmatpush.msra.mxu0 %v1178
  %1293 = vmatpush.msra.mxu0 %v1177
  %1294 = vmatpush.msra.mxu0 %v1176
  %1295 = vmatmul.f32.gmra.mxu0 %v1191
  %v1296 = vpop.f32.mrf.mxu0
  %v1297 = vadd.f32 %v1222, %v1296
  %1298 = vmatmul.f32.gmra.mxu0 %v1194
  %v1299 = vpop.f32.mrf.mxu0
  %v1300 = vadd.f32 %v1222, %v1299
  %1301 = vdwg.mxu0
  %v1303 = vsel %vm199, %v1297, 0
  %v1306 = vsel %vm199, %v1300, 0
  %1308 = vmatpush.xpose.msra.mxu0 0.0
  %1309 = vmatpush.xpose.msra.mxu0 0.0
  %1310 = vmatpush.xpose.msra.mxu0 0.0
  %1311 = vmatpush.xpose.msra.mxu0 0.0
  %1312 = vmatpush.xpose.msra.mxu0 0.0
  %1313 = vmatpush.xpose.msra.mxu0 0.0
  %1314 = vmatpush.xpose.msra.mxu0 0.0
  %1315 = vmatpush.xpose.msra.mxu0 0.0
  %1316 = vmatpush.xpose.msra.mxu0 0.0
  %1317 = vmatpush.xpose.msra.mxu0 0.0
  %1318 = vmatpush.xpose.msra.mxu0 0.0
  %1319 = vmatpush.xpose.msra.mxu0 0.0
  %1320 = vmatpush.xpose.msra.mxu0 0.0
  %1321 = vmatpush.xpose.msra.mxu0 0.0
  %1322 = vmatpush.xpose.msra.mxu0 %v1306
  %1323 = vmatpush.xpose.msra.mxu0 %v1303
  %1324 = vmatmul.f32.gmra.mxu0 %v1248
  %v1325 = vpop.f32.mrf.mxu0
  %v1326 = vadd.f32 %v1170, %v1325
  %1327 = vmatmul.f32.gmra.mxu0 %v1251
  %v1328 = vpop.f32.mrf.mxu0
  %v1329 = vadd.f32 %v1171, %v1328
  %1330 = vdwg.mxu0
  %v1331 = vsel %vm284, %v1274, -inf
  %1332 = vmax.xlane.f32.xlu0 %v1331
  %v1333 = vpop.xlane.xlu0 %1332
  %v1334 = vsel %vm288, %v1277, -inf
  %1335 = vmax.xlane.f32.xlu0 %v1334
  %v1336 = vpop.xlane.xlu0 %1335
  %v1337 = vsel %vm292, %v1326, -inf
  %1338 = vmax.xlane.f32.xlu0 %v1337
  %v1339 = vpop.xlane.xlu0 %1338
  %v1340 = vsel %vm296, %v1329, -inf
  %1341 = vmax.xlane.f32.xlu0 %v1340
  %v1342 = vpop.xlane.xlu0 %1341
  %v1343 = vmax.f32 %v1333, %v1339
  %v1344 = vmax.f32 %v1336, %v1342
  %v1345 = vsub.f32 %v1274, %v1343
  %v1346 = vsub.f32 %v1277, %v1344
  %v1347 = vmul.f32 %v1345, 1.442695
  %v1348 = vpow.pop %v1347
  %v1349 = vmul.f32 %v1346, 1.442695
  %v1350 = vpow.pop %v1349
  %v1351 = vsub.f32 %v1326, %v1343
  %v1352 = vsub.f32 %v1329, %v1344
  %v1353 = vmul.f32 %v1351, 1.442695
  %v1354 = vpow.pop %v1353
  %v1355 = vmul.f32 %v1352, 1.442695
  %v1356 = vpow.pop %v1355
  %v1357 = vsel %vm284, %v1348, 0.0
  %1358 = vadd.xlane.f32.xlu0 %v1357
  %v1359 = vpop.xlane.xlu0 %1358
  %v1360 = vsel %vm288, %v1350, 0.0
  %1361 = vadd.xlane.f32.xlu0 %v1360
  %v1362 = vpop.xlane.xlu0 %1361
  %v1363 = vsel %vm292, %v1354, 0.0
  %1364 = vadd.xlane.f32.xlu0 %v1363
  %v1365 = vpop.xlane.xlu0 %1364
  %v1366 = vsel %vm296, %v1356, 0.0
  %1367 = vadd.xlane.f32.xlu0 %v1366
  %v1368 = vpop.xlane.xlu0 %1367
  %v1369 = vadd.f32 %v1359, %v1365
  %v1370 = vadd.f32 %v1362, %v1368
  %v1372 = vperm.slane %v1186, 0
  %1374 = vmatpush.msra.mxu0 0.0
  %1375 = vmatpush.msra.mxu0 0.0
  %1376 = vmatpush.msra.mxu0 0.0
  %1377 = vmatpush.msra.mxu0 0.0
  %1378 = vmatpush.msra.mxu0 0.0
  %1379 = vmatpush.msra.mxu0 0.0
  %1380 = vmatpush.msra.mxu0 0.0
  %1381 = vmatpush.msra.mxu0 0.0
  %1382 = vmatpush.msra.mxu0 0.0
  %1383 = vmatpush.msra.mxu0 0.0
  %1384 = vmatpush.msra.mxu0 0.0
  %1385 = vmatpush.msra.mxu0 0.0
  %1386 = vmatpush.msra.mxu0 %v1183
  %1387 = vmatpush.msra.mxu0 %v1182
  %1388 = vmatpush.msra.mxu0 %v1181
  %1389 = vmatpush.msra.mxu0 %v1180
  %1390 = vmatmul.f32.gmra.mxu0 %v1225
  %v1391 = vpop.f32.mrf.mxu0
  %v1392 = vadd.f32 %v1372, %v1391
  %1393 = vdwg.mxu0
  %1394 = vmatpush.msra.mxu0 0.0
  %1395 = vmatpush.msra.mxu0 0.0
  %1396 = vmatpush.msra.mxu0 0.0
  %1397 = vmatpush.msra.mxu0 0.0
  %1398 = vmatpush.msra.mxu0 0.0
  %1399 = vmatpush.msra.mxu0 0.0
  %1400 = vmatpush.msra.mxu0 0.0
  %1401 = vmatpush.msra.mxu0 0.0
  %1402 = vmatpush.msra.mxu0 0.0
  %1403 = vmatpush.msra.mxu0 0.0
  %1404 = vmatpush.msra.mxu0 0.0
  %1405 = vmatpush.msra.mxu0 0.0
  %1406 = vmatpush.msra.mxu0 %v1183
  %1407 = vmatpush.msra.mxu0 %v1182
  %1408 = vmatpush.msra.mxu0 %v1181
  %1409 = vmatpush.msra.mxu0 %v1180
  %1410 = vmatmul.f32.gmra.mxu0 %v1191
  %v1411 = vpop.f32.mrf.mxu0
  %v1412 = vadd.f32 %v1372, %v1411
  %1413 = vmatmul.f32.gmra.mxu0 %v1194
  %v1414 = vpop.f32.mrf.mxu0
  %v1415 = vadd.f32 %v1372, %v1414
  %1416 = vdwg.mxu0
  %v1418 = vsel %vm292, %v1354, 0
  %v1421 = vsel %vm292, %v1356, 0
  %v1424 = vsel %vm380, %v1415, 0
  %1426 = vmatpush.msra.mxu0 0.0
  %1427 = vmatpush.msra.mxu0 0.0
  %1428 = vmatpush.msra.mxu0 0.0
  %1429 = vmatpush.msra.mxu0 0.0
  %1430 = vmatpush.msra.mxu0 0.0
  %1431 = vmatpush.msra.mxu0 0.0
  %1432 = vmatpush.msra.mxu0 0.0
  %1433 = vmatpush.msra.mxu0 0.0
  %1434 = vmatpush.msra.mxu0 0.0
  %1435 = vmatpush.msra.mxu0 0.0
  %1436 = vmatpush.msra.mxu0 0.0
  %1437 = vmatpush.msra.mxu0 0.0
  %1438 = vmatpush.msra.mxu0 0.0
  %1439 = vmatpush.msra.mxu0 0.0
  %1440 = vmatpush.msra.mxu0 %v1424
  %1441 = vmatpush.msra.mxu0 %v1412
  %1442 = vmatmul.f32.gmra.mxu0 %v1418
  %v1443 = vpop.f32.mrf.mxu0
  %v1444 = vadd.f32 0.0, %v1443
  %1445 = vmatmul.f32.gmra.mxu0 %v1421
  %v1446 = vpop.f32.mrf.mxu0
  %v1447 = vadd.f32 0.0, %v1446
  %1448 = vdwg.mxu0
  %v1450 = vsel %vm284, %v1348, 0
  %v1453 = vsel %vm284, %v1350, 0
  %v1456 = vsel %vm413, %v1392, 0
  %1458 = vmatpush.msra.mxu0 0.0
  %1459 = vmatpush.msra.mxu0 0.0
  %1460 = vmatpush.msra.mxu0 0.0
  %1461 = vmatpush.msra.mxu0 0.0
  %1462 = vmatpush.msra.mxu0 0.0
  %1463 = vmatpush.msra.mxu0 0.0
  %1464 = vmatpush.msra.mxu0 0.0
  %1465 = vmatpush.msra.mxu0 0.0
  %1466 = vmatpush.msra.mxu0 0.0
  %1467 = vmatpush.msra.mxu0 0.0
  %1468 = vmatpush.msra.mxu0 0.0
  %1469 = vmatpush.msra.mxu0 0.0
  %1470 = vmatpush.msra.mxu0 0.0
  %1471 = vmatpush.msra.mxu0 0.0
  %1472 = vmatpush.msra.mxu0 0.0
  %1473 = vmatpush.msra.mxu0 %v1456
  %1474 = vmatmul.f32.gmra.mxu0 %v1450
  %v1475 = vpop.f32.mrf.mxu0
  %v1476 = vadd.f32 %v1444, %v1475
  %1477 = vmatmul.f32.gmra.mxu0 %v1453
  %v1478 = vpop.f32.mrf.mxu0
  %v1479 = vadd.f32 %v1447, %v1478
  %1480 = vdwg.mxu0
  %v1481 = vrcp.pop %v1369
  %v1482 = vmul.f32 %v1369, %v1481
  %v1483 = vsub.f32 1.0, %v1482
  %v1484 = vmul.f32 %v1481, %v1483
  %v1485 = vadd.f32 %v1481, %v1484
  %vm1486 = vweird.f32 %v1369
  %vm1487 = vweird.f32 %v1481
  %vm1488 = vmor %vm1486, %vm1487
  %v1489 = vsel %vm1488, %v1481, %v1485
  %v1490 = vand.u32 2147483647, %v1369
  %vm1491 = vcmp.eq.f32.partialorder %v1490, 8.507059e+37
  %v1492 = vand.u32 %v1369, 2147483648
  %v1493 = vor.u32 1.1754944e-38, %v1492
  %v1494 = vsel %vm1491, %v1493, %v1489
  %v1495 = vrcp.pop %v1370
  %v1496 = vmul.f32 %v1370, %v1495
  %v1497 = vsub.f32 1.0, %v1496
  %v1498 = vmul.f32 %v1495, %v1497
  %v1499 = vadd.f32 %v1495, %v1498
  %vm1500 = vweird.f32 %v1370
  %vm1501 = vweird.f32 %v1495
  %vm1502 = vmor %vm1500, %vm1501
  %v1503 = vsel %vm1502, %v1495, %v1499
  %v1504 = vand.u32 2147483647, %v1370
  %vm1505 = vcmp.eq.f32.partialorder %v1504, 8.507059e+37
  %v1506 = vand.u32 %v1370, 2147483648
  %v1507 = vor.u32 1.1754944e-38, %v1506
  %v1508 = vsel %vm1505, %v1507, %v1503
  %v1509 = vmul.f32 %v1476, %v1494
  %v1510 = vmul.f32 %v1479, %v1508
  %v1511 = vld [vmem:[%s11] sm:$0xff]
  %v1512 = vld [vmem:[%s11 + $0x8] sm:$0xff]
  %v1513 = vld [vmem:[%s472] sm:$0xff]
  %v1514 = vld [vmem:[%s472 + $0x8] sm:$0xff]
  %v1515 = vld [vmem:[%s472 + $0x10] sm:$0xff]
  %v1516 = vld [vmem:[%s472 + $0x18] sm:$0xff]
  %v1517 = vld [vmem:[%s477] sm:$0xff]
  %v1518 = vld [vmem:[%s477 + $0x8] sm:$0xff]
  %v1519 = vld [vmem:[%s477 + $0x10] sm:$0xff]
  %v1520 = vld [vmem:[%s477 + $0x18] sm:$0xff]
  %v1521 = vld [vmem:[%s482] sm:$0xff]
  %v1522 = vld [vmem:[%s482 + $0x8] sm:$0xff]
  %v1523 = vld [vmem:[%s482 + $0x10] sm:$0xff]
  %v1524 = vld [vmem:[%s482 + $0x18] sm:$0xff]
  %v1525 = vld [vmem:[%s487] sm:$0x1]
  %v1526 = vld [vmem:[%s489] sm:$0x1]
  %v1527 = vld [vmem:[%s491] sm:$0x1]
  %v1529 = vperm.slane %v1525, 0
  %1531 = vmatpush.msra.mxu0 0.0
  %1532 = vmatpush.msra.mxu0 0.0
  %1533 = vmatpush.msra.mxu0 0.0
  %1534 = vmatpush.msra.mxu0 0.0
  %1535 = vmatpush.msra.mxu0 0.0
  %1536 = vmatpush.msra.mxu0 0.0
  %1537 = vmatpush.msra.mxu0 0.0
  %1538 = vmatpush.msra.mxu0 0.0
  %1539 = vmatpush.msra.mxu0 0.0
  %1540 = vmatpush.msra.mxu0 0.0
  %1541 = vmatpush.msra.mxu0 0.0
  %1542 = vmatpush.msra.mxu0 0.0
  %1543 = vmatpush.msra.mxu0 %v1516
  %1544 = vmatpush.msra.mxu0 %v1515
  %1545 = vmatpush.msra.mxu0 %v1514
  %1546 = vmatpush.msra.mxu0 %v1513
  %1547 = vmatmul.f32.gmra.mxu0 %v1191
  %v1548 = vpop.f32.mrf.mxu0
  %v1549 = vadd.f32 %v1529, %v1548
  %1550 = vmatmul.f32.gmra.mxu0 %v1194
  %v1551 = vpop.f32.mrf.mxu0
  %v1552 = vadd.f32 %v1529, %v1551
  %1553 = vdwg.mxu0
  %v1554 = vmul.f32 %v1549, 0.25
  %v1555 = vmul.f32 %v1552, 0.25
  %v1557 = vperm.slane %v1526, 0
  %1559 = vmatpush.msra.mxu0 0.0
  %1560 = vmatpush.msra.mxu0 0.0
  %1561 = vmatpush.msra.mxu0 0.0
  %1562 = vmatpush.msra.mxu0 0.0
  %1563 = vmatpush.msra.mxu0 0.0
  %1564 = vmatpush.msra.mxu0 0.0
  %1565 = vmatpush.msra.mxu0 0.0
  %1566 = vmatpush.msra.mxu0 0.0
  %1567 = vmatpush.msra.mxu0 0.0
  %1568 = vmatpush.msra.mxu0 0.0
  %1569 = vmatpush.msra.mxu0 0.0
  %1570 = vmatpush.msra.mxu0 0.0
  %1571 = vmatpush.msra.mxu0 %v1520
  %1572 = vmatpush.msra.mxu0 %v1519
  %1573 = vmatpush.msra.mxu0 %v1518
  %1574 = vmatpush.msra.mxu0 %v1517
  %1575 = vmatmul.f32.gmra.mxu0 %v1225
  %v1576 = vpop.f32.mrf.mxu0
  %v1577 = vadd.f32 %v1557, %v1576
  %1578 = vdwg.mxu0
  %v1580 = vsel %vm199, %v1554, 0
  %v1583 = vsel %vm199, %v1555, 0
  %v1586 = vsel %vm199, %v1577, 0
  %1588 = vmatpush.xpose.msra.mxu0 0.0
  %1589 = vmatpush.xpose.msra.mxu0 0.0
  %1590 = vmatpush.xpose.msra.mxu0 0.0
  %1591 = vmatpush.xpose.msra.mxu0 0.0
  %1592 = vmatpush.xpose.msra.mxu0 0.0
  %1593 = vmatpush.xpose.msra.mxu0 0.0
  %1594 = vmatpush.xpose.msra.mxu0 0.0
  %1595 = vmatpush.xpose.msra.mxu0 0.0
  %1596 = vmatpush.xpose.msra.mxu0 0.0
  %1597 = vmatpush.xpose.msra.mxu0 0.0
  %1598 = vmatpush.xpose.msra.mxu0 0.0
  %1599 = vmatpush.xpose.msra.mxu0 0.0
  %1600 = vmatpush.xpose.msra.mxu0 0.0
  %1601 = vmatpush.xpose.msra.mxu0 0.0
  %1602 = vmatpush.xpose.msra.mxu0 0.0
  %1603 = vmatpush.xpose.msra.mxu0 %v1586
  %1604 = vmatmul.f32.gmra.mxu0 %v1580
  %v1605 = vpop.f32.mrf.mxu0
  %v1606 = vadd.f32 0.0, %v1605
  %1607 = vmatmul.f32.gmra.mxu0 %v1583
  %v1608 = vpop.f32.mrf.mxu0
  %v1609 = vadd.f32 0.0, %v1608
  %1610 = vdwg.mxu0
  %1611 = vmatpush.msra.mxu0 0.0
  %1612 = vmatpush.msra.mxu0 0.0
  %1613 = vmatpush.msra.mxu0 0.0
  %1614 = vmatpush.msra.mxu0 0.0
  %1615 = vmatpush.msra.mxu0 0.0
  %1616 = vmatpush.msra.mxu0 0.0
  %1617 = vmatpush.msra.mxu0 0.0
  %1618 = vmatpush.msra.mxu0 0.0
  %1619 = vmatpush.msra.mxu0 0.0
  %1620 = vmatpush.msra.mxu0 0.0
  %1621 = vmatpush.msra.mxu0 0.0
  %1622 = vmatpush.msra.mxu0 0.0
  %1623 = vmatpush.msra.mxu0 %v1520
  %1624 = vmatpush.msra.mxu0 %v1519
  %1625 = vmatpush.msra.mxu0 %v1518
  %1626 = vmatpush.msra.mxu0 %v1517
  %1627 = vmatmul.f32.gmra.mxu0 %v1191
  %v1628 = vpop.f32.mrf.mxu0
  %v1629 = vadd.f32 %v1557, %v1628
  %1630 = vmatmul.f32.gmra.mxu0 %v1194
  %v1631 = vpop.f32.mrf.mxu0
  %v1632 = vadd.f32 %v1557, %v1631
  %1633 = vdwg.mxu0
  %v1635 = vsel %vm199, %v1629, 0
  %v1638 = vsel %vm199, %v1632, 0
  %1640 = vmatpush.xpose.msra.mxu0 0.0
  %1641 = vmatpush.xpose.msra.mxu0 0.0
  %1642 = vmatpush.xpose.msra.mxu0 0.0
  %1643 = vmatpush.xpose.msra.mxu0 0.0
  %1644 = vmatpush.xpose.msra.mxu0 0.0
  %1645 = vmatpush.xpose.msra.mxu0 0.0
  %1646 = vmatpush.xpose.msra.mxu0 0.0
  %1647 = vmatpush.xpose.msra.mxu0 0.0
  %1648 = vmatpush.xpose.msra.mxu0 0.0
  %1649 = vmatpush.xpose.msra.mxu0 0.0
  %1650 = vmatpush.xpose.msra.mxu0 0.0
  %1651 = vmatpush.xpose.msra.mxu0 0.0
  %1652 = vmatpush.xpose.msra.mxu0 0.0
  %1653 = vmatpush.xpose.msra.mxu0 0.0
  %1654 = vmatpush.xpose.msra.mxu0 %v1638
  %1655 = vmatpush.xpose.msra.mxu0 %v1635
  %1656 = vmatmul.f32.gmra.mxu0 %v1580
  %v1657 = vpop.f32.mrf.mxu0
  %v1658 = vadd.f32 %v1170, %v1657
  %1659 = vmatmul.f32.gmra.mxu0 %v1583
  %v1660 = vpop.f32.mrf.mxu0
  %v1661 = vadd.f32 %v1171, %v1660
  %1662 = vdwg.mxu0
  %v1663 = vsel %vm284, %v1606, -inf
  %1664 = vmax.xlane.f32.xlu0 %v1663
  %v1665 = vpop.xlane.xlu0 %1664
  %v1666 = vsel %vm288, %v1609, -inf
  %1667 = vmax.xlane.f32.xlu0 %v1666
  %v1668 = vpop.xlane.xlu0 %1667
  %v1669 = vsel %vm292, %v1658, -inf
  %1670 = vmax.xlane.f32.xlu0 %v1669
  %v1671 = vpop.xlane.xlu0 %1670
  %v1672 = vsel %vm296, %v1661, -inf
  %1673 = vmax.xlane.f32.xlu0 %v1672
  %v1674 = vpop.xlane.xlu0 %1673
  %v1675 = vmax.f32 %v1665, %v1671
  %v1676 = vmax.f32 %v1668, %v1674
  %v1677 = vsub.f32 %v1606, %v1675
  %v1678 = vsub.f32 %v1609, %v1676
  %v1679 = vmul.f32 %v1677, 1.442695
  %v1680 = vpow.pop %v1679
  %v1681 = vmul.f32 %v1678, 1.442695
  %v1682 = vpow.pop %v1681
  %v1683 = vsub.f32 %v1658, %v1675
  %v1684 = vsub.f32 %v1661, %v1676
  %v1685 = vmul.f32 %v1683, 1.442695
  %v1686 = vpow.pop %v1685
  %v1687 = vmul.f32 %v1684, 1.442695
  %v1688 = vpow.pop %v1687
  %v1689 = vsel %vm284, %v1680, 0.0
  %1690 = vadd.xlane.f32.xlu0 %v1689
  %v1691 = vpop.xlane.xlu0 %1690
  %v1692 = vsel %vm288, %v1682, 0.0
  %1693 = vadd.xlane.f32.xlu0 %v1692
  %v1694 = vpop.xlane.xlu0 %1693
  %v1695 = vsel %vm292, %v1686, 0.0
  %1696 = vadd.xlane.f32.xlu0 %v1695
  %v1697 = vpop.xlane.xlu0 %1696
  %v1698 = vsel %vm296, %v1688, 0.0
  %1699 = vadd.xlane.f32.xlu0 %v1698
  %v1700 = vpop.xlane.xlu0 %1699
  %v1701 = vadd.f32 %v1691, %v1697
  %v1702 = vadd.f32 %v1694, %v1700
  %v1704 = vperm.slane %v1527, 0
  %1706 = vmatpush.msra.mxu0 0.0
  %1707 = vmatpush.msra.mxu0 0.0
  %1708 = vmatpush.msra.mxu0 0.0
  %1709 = vmatpush.msra.mxu0 0.0
  %1710 = vmatpush.msra.mxu0 0.0
  %1711 = vmatpush.msra.mxu0 0.0
  %1712 = vmatpush.msra.mxu0 0.0
  %1713 = vmatpush.msra.mxu0 0.0
  %1714 = vmatpush.msra.mxu0 0.0
  %1715 = vmatpush.msra.mxu0 0.0
  %1716 = vmatpush.msra.mxu0 0.0
  %1717 = vmatpush.msra.mxu0 0.0
  %1718 = vmatpush.msra.mxu0 %v1524
  %1719 = vmatpush.msra.mxu0 %v1523
  %1720 = vmatpush.msra.mxu0 %v1522
  %1721 = vmatpush.msra.mxu0 %v1521
  %1722 = vmatmul.f32.gmra.mxu0 %v1225
  %v1723 = vpop.f32.mrf.mxu0
  %v1724 = vadd.f32 %v1704, %v1723
  %1725 = vdwg.mxu0
  %1726 = vmatpush.msra.mxu0 0.0
  %1727 = vmatpush.msra.mxu0 0.0
  %1728 = vmatpush.msra.mxu0 0.0
  %1729 = vmatpush.msra.mxu0 0.0
  %1730 = vmatpush.msra.mxu0 0.0
  %1731 = vmatpush.msra.mxu0 0.0
  %1732 = vmatpush.msra.mxu0 0.0
  %1733 = vmatpush.msra.mxu0 0.0
  %1734 = vmatpush.msra.mxu0 0.0
  %1735 = vmatpush.msra.mxu0 0.0
  %1736 = vmatpush.msra.mxu0 0.0
  %1737 = vmatpush.msra.mxu0 0.0
  %1738 = vmatpush.msra.mxu0 %v1524
  %1739 = vmatpush.msra.mxu0 %v1523
  %1740 = vmatpush.msra.mxu0 %v1522
  %1741 = vmatpush.msra.mxu0 %v1521
  %1742 = vmatmul.f32.gmra.mxu0 %v1191
  %v1743 = vpop.f32.mrf.mxu0
  %v1744 = vadd.f32 %v1704, %v1743
  %1745 = vmatmul.f32.gmra.mxu0 %v1194
  %v1746 = vpop.f32.mrf.mxu0
  %v1747 = vadd.f32 %v1704, %v1746
  %1748 = vdwg.mxu0
  %v1750 = vsel %vm292, %v1686, 0
  %v1753 = vsel %vm292, %v1688, 0
  %v1756 = vsel %vm380, %v1747, 0
  %1758 = vmatpush.msra.mxu0 0.0
  %1759 = vmatpush.msra.mxu0 0.0
  %1760 = vmatpush.msra.mxu0 0.0
  %1761 = vmatpush.msra.mxu0 0.0
  %1762 = vmatpush.msra.mxu0 0.0
  %1763 = vmatpush.msra.mxu0 0.0
  %1764 = vmatpush.msra.mxu0 0.0
  %1765 = vmatpush.msra.mxu0 0.0
  %1766 = vmatpush.msra.mxu0 0.0
  %1767 = vmatpush.msra.mxu0 0.0
  %1768 = vmatpush.msra.mxu0 0.0
  %1769 = vmatpush.msra.mxu0 0.0
  %1770 = vmatpush.msra.mxu0 0.0
  %1771 = vmatpush.msra.mxu0 0.0
  %1772 = vmatpush.msra.mxu0 %v1756
  %1773 = vmatpush.msra.mxu0 %v1744
  %1774 = vmatmul.f32.gmra.mxu0 %v1750
  %v1775 = vpop.f32.mrf.mxu0
  %v1776 = vadd.f32 0.0, %v1775
  %1777 = vmatmul.f32.gmra.mxu0 %v1753
  %v1778 = vpop.f32.mrf.mxu0
  %v1779 = vadd.f32 0.0, %v1778
  %1780 = vdwg.mxu0
  %v1782 = vsel %vm284, %v1680, 0
  %v1785 = vsel %vm284, %v1682, 0
  %v1788 = vsel %vm413, %v1724, 0
  %1790 = vmatpush.msra.mxu0 0.0
  %1791 = vmatpush.msra.mxu0 0.0
  %1792 = vmatpush.msra.mxu0 0.0
  %1793 = vmatpush.msra.mxu0 0.0
  %1794 = vmatpush.msra.mxu0 0.0
  %1795 = vmatpush.msra.mxu0 0.0
  %1796 = vmatpush.msra.mxu0 0.0
  %1797 = vmatpush.msra.mxu0 0.0
  %1798 = vmatpush.msra.mxu0 0.0
  %1799 = vmatpush.msra.mxu0 0.0
  %1800 = vmatpush.msra.mxu0 0.0
  %1801 = vmatpush.msra.mxu0 0.0
  %1802 = vmatpush.msra.mxu0 0.0
  %1803 = vmatpush.msra.mxu0 0.0
  %1804 = vmatpush.msra.mxu0 0.0
  %1805 = vmatpush.msra.mxu0 %v1788
  %1806 = vmatmul.f32.gmra.mxu0 %v1782
  %v1807 = vpop.f32.mrf.mxu0
  %v1808 = vadd.f32 %v1776, %v1807
  %1809 = vmatmul.f32.gmra.mxu0 %v1785
  %v1810 = vpop.f32.mrf.mxu0
  %v1811 = vadd.f32 %v1779, %v1810
  %1812 = vdwg.mxu0
  %v1813 = vrcp.pop %v1701
  %v1814 = vmul.f32 %v1701, %v1813
  %v1815 = vsub.f32 1.0, %v1814
  %v1816 = vmul.f32 %v1813, %v1815
  %v1817 = vadd.f32 %v1813, %v1816
  %vm1818 = vweird.f32 %v1701
  %vm1819 = vweird.f32 %v1813
  %vm1820 = vmor %vm1818, %vm1819
  %v1821 = vsel %vm1820, %v1813, %v1817
  %v1822 = vand.u32 2147483647, %v1701
  %vm1823 = vcmp.eq.f32.partialorder %v1822, 8.507059e+37
  %v1824 = vand.u32 %v1701, 2147483648
  %v1825 = vor.u32 1.1754944e-38, %v1824
  %v1826 = vsel %vm1823, %v1825, %v1821
  %v1827 = vrcp.pop %v1702
  %v1828 = vmul.f32 %v1702, %v1827
  %v1829 = vsub.f32 1.0, %v1828
  %v1830 = vmul.f32 %v1827, %v1829
  %v1831 = vadd.f32 %v1827, %v1830
  %vm1832 = vweird.f32 %v1702
  %vm1833 = vweird.f32 %v1827
  %vm1834 = vmor %vm1832, %vm1833
  %v1835 = vsel %vm1834, %v1827, %v1831
  %v1836 = vand.u32 2147483647, %v1702
  %vm1837 = vcmp.eq.f32.partialorder %v1836, 8.507059e+37
  %v1838 = vand.u32 %v1702, 2147483648
  %v1839 = vor.u32 1.1754944e-38, %v1838
  %v1840 = vsel %vm1837, %v1839, %v1835
  %v1841 = vmul.f32 %v1808, %v1826
  %v1842 = vmul.f32 %v1811, %v1840
  %v1843 = vld [vmem:[%s808] sm:$0xff]
  %v1844 = vld [vmem:[%s808 + $0x8] sm:$0xff]
  %v1846 = vsel %vm199, %v1841, 0
  %v1849 = vsel %vm199, %v1842, 0
  %1851 = vmatpush.msra.mxu0 0.0
  %1852 = vmatpush.msra.mxu0 0.0
  %1853 = vmatpush.msra.mxu0 0.0
  %1854 = vmatpush.msra.mxu0 0.0
  %1855 = vmatpush.msra.mxu0 0.0
  %1856 = vmatpush.msra.mxu0 0.0
  %1857 = vmatpush.msra.mxu0 0.0
  %1858 = vmatpush.msra.mxu0 0.0
  %1859 = vmatpush.msra.mxu0 0.0
  %1860 = vmatpush.msra.mxu0 0.0
  %1861 = vmatpush.msra.mxu0 0.0
  %1862 = vmatpush.msra.mxu0 0.0
  %1863 = vmatpush.msra.mxu0 0.0
  %1864 = vmatpush.msra.mxu0 0.0
  %1865 = vmatpush.msra.mxu0 %v1844
  %1866 = vmatpush.msra.mxu0 %v1843
  %1867 = vmatmul.f32.gmra.mxu0 %v1846
  %v1868 = vpop.f32.mrf.mxu0
  %v1869 = vadd.f32 0.0, %v1868
  %1870 = vmatmul.f32.gmra.mxu0 %v1849
  %v1871 = vpop.f32.mrf.mxu0
  %v1872 = vadd.f32 0.0, %v1871
  %1873 = vdwg.mxu0
  %v1875 = vsel %vm199, %v1509, 0
  %v1878 = vsel %vm199, %v1510, 0
  %1880 = vmatpush.msra.mxu0 0.0
  %1881 = vmatpush.msra.mxu0 0.0
  %1882 = vmatpush.msra.mxu0 0.0
  %1883 = vmatpush.msra.mxu0 0.0
  %1884 = vmatpush.msra.mxu0 0.0
  %1885 = vmatpush.msra.mxu0 0.0
  %1886 = vmatpush.msra.mxu0 0.0
  %1887 = vmatpush.msra.mxu0 0.0
  %1888 = vmatpush.msra.mxu0 0.0
  %1889 = vmatpush.msra.mxu0 0.0
  %1890 = vmatpush.msra.mxu0 0.0
  %1891 = vmatpush.msra.mxu0 0.0
  %1892 = vmatpush.msra.mxu0 0.0
  %1893 = vmatpush.msra.mxu0 0.0
  %1894 = vmatpush.msra.mxu0 %v1512
  %1895 = vmatpush.msra.mxu0 %v1511
  %1896 = vmatmul.f32.gmra.mxu0 %v1875
  %v1897 = vpop.f32.mrf.mxu0
  %v1898 = vadd.f32 %v1869, %v1897
  %1899 = vmatmul.f32.gmra.mxu0 %v1878
  %v1900 = vpop.f32.mrf.mxu0
  %v1901 = vadd.f32 %v1872, %v1900
  %1902 = vdwg.mxu0
  %v1903 = vadd.f32 %v1142, %v1898
  %v1904 = vadd.f32 %v1143, %v1901
  %v1905 = vadd.f32 %v1903, %v872
  %v1906 = vadd.f32 %v1904, %v872
  %v1907 = vsel %vm98, %v1905, 0.0
  %1908 = vadd.xlane.f32.xlu0 %v1907
  %v1909 = vpop.xlane.xlu0 %1908
  %v1910 = vsel %vm879, %v1906, 0.0
  %1911 = vadd.xlane.f32.xlu0 %v1910
  %v1912 = vpop.xlane.xlu0 %1911
  %v1913 = vmul.f32 %v1909, %v889
  %v1914 = vmul.f32 %v1912, %v889
  %v1915 = vsub.f32 %v1905, %v1913
  %v1916 = vsub.f32 %v1906, %v1914
  %v1917 = vmul.f32 %v1915, %v1915
  %v1918 = vmul.f32 %v1916, %v1916
  %v1919 = vsel %vm98, %v1917, 0.0
  %1920 = vadd.xlane.f32.xlu0 %v1919
  %v1921 = vpop.xlane.xlu0 %1920
  %v1922 = vsel %vm879, %v1918, 0.0
  %1923 = vadd.xlane.f32.xlu0 %v1922
  %v1924 = vpop.xlane.xlu0 %1923
  %v1925 = vmul.f32 %v1921, %v889
  %v1926 = vmul.f32 %v1924, %v889
  %v1927 = vadd.f32 %v1925, 1e-05
  %v1928 = vadd.f32 %v1926, 1e-05
  %v1929 = vrsqrt.pop %v1927
  %v1930 = vmul.f32 %v1929, %v1927
  %v1931 = vmul.f32 %v1930, %v1929
  %v1932 = vmul.f32 0.5, %v1931
  %v1933 = vsub.f32 1.5, %v1932
  %v1934 = vmul.f32 %v1929, %v1933
  %vm1935 = vweird.f32 %v1927
  %vm1936 = vweird.f32 %v1929
  %vm1937 = vmor %vm1935, %vm1936
  %v1938 = vsel %vm1937, %v1929, %v1934
  %v1939 = vrsqrt.pop %v1928
  %v1940 = vmul.f32 %v1939, %v1928
  %v1941 = vmul.f32 %v1940, %v1939
  %v1942 = vmul.f32 0.5, %v1941
  %v1943 = vsub.f32 1.5, %v1942
  %v1944 = vmul.f32 %v1939, %v1943
  %vm1945 = vweird.f32 %v1928
  %vm1946 = vweird.f32 %v1939
  %vm1947 = vmor %vm1945, %vm1946
  %v1948 = vsel %vm1947, %v1939, %v1944
  %v1949 = vmul.f32 %v1915, %v1938
  %v1950 = vmul.f32 %v1916, %v1948
  %v1951 = vmul.f32 %v1949, %v929
  %v1952 = vmul.f32 %v1950, %v929
  %v1953 = vadd.f32 %v1951, %v934
  %v1954 = vadd.f32 %v1952, %v934
  %v1956 = vsel %vm98, %v1953, 0
  %v1959 = vsel %vm98, %v1954, 0
  %1961 = vmatpush.msra.mxu0 0.0
  %1962 = vmatpush.msra.mxu0 0.0
  %1963 = vmatpush.msra.mxu0 0.0
  %1964 = vmatpush.msra.mxu0 0.0
  %1965 = vmatpush.msra.mxu0 0.0
  %1966 = vmatpush.msra.mxu0 0.0
  %1967 = vmatpush.msra.mxu0 0.0
  %1968 = vmatpush.msra.mxu0 0.0
  %1969 = vmatpush.msra.mxu0 0.0
  %1970 = vmatpush.msra.mxu0 0.0
  %1971 = vmatpush.msra.mxu0 0.0
  %1972 = vmatpush.msra.mxu0 0.0
  %1973 = vmatpush.msra.mxu0 %v77
  %1974 = vmatpush.msra.mxu0 %v76
  %1975 = vmatpush.msra.mxu0 %v75
  %1976 = vmatpush.msra.mxu0 %v74
  %1977 = vmatmul.f32.gmra.mxu0 %v1956
  %v1978 = vpop.f32.mrf.mxu0
  %v1979 = vadd.f32 %v939, %v1978
  %1980 = vmatmul.f32.gmra.mxu0 %v1959
  %v1981 = vpop.f32.mrf.mxu0
  %v1982 = vadd.f32 %v939, %v1981
  %1983 = vdwg.mxu0
  %v1984 = vmul.f32 %v1979, 0.5
  %v1985 = vmul.f32 %v1982, 0.5
  %v1986 = vmul.f32 %v1979, 0.70710677
  %v1987 = vmul.f32 %v1982, 0.70710677
  %v1988 = vand.u32 2147483647, %v1986
  %v1989 = vand.u32 2147483647, %v1987
  %v1990 = vmul.f32 %v1988, 0.3275911
  %v1991 = vmul.f32 %v1989, 0.3275911
  %v1992 = vadd.f32 %v1990, 1.0
  %v1993 = vadd.f32 %v1991, 1.0
  %v1994 = vrcp.pop %v1992
  %v1995 = vmul.f32 %v1992, %v1994
  %v1996 = vsub.f32 1.0, %v1995
  %v1997 = vmul.f32 %v1994, %v1996
  %v1998 = vadd.f32 %v1994, %v1997
  %vm1999 = vweird.f32 %v1992
  %vm2000 = vweird.f32 %v1994
  %vm2001 = vmor %vm1999, %vm2000
  %v2002 = vsel %vm2001, %v1994, %v1998
  %v2003 = vand.u32 2147483647, %v1992
  %vm2004 = vcmp.eq.f32.partialorder %v2003, 8.507059e+37
  %v2005 = vand.u32 %v1992, 2147483648
  %v2006 = vor.u32 1.1754944e-38, %v2005
  %v2007 = vsel %vm2004, %v2006, %v2002
  %v2008 = vmul.f32 1.0, %v2007
  %v2009 = vrcp.pop %v1993
  %v2010 = vmul.f32 %v1993, %v2009
  %v2011 = vsub.f32 1.0, %v2010
  %v2012 = vmul.f32 %v2009, %v2011
  %v2013 = vadd.f32 %v2009, %v2012
  %vm2014 = vweird.f32 %v1993
  %vm2015 = vweird.f32 %v2009
  %vm2016 = vmor %vm2014, %vm2015
  %v2017 = vsel %vm2016, %v2009, %v2013
  %v2018 = vand.u32 2147483647, %v1993
  %vm2019 = vcmp.eq.f32.partialorder %v2018, 8.507059e+37
  %v2020 = vand.u32 %v1993, 2147483648
  %v2021 = vor.u32 1.1754944e-38, %v2020
  %v2022 = vsel %vm2019, %v2021, %v2017
  %v2023 = vmul.f32 1.0, %v2022
  %v2024 = vmul.f32 %v2008, 1.0614054
  %v2025 = vmul.f32 %v2023, 1.0614054
  %v2026 = vadd.f32 %v2024, -1.4531521
  %v2027 = vadd.f32 %v2025, -1.4531521
  %v2028 = vmul.f32 %v2026, %v2008
  %v2029 = vmul.f32 %v2027, %v2023
  %v2030 = vadd.f32 %v2028, 1.4214138
  %v2031 = vadd.f32 %v2029, 1.4214138
  %v2032 = vmul.f32 %v2030, %v2008
  %v2033 = vmul.f32 %v2031, %v2023
  %v2034 = vadd.f32 %v2032, -0.28449672
  %v2035 = vadd.f32 %v2033, -0.28449672
  %v2036 = vmul.f32 %v2034, %v2008
  %v2037 = vmul.f32 %v2035, %v2023
  %v2038 = vadd.f32 %v2036, 0.2548296
  %v2039 = vadd.f32 %v2037, 0.2548296
  %v2040 = vmul.f32 %v2038, %v2008
  %v2041 = vmul.f32 %v2039, %v2023
  %v2042 = vsub.f32 0.0, %v1988
  %v2043 = vsub.f32 0.0, %v1989
  %v2044 = vmul.f32 %v2042, %v1988
  %v2045 = vmul.f32 %v2043, %v1989
  %v2046 = vmul.f32 %v2044, 1.442695
  %v2047 = vpow.pop %v2046
  %v2048 = vmul.f32 %v2045, 1.442695
  %v2049 = vpow.pop %v2048
  %v2050 = vmul.f32 %v2040, %v2047
  %v2051 = vmul.f32 %v2041, %v2049
  %v2052 = vsub.f32 1.0, %v2050
  %v2053 = vsub.f32 1.0, %v2051
  %vm2054 = vcmp.lt.f32.partialorder %v1986, 0.0
  %vm2055 = vcmp.lt.f32.partialorder %v1987, 0.0
  %v2056 = vsub.f32 0.0, %v2052
  %v2057 = vsub.f32 0.0, %v2053
  %v2058 = vsel %vm2054, %v2056, %v2052
  %v2059 = vsel %vm2055, %v2057, %v2053
  %v2060 = vadd.f32 %v2058, 1.0
  %v2061 = vadd.f32 %v2059, 1.0
  %v2062 = vmul.f32 %v1984, %v2060
  %v2063 = vmul.f32 %v1985, %v2061
  %v2065 = vsel %vm1053, %v2062, 0
  %v2068 = vsel %vm1053, %v2063, 0
  %2070 = vmatpush.msra.mxu0 0.0
  %2071 = vmatpush.msra.mxu0 0.0
  %2072 = vmatpush.msra.mxu0 0.0
  %2073 = vmatpush.msra.mxu0 0.0
  %2074 = vmatpush.msra.mxu0 0.0
  %2075 = vmatpush.msra.mxu0 0.0
  %2076 = vmatpush.msra.mxu0 0.0
  %2077 = vmatpush.msra.mxu0 0.0
  %2078 = vmatpush.msra.mxu0 %v86
  %2079 = vmatpush.msra.mxu0 %v85
  %2080 = vmatpush.msra.mxu0 %v84
  %2081 = vmatpush.msra.mxu0 %v83
  %2082 = vmatpush.msra.mxu0 %v82
  %2083 = vmatpush.msra.mxu0 %v81
  %2084 = vmatpush.msra.mxu0 %v80
  %2085 = vmatpush.msra.mxu0 %v79
  %2086 = vmatmul.f32.gmra.mxu0 %v2065
  %v2087 = vpop.f32.mrf.mxu0
  %v2088 = vadd.f32 %v1051, %v2087
  %2089 = vmatmul.f32.gmra.mxu0 %v2068
  %v2090 = vpop.f32.mrf.mxu0
  %v2091 = vadd.f32 %v1051, %v2090
  %2092 = vdwg.mxu0
  %v2093 = vadd.f32 %v1953, %v2088
  %v2094 = vadd.f32 %v1954, %v2091
  %v2095 = vsel %vm98, %v2093, 0.0
  %2096 = vadd.xlane.f32.xlu0 %v2095
  %v2097 = vpop.xlane.xlu0 %2096
  %v2098 = vsel %vm879, %v2094, 0.0
  %2099 = vadd.xlane.f32.xlu0 %v2098
  %v2100 = vpop.xlane.xlu0 %2099
  %v2101 = vmul.f32 %v2097, %v889
  %v2102 = vmul.f32 %v2100, %v889
  %v2103 = vsub.f32 %v2093, %v2101
  %v2104 = vsub.f32 %v2094, %v2102
  %v2105 = vmul.f32 %v2103, %v2103
  %v2106 = vmul.f32 %v2104, %v2104
  %v2107 = vsel %vm98, %v2105, 0.0
  %2108 = vadd.xlane.f32.xlu0 %v2107
  %v2109 = vpop.xlane.xlu0 %2108
  %v2110 = vsel %vm879, %v2106, 0.0
  %2111 = vadd.xlane.f32.xlu0 %v2110
  %v2112 = vpop.xlane.xlu0 %2111
  %v2113 = vmul.f32 %v2109, %v889
  %v2114 = vmul.f32 %v2112, %v889
  %v2115 = vadd.f32 %v2113, 1e-05
  %v2116 = vadd.f32 %v2114, 1e-05
  %v2117 = vrsqrt.pop %v2115
  %v2118 = vmul.f32 %v2117, %v2115
  %v2119 = vmul.f32 %v2118, %v2117
  %v2120 = vmul.f32 0.5, %v2119
  %v2121 = vsub.f32 1.5, %v2120
  %v2122 = vmul.f32 %v2117, %v2121
  %vm2123 = vweird.f32 %v2115
  %vm2124 = vweird.f32 %v2117
  %vm2125 = vmor %vm2123, %vm2124
  %v2126 = vsel %vm2125, %v2117, %v2122
  %v2127 = vrsqrt.pop %v2116
  %v2128 = vmul.f32 %v2127, %v2116
  %v2129 = vmul.f32 %v2128, %v2127
  %v2130 = vmul.f32 0.5, %v2129
  %v2131 = vsub.f32 1.5, %v2130
  %v2132 = vmul.f32 %v2127, %v2131
  %vm2133 = vweird.f32 %v2116
  %vm2134 = vweird.f32 %v2127
  %vm2135 = vmor %vm2133, %vm2134
  %v2136 = vsel %vm2135, %v2127, %v2132
  %v2137 = vmul.f32 %v2103, %v2126
  %v2138 = vmul.f32 %v2104, %v2136
  %v2139 = vmul.f32 %v2137, %v1130
  %v2140 = vmul.f32 %v2138, %v1130
  %v2141 = vadd.f32 %v2139, %v1135
  %v2142 = vadd.f32 %v2140, %v1135
  %s2143 = scalar_lea.vmem %s21, 16
  %2144 = vst.msk [vmem:[%s2143] sm:$0xff] %vm98, %v2141
  %2145 = vst.msk [vmem:[%s2143 + $0x8] sm:$0x3] %vm879, %v2142
  // Predicated region
  $region86: #{transformer_vae_v4_forward.14} parent=0 // pred_check
    _
  $region87: #{transformer_vae_v4_forward.14} parent=0 // pred_check_branch
    %2147 = sbr.rel (0) target = $region89
  $region88: #{transformer_vae_v4_forward.14} parent=0 // pred_region
    _
  $region89: #{transformer_vae_v4_forward.14} parent=0 // pred_fallthru
    _
  // Predicated region
  $region90: #{transformer_vae_v4_forward.14} parent=0 // pred_check
    _
  $region91: #{transformer_vae_v4_forward.14} parent=0 // pred_check_branch
    %2149 = sbr.rel (0) target = $region93
  $region92: #{transformer_vae_v4_forward.14} parent=0 // pred_region
    _
  $region93: #{transformer_vae_v4_forward.14} parent=0 // pred_fallthru
    _

// kernel: transformer_vae_v4_forward.17
$region0: #{transformer_vae_v4_forward.17}
  #allocation0 [shape = 'u32[]', space=smem, size = 0x4, offset = 0x4, fixed_abs, tag = 'smem constant byte address 0x4 - core index']
  #allocation1 [shape = 'u32[72,128]{1,0:T(1,128)}', space=vmem, size = 0x9000, scoped, tag = 'internal scratch']
  %s0 = inlined_call_operand.vmem [shape: f32[2,5,32], index: 0, kind: input, shape index: {}]
  %s1 = inlined_call_operand.vmem [shape: f32[2,8,32], index: 1, kind: input, shape index: {}]
  %s2 = inlined_call_operand.vmem [shape: f32[2,8,8], index: 2, kind: input, shape index: {}]
  %s3 = inlined_call_operand.vmem [shape: f32[32,32], index: 3, kind: input, shape index: {}]
  %s4 = inlined_call_operand.vmem [shape: f32[1,32], index: 4, kind: input, shape index: {}]
  %s5 = inlined_call_operand.vmem [shape: f32[2,32,16], index: 5, kind: input, shape index: {}]
  %s6 = inlined_call_operand.vmem [shape: f32[2,32,16], index: 6, kind: input, shape index: {}]
  %s7 = inlined_call_operand.vmem [shape: f32[2,32,16], index: 7, kind: input, shape index: {}]
  %s8 = inlined_call_operand.vmem [shape: f32[2,1,16], index: 8, kind: input, shape index: {}]
  %s9 = inlined_call_operand.vmem [shape: f32[2,1,16], index: 9, kind: input, shape index: {}]
  %s10 = inlined_call_operand.vmem [shape: f32[2,1,16], index: 10, kind: input, shape index: {}]
  %s11 = inlined_call_operand.vmem [shape: f32[2,16,32], index: 11, kind: input, shape index: {}]
  %s12 = inlined_call_operand.vmem [shape: f32[1,32], index: 12, kind: input, shape index: {}]
  %s13 = inlined_call_operand.vmem [shape: f32[32,64], index: 13, kind: input, shape index: {}]
  %s14 = inlined_call_operand.vmem [shape: f32[1,64], index: 14, kind: input, shape index: {}]
  %s15 = inlined_call_operand.vmem [shape: f32[64,32], index: 15, kind: input, shape index: {}]
  %s16 = inlined_call_operand.vmem [shape: f32[1,32], index: 16, kind: input, shape index: {}]
  %s17 = inlined_call_operand.vmem [shape: f32[1,32], index: 17, kind: input, shape index: {}]
  %s18 = inlined_call_operand.vmem [shape: f32[1,32], index: 18, kind: input, shape index: {}]
  %s19 = inlined_call_operand.vmem [shape: f32[1,32], index: 19, kind: input, shape index: {}]
  %s20 = inlined_call_operand.vmem [shape: f32[1,32], index: 20, kind: input, shape index: {}]
  %s21 = inlined_call_operand.vmem [shape: f32[2,8,32], index: 21, kind: output, shape index: {}]
  %s22 = sld [smem:[#allocation0]]
  $region94: #{transformer_vae_v4_forward.17} parent=0
    _
  %s24 = ssub.s32 1, %s22
  %s25 = scalar_select 0, %s24, %s22
  // Predicated region
  $region2: #{transformer_vae_v4_forward.17} parent=0 // pred_check
    _
  $region3: #{transformer_vae_v4_forward.17} parent=0 // pred_check_branch
    %27 = sbr.rel (0) target = $region5
  $region4: #{transformer_vae_v4_forward.17} parent=0 // pred_region
    _
  $region5: #{transformer_vae_v4_forward.17} parent=0 // pred_fallthru
    _
  // Predicated region
  $region6: #{transformer_vae_v4_forward.17} parent=0 // pred_check
    _
  $region7: #{transformer_vae_v4_forward.17} parent=0 // pred_check_branch
    %29 = sbr.rel (0) target = $region9
  $region8: #{transformer_vae_v4_forward.17} parent=0 // pred_region
    _
  $region9: #{transformer_vae_v4_forward.17} parent=0 // pred_fallthru
    _
  // Predicated region
  $region10: #{transformer_vae_v4_forward.17} parent=0 // pred_check
    _
  $region11: #{transformer_vae_v4_forward.17} parent=0 // pred_check_branch
    %31 = sbr.rel (0) target = $region13
  $region12: #{transformer_vae_v4_forward.17} parent=0 // pred_region
    _
  $region13: #{transformer_vae_v4_forward.17} parent=0 // pred_fallthru
    _
  // Predicated region
  $region14: #{transformer_vae_v4_forward.17} parent=0 // pred_check
    _
  $region15: #{transformer_vae_v4_forward.17} parent=0 // pred_check_branch
    %33 = sbr.rel (0) target = $region17
  $region16: #{transformer_vae_v4_forward.17} parent=0 // pred_region
    _
  $region17: #{transformer_vae_v4_forward.17} parent=0 // pred_fallthru
    _
  // Predicated region
  $region18: #{transformer_vae_v4_forward.17} parent=0 // pred_check
    _
  $region19: #{transformer_vae_v4_forward.17} parent=0 // pred_check_branch
    %35 = sbr.rel (0) target = $region21
  $region20: #{transformer_vae_v4_forward.17} parent=0 // pred_region
    _
  $region21: #{transformer_vae_v4_forward.17} parent=0 // pred_fallthru
    _
  // Predicated region
  $region22: #{transformer_vae_v4_forward.17} parent=0 // pred_check
    _
  $region23: #{transformer_vae_v4_forward.17} parent=0 // pred_check_branch
    %37 = sbr.rel (0) target = $region25
  $region24: #{transformer_vae_v4_forward.17} parent=0 // pred_region
    _
  $region25: #{transformer_vae_v4_forward.17} parent=0 // pred_fallthru
    _
  // Predicated region
  $region26: #{transformer_vae_v4_forward.17} parent=0 // pred_check
    _
  $region27: #{transformer_vae_v4_forward.17} parent=0 // pred_check_branch
    %39 = sbr.rel (0) target = $region29
  $region28: #{transformer_vae_v4_forward.17} parent=0 // pred_region
    _
  $region29: #{transformer_vae_v4_forward.17} parent=0 // pred_fallthru
    _
  // Predicated region
  $region30: #{transformer_vae_v4_forward.17} parent=0 // pred_check
    _
  $region31: #{transformer_vae_v4_forward.17} parent=0 // pred_check_branch
    %41 = sbr.rel (0) target = $region33
  $region32: #{transformer_vae_v4_forward.17} parent=0 // pred_region
    _
  $region33: #{transformer_vae_v4_forward.17} parent=0 // pred_fallthru
    _
  // Predicated region
  $region34: #{transformer_vae_v4_forward.17} parent=0 // pred_check
    _
  $region35: #{transformer_vae_v4_forward.17} parent=0 // pred_check_branch
    %43 = sbr.rel (0) target = $region37
  $region36: #{transformer_vae_v4_forward.17} parent=0 // pred_region
    _
  $region37: #{transformer_vae_v4_forward.17} parent=0 // pred_fallthru
    _
  // Predicated region
  $region38: #{transformer_vae_v4_forward.17} parent=0 // pred_check
    _
  $region39: #{transformer_vae_v4_forward.17} parent=0 // pred_check_branch
    %45 = sbr.rel (0) target = $region41
  $region40: #{transformer_vae_v4_forward.17} parent=0 // pred_region
    _
  $region41: #{transformer_vae_v4_forward.17} parent=0 // pred_fallthru
    _
  // Predicated region
  $region42: #{transformer_vae_v4_forward.17} parent=0 // pred_check
    _
  $region43: #{transformer_vae_v4_forward.17} parent=0 // pred_check_branch
    %47 = sbr.rel (0) target = $region45
  $region44: #{transformer_vae_v4_forward.17} parent=0 // pred_region
    _
  $region45: #{transformer_vae_v4_forward.17} parent=0 // pred_fallthru
    _
  // Predicated region
  $region46: #{transformer_vae_v4_forward.17} parent=0 // pred_check
    _
  $region47: #{transformer_vae_v4_forward.17} parent=0 // pred_check_branch
    %49 = sbr.rel (0) target = $region49
  $region48: #{transformer_vae_v4_forward.17} parent=0 // pred_region
    _
  $region49: #{transformer_vae_v4_forward.17} parent=0 // pred_fallthru
    _
  // Predicated region
  $region50: #{transformer_vae_v4_forward.17} parent=0 // pred_check
    _
  $region51: #{transformer_vae_v4_forward.17} parent=0 // pred_check_branch
    %51 = sbr.rel (0) target = $region53
  $region52: #{transformer_vae_v4_forward.17} parent=0 // pred_region
    _
  $region53: #{transformer_vae_v4_forward.17} parent=0 // pred_fallthru
    _
  // Predicated region
  $region54: #{transformer_vae_v4_forward.17} parent=0 // pred_check
    _
  $region55: #{transformer_vae_v4_forward.17} parent=0 // pred_check_branch
    %53 = sbr.rel (0) target = $region57
  $region56: #{transformer_vae_v4_forward.17} parent=0 // pred_region
    _
  $region57: #{transformer_vae_v4_forward.17} parent=0 // pred_fallthru
    _
  // Predicated region
  $region58: #{transformer_vae_v4_forward.17} parent=0 // pred_check
    _
  $region59: #{transformer_vae_v4_forward.17} parent=0 // pred_check_branch
    %55 = sbr.rel (0) target = $region61
  $region60: #{transformer_vae_v4_forward.17} parent=0 // pred_region
    _
  $region61: #{transformer_vae_v4_forward.17} parent=0 // pred_fallthru
    _
  // Predicated region
  $region62: #{transformer_vae_v4_forward.17} parent=0 // pred_check
    _
  $region63: #{transformer_vae_v4_forward.17} parent=0 // pred_check_branch
    %57 = sbr.rel (0) target = $region65
  $region64: #{transformer_vae_v4_forward.17} parent=0 // pred_region
    _
  $region65: #{transformer_vae_v4_forward.17} parent=0 // pred_fallthru
    _
  // Predicated region
  $region66: #{transformer_vae_v4_forward.17} parent=0 // pred_check
    _
  $region67: #{transformer_vae_v4_forward.17} parent=0 // pred_check_branch
    %59 = sbr.rel (0) target = $region69
  $region68: #{transformer_vae_v4_forward.17} parent=0 // pred_region
    _
  $region69: #{transformer_vae_v4_forward.17} parent=0 // pred_fallthru
    _
  // Predicated region
  $region70: #{transformer_vae_v4_forward.17} parent=0 // pred_check
    _
  $region71: #{transformer_vae_v4_forward.17} parent=0 // pred_check_branch
    %61 = sbr.rel (0) target = $region73
  $region72: #{transformer_vae_v4_forward.17} parent=0 // pred_region
    _
  $region73: #{transformer_vae_v4_forward.17} parent=0 // pred_fallthru
    _
  // Predicated region
  $region74: #{transformer_vae_v4_forward.17} parent=0 // pred_check
    _
  $region75: #{transformer_vae_v4_forward.17} parent=0 // pred_check_branch
    %63 = sbr.rel (0) target = $region77
  $region76: #{transformer_vae_v4_forward.17} parent=0 // pred_region
    _
  $region77: #{transformer_vae_v4_forward.17} parent=0 // pred_fallthru
    _
  // Predicated region
  $region78: #{transformer_vae_v4_forward.17} parent=0 // pred_check
    _
  $region79: #{transformer_vae_v4_forward.17} parent=0 // pred_check_branch
    %65 = sbr.rel (0) target = $region81
  $region80: #{transformer_vae_v4_forward.17} parent=0 // pred_region
    _
  $region81: #{transformer_vae_v4_forward.17} parent=0 // pred_fallthru
    _
  // Predicated region
  $region82: #{transformer_vae_v4_forward.17} parent=0 // pred_check
    _
  $region83: #{transformer_vae_v4_forward.17} parent=0 // pred_check_branch
    %67 = sbr.rel (0) target = $region85
  $region84: #{transformer_vae_v4_forward.17} parent=0 // pred_region
    _
  $region85: #{transformer_vae_v4_forward.17} parent=0 // pred_fallthru
    _
  %v68 = vld [vmem:[%s3] sm:$0xff]
  %v69 = vld [vmem:[%s3 + $0x8] sm:$0xff]
  %v70 = vld [vmem:[%s3 + $0x10] sm:$0xff]
  %v71 = vld [vmem:[%s3 + $0x18] sm:$0xff]
  %v72 = vld [vmem:[%s4] sm:$0x1]
  %v73 = vld [vmem:[%s12] sm:$0x1]
  %v74 = vld [vmem:[%s13] sm:$0xff]
  %v75 = vld [vmem:[%s13 + $0x8] sm:$0xff]
  %v76 = vld [vmem:[%s13 + $0x10] sm:$0xff]
  %v77 = vld [vmem:[%s13 + $0x18] sm:$0xff]
  %v78 = vld [vmem:[%s14] sm:$0x1]
  %v79 = vld [vmem:[%s15] sm:$0xff]
  %v80 = vld [vmem:[%s15 + $0x8] sm:$0xff]
  %v81 = vld [vmem:[%s15 + $0x10] sm:$0xff]
  %v82 = vld [vmem:[%s15 + $0x18] sm:$0xff]
  %v83 = vld [vmem:[%s15 + $0x20] sm:$0xff]
  %v84 = vld [vmem:[%s15 + $0x28] sm:$0xff]
  %v85 = vld [vmem:[%s15 + $0x30] sm:$0xff]
  %v86 = vld [vmem:[%s15 + $0x38] sm:$0xff]
  %v87 = vld [vmem:[%s16] sm:$0x1]
  %v88 = vld [vmem:[%s17] sm:$0x1]
  %v89 = vld [vmem:[%s18] sm:$0x1]
  %v90 = vld [vmem:[%s19] sm:$0x1]
  %v91 = vld [vmem:[%s20] sm:$0x1]
  %v92 = vld [vmem:[%s1] sm:$0xff]
  %v93 = vld [vmem:[%s0] sm:$0x1f]
  %v95 = vperm.slane %v72, 0
  %vm97 = vcmask 261120
  %v99 = vsel %vm97, %v93, 0
  %101 = vmatpush.msra.mxu0 0.0
  %102 = vmatpush.msra.mxu0 0.0
  %103 = vmatpush.msra.mxu0 0.0
  %104 = vmatpush.msra.mxu0 0.0
  %105 = vmatpush.msra.mxu0 0.0
  %106 = vmatpush.msra.mxu0 0.0
  %107 = vmatpush.msra.mxu0 0.0
  %108 = vmatpush.msra.mxu0 0.0
  %109 = vmatpush.msra.mxu0 0.0
  %110 = vmatpush.msra.mxu0 0.0
  %111 = vmatpush.msra.mxu0 0.0
  %112 = vmatpush.msra.mxu0 0.0
  %113 = vmatpush.msra.mxu0 %v71
  %114 = vmatpush.msra.mxu0 %v70
  %115 = vmatpush.msra.mxu0 %v69
  %116 = vmatpush.msra.mxu0 %v68
  %117 = vmatmul.f32.gmra.mxu0 %v99
  %v118 = vpop.f32.mrf.mxu0
  %v119 = vadd.f32 %v95, %v118
  %120 = vdwg.mxu0
  %v121 = vld [vmem:[%s2] sm:$0xff]
  %v122 = vld [vmem:[%s5] sm:$0xff]
  %v123 = vld [vmem:[%s5 + $0x8] sm:$0xff]
  %v124 = vld [vmem:[%s5 + $0x10] sm:$0xff]
  %v125 = vld [vmem:[%s5 + $0x18] sm:$0xff]
  %v126 = vld [vmem:[%s6] sm:$0xff]
  %v127 = vld [vmem:[%s6 + $0x8] sm:$0xff]
  %v128 = vld [vmem:[%s6 + $0x10] sm:$0xff]
  %v129 = vld [vmem:[%s6 + $0x18] sm:$0xff]
  %v130 = vld [vmem:[%s7] sm:$0xff]
  %v131 = vld [vmem:[%s7 + $0x8] sm:$0xff]
  %v132 = vld [vmem:[%s7 + $0x10] sm:$0xff]
  %v133 = vld [vmem:[%s7 + $0x18] sm:$0xff]
  %v134 = vld [vmem:[%s8] sm:$0x1]
  %v135 = vld [vmem:[%s9] sm:$0x1]
  %v136 = vld [vmem:[%s10] sm:$0x1]
  %v138 = vperm.slane %v134, 0
  %v141 = vsel %vm97, %v92, 0
  %143 = vmatpush.msra.mxu0 0.0
  %144 = vmatpush.msra.mxu0 0.0
  %145 = vmatpush.msra.mxu0 0.0
  %146 = vmatpush.msra.mxu0 0.0
  %147 = vmatpush.msra.mxu0 0.0
  %148 = vmatpush.msra.mxu0 0.0
  %149 = vmatpush.msra.mxu0 0.0
  %150 = vmatpush.msra.mxu0 0.0
  %151 = vmatpush.msra.mxu0 0.0
  %152 = vmatpush.msra.mxu0 0.0
  %153 = vmatpush.msra.mxu0 0.0
  %154 = vmatpush.msra.mxu0 0.0
  %155 = vmatpush.msra.mxu0 %v125
  %156 = vmatpush.msra.mxu0 %v124
  %157 = vmatpush.msra.mxu0 %v123
  %158 = vmatpush.msra.mxu0 %v122
  %159 = vmatmul.f32.gmra.mxu0 %v141
  %v160 = vpop.f32.mrf.mxu0
  %v161 = vadd.f32 %v138, %v160
  %162 = vdwg.mxu0
  %v163 = vmul.f32 %v161, 0.25
  %v165 = vperm.slane %v135, 0
  %v168 = vsel %vm97, %v119, 0
  %170 = vmatpush.msra.mxu0 0.0
  %171 = vmatpush.msra.mxu0 0.0
  %172 = vmatpush.msra.mxu0 0.0
  %173 = vmatpush.msra.mxu0 0.0
  %174 = vmatpush.msra.mxu0 0.0
  %175 = vmatpush.msra.mxu0 0.0
  %176 = vmatpush.msra.mxu0 0.0
  %177 = vmatpush.msra.mxu0 0.0
  %178 = vmatpush.msra.mxu0 0.0
  %179 = vmatpush.msra.mxu0 0.0
  %180 = vmatpush.msra.mxu0 0.0
  %181 = vmatpush.msra.mxu0 0.0
  %182 = vmatpush.msra.mxu0 %v129
  %183 = vmatpush.msra.mxu0 %v128
  %184 = vmatpush.msra.mxu0 %v127
  %185 = vmatpush.msra.mxu0 %v126
  %186 = vmatmul.f32.gmra.mxu0 %v168
  %v187 = vpop.f32.mrf.mxu0
  %v188 = vadd.f32 %v165, %v187
  %189 = vdwg.mxu0
  %vm190 = vcmask 130048
  %v192 = vsel %vm190, %v163, 0
  %v195 = vsel %vm190, %v188, 0
  %197 = vmatpush.xpose.msra.mxu0 0.0
  %198 = vmatpush.xpose.msra.mxu0 0.0
  %199 = vmatpush.xpose.msra.mxu0 0.0
  %200 = vmatpush.xpose.msra.mxu0 0.0
  %201 = vmatpush.xpose.msra.mxu0 0.0
  %202 = vmatpush.xpose.msra.mxu0 0.0
  %203 = vmatpush.xpose.msra.mxu0 0.0
  %204 = vmatpush.xpose.msra.mxu0 0.0
  %205 = vmatpush.xpose.msra.mxu0 0.0
  %206 = vmatpush.xpose.msra.mxu0 0.0
  %207 = vmatpush.xpose.msra.mxu0 0.0
  %208 = vmatpush.xpose.msra.mxu0 0.0
  %209 = vmatpush.xpose.msra.mxu0 0.0
  %210 = vmatpush.xpose.msra.mxu0 0.0
  %211 = vmatpush.xpose.msra.mxu0 0.0
  %212 = vmatpush.xpose.msra.mxu0 %v195
  %213 = vmatmul.f32.gmra.mxu0 %v192
  %v214 = vpop.f32.mrf.mxu0
  %v215 = vadd.f32 0.0, %v214
  %216 = vdwg.mxu0
  %217 = vmatpush.msra.mxu0 0.0
  %218 = vmatpush.msra.mxu0 0.0
  %219 = vmatpush.msra.mxu0 0.0
  %220 = vmatpush.msra.mxu0 0.0
  %221 = vmatpush.msra.mxu0 0.0
  %222 = vmatpush.msra.mxu0 0.0
  %223 = vmatpush.msra.mxu0 0.0
  %224 = vmatpush.msra.mxu0 0.0
  %225 = vmatpush.msra.mxu0 0.0
  %226 = vmatpush.msra.mxu0 0.0
  %227 = vmatpush.msra.mxu0 0.0
  %228 = vmatpush.msra.mxu0 0.0
  %229 = vmatpush.msra.mxu0 %v129
  %230 = vmatpush.msra.mxu0 %v128
  %231 = vmatpush.msra.mxu0 %v127
  %232 = vmatpush.msra.mxu0 %v126
  %233 = vmatmul.f32.gmra.mxu0 %v141
  %v234 = vpop.f32.mrf.mxu0
  %v235 = vadd.f32 %v165, %v234
  %236 = vdwg.mxu0
  %v238 = vsel %vm190, %v235, 0
  %240 = vmatpush.xpose.msra.mxu0 0.0
  %241 = vmatpush.xpose.msra.mxu0 0.0
  %242 = vmatpush.xpose.msra.mxu0 0.0
  %243 = vmatpush.xpose.msra.mxu0 0.0
  %244 = vmatpush.xpose.msra.mxu0 0.0
  %245 = vmatpush.xpose.msra.mxu0 0.0
  %246 = vmatpush.xpose.msra.mxu0 0.0
  %247 = vmatpush.xpose.msra.mxu0 0.0
  %248 = vmatpush.xpose.msra.mxu0 0.0
  %249 = vmatpush.xpose.msra.mxu0 0.0
  %250 = vmatpush.xpose.msra.mxu0 0.0
  %251 = vmatpush.xpose.msra.mxu0 0.0
  %252 = vmatpush.xpose.msra.mxu0 0.0
  %253 = vmatpush.xpose.msra.mxu0 0.0
  %254 = vmatpush.xpose.msra.mxu0 0.0
  %255 = vmatpush.xpose.msra.mxu0 %v238
  %256 = vmatmul.f32.gmra.mxu0 %v192
  %v257 = vpop.f32.mrf.mxu0
  %v258 = vadd.f32 %v121, %v257
  %259 = vdwg.mxu0
  %vm260 = vcmask 39936
  %v261 = vsel %vm260, %v215, -inf
  %262 = vmax.xlane.f32.xlu0 %v261
  %v263 = vpop.xlane.xlu0 %262
  %vm264 = vcmask 64512
  %v265 = vsel %vm264, %v258, -inf
  %266 = vmax.xlane.f32.xlu0 %v265
  %v267 = vpop.xlane.xlu0 %266
  %v268 = vmax.f32 %v263, %v267
  %v269 = vsub.f32 %v215, %v268
  %v270 = vmul.f32 %v269, 1.442695
  %v271 = vpow.pop %v270
  %v272 = vsub.f32 %v258, %v268
  %v273 = vmul.f32 %v272, 1.442695
  %v274 = vpow.pop %v273
  %v275 = vsel %vm260, %v271, 0.0
  %276 = vadd.xlane.f32.xlu0 %v275
  %v277 = vpop.xlane.xlu0 %276
  %v278 = vsel %vm264, %v274, 0.0
  %279 = vadd.xlane.f32.xlu0 %v278
  %v280 = vpop.xlane.xlu0 %279
  %v281 = vadd.f32 %v277, %v280
  %v283 = vperm.slane %v136, 0
  %285 = vmatpush.msra.mxu0 0.0
  %286 = vmatpush.msra.mxu0 0.0
  %287 = vmatpush.msra.mxu0 0.0
  %288 = vmatpush.msra.mxu0 0.0
  %289 = vmatpush.msra.mxu0 0.0
  %290 = vmatpush.msra.mxu0 0.0
  %291 = vmatpush.msra.mxu0 0.0
  %292 = vmatpush.msra.mxu0 0.0
  %293 = vmatpush.msra.mxu0 0.0
  %294 = vmatpush.msra.mxu0 0.0
  %295 = vmatpush.msra.mxu0 0.0
  %296 = vmatpush.msra.mxu0 0.0
  %297 = vmatpush.msra.mxu0 %v133
  %298 = vmatpush.msra.mxu0 %v132
  %299 = vmatpush.msra.mxu0 %v131
  %300 = vmatpush.msra.mxu0 %v130
  %301 = vmatmul.f32.gmra.mxu0 %v168
  %v302 = vpop.f32.mrf.mxu0
  %v303 = vadd.f32 %v283, %v302
  %304 = vdwg.mxu0
  %305 = vmatpush.msra.mxu0 0.0
  %306 = vmatpush.msra.mxu0 0.0
  %307 = vmatpush.msra.mxu0 0.0
  %308 = vmatpush.msra.mxu0 0.0
  %309 = vmatpush.msra.mxu0 0.0
  %310 = vmatpush.msra.mxu0 0.0
  %311 = vmatpush.msra.mxu0 0.0
  %312 = vmatpush.msra.mxu0 0.0
  %313 = vmatpush.msra.mxu0 0.0
  %314 = vmatpush.msra.mxu0 0.0
  %315 = vmatpush.msra.mxu0 0.0
  %316 = vmatpush.msra.mxu0 0.0
  %317 = vmatpush.msra.mxu0 %v133
  %318 = vmatpush.msra.mxu0 %v132
  %319 = vmatpush.msra.mxu0 %v131
  %320 = vmatpush.msra.mxu0 %v130
  %321 = vmatmul.f32.gmra.mxu0 %v141
  %v322 = vpop.f32.mrf.mxu0
  %v323 = vadd.f32 %v283, %v322
  %324 = vdwg.mxu0
  %v326 = vsel %vm264, %v274, 0
  %328 = vmatpush.msra.mxu0 0.0
  %329 = vmatpush.msra.mxu0 0.0
  %330 = vmatpush.msra.mxu0 0.0
  %331 = vmatpush.msra.mxu0 0.0
  %332 = vmatpush.msra.mxu0 0.0
  %333 = vmatpush.msra.mxu0 0.0
  %334 = vmatpush.msra.mxu0 0.0
  %335 = vmatpush.msra.mxu0 0.0
  %336 = vmatpush.msra.mxu0 0.0
  %337 = vmatpush.msra.mxu0 0.0
  %338 = vmatpush.msra.mxu0 0.0
  %339 = vmatpush.msra.mxu0 0.0
  %340 = vmatpush.msra.mxu0 0.0
  %341 = vmatpush.msra.mxu0 0.0
  %342 = vmatpush.msra.mxu0 0.0
  %343 = vmatpush.msra.mxu0 %v323
  %344 = vmatmul.f32.gmra.mxu0 %v326
  %v345 = vpop.f32.mrf.mxu0
  %v346 = vadd.f32 0.0, %v345
  %347 = vdwg.mxu0
  %v349 = vsel %vm260, %v271, 0
  %vm351 = vcmask 1044480
  %v353 = vsel %vm351, %v303, 0
  %355 = vmatpush.msra.mxu0 0.0
  %356 = vmatpush.msra.mxu0 0.0
  %357 = vmatpush.msra.mxu0 0.0
  %358 = vmatpush.msra.mxu0 0.0
  %359 = vmatpush.msra.mxu0 0.0
  %360 = vmatpush.msra.mxu0 0.0
  %361 = vmatpush.msra.mxu0 0.0
  %362 = vmatpush.msra.mxu0 0.0
  %363 = vmatpush.msra.mxu0 0.0
  %364 = vmatpush.msra.mxu0 0.0
  %365 = vmatpush.msra.mxu0 0.0
  %366 = vmatpush.msra.mxu0 0.0
  %367 = vmatpush.msra.mxu0 0.0
  %368 = vmatpush.msra.mxu0 0.0
  %369 = vmatpush.msra.mxu0 0.0
  %370 = vmatpush.msra.mxu0 %v353
  %371 = vmatmul.f32.gmra.mxu0 %v349
  %v372 = vpop.f32.mrf.mxu0
  %v373 = vadd.f32 %v346, %v372
  %374 = vdwg.mxu0
  %v375 = vrcp.pop %v281
  %v376 = vmul.f32 %v281, %v375
  %v377 = vsub.f32 1.0, %v376
  %v378 = vmul.f32 %v375, %v377
  %v379 = vadd.f32 %v375, %v378
  %vm380 = vweird.f32 %v281
  %vm381 = vweird.f32 %v375
  %vm382 = vmor %vm380, %vm381
  %v383 = vsel %vm382, %v375, %v379
  %v384 = vand.u32 2147483647, %v281
  %vm385 = vcmp.eq.f32.partialorder %v384, 8.507059e+37
  %v386 = vand.u32 %v281, 2147483648
  %v387 = vor.u32 1.1754944e-38, %v386
  %v388 = vsel %vm385, %v387, %v383
  %v389 = vmul.f32 %v373, %v388
  %v390 = vld [vmem:[%s11] sm:$0xff]
  %v391 = vld [vmem:[%s11 + $0x8] sm:$0xff]
  %s392 = scalar_lea.vmem %s5, 32
  %v393 = vld [vmem:[%s392] sm:$0xff]
  %v394 = vld [vmem:[%s392 + $0x8] sm:$0xff]
  %v395 = vld [vmem:[%s392 + $0x10] sm:$0xff]
  %v396 = vld [vmem:[%s392 + $0x18] sm:$0xff]
  %s397 = scalar_lea.vmem %s6, 32
  %v398 = vld [vmem:[%s397] sm:$0xff]
  %v399 = vld [vmem:[%s397 + $0x8] sm:$0xff]
  %v400 = vld [vmem:[%s397 + $0x10] sm:$0xff]
  %v401 = vld [vmem:[%s397 + $0x18] sm:$0xff]
  %s402 = scalar_lea.vmem %s7, 32
  %v403 = vld [vmem:[%s402] sm:$0xff]
  %v404 = vld [vmem:[%s402 + $0x8] sm:$0xff]
  %v405 = vld [vmem:[%s402 + $0x10] sm:$0xff]
  %v406 = vld [vmem:[%s402 + $0x18] sm:$0xff]
  %s407 = scalar_lea.vmem %s8, 1
  %v408 = vld [vmem:[%s407] sm:$0x1]
  %s409 = scalar_lea.vmem %s9, 1
  %v410 = vld [vmem:[%s409] sm:$0x1]
  %s411 = scalar_lea.vmem %s10, 1
  %v412 = vld [vmem:[%s411] sm:$0x1]
  %v414 = vperm.slane %v408, 0
  %416 = vmatpush.msra.mxu0 0.0
  %417 = vmatpush.msra.mxu0 0.0
  %418 = vmatpush.msra.mxu0 0.0
  %419 = vmatpush.msra.mxu0 0.0
  %420 = vmatpush.msra.mxu0 0.0
  %421 = vmatpush.msra.mxu0 0.0
  %422 = vmatpush.msra.mxu0 0.0
  %423 = vmatpush.msra.mxu0 0.0
  %424 = vmatpush.msra.mxu0 0.0
  %425 = vmatpush.msra.mxu0 0.0
  %426 = vmatpush.msra.mxu0 0.0
  %427 = vmatpush.msra.mxu0 0.0
  %428 = vmatpush.msra.mxu0 %v396
  %429 = vmatpush.msra.mxu0 %v395
  %430 = vmatpush.msra.mxu0 %v394
  %431 = vmatpush.msra.mxu0 %v393
  %432 = vmatmul.f32.gmra.mxu0 %v141
  %v433 = vpop.f32.mrf.mxu0
  %v434 = vadd.f32 %v414, %v433
  %435 = vdwg.mxu0
  %v436 = vmul.f32 %v434, 0.25
  %v438 = vperm.slane %v410, 0
  %440 = vmatpush.msra.mxu0 0.0
  %441 = vmatpush.msra.mxu0 0.0
  %442 = vmatpush.msra.mxu0 0.0
  %443 = vmatpush.msra.mxu0 0.0
  %444 = vmatpush.msra.mxu0 0.0
  %445 = vmatpush.msra.mxu0 0.0
  %446 = vmatpush.msra.mxu0 0.0
  %447 = vmatpush.msra.mxu0 0.0
  %448 = vmatpush.msra.mxu0 0.0
  %449 = vmatpush.msra.mxu0 0.0
  %450 = vmatpush.msra.mxu0 0.0
  %451 = vmatpush.msra.mxu0 0.0
  %452 = vmatpush.msra.mxu0 %v401
  %453 = vmatpush.msra.mxu0 %v400
  %454 = vmatpush.msra.mxu0 %v399
  %455 = vmatpush.msra.mxu0 %v398
  %456 = vmatmul.f32.gmra.mxu0 %v168
  %v457 = vpop.f32.mrf.mxu0
  %v458 = vadd.f32 %v438, %v457
  %459 = vdwg.mxu0
  %v461 = vsel %vm190, %v436, 0
  %v464 = vsel %vm190, %v458, 0
  %466 = vmatpush.xpose.msra.mxu0 0.0
  %467 = vmatpush.xpose.msra.mxu0 0.0
  %468 = vmatpush.xpose.msra.mxu0 0.0
  %469 = vmatpush.xpose.msra.mxu0 0.0
  %470 = vmatpush.xpose.msra.mxu0 0.0
  %471 = vmatpush.xpose.msra.mxu0 0.0
  %472 = vmatpush.xpose.msra.mxu0 0.0
  %473 = vmatpush.xpose.msra.mxu0 0.0
  %474 = vmatpush.xpose.msra.mxu0 0.0
  %475 = vmatpush.xpose.msra.mxu0 0.0
  %476 = vmatpush.xpose.msra.mxu0 0.0
  %477 = vmatpush.xpose.msra.mxu0 0.0
  %478 = vmatpush.xpose.msra.mxu0 0.0
  %479 = vmatpush.xpose.msra.mxu0 0.0
  %480 = vmatpush.xpose.msra.mxu0 0.0
  %481 = vmatpush.xpose.msra.mxu0 %v464
  %482 = vmatmul.f32.gmra.mxu0 %v461
  %v483 = vpop.f32.mrf.mxu0
  %v484 = vadd.f32 0.0, %v483
  %485 = vdwg.mxu0
  %486 = vmatpush.msra.mxu0 0.0
  %487 = vmatpush.msra.mxu0 0.0
  %488 = vmatpush.msra.mxu0 0.0
  %489 = vmatpush.msra.mxu0 0.0
  %490 = vmatpush.msra.mxu0 0.0
  %491 = vmatpush.msra.mxu0 0.0
  %492 = vmatpush.msra.mxu0 0.0
  %493 = vmatpush.msra.mxu0 0.0
  %494 = vmatpush.msra.mxu0 0.0
  %495 = vmatpush.msra.mxu0 0.0
  %496 = vmatpush.msra.mxu0 0.0
  %497 = vmatpush.msra.mxu0 0.0
  %498 = vmatpush.msra.mxu0 %v401
  %499 = vmatpush.msra.mxu0 %v400
  %500 = vmatpush.msra.mxu0 %v399
  %501 = vmatpush.msra.mxu0 %v398
  %502 = vmatmul.f32.gmra.mxu0 %v141
  %v503 = vpop.f32.mrf.mxu0
  %v504 = vadd.f32 %v438, %v503
  %505 = vdwg.mxu0
  %v507 = vsel %vm190, %v504, 0
  %509 = vmatpush.xpose.msra.mxu0 0.0
  %510 = vmatpush.xpose.msra.mxu0 0.0
  %511 = vmatpush.xpose.msra.mxu0 0.0
  %512 = vmatpush.xpose.msra.mxu0 0.0
  %513 = vmatpush.xpose.msra.mxu0 0.0
  %514 = vmatpush.xpose.msra.mxu0 0.0
  %515 = vmatpush.xpose.msra.mxu0 0.0
  %516 = vmatpush.xpose.msra.mxu0 0.0
  %517 = vmatpush.xpose.msra.mxu0 0.0
  %518 = vmatpush.xpose.msra.mxu0 0.0
  %519 = vmatpush.xpose.msra.mxu0 0.0
  %520 = vmatpush.xpose.msra.mxu0 0.0
  %521 = vmatpush.xpose.msra.mxu0 0.0
  %522 = vmatpush.xpose.msra.mxu0 0.0
  %523 = vmatpush.xpose.msra.mxu0 0.0
  %524 = vmatpush.xpose.msra.mxu0 %v507
  %525 = vmatmul.f32.gmra.mxu0 %v461
  %v526 = vpop.f32.mrf.mxu0
  %v527 = vadd.f32 %v121, %v526
  %528 = vdwg.mxu0
  %v529 = vsel %vm260, %v484, -inf
  %530 = vmax.xlane.f32.xlu0 %v529
  %v531 = vpop.xlane.xlu0 %530
  %v532 = vsel %vm264, %v527, -inf
  %533 = vmax.xlane.f32.xlu0 %v532
  %v534 = vpop.xlane.xlu0 %533
  %v535 = vmax.f32 %v531, %v534
  %v536 = vsub.f32 %v484, %v535
  %v537 = vmul.f32 %v536, 1.442695
  %v538 = vpow.pop %v537
  %v539 = vsub.f32 %v527, %v535
  %v540 = vmul.f32 %v539, 1.442695
  %v541 = vpow.pop %v540
  %v542 = vsel %vm260, %v538, 0.0
  %543 = vadd.xlane.f32.xlu0 %v542
  %v544 = vpop.xlane.xlu0 %543
  %v545 = vsel %vm264, %v541, 0.0
  %546 = vadd.xlane.f32.xlu0 %v545
  %v547 = vpop.xlane.xlu0 %546
  %v548 = vadd.f32 %v544, %v547
  %v550 = vperm.slane %v412, 0
  %552 = vmatpush.msra.mxu0 0.0
  %553 = vmatpush.msra.mxu0 0.0
  %554 = vmatpush.msra.mxu0 0.0
  %555 = vmatpush.msra.mxu0 0.0
  %556 = vmatpush.msra.mxu0 0.0
  %557 = vmatpush.msra.mxu0 0.0
  %558 = vmatpush.msra.mxu0 0.0
  %559 = vmatpush.msra.mxu0 0.0
  %560 = vmatpush.msra.mxu0 0.0
  %561 = vmatpush.msra.mxu0 0.0
  %562 = vmatpush.msra.mxu0 0.0
  %563 = vmatpush.msra.mxu0 0.0
  %564 = vmatpush.msra.mxu0 %v406
  %565 = vmatpush.msra.mxu0 %v405
  %566 = vmatpush.msra.mxu0 %v404
  %567 = vmatpush.msra.mxu0 %v403
  %568 = vmatmul.f32.gmra.mxu0 %v168
  %v569 = vpop.f32.mrf.mxu0
  %v570 = vadd.f32 %v550, %v569
  %571 = vdwg.mxu0
  %572 = vmatpush.msra.mxu0 0.0
  %573 = vmatpush.msra.mxu0 0.0
  %574 = vmatpush.msra.mxu0 0.0
  %575 = vmatpush.msra.mxu0 0.0
  %576 = vmatpush.msra.mxu0 0.0
  %577 = vmatpush.msra.mxu0 0.0
  %578 = vmatpush.msra.mxu0 0.0
  %579 = vmatpush.msra.mxu0 0.0
  %580 = vmatpush.msra.mxu0 0.0
  %581 = vmatpush.msra.mxu0 0.0
  %582 = vmatpush.msra.mxu0 0.0
  %583 = vmatpush.msra.mxu0 0.0
  %584 = vmatpush.msra.mxu0 %v406
  %585 = vmatpush.msra.mxu0 %v405
  %586 = vmatpush.msra.mxu0 %v404
  %587 = vmatpush.msra.mxu0 %v403
  %588 = vmatmul.f32.gmra.mxu0 %v141
  %v589 = vpop.f32.mrf.mxu0
  %v590 = vadd.f32 %v550, %v589
  %591 = vdwg.mxu0
  %v593 = vsel %vm264, %v541, 0
  %595 = vmatpush.msra.mxu0 0.0
  %596 = vmatpush.msra.mxu0 0.0
  %597 = vmatpush.msra.mxu0 0.0
  %598 = vmatpush.msra.mxu0 0.0
  %599 = vmatpush.msra.mxu0 0.0
  %600 = vmatpush.msra.mxu0 0.0
  %601 = vmatpush.msra.mxu0 0.0
  %602 = vmatpush.msra.mxu0 0.0
  %603 = vmatpush.msra.mxu0 0.0
  %604 = vmatpush.msra.mxu0 0.0
  %605 = vmatpush.msra.mxu0 0.0
  %606 = vmatpush.msra.mxu0 0.0
  %607 = vmatpush.msra.mxu0 0.0
  %608 = vmatpush.msra.mxu0 0.0
  %609 = vmatpush.msra.mxu0 0.0
  %610 = vmatpush.msra.mxu0 %v590
  %611 = vmatmul.f32.gmra.mxu0 %v593
  %v612 = vpop.f32.mrf.mxu0
  %v613 = vadd.f32 0.0, %v612
  %614 = vdwg.mxu0
  %v616 = vsel %vm260, %v538, 0
  %v619 = vsel %vm351, %v570, 0
  %621 = vmatpush.msra.mxu0 0.0
  %622 = vmatpush.msra.mxu0 0.0
  %623 = vmatpush.msra.mxu0 0.0
  %624 = vmatpush.msra.mxu0 0.0
  %625 = vmatpush.msra.mxu0 0.0
  %626 = vmatpush.msra.mxu0 0.0
  %627 = vmatpush.msra.mxu0 0.0
  %628 = vmatpush.msra.mxu0 0.0
  %629 = vmatpush.msra.mxu0 0.0
  %630 = vmatpush.msra.mxu0 0.0
  %631 = vmatpush.msra.mxu0 0.0
  %632 = vmatpush.msra.mxu0 0.0
  %633 = vmatpush.msra.mxu0 0.0
  %634 = vmatpush.msra.mxu0 0.0
  %635 = vmatpush.msra.mxu0 0.0
  %636 = vmatpush.msra.mxu0 %v619
  %637 = vmatmul.f32.gmra.mxu0 %v616
  %v638 = vpop.f32.mrf.mxu0
  %v639 = vadd.f32 %v613, %v638
  %640 = vdwg.mxu0
  %v641 = vrcp.pop %v548
  %v642 = vmul.f32 %v548, %v641
  %v643 = vsub.f32 1.0, %v642
  %v644 = vmul.f32 %v641, %v643
  %v645 = vadd.f32 %v641, %v644
  %vm646 = vweird.f32 %v548
  %vm647 = vweird.f32 %v641
  %vm648 = vmor %vm646, %vm647
  %v649 = vsel %vm648, %v641, %v645
  %v650 = vand.u32 2147483647, %v548
  %vm651 = vcmp.eq.f32.partialorder %v650, 8.507059e+37
  %v652 = vand.u32 %v548, 2147483648
  %v653 = vor.u32 1.1754944e-38, %v652
  %v654 = vsel %vm651, %v653, %v649
  %v655 = vmul.f32 %v639, %v654
  %s656 = scalar_lea.vmem %s11, 16
  %v657 = vld [vmem:[%s656] sm:$0xff]
  %v658 = vld [vmem:[%s656 + $0x8] sm:$0xff]
  %v660 = vsel %vm190, %v655, 0
  %662 = vmatpush.msra.mxu0 0.0
  %663 = vmatpush.msra.mxu0 0.0
  %664 = vmatpush.msra.mxu0 0.0
  %665 = vmatpush.msra.mxu0 0.0
  %666 = vmatpush.msra.mxu0 0.0
  %667 = vmatpush.msra.mxu0 0.0
  %668 = vmatpush.msra.mxu0 0.0
  %669 = vmatpush.msra.mxu0 0.0
  %670 = vmatpush.msra.mxu0 0.0
  %671 = vmatpush.msra.mxu0 0.0
  %672 = vmatpush.msra.mxu0 0.0
  %673 = vmatpush.msra.mxu0 0.0
  %674 = vmatpush.msra.mxu0 0.0
  %675 = vmatpush.msra.mxu0 0.0
  %676 = vmatpush.msra.mxu0 %v658
  %677 = vmatpush.msra.mxu0 %v657
  %678 = vmatmul.f32.gmra.mxu0 %v660
  %v679 = vpop.f32.mrf.mxu0
  %v680 = vadd.f32 0.0, %v679
  %681 = vdwg.mxu0
  %v683 = vsel %vm190, %v389, 0
  %685 = vmatpush.msra.mxu0 0.0
  %686 = vmatpush.msra.mxu0 0.0
  %687 = vmatpush.msra.mxu0 0.0
  %688 = vmatpush.msra.mxu0 0.0
  %689 = vmatpush.msra.mxu0 0.0
  %690 = vmatpush.msra.mxu0 0.0
  %691 = vmatpush.msra.mxu0 0.0
  %692 = vmatpush.msra.mxu0 0.0
  %693 = vmatpush.msra.mxu0 0.0
  %694 = vmatpush.msra.mxu0 0.0
  %695 = vmatpush.msra.mxu0 0.0
  %696 = vmatpush.msra.mxu0 0.0
  %697 = vmatpush.msra.mxu0 0.0
  %698 = vmatpush.msra.mxu0 0.0
  %699 = vmatpush.msra.mxu0 %v391
  %700 = vmatpush.msra.mxu0 %v390
  %701 = vmatmul.f32.gmra.mxu0 %v683
  %v702 = vpop.f32.mrf.mxu0
  %v703 = vadd.f32 %v680, %v702
  %704 = vdwg.mxu0
  %v705 = vadd.f32 %v92, %v703
  %v707 = vperm.slane %v73, 0
  %v709 = vadd.f32 %v705, %v707
  %v710 = vsel %vm97, %v709, 0.0
  %711 = vadd.xlane.f32.xlu0 %v710
  %v712 = vpop.xlane.xlu0 %711
  %v713 = vrcp.pop 32.0
  %v714 = vmul.f32 32.0, %v713
  %v715 = vsub.f32 1.0, %v714
  %v716 = vmul.f32 %v713, %v715
  %v717 = vadd.f32 %v713, %v716
  %vm718 = vweird.f32 %v713
  %v719 = vsel %vm718, %v713, %v717
  %v720 = vmul.f32 %v712, %v719
  %v721 = vsub.f32 %v709, %v720
  %v722 = vmul.f32 %v721, %v721
  %v723 = vsel %vm97, %v722, 0.0
  %724 = vadd.xlane.f32.xlu0 %v723
  %v725 = vpop.xlane.xlu0 %724
  %v726 = vmul.f32 %v725, %v719
  %v727 = vadd.f32 %v726, 1e-05
  %v728 = vrsqrt.pop %v727
  %v729 = vmul.f32 %v728, %v727
  %v730 = vmul.f32 %v729, %v728
  %v731 = vmul.f32 0.5, %v730
  %v732 = vsub.f32 1.5, %v731
  %v733 = vmul.f32 %v728, %v732
  %vm734 = vweird.f32 %v727
  %vm735 = vweird.f32 %v728
  %vm736 = vmor %vm734, %vm735
  %v737 = vsel %vm736, %v728, %v733
  %v738 = vmul.f32 %v721, %v737
  %v740 = vperm.slane %v88, 0
  %v742 = vmul.f32 %v738, %v740
  %v744 = vperm.slane %v89, 0
  %v746 = vadd.f32 %v742, %v744
  %v748 = vperm.slane %v78, 0
  %v751 = vsel %vm97, %v746, 0
  %753 = vmatpush.msra.mxu0 0.0
  %754 = vmatpush.msra.mxu0 0.0
  %755 = vmatpush.msra.mxu0 0.0
  %756 = vmatpush.msra.mxu0 0.0
  %757 = vmatpush.msra.mxu0 0.0
  %758 = vmatpush.msra.mxu0 0.0
  %759 = vmatpush.msra.mxu0 0.0
  %760 = vmatpush.msra.mxu0 0.0
  %761 = vmatpush.msra.mxu0 0.0
  %762 = vmatpush.msra.mxu0 0.0
  %763 = vmatpush.msra.mxu0 0.0
  %764 = vmatpush.msra.mxu0 0.0
  %765 = vmatpush.msra.mxu0 %v77
  %766 = vmatpush.msra.mxu0 %v76
  %767 = vmatpush.msra.mxu0 %v75
  %768 = vmatpush.msra.mxu0 %v74
  %769 = vmatmul.f32.gmra.mxu0 %v751
  %v770 = vpop.f32.mrf.mxu0
  %v771 = vadd.f32 %v748, %v770
  %772 = vdwg.mxu0
  %v773 = vmul.f32 %v771, 0.5
  %v774 = vmul.f32 %v771, 0.70710677
  %v775 = vand.u32 2147483647, %v774
  %v776 = vmul.f32 %v775, 0.3275911
  %v777 = vadd.f32 %v776, 1.0
  %v778 = vrcp.pop %v777
  %v779 = vmul.f32 %v777, %v778
  %v780 = vsub.f32 1.0, %v779
  %v781 = vmul.f32 %v778, %v780
  %v782 = vadd.f32 %v778, %v781
  %vm783 = vweird.f32 %v777
  %vm784 = vweird.f32 %v778
  %vm785 = vmor %vm783, %vm784
  %v786 = vsel %vm785, %v778, %v782
  %v787 = vand.u32 2147483647, %v777
  %vm788 = vcmp.eq.f32.partialorder %v787, 8.507059e+37
  %v789 = vand.u32 %v777, 2147483648
  %v790 = vor.u32 1.1754944e-38, %v789
  %v791 = vsel %vm788, %v790, %v786
  %v792 = vmul.f32 1.0, %v791
  %v793 = vmul.f32 %v792, 1.0614054
  %v794 = vadd.f32 %v793, -1.4531521
  %v795 = vmul.f32 %v794, %v792
  %v796 = vadd.f32 %v795, 1.4214138
  %v797 = vmul.f32 %v796, %v792
  %v798 = vadd.f32 %v797, -0.28449672
  %v799 = vmul.f32 %v798, %v792
  %v800 = vadd.f32 %v799, 0.2548296
  %v801 = vmul.f32 %v800, %v792
  %v802 = vsub.f32 0.0, %v775
  %v803 = vmul.f32 %v802, %v775
  %v804 = vmul.f32 %v803, 1.442695
  %v805 = vpow.pop %v804
  %v806 = vmul.f32 %v801, %v805
  %v807 = vsub.f32 1.0, %v806
  %vm808 = vcmp.lt.f32.partialorder %v774, 0.0
  %v809 = vsub.f32 0.0, %v807
  %v810 = vsel %vm808, %v809, %v807
  %v811 = vadd.f32 %v810, 1.0
  %v812 = vmul.f32 %v773, %v811
  %v814 = vperm.slane %v87, 0
  %vm816 = vcmask 523264
  %v818 = vsel %vm816, %v812, 0
  %820 = vmatpush.msra.mxu0 0.0
  %821 = vmatpush.msra.mxu0 0.0
  %822 = vmatpush.msra.mxu0 0.0
  %823 = vmatpush.msra.mxu0 0.0
  %824 = vmatpush.msra.mxu0 0.0
  %825 = vmatpush.msra.mxu0 0.0
  %826 = vmatpush.msra.mxu0 0.0
  %827 = vmatpush.msra.mxu0 0.0
  %828 = vmatpush.msra.mxu0 %v86
  %829 = vmatpush.msra.mxu0 %v85
  %830 = vmatpush.msra.mxu0 %v84
  %831 = vmatpush.msra.mxu0 %v83
  %832 = vmatpush.msra.mxu0 %v82
  %833 = vmatpush.msra.mxu0 %v81
  %834 = vmatpush.msra.mxu0 %v80
  %835 = vmatpush.msra.mxu0 %v79
  %836 = vmatmul.f32.gmra.mxu0 %v818
  %v837 = vpop.f32.mrf.mxu0
  %v838 = vadd.f32 %v814, %v837
  %839 = vdwg.mxu0
  %v840 = vadd.f32 %v746, %v838
  %v841 = vsel %vm97, %v840, 0.0
  %842 = vadd.xlane.f32.xlu0 %v841
  %v843 = vpop.xlane.xlu0 %842
  %v844 = vmul.f32 %v843, %v719
  %v845 = vsub.f32 %v840, %v844
  %v846 = vmul.f32 %v845, %v845
  %v847 = vsel %vm97, %v846, 0.0
  %848 = vadd.xlane.f32.xlu0 %v847
  %v849 = vpop.xlane.xlu0 %848
  %v850 = vmul.f32 %v849, %v719
  %v851 = vadd.f32 %v850, 1e-05
  %v852 = vrsqrt.pop %v851
  %v853 = vmul.f32 %v852, %v851
  %v854 = vmul.f32 %v853, %v852
  %v855 = vmul.f32 0.5, %v854
  %v856 = vsub.f32 1.5, %v855
  %v857 = vmul.f32 %v852, %v856
  %vm858 = vweird.f32 %v851
  %vm859 = vweird.f32 %v852
  %vm860 = vmor %vm858, %vm859
  %v861 = vsel %vm860, %v852, %v857
  %v862 = vmul.f32 %v845, %v861
  %v864 = vperm.slane %v90, 0
  %v866 = vmul.f32 %v862, %v864
  %v868 = vperm.slane %v91, 0
  %v870 = vadd.f32 %v866, %v868
  %871 = vst.msk [vmem:[%s21] sm:$0xff] %vm97, %v870
  %s872 = scalar_lea.vmem %s1, 8
  %v873 = vld [vmem:[%s872] sm:$0xff]
  %s874 = scalar_lea.vmem %s0, 8
  %v875 = vld [vmem:[%s874] sm:$0x1f]
  %v877 = vsel %vm97, %v875, 0
  %879 = vmatpush.msra.mxu0 0.0
  %880 = vmatpush.msra.mxu0 0.0
  %881 = vmatpush.msra.mxu0 0.0
  %882 = vmatpush.msra.mxu0 0.0
  %883 = vmatpush.msra.mxu0 0.0
  %884 = vmatpush.msra.mxu0 0.0
  %885 = vmatpush.msra.mxu0 0.0
  %886 = vmatpush.msra.mxu0 0.0
  %887 = vmatpush.msra.mxu0 0.0
  %888 = vmatpush.msra.mxu0 0.0
  %889 = vmatpush.msra.mxu0 0.0
  %890 = vmatpush.msra.mxu0 0.0
  %891 = vmatpush.msra.mxu0 %v71
  %892 = vmatpush.msra.mxu0 %v70
  %893 = vmatpush.msra.mxu0 %v69
  %894 = vmatpush.msra.mxu0 %v68
  %895 = vmatmul.f32.gmra.mxu0 %v877
  %v896 = vpop.f32.mrf.mxu0
  %v897 = vadd.f32 %v95, %v896
  %898 = vdwg.mxu0
  %s899 = scalar_lea.vmem %s2, 8
  %v900 = vld [vmem:[%s899] sm:$0xff]
  %v901 = vld [vmem:[%s5] sm:$0xff]
  %v902 = vld [vmem:[%s5 + $0x8] sm:$0xff]
  %v903 = vld [vmem:[%s5 + $0x10] sm:$0xff]
  %v904 = vld [vmem:[%s5 + $0x18] sm:$0xff]
  %v905 = vld [vmem:[%s6] sm:$0xff]
  %v906 = vld [vmem:[%s6 + $0x8] sm:$0xff]
  %v907 = vld [vmem:[%s6 + $0x10] sm:$0xff]
  %v908 = vld [vmem:[%s6 + $0x18] sm:$0xff]
  %v909 = vld [vmem:[%s7] sm:$0xff]
  %v910 = vld [vmem:[%s7 + $0x8] sm:$0xff]
  %v911 = vld [vmem:[%s7 + $0x10] sm:$0xff]
  %v912 = vld [vmem:[%s7 + $0x18] sm:$0xff]
  %v913 = vld [vmem:[%s8] sm:$0x1]
  %v914 = vld [vmem:[%s9] sm:$0x1]
  %v915 = vld [vmem:[%s10] sm:$0x1]
  %v917 = vperm.slane %v913, 0
  %v920 = vsel %vm97, %v873, 0
  %922 = vmatpush.msra.mxu0 0.0
  %923 = vmatpush.msra.mxu0 0.0
  %924 = vmatpush.msra.mxu0 0.0
  %925 = vmatpush.msra.mxu0 0.0
  %926 = vmatpush.msra.mxu0 0.0
  %927 = vmatpush.msra.mxu0 0.0
  %928 = vmatpush.msra.mxu0 0.0
  %929 = vmatpush.msra.mxu0 0.0
  %930 = vmatpush.msra.mxu0 0.0
  %931 = vmatpush.msra.mxu0 0.0
  %932 = vmatpush.msra.mxu0 0.0
  %933 = vmatpush.msra.mxu0 0.0
  %934 = vmatpush.msra.mxu0 %v904
  %935 = vmatpush.msra.mxu0 %v903
  %936 = vmatpush.msra.mxu0 %v902
  %937 = vmatpush.msra.mxu0 %v901
  %938 = vmatmul.f32.gmra.mxu0 %v920
  %v939 = vpop.f32.mrf.mxu0
  %v940 = vadd.f32 %v917, %v939
  %941 = vdwg.mxu0
  %v942 = vmul.f32 %v940, 0.25
  %v944 = vperm.slane %v914, 0
  %v947 = vsel %vm97, %v897, 0
  %949 = vmatpush.msra.mxu0 0.0
  %950 = vmatpush.msra.mxu0 0.0
  %951 = vmatpush.msra.mxu0 0.0
  %952 = vmatpush.msra.mxu0 0.0
  %953 = vmatpush.msra.mxu0 0.0
  %954 = vmatpush.msra.mxu0 0.0
  %955 = vmatpush.msra.mxu0 0.0
  %956 = vmatpush.msra.mxu0 0.0
  %957 = vmatpush.msra.mxu0 0.0
  %958 = vmatpush.msra.mxu0 0.0
  %959 = vmatpush.msra.mxu0 0.0
  %960 = vmatpush.msra.mxu0 0.0
  %961 = vmatpush.msra.mxu0 %v908
  %962 = vmatpush.msra.mxu0 %v907
  %963 = vmatpush.msra.mxu0 %v906
  %964 = vmatpush.msra.mxu0 %v905
  %965 = vmatmul.f32.gmra.mxu0 %v947
  %v966 = vpop.f32.mrf.mxu0
  %v967 = vadd.f32 %v944, %v966
  %968 = vdwg.mxu0
  %v970 = vsel %vm190, %v942, 0
  %v973 = vsel %vm190, %v967, 0
  %975 = vmatpush.xpose.msra.mxu0 0.0
  %976 = vmatpush.xpose.msra.mxu0 0.0
  %977 = vmatpush.xpose.msra.mxu0 0.0
  %978 = vmatpush.xpose.msra.mxu0 0.0
  %979 = vmatpush.xpose.msra.mxu0 0.0
  %980 = vmatpush.xpose.msra.mxu0 0.0
  %981 = vmatpush.xpose.msra.mxu0 0.0
  %982 = vmatpush.xpose.msra.mxu0 0.0
  %983 = vmatpush.xpose.msra.mxu0 0.0
  %984 = vmatpush.xpose.msra.mxu0 0.0
  %985 = vmatpush.xpose.msra.mxu0 0.0
  %986 = vmatpush.xpose.msra.mxu0 0.0
  %987 = vmatpush.xpose.msra.mxu0 0.0
  %988 = vmatpush.xpose.msra.mxu0 0.0
  %989 = vmatpush.xpose.msra.mxu0 0.0
  %990 = vmatpush.xpose.msra.mxu0 %v973
  %991 = vmatmul.f32.gmra.mxu0 %v970
  %v992 = vpop.f32.mrf.mxu0
  %v993 = vadd.f32 0.0, %v992
  %994 = vdwg.mxu0
  %995 = vmatpush.msra.mxu0 0.0
  %996 = vmatpush.msra.mxu0 0.0
  %997 = vmatpush.msra.mxu0 0.0
  %998 = vmatpush.msra.mxu0 0.0
  %999 = vmatpush.msra.mxu0 0.0
  %1000 = vmatpush.msra.mxu0 0.0
  %1001 = vmatpush.msra.mxu0 0.0
  %1002 = vmatpush.msra.mxu0 0.0
  %1003 = vmatpush.msra.mxu0 0.0
  %1004 = vmatpush.msra.mxu0 0.0
  %1005 = vmatpush.msra.mxu0 0.0
  %1006 = vmatpush.msra.mxu0 0.0
  %1007 = vmatpush.msra.mxu0 %v908
  %1008 = vmatpush.msra.mxu0 %v907
  %1009 = vmatpush.msra.mxu0 %v906
  %1010 = vmatpush.msra.mxu0 %v905
  %1011 = vmatmul.f32.gmra.mxu0 %v920
  %v1012 = vpop.f32.mrf.mxu0
  %v1013 = vadd.f32 %v944, %v1012
  %1014 = vdwg.mxu0
  %v1016 = vsel %vm190, %v1013, 0
  %1018 = vmatpush.xpose.msra.mxu0 0.0
  %1019 = vmatpush.xpose.msra.mxu0 0.0
  %1020 = vmatpush.xpose.msra.mxu0 0.0
  %1021 = vmatpush.xpose.msra.mxu0 0.0
  %1022 = vmatpush.xpose.msra.mxu0 0.0
  %1023 = vmatpush.xpose.msra.mxu0 0.0
  %1024 = vmatpush.xpose.msra.mxu0 0.0
  %1025 = vmatpush.xpose.msra.mxu0 0.0
  %1026 = vmatpush.xpose.msra.mxu0 0.0
  %1027 = vmatpush.xpose.msra.mxu0 0.0
  %1028 = vmatpush.xpose.msra.mxu0 0.0
  %1029 = vmatpush.xpose.msra.mxu0 0.0
  %1030 = vmatpush.xpose.msra.mxu0 0.0
  %1031 = vmatpush.xpose.msra.mxu0 0.0
  %1032 = vmatpush.xpose.msra.mxu0 0.0
  %1033 = vmatpush.xpose.msra.mxu0 %v1016
  %1034 = vmatmul.f32.gmra.mxu0 %v970
  %v1035 = vpop.f32.mrf.mxu0
  %v1036 = vadd.f32 %v900, %v1035
  %1037 = vdwg.mxu0
  %v1038 = vsel %vm260, %v993, -inf
  %1039 = vmax.xlane.f32.xlu0 %v1038
  %v1040 = vpop.xlane.xlu0 %1039
  %v1041 = vsel %vm264, %v1036, -inf
  %1042 = vmax.xlane.f32.xlu0 %v1041
  %v1043 = vpop.xlane.xlu0 %1042
  %v1044 = vmax.f32 %v1040, %v1043
  %v1045 = vsub.f32 %v993, %v1044
  %v1046 = vmul.f32 %v1045, 1.442695
  %v1047 = vpow.pop %v1046
  %v1048 = vsub.f32 %v1036, %v1044
  %v1049 = vmul.f32 %v1048, 1.442695
  %v1050 = vpow.pop %v1049
  %v1051 = vsel %vm260, %v1047, 0.0
  %1052 = vadd.xlane.f32.xlu0 %v1051
  %v1053 = vpop.xlane.xlu0 %1052
  %v1054 = vsel %vm264, %v1050, 0.0
  %1055 = vadd.xlane.f32.xlu0 %v1054
  %v1056 = vpop.xlane.xlu0 %1055
  %v1057 = vadd.f32 %v1053, %v1056
  %v1059 = vperm.slane %v915, 0
  %1061 = vmatpush.msra.mxu0 0.0
  %1062 = vmatpush.msra.mxu0 0.0
  %1063 = vmatpush.msra.mxu0 0.0
  %1064 = vmatpush.msra.mxu0 0.0
  %1065 = vmatpush.msra.mxu0 0.0
  %1066 = vmatpush.msra.mxu0 0.0
  %1067 = vmatpush.msra.mxu0 0.0
  %1068 = vmatpush.msra.mxu0 0.0
  %1069 = vmatpush.msra.mxu0 0.0
  %1070 = vmatpush.msra.mxu0 0.0
  %1071 = vmatpush.msra.mxu0 0.0
  %1072 = vmatpush.msra.mxu0 0.0
  %1073 = vmatpush.msra.mxu0 %v912
  %1074 = vmatpush.msra.mxu0 %v911
  %1075 = vmatpush.msra.mxu0 %v910
  %1076 = vmatpush.msra.mxu0 %v909
  %1077 = vmatmul.f32.gmra.mxu0 %v947
  %v1078 = vpop.f32.mrf.mxu0
  %v1079 = vadd.f32 %v1059, %v1078
  %1080 = vdwg.mxu0
  %1081 = vmatpush.msra.mxu0 0.0
  %1082 = vmatpush.msra.mxu0 0.0
  %1083 = vmatpush.msra.mxu0 0.0
  %1084 = vmatpush.msra.mxu0 0.0
  %1085 = vmatpush.msra.mxu0 0.0
  %1086 = vmatpush.msra.mxu0 0.0
  %1087 = vmatpush.msra.mxu0 0.0
  %1088 = vmatpush.msra.mxu0 0.0
  %1089 = vmatpush.msra.mxu0 0.0
  %1090 = vmatpush.msra.mxu0 0.0
  %1091 = vmatpush.msra.mxu0 0.0
  %1092 = vmatpush.msra.mxu0 0.0
  %1093 = vmatpush.msra.mxu0 %v912
  %1094 = vmatpush.msra.mxu0 %v911
  %1095 = vmatpush.msra.mxu0 %v910
  %1096 = vmatpush.msra.mxu0 %v909
  %1097 = vmatmul.f32.gmra.mxu0 %v920
  %v1098 = vpop.f32.mrf.mxu0
  %v1099 = vadd.f32 %v1059, %v1098
  %1100 = vdwg.mxu0
  %v1102 = vsel %vm264, %v1050, 0
  %1104 = vmatpush.msra.mxu0 0.0
  %1105 = vmatpush.msra.mxu0 0.0
  %1106 = vmatpush.msra.mxu0 0.0
  %1107 = vmatpush.msra.mxu0 0.0
  %1108 = vmatpush.msra.mxu0 0.0
  %1109 = vmatpush.msra.mxu0 0.0
  %1110 = vmatpush.msra.mxu0 0.0
  %1111 = vmatpush.msra.mxu0 0.0
  %1112 = vmatpush.msra.mxu0 0.0
  %1113 = vmatpush.msra.mxu0 0.0
  %1114 = vmatpush.msra.mxu0 0.0
  %1115 = vmatpush.msra.mxu0 0.0
  %1116 = vmatpush.msra.mxu0 0.0
  %1117 = vmatpush.msra.mxu0 0.0
  %1118 = vmatpush.msra.mxu0 0.0
  %1119 = vmatpush.msra.mxu0 %v1099
  %1120 = vmatmul.f32.gmra.mxu0 %v1102
  %v1121 = vpop.f32.mrf.mxu0
  %v1122 = vadd.f32 0.0, %v1121
  %1123 = vdwg.mxu0
  %v1125 = vsel %vm260, %v1047, 0
  %v1128 = vsel %vm351, %v1079, 0
  %1130 = vmatpush.msra.mxu0 0.0
  %1131 = vmatpush.msra.mxu0 0.0
  %1132 = vmatpush.msra.mxu0 0.0
  %1133 = vmatpush.msra.mxu0 0.0
  %1134 = vmatpush.msra.mxu0 0.0
  %1135 = vmatpush.msra.mxu0 0.0
  %1136 = vmatpush.msra.mxu0 0.0
  %1137 = vmatpush.msra.mxu0 0.0
  %1138 = vmatpush.msra.mxu0 0.0
  %1139 = vmatpush.msra.mxu0 0.0
  %1140 = vmatpush.msra.mxu0 0.0
  %1141 = vmatpush.msra.mxu0 0.0
  %1142 = vmatpush.msra.mxu0 0.0
  %1143 = vmatpush.msra.mxu0 0.0
  %1144 = vmatpush.msra.mxu0 0.0
  %1145 = vmatpush.msra.mxu0 %v1128
  %1146 = vmatmul.f32.gmra.mxu0 %v1125
  %v1147 = vpop.f32.mrf.mxu0
  %v1148 = vadd.f32 %v1122, %v1147
  %1149 = vdwg.mxu0
  %v1150 = vrcp.pop %v1057
  %v1151 = vmul.f32 %v1057, %v1150
  %v1152 = vsub.f32 1.0, %v1151
  %v1153 = vmul.f32 %v1150, %v1152
  %v1154 = vadd.f32 %v1150, %v1153
  %vm1155 = vweird.f32 %v1057
  %vm1156 = vweird.f32 %v1150
  %vm1157 = vmor %vm1155, %vm1156
  %v1158 = vsel %vm1157, %v1150, %v1154
  %v1159 = vand.u32 2147483647, %v1057
  %vm1160 = vcmp.eq.f32.partialorder %v1159, 8.507059e+37
  %v1161 = vand.u32 %v1057, 2147483648
  %v1162 = vor.u32 1.1754944e-38, %v1161
  %v1163 = vsel %vm1160, %v1162, %v1158
  %v1164 = vmul.f32 %v1148, %v1163
  %v1165 = vld [vmem:[%s11] sm:$0xff]
  %v1166 = vld [vmem:[%s11 + $0x8] sm:$0xff]
  %v1167 = vld [vmem:[%s392] sm:$0xff]
  %v1168 = vld [vmem:[%s392 + $0x8] sm:$0xff]
  %v1169 = vld [vmem:[%s392 + $0x10] sm:$0xff]
  %v1170 = vld [vmem:[%s392 + $0x18] sm:$0xff]
  %v1171 = vld [vmem:[%s397] sm:$0xff]
  %v1172 = vld [vmem:[%s397 + $0x8] sm:$0xff]
  %v1173 = vld [vmem:[%s397 + $0x10] sm:$0xff]
  %v1174 = vld [vmem:[%s397 + $0x18] sm:$0xff]
  %v1175 = vld [vmem:[%s402] sm:$0xff]
  %v1176 = vld [vmem:[%s402 + $0x8] sm:$0xff]
  %v1177 = vld [vmem:[%s402 + $0x10] sm:$0xff]
  %v1178 = vld [vmem:[%s402 + $0x18] sm:$0xff]
  %v1179 = vld [vmem:[%s407] sm:$0x1]
  %v1180 = vld [vmem:[%s409] sm:$0x1]
  %v1181 = vld [vmem:[%s411] sm:$0x1]
  %v1183 = vperm.slane %v1179, 0
  %1185 = vmatpush.msra.mxu0 0.0
  %1186 = vmatpush.msra.mxu0 0.0
  %1187 = vmatpush.msra.mxu0 0.0
  %1188 = vmatpush.msra.mxu0 0.0
  %1189 = vmatpush.msra.mxu0 0.0
  %1190 = vmatpush.msra.mxu0 0.0
  %1191 = vmatpush.msra.mxu0 0.0
  %1192 = vmatpush.msra.mxu0 0.0
  %1193 = vmatpush.msra.mxu0 0.0
  %1194 = vmatpush.msra.mxu0 0.0
  %1195 = vmatpush.msra.mxu0 0.0
  %1196 = vmatpush.msra.mxu0 0.0
  %1197 = vmatpush.msra.mxu0 %v1170
  %1198 = vmatpush.msra.mxu0 %v1169
  %1199 = vmatpush.msra.mxu0 %v1168
  %1200 = vmatpush.msra.mxu0 %v1167
  %1201 = vmatmul.f32.gmra.mxu0 %v920
  %v1202 = vpop.f32.mrf.mxu0
  %v1203 = vadd.f32 %v1183, %v1202
  %1204 = vdwg.mxu0
  %v1205 = vmul.f32 %v1203, 0.25
  %v1207 = vperm.slane %v1180, 0
  %1209 = vmatpush.msra.mxu0 0.0
  %1210 = vmatpush.msra.mxu0 0.0
  %1211 = vmatpush.msra.mxu0 0.0
  %1212 = vmatpush.msra.mxu0 0.0
  %1213 = vmatpush.msra.mxu0 0.0
  %1214 = vmatpush.msra.mxu0 0.0
  %1215 = vmatpush.msra.mxu0 0.0
  %1216 = vmatpush.msra.mxu0 0.0
  %1217 = vmatpush.msra.mxu0 0.0
  %1218 = vmatpush.msra.mxu0 0.0
  %1219 = vmatpush.msra.mxu0 0.0
  %1220 = vmatpush.msra.mxu0 0.0
  %1221 = vmatpush.msra.mxu0 %v1174
  %1222 = vmatpush.msra.mxu0 %v1173
  %1223 = vmatpush.msra.mxu0 %v1172
  %1224 = vmatpush.msra.mxu0 %v1171
  %1225 = vmatmul.f32.gmra.mxu0 %v947
  %v1226 = vpop.f32.mrf.mxu0
  %v1227 = vadd.f32 %v1207, %v1226
  %1228 = vdwg.mxu0
  %v1230 = vsel %vm190, %v1205, 0
  %v1233 = vsel %vm190, %v1227, 0
  %1235 = vmatpush.xpose.msra.mxu0 0.0
  %1236 = vmatpush.xpose.msra.mxu0 0.0
  %1237 = vmatpush.xpose.msra.mxu0 0.0
  %1238 = vmatpush.xpose.msra.mxu0 0.0
  %1239 = vmatpush.xpose.msra.mxu0 0.0
  %1240 = vmatpush.xpose.msra.mxu0 0.0
  %1241 = vmatpush.xpose.msra.mxu0 0.0
  %1242 = vmatpush.xpose.msra.mxu0 0.0
  %1243 = vmatpush.xpose.msra.mxu0 0.0
  %1244 = vmatpush.xpose.msra.mxu0 0.0
  %1245 = vmatpush.xpose.msra.mxu0 0.0
  %1246 = vmatpush.xpose.msra.mxu0 0.0
  %1247 = vmatpush.xpose.msra.mxu0 0.0
  %1248 = vmatpush.xpose.msra.mxu0 0.0
  %1249 = vmatpush.xpose.msra.mxu0 0.0
  %1250 = vmatpush.xpose.msra.mxu0 %v1233
  %1251 = vmatmul.f32.gmra.mxu0 %v1230
  %v1252 = vpop.f32.mrf.mxu0
  %v1253 = vadd.f32 0.0, %v1252
  %1254 = vdwg.mxu0
  %1255 = vmatpush.msra.mxu0 0.0
  %1256 = vmatpush.msra.mxu0 0.0
  %1257 = vmatpush.msra.mxu0 0.0
  %1258 = vmatpush.msra.mxu0 0.0
  %1259 = vmatpush.msra.mxu0 0.0
  %1260 = vmatpush.msra.mxu0 0.0
  %1261 = vmatpush.msra.mxu0 0.0
  %1262 = vmatpush.msra.mxu0 0.0
  %1263 = vmatpush.msra.mxu0 0.0
  %1264 = vmatpush.msra.mxu0 0.0
  %1265 = vmatpush.msra.mxu0 0.0
  %1266 = vmatpush.msra.mxu0 0.0
  %1267 = vmatpush.msra.mxu0 %v1174
  %1268 = vmatpush.msra.mxu0 %v1173
  %1269 = vmatpush.msra.mxu0 %v1172
  %1270 = vmatpush.msra.mxu0 %v1171
  %1271 = vmatmul.f32.gmra.mxu0 %v920
  %v1272 = vpop.f32.mrf.mxu0
  %v1273 = vadd.f32 %v1207, %v1272
  %1274 = vdwg.mxu0
  %v1276 = vsel %vm190, %v1273, 0
  %1278 = vmatpush.xpose.msra.mxu0 0.0
  %1279 = vmatpush.xpose.msra.mxu0 0.0
  %1280 = vmatpush.xpose.msra.mxu0 0.0
  %1281 = vmatpush.xpose.msra.mxu0 0.0
  %1282 = vmatpush.xpose.msra.mxu0 0.0
  %1283 = vmatpush.xpose.msra.mxu0 0.0
  %1284 = vmatpush.xpose.msra.mxu0 0.0
  %1285 = vmatpush.xpose.msra.mxu0 0.0
  %1286 = vmatpush.xpose.msra.mxu0 0.0
  %1287 = vmatpush.xpose.msra.mxu0 0.0
  %1288 = vmatpush.xpose.msra.mxu0 0.0
  %1289 = vmatpush.xpose.msra.mxu0 0.0
  %1290 = vmatpush.xpose.msra.mxu0 0.0
  %1291 = vmatpush.xpose.msra.mxu0 0.0
  %1292 = vmatpush.xpose.msra.mxu0 0.0
  %1293 = vmatpush.xpose.msra.mxu0 %v1276
  %1294 = vmatmul.f32.gmra.mxu0 %v1230
  %v1295 = vpop.f32.mrf.mxu0
  %v1296 = vadd.f32 %v900, %v1295
  %1297 = vdwg.mxu0
  %v1298 = vsel %vm260, %v1253, -inf
  %1299 = vmax.xlane.f32.xlu0 %v1298
  %v1300 = vpop.xlane.xlu0 %1299
  %v1301 = vsel %vm264, %v1296, -inf
  %1302 = vmax.xlane.f32.xlu0 %v1301
  %v1303 = vpop.xlane.xlu0 %1302
  %v1304 = vmax.f32 %v1300, %v1303
  %v1305 = vsub.f32 %v1253, %v1304
  %v1306 = vmul.f32 %v1305, 1.442695
  %v1307 = vpow.pop %v1306
  %v1308 = vsub.f32 %v1296, %v1304
  %v1309 = vmul.f32 %v1308, 1.442695
  %v1310 = vpow.pop %v1309
  %v1311 = vsel %vm260, %v1307, 0.0
  %1312 = vadd.xlane.f32.xlu0 %v1311
  %v1313 = vpop.xlane.xlu0 %1312
  %v1314 = vsel %vm264, %v1310, 0.0
  %1315 = vadd.xlane.f32.xlu0 %v1314
  %v1316 = vpop.xlane.xlu0 %1315
  %v1317 = vadd.f32 %v1313, %v1316
  %v1319 = vperm.slane %v1181, 0
  %1321 = vmatpush.msra.mxu0 0.0
  %1322 = vmatpush.msra.mxu0 0.0
  %1323 = vmatpush.msra.mxu0 0.0
  %1324 = vmatpush.msra.mxu0 0.0
  %1325 = vmatpush.msra.mxu0 0.0
  %1326 = vmatpush.msra.mxu0 0.0
  %1327 = vmatpush.msra.mxu0 0.0
  %1328 = vmatpush.msra.mxu0 0.0
  %1329 = vmatpush.msra.mxu0 0.0
  %1330 = vmatpush.msra.mxu0 0.0
  %1331 = vmatpush.msra.mxu0 0.0
  %1332 = vmatpush.msra.mxu0 0.0
  %1333 = vmatpush.msra.mxu0 %v1178
  %1334 = vmatpush.msra.mxu0 %v1177
  %1335 = vmatpush.msra.mxu0 %v1176
  %1336 = vmatpush.msra.mxu0 %v1175
  %1337 = vmatmul.f32.gmra.mxu0 %v947
  %v1338 = vpop.f32.mrf.mxu0
  %v1339 = vadd.f32 %v1319, %v1338
  %1340 = vdwg.mxu0
  %1341 = vmatpush.msra.mxu0 0.0
  %1342 = vmatpush.msra.mxu0 0.0
  %1343 = vmatpush.msra.mxu0 0.0
  %1344 = vmatpush.msra.mxu0 0.0
  %1345 = vmatpush.msra.mxu0 0.0
  %1346 = vmatpush.msra.mxu0 0.0
  %1347 = vmatpush.msra.mxu0 0.0
  %1348 = vmatpush.msra.mxu0 0.0
  %1349 = vmatpush.msra.mxu0 0.0
  %1350 = vmatpush.msra.mxu0 0.0
  %1351 = vmatpush.msra.mxu0 0.0
  %1352 = vmatpush.msra.mxu0 0.0
  %1353 = vmatpush.msra.mxu0 %v1178
  %1354 = vmatpush.msra.mxu0 %v1177
  %1355 = vmatpush.msra.mxu0 %v1176
  %1356 = vmatpush.msra.mxu0 %v1175
  %1357 = vmatmul.f32.gmra.mxu0 %v920
  %v1358 = vpop.f32.mrf.mxu0
  %v1359 = vadd.f32 %v1319, %v1358
  %1360 = vdwg.mxu0
  %v1362 = vsel %vm264, %v1310, 0
  %1364 = vmatpush.msra.mxu0 0.0
  %1365 = vmatpush.msra.mxu0 0.0
  %1366 = vmatpush.msra.mxu0 0.0
  %1367 = vmatpush.msra.mxu0 0.0
  %1368 = vmatpush.msra.mxu0 0.0
  %1369 = vmatpush.msra.mxu0 0.0
  %1370 = vmatpush.msra.mxu0 0.0
  %1371 = vmatpush.msra.mxu0 0.0
  %1372 = vmatpush.msra.mxu0 0.0
  %1373 = vmatpush.msra.mxu0 0.0
  %1374 = vmatpush.msra.mxu0 0.0
  %1375 = vmatpush.msra.mxu0 0.0
  %1376 = vmatpush.msra.mxu0 0.0
  %1377 = vmatpush.msra.mxu0 0.0
  %1378 = vmatpush.msra.mxu0 0.0
  %1379 = vmatpush.msra.mxu0 %v1359
  %1380 = vmatmul.f32.gmra.mxu0 %v1362
  %v1381 = vpop.f32.mrf.mxu0
  %v1382 = vadd.f32 0.0, %v1381
  %1383 = vdwg.mxu0
  %v1385 = vsel %vm260, %v1307, 0
  %v1388 = vsel %vm351, %v1339, 0
  %1390 = vmatpush.msra.mxu0 0.0
  %1391 = vmatpush.msra.mxu0 0.0
  %1392 = vmatpush.msra.mxu0 0.0
  %1393 = vmatpush.msra.mxu0 0.0
  %1394 = vmatpush.msra.mxu0 0.0
  %1395 = vmatpush.msra.mxu0 0.0
  %1396 = vmatpush.msra.mxu0 0.0
  %1397 = vmatpush.msra.mxu0 0.0
  %1398 = vmatpush.msra.mxu0 0.0
  %1399 = vmatpush.msra.mxu0 0.0
  %1400 = vmatpush.msra.mxu0 0.0
  %1401 = vmatpush.msra.mxu0 0.0
  %1402 = vmatpush.msra.mxu0 0.0
  %1403 = vmatpush.msra.mxu0 0.0
  %1404 = vmatpush.msra.mxu0 0.0
  %1405 = vmatpush.msra.mxu0 %v1388
  %1406 = vmatmul.f32.gmra.mxu0 %v1385
  %v1407 = vpop.f32.mrf.mxu0
  %v1408 = vadd.f32 %v1382, %v1407
  %1409 = vdwg.mxu0
  %v1410 = vrcp.pop %v1317
  %v1411 = vmul.f32 %v1317, %v1410
  %v1412 = vsub.f32 1.0, %v1411
  %v1413 = vmul.f32 %v1410, %v1412
  %v1414 = vadd.f32 %v1410, %v1413
  %vm1415 = vweird.f32 %v1317
  %vm1416 = vweird.f32 %v1410
  %vm1417 = vmor %vm1415, %vm1416
  %v1418 = vsel %vm1417, %v1410, %v1414
  %v1419 = vand.u32 2147483647, %v1317
  %vm1420 = vcmp.eq.f32.partialorder %v1419, 8.507059e+37
  %v1421 = vand.u32 %v1317, 2147483648
  %v1422 = vor.u32 1.1754944e-38, %v1421
  %v1423 = vsel %vm1420, %v1422, %v1418
  %v1424 = vmul.f32 %v1408, %v1423
  %v1425 = vld [vmem:[%s656] sm:$0xff]
  %v1426 = vld [vmem:[%s656 + $0x8] sm:$0xff]
  %v1428 = vsel %vm190, %v1424, 0
  %1430 = vmatpush.msra.mxu0 0.0
  %1431 = vmatpush.msra.mxu0 0.0
  %1432 = vmatpush.msra.mxu0 0.0
  %1433 = vmatpush.msra.mxu0 0.0
  %1434 = vmatpush.msra.mxu0 0.0
  %1435 = vmatpush.msra.mxu0 0.0
  %1436 = vmatpush.msra.mxu0 0.0
  %1437 = vmatpush.msra.mxu0 0.0
  %1438 = vmatpush.msra.mxu0 0.0
  %1439 = vmatpush.msra.mxu0 0.0
  %1440 = vmatpush.msra.mxu0 0.0
  %1441 = vmatpush.msra.mxu0 0.0
  %1442 = vmatpush.msra.mxu0 0.0
  %1443 = vmatpush.msra.mxu0 0.0
  %1444 = vmatpush.msra.mxu0 %v1426
  %1445 = vmatpush.msra.mxu0 %v1425
  %1446 = vmatmul.f32.gmra.mxu0 %v1428
  %v1447 = vpop.f32.mrf.mxu0
  %v1448 = vadd.f32 0.0, %v1447
  %1449 = vdwg.mxu0
  %v1451 = vsel %vm190, %v1164, 0
  %1453 = vmatpush.msra.mxu0 0.0
  %1454 = vmatpush.msra.mxu0 0.0
  %1455 = vmatpush.msra.mxu0 0.0
  %1456 = vmatpush.msra.mxu0 0.0
  %1457 = vmatpush.msra.mxu0 0.0
  %1458 = vmatpush.msra.mxu0 0.0
  %1459 = vmatpush.msra.mxu0 0.0
  %1460 = vmatpush.msra.mxu0 0.0
  %1461 = vmatpush.msra.mxu0 0.0
  %1462 = vmatpush.msra.mxu0 0.0
  %1463 = vmatpush.msra.mxu0 0.0
  %1464 = vmatpush.msra.mxu0 0.0
  %1465 = vmatpush.msra.mxu0 0.0
  %1466 = vmatpush.msra.mxu0 0.0
  %1467 = vmatpush.msra.mxu0 %v1166
  %1468 = vmatpush.msra.mxu0 %v1165
  %1469 = vmatmul.f32.gmra.mxu0 %v1451
  %v1470 = vpop.f32.mrf.mxu0
  %v1471 = vadd.f32 %v1448, %v1470
  %1472 = vdwg.mxu0
  %v1473 = vadd.f32 %v873, %v1471
  %v1474 = vadd.f32 %v1473, %v707
  %v1475 = vsel %vm97, %v1474, 0.0
  %1476 = vadd.xlane.f32.xlu0 %v1475
  %v1477 = vpop.xlane.xlu0 %1476
  %v1478 = vmul.f32 %v1477, %v719
  %v1479 = vsub.f32 %v1474, %v1478
  %v1480 = vmul.f32 %v1479, %v1479
  %v1481 = vsel %vm97, %v1480, 0.0
  %1482 = vadd.xlane.f32.xlu0 %v1481
  %v1483 = vpop.xlane.xlu0 %1482
  %v1484 = vmul.f32 %v1483, %v719
  %v1485 = vadd.f32 %v1484, 1e-05
  %v1486 = vrsqrt.pop %v1485
  %v1487 = vmul.f32 %v1486, %v1485
  %v1488 = vmul.f32 %v1487, %v1486
  %v1489 = vmul.f32 0.5, %v1488
  %v1490 = vsub.f32 1.5, %v1489
  %v1491 = vmul.f32 %v1486, %v1490
  %vm1492 = vweird.f32 %v1485
  %vm1493 = vweird.f32 %v1486
  %vm1494 = vmor %vm1492, %vm1493
  %v1495 = vsel %vm1494, %v1486, %v1491
  %v1496 = vmul.f32 %v1479, %v1495
  %v1497 = vmul.f32 %v1496, %v740
  %v1498 = vadd.f32 %v1497, %v744
  %v1500 = vsel %vm97, %v1498, 0
  %1502 = vmatpush.msra.mxu0 0.0
  %1503 = vmatpush.msra.mxu0 0.0
  %1504 = vmatpush.msra.mxu0 0.0
  %1505 = vmatpush.msra.mxu0 0.0
  %1506 = vmatpush.msra.mxu0 0.0
  %1507 = vmatpush.msra.mxu0 0.0
  %1508 = vmatpush.msra.mxu0 0.0
  %1509 = vmatpush.msra.mxu0 0.0
  %1510 = vmatpush.msra.mxu0 0.0
  %1511 = vmatpush.msra.mxu0 0.0
  %1512 = vmatpush.msra.mxu0 0.0
  %1513 = vmatpush.msra.mxu0 0.0
  %1514 = vmatpush.msra.mxu0 %v77
  %1515 = vmatpush.msra.mxu0 %v76
  %1516 = vmatpush.msra.mxu0 %v75
  %1517 = vmatpush.msra.mxu0 %v74
  %1518 = vmatmul.f32.gmra.mxu0 %v1500
  %v1519 = vpop.f32.mrf.mxu0
  %v1520 = vadd.f32 %v748, %v1519
  %1521 = vdwg.mxu0
  %v1522 = vmul.f32 %v1520, 0.5
  %v1523 = vmul.f32 %v1520, 0.70710677
  %v1524 = vand.u32 2147483647, %v1523
  %v1525 = vmul.f32 %v1524, 0.3275911
  %v1526 = vadd.f32 %v1525, 1.0
  %v1527 = vrcp.pop %v1526
  %v1528 = vmul.f32 %v1526, %v1527
  %v1529 = vsub.f32 1.0, %v1528
  %v1530 = vmul.f32 %v1527, %v1529
  %v1531 = vadd.f32 %v1527, %v1530
  %vm1532 = vweird.f32 %v1526
  %vm1533 = vweird.f32 %v1527
  %vm1534 = vmor %vm1532, %vm1533
  %v1535 = vsel %vm1534, %v1527, %v1531
  %v1536 = vand.u32 2147483647, %v1526
  %vm1537 = vcmp.eq.f32.partialorder %v1536, 8.507059e+37
  %v1538 = vand.u32 %v1526, 2147483648
  %v1539 = vor.u32 1.1754944e-38, %v1538
  %v1540 = vsel %vm1537, %v1539, %v1535
  %v1541 = vmul.f32 1.0, %v1540
  %v1542 = vmul.f32 %v1541, 1.0614054
  %v1543 = vadd.f32 %v1542, -1.4531521
  %v1544 = vmul.f32 %v1543, %v1541
  %v1545 = vadd.f32 %v1544, 1.4214138
  %v1546 = vmul.f32 %v1545, %v1541
  %v1547 = vadd.f32 %v1546, -0.28449672
  %v1548 = vmul.f32 %v1547, %v1541
  %v1549 = vadd.f32 %v1548, 0.2548296
  %v1550 = vmul.f32 %v1549, %v1541
  %v1551 = vsub.f32 0.0, %v1524
  %v1552 = vmul.f32 %v1551, %v1524
  %v1553 = vmul.f32 %v1552, 1.442695
  %v1554 = vpow.pop %v1553
  %v1555 = vmul.f32 %v1550, %v1554
  %v1556 = vsub.f32 1.0, %v1555
  %vm1557 = vcmp.lt.f32.partialorder %v1523, 0.0
  %v1558 = vsub.f32 0.0, %v1556
  %v1559 = vsel %vm1557, %v1558, %v1556
  %v1560 = vadd.f32 %v1559, 1.0
  %v1561 = vmul.f32 %v1522, %v1560
  %v1563 = vsel %vm816, %v1561, 0
  %1565 = vmatpush.msra.mxu0 0.0
  %1566 = vmatpush.msra.mxu0 0.0
  %1567 = vmatpush.msra.mxu0 0.0
  %1568 = vmatpush.msra.mxu0 0.0
  %1569 = vmatpush.msra.mxu0 0.0
  %1570 = vmatpush.msra.mxu0 0.0
  %1571 = vmatpush.msra.mxu0 0.0
  %1572 = vmatpush.msra.mxu0 0.0
  %1573 = vmatpush.msra.mxu0 %v86
  %1574 = vmatpush.msra.mxu0 %v85
  %1575 = vmatpush.msra.mxu0 %v84
  %1576 = vmatpush.msra.mxu0 %v83
  %1577 = vmatpush.msra.mxu0 %v82
  %1578 = vmatpush.msra.mxu0 %v81
  %1579 = vmatpush.msra.mxu0 %v80
  %1580 = vmatpush.msra.mxu0 %v79
  %1581 = vmatmul.f32.gmra.mxu0 %v1563
  %v1582 = vpop.f32.mrf.mxu0
  %v1583 = vadd.f32 %v814, %v1582
  %1584 = vdwg.mxu0
  %v1585 = vadd.f32 %v1498, %v1583
  %v1586 = vsel %vm97, %v1585, 0.0
  %1587 = vadd.xlane.f32.xlu0 %v1586
  %v1588 = vpop.xlane.xlu0 %1587
  %v1589 = vmul.f32 %v1588, %v719
  %v1590 = vsub.f32 %v1585, %v1589
  %v1591 = vmul.f32 %v1590, %v1590
  %v1592 = vsel %vm97, %v1591, 0.0
  %1593 = vadd.xlane.f32.xlu0 %v1592
  %v1594 = vpop.xlane.xlu0 %1593
  %v1595 = vmul.f32 %v1594, %v719
  %v1596 = vadd.f32 %v1595, 1e-05
  %v1597 = vrsqrt.pop %v1596
  %v1598 = vmul.f32 %v1597, %v1596
  %v1599 = vmul.f32 %v1598, %v1597
  %v1600 = vmul.f32 0.5, %v1599
  %v1601 = vsub.f32 1.5, %v1600
  %v1602 = vmul.f32 %v1597, %v1601
  %vm1603 = vweird.f32 %v1596
  %vm1604 = vweird.f32 %v1597
  %vm1605 = vmor %vm1603, %vm1604
  %v1606 = vsel %vm1605, %v1597, %v1602
  %v1607 = vmul.f32 %v1590, %v1606
  %v1608 = vmul.f32 %v1607, %v864
  %v1609 = vadd.f32 %v1608, %v868
  %s1610 = scalar_lea.vmem %s21, 8
  %1611 = vst.msk [vmem:[%s1610] sm:$0xff] %vm97, %v1609
  // Predicated region
  $region86: #{transformer_vae_v4_forward.17} parent=0 // pred_check
    _
  $region87: #{transformer_vae_v4_forward.17} parent=0 // pred_check_branch
    %1613 = sbr.rel (0) target = $region89
  $region88: #{transformer_vae_v4_forward.17} parent=0 // pred_region
    _
  $region89: #{transformer_vae_v4_forward.17} parent=0 // pred_fallthru
    _
  // Predicated region
  $region90: #{transformer_vae_v4_forward.17} parent=0 // pred_check
    _
  $region91: #{transformer_vae_v4_forward.17} parent=0 // pred_check_branch
    %1615 = sbr.rel (0) target = $region93
  $region92: #{transformer_vae_v4_forward.17} parent=0 // pred_region
    _
  $region93: #{transformer_vae_v4_forward.17} parent=0 // pred_fallthru
    _

</llo_original>
